<compile_context>
chip_gen: v7x
topology: tpu7x:2x2x1
jax: 0.10.0
libtpu: 0.0.40
codegen_flags: <defaults>
</compile_context>

<pallas_src>
import jax
import jax.numpy as jnp
from jax.experimental import pallas as pl
from jax.experimental.pallas import tpu as pltpu


_VMEM_LIMIT = 32 * 1024 * 1024   # scoped-VMEM budget valid on v5e/v6e/v7x


def _round_up(x, m):
    return ((x + m - 1) // m) * m


def _largest_divisor_le(n, target):
    target = max(1, min(n, target))
    for d in range(target, 0, -1):
        if n % d == 0:
            return d
    return 1


# ----------------------------- Pallas kernels -----------------------------

def _upconv_kernel(x_ref, w_ref, b_ref, o_ref):
    # ConvTranspose2d(k=2, s=2) on one pixel tile as a single MXU matmul.
    # x: (TM, Cin) bf16, w: (Cin, 4*Coutp) bf16, b: (1, 4*Coutp) f32.
    y = jnp.dot(x_ref[...], w_ref[...], preferred_element_type=jnp.float32)
    o_ref[...] = y + b_ref[...]


def _conv3x3_stats_kernel(xb_ref, w_ref, y_ref, st_ref):
    # 3x3 conv (padding=1) on one (TH, W) spatial row-tile.  The wrapper packs
    # a 1-pixel halo into the block, so the 9 taps are 9 shifted
    # (TH*W, Cin) x (Cin, Coutp) matmuls accumulated in f32 — no im2col in HBM.
    # Also emits per-tile BatchNorm partials (sum, sum-of-squares) so global
    # batch stats can be reduced cheaply without serializing the grid.
    th, w_out, coutp = y_ref.shape
    cin = w_ref.shape[1]
    x3 = xb_ref[...]                                     # (th+2, w_out+2, cin) bf16
    acc = jnp.zeros((th * w_out, coutp), jnp.float32)
    for di in range(3):
        for dj in range(3):
            tap = x3[di:di + th, dj:dj + w_out, :].reshape(th * w_out, cin)
            acc = acc + jnp.dot(tap, w_ref[di * 3 + dj],
                                preferred_element_type=jnp.float32)
    y_ref[...] = acc.reshape(th, w_out, coutp)
    s = jnp.sum(acc, axis=0, keepdims=True)              # single pass:
    ss = jnp.sum(acc * acc, axis=0, keepdims=True)       # sum and sum-of-squares
    st_ref[...] = jnp.concatenate([s, ss], axis=0)


def _bn_relu_kernel(y_ref, scale_ref, shift_ref, o_ref):
    # y * (gamma*inv_std) + (beta - mean*gamma*inv_std), then ReLU; all f32.
    o_ref[...] = jnp.maximum(y_ref[...] * scale_ref[...] + shift_ref[...], 0.0)


# ------------------------------ glue wrappers ------------------------------

def conv_transpose_2x2_s2(x_nhwc, w, b):
    """ConvTranspose2d(Cin, Cout, kernel_size=2, stride=2).

    x_nhwc: (N, H, W, Cin); w: PyTorch weight (Cin, Cout, 2, 2); b: (Cout,).
    Returns (N, 2H, 2W, Cout).
    """
    N, H, W, Cin = x_nhwc.shape
    Cout = w.shape[1]
    Coutp = _round_up(Cout, 128)                 # 128-lane-dense output
    M = N * H * W
    TM = min(1024, _round_up(M, 16))             # pixel-tile (rows) per step
    Mp = _round_up(M, TM)

    xm = x_nhwc.reshape(M, Cin).astype(jnp.bfloat16)
    if Mp != M:
        xm = jnp.pad(xm, ((0, Mp - M), (0, 0)))
    # (Cin, Cout, kh, kw) -> (Cin, kh, kw, Cout) -> pad Cout -> (Cin, 4*Coutp)
    wm = jnp.transpose(w, (0, 2, 3, 1))
    wm = jnp.pad(wm, ((0, 0), (0, 0), (0, 0), (0, Coutp - Cout)))
    wm = wm.reshape(Cin, 4 * Coutp).astype(jnp.bfloat16)
    bm = jnp.tile(jnp.pad(b, (0, Coutp - Cout)), 4).reshape(1, 4 * Coutp)
    bm = bm.astype(jnp.float32)

    y = pl.pallas_call(
        _upconv_kernel,
        grid=(Mp // TM,),
        in_specs=[
            pl.BlockSpec((TM, Cin), lambda i: (i, 0)),
            pl.BlockSpec((Cin, 4 * Coutp), lambda i: (0, 0)),   # resident weight
            pl.BlockSpec((1, 4 * Coutp), lambda i: (0, 0)),     # resident bias
        ],
        out_specs=pl.BlockSpec((TM, 4 * Coutp), lambda i: (i, 0)),
        out_shape=jax.ShapeDtypeStruct((Mp, 4 * Coutp), jnp.float32),
        compiler_params=pltpu.CompilerParams(
            dimension_semantics=("parallel",),
            vmem_limit_bytes=_VMEM_LIMIT),
    )(xm, wm, bm)

    # Pixel-shuffle the (di, dj) lanes to (2H, 2W); XLA fuses this with the
    # following pad/concat/halo-block gather that feeds the first conv.
    # TODO(synk): fold the shuffle directly into the up-conv out_spec
    # index_map to remove this pure-layout pass entirely.
    y = y[:M].reshape(N, H, W, 2, 2, Coutp)
    y = jnp.transpose(y, (0, 1, 3, 2, 4, 5)).reshape(N, 2 * H, 2 * W, Coutp)
    return y[..., :Cout]


def _halo_blocks(x_nhwc, th):
    """(N, H, W, C) -> (N, H//th, th+2, W+2, C): padded row tiles with halo."""
    N, H, W, C = x_nhwc.shape
    hb = H // th
    xp = jnp.pad(x_nhwc, ((0, 0), (1, 1), (1, 1), (0, 0)))
    idx = (jnp.arange(hb)[:, None] * th + jnp.arange(th + 2)[None, :]).reshape(-1)
    xb = jnp.take(xp, idx, axis=1)               # (N, hb*(th+2), W+2, C)
    return xb.reshape(N, hb, th + 2, W + 2, C)


def conv3x3_bn_relu(x_nhwc, w, gamma, beta):
    """Conv2d(k=3, pad=1, conv-bias dropped) + BatchNorm2d(batch stats) + ReLU.

    The conv bias is omitted on purpose: training-mode BatchNorm subtracts the
    batch mean, which cancels any constant per-channel bias exactly.
    Returns (N, H, W, Coutp) with Coutp = Cout rounded up to 128 lanes; the
    padded channels are identically zero.
    """
    N, H, W, Cin = x_nhwc.shape
    Cout, wcin = w.shape[0], w.shape[1]
    if wcin != Cin:                      # input carries zero 128-lane padding
        w = jnp.pad(w, ((0, 0), (0, Cin - wcin), (0, 0), (0, 0)))
    Coutp = _round_up(Cout, 128)

    # Row-tile height: keep (halo input block + f32 accumulator + double-
    # buffered f32 output tile) well under the 32 MiB scoped-VMEM budget.
    th = _largest_divisor_le(H, max(8, 8192 // max(W, 1)))
    hb = H // th

    xb = _halo_blocks(x_nhwc.astype(jnp.bfloat16), th)
    # (Cout, Cin, 3, 3) -> (kh, kw, Cin, Cout) -> pad Cout -> (9, Cin, Coutp)
    wk = jnp.transpose(w, (2, 3, 1, 0))
    wk = jnp.pad(wk, ((0, 0), (0, 0), (0, 0), (0, Coutp - Cout)))
    wk = wk.reshape(9, Cin, Coutp).astype(jnp.bfloat16)

    y, st = pl.pallas_call(
        _conv3x3_stats_kernel,
        grid=(N, hb),
        in_specs=[
            pl.BlockSpec((None, None, th + 2, W + 2, Cin),
                         lambda n, h: (n, h, 0, 0, 0)),
            pl.BlockSpec((9, Cin, Coutp), lambda n, h: (0, 0, 0)),  # resident
        ],
        out_specs=[
            pl.BlockSpec((None, th, W, Coutp), lambda n, h: (n, h, 0, 0)),
            pl.BlockSpec((None, None, 2, Coutp), lambda n, h: (n, h, 0, 0)),
        ],
        out_shape=(
            jax.ShapeDtypeStruct((N, H, W, Coutp), jnp.float32),
            jax.ShapeDtypeStruct((N, hb, 2, Coutp), jnp.float32),
        ),
        compiler_params=pltpu.CompilerParams(
            dimension_semantics=("parallel", "parallel"),
            vmem_limit_bytes=_VMEM_LIMIT),
    )(xb, wk)

    # Global training-mode BN statistics (biased variance, eps=1e-5), reduced
    # from the tiny per-tile partials (keeps the conv grid fully parallel).
    m = float(N * H * W)
    tot = jnp.sum(st, axis=(0, 1))                        # (2, Coutp)
    mean = tot[0] / m
    var = jnp.maximum(tot[1] / m - mean * mean, 0.0)
    inv = jax.lax.rsqrt(var + 1e-5)
    gp = jnp.pad(gamma, (0, Coutp - Cout))
    bp = jnp.pad(beta, (0, Coutp - Cout))
    scale = (gp * inv).reshape(1, 1, Coutp).astype(jnp.float32)
    shift = (bp - mean * gp * inv).reshape(1, 1, Coutp).astype(jnp.float32)

    out = pl.pallas_call(
        _bn_relu_kernel,
        grid=(N, hb),
        in_specs=[
            pl.BlockSpec((None, th, W, Coutp), lambda n, h: (n, h, 0, 0)),
            pl.BlockSpec((1, 1, Coutp), lambda n, h: (0, 0, 0)),
            pl.BlockSpec((1, 1, Coutp), lambda n, h: (0, 0, 0)),
        ],
        out_specs=pl.BlockSpec((None, th, W, Coutp), lambda n, h: (n, h, 0, 0)),
        out_shape=jax.ShapeDtypeStruct((N, H, W, Coutp), jnp.float32),
        compiler_params=pltpu.CompilerParams(
            dimension_semantics=("parallel", "parallel"),
            vmem_limit_bytes=_VMEM_LIMIT),
    )(y, scale, shift)
    return out


def up_layer_forward(params, x1_nchw, x2_nchw):
    """Equivalent of Up_Layer.forward(x1, x2); inputs/outputs are NCHW."""
    x1 = jnp.transpose(x1_nchw, (0, 2, 3, 1)).astype(jnp.float32)
    x2 = jnp.transpose(x2_nchw, (0, 2, 3, 1)).astype(jnp.float32)

    x1u = conv_transpose_2x2_s2(x1, params["up_w"], params["up_b"])

    # Replicate the module's F.pad call exactly (including its axis quirk):
    #   delta_x = H2-H1 pads the last (W) axis, delta_y = W2-W1 pads H.
    dx = x2.shape[1] - x1u.shape[1]
    dy = x2.shape[2] - x1u.shape[2]
    x1u = jnp.pad(
        x1u, ((0, 0), (dy // 2, dy - dy // 2), (dx // 2, dx - dx // 2), (0, 0)))

    # Channel concat: fused by XLA (together with the pad above) into the
    # halo-block gather feeding the first conv, so no extra materialized pass.
    x = jnp.concatenate([x2, x1u], axis=-1)

    y = conv3x3_bn_relu(x, params["c1_w"], params["bn1_g"], params["bn1_b"])
    y = conv3x3_bn_relu(y, params["c2_w"], params["bn2_g"], params["bn2_b"])

    out_c = params["c2_w"].shape[0]
    y = y[..., :out_c]                          # drop 128-lane padding channels
    # F.dropout(..., p=0) is the identity.
    return jnp.transpose(y, (0, 3, 1, 2))       # back to NCHW


def init_params(key, in_c, out_c):
    ks = jax.random.split(key, 8)
    f32 = jnp.float32
    return {
        # ConvTranspose2d(in_c, in_c//2, 2, 2): weight (in_c, in_c//2, 2, 2)
        "up_w": 0.1 * jax.random.normal(ks[0], (in_c, in_c // 2, 2, 2), f32),
        "up_b": 0.1 * jax.random.normal(ks[1], (in_c // 2,), f32),
        # Conv2d(in_c, out_c, 3, padding=1); conv bias present in the module
        # but unused by the kernels — training-mode BN cancels it exactly.
        "c1_w": 0.1 * jax.random.normal(ks[2], (out_c, in_c, 3, 3), f32),
        "c1_b": 0.1 * jax.random.normal(ks[3], (out_c,), f32),
        "bn1_g": 1.0 + 0.1 * jax.random.normal(ks[4], (out_c,), f32),
        "bn1_b": 0.1 * jax.random.normal(ks[5], (out_c,), f32),
        # Conv2d(out_c, out_c, 3, padding=1)
        "c2_w": 0.1 * jax.random.normal(ks[6], (out_c, out_c, 3, 3), f32),
        "c2_b": 0.1 * jax.random.normal(ks[7], (out_c,), f32),
        "bn2_g": jnp.ones((out_c,), f32),
        "bn2_b": jnp.zeros((out_c,), f32),
    }


if __name__ == "__main__":
    in_c, out_c = 8, 4
    key = jax.random.PRNGKey(0)
    k1, k2, kp = jax.random.split(key, 3)

    # x1: low-res feature map (in_c channels), x2: skip connection (in_c//2).
    x1 = jax.random.normal(k1, (2, in_c, 8, 8), jnp.float32)         # NCHW
    x2 = jax.random.normal(k2, (2, in_c // 2, 16, 16), jnp.float32)  # NCHW
    params = init_params(kp, in_c, out_c)

    out = jax.jit(up_layer_forward)(params, x1, x2)
    out = jax.block_until_ready(out)
    assert out.shape == (2, out_c, 16, 16), out.shape
    print("KERNEL_OK")
</pallas_src>

<mosaic_0001>
module attributes {stable_mosaic.version = 11 : i64} {
  func.func @_upconv_kernel(%arg0: i32, %arg1: memref<128x8xbf16, #tpu.memory_space<vmem>>, %arg2: memref<8x512xbf16, #tpu.memory_space<vmem>>, %arg3: memref<1x512xf32, #tpu.memory_space<vmem>>, %arg4: memref<128x512xf32, #tpu.memory_space<vmem>>) attributes {dimension_semantics = [#tpu.dimension_semantics<parallel>], iteration_bounds = array<i64: 1>, scalar_prefetch = 0 : i64, scratch_operands = 0 : i64, tpu.core_type = #tpu.core_type<tc>, window_params = [{transform_indices = @transform_0, window_bounds = array<i64: 128, 8>}, {pipeline_mode = #tpu.pipeline_mode<synchronous>, transform_indices = @transform_1, window_bounds = array<i64: 8, 512>}, {pipeline_mode = #tpu.pipeline_mode<synchronous>, transform_indices = @transform_2, window_bounds = array<i64: 1, 512>}, {transform_indices = @transform_3, window_bounds = array<i64: 128, 512>}]} {
    %c0 = arith.constant 0 : index
    %c0_0 = arith.constant 0 : index
    %0 = vector.load %arg1[%c0, %c0_0] : memref<128x8xbf16, #tpu.memory_space<vmem>>, vector<128x8xbf16>
    %c0_1 = arith.constant 0 : index
    %c0_2 = arith.constant 0 : index
    %1 = vector.load %arg2[%c0_1, %c0_2] : memref<8x512xbf16, #tpu.memory_space<vmem>>, vector<8x512xbf16>
    %cst = arith.constant dense<0.000000e+00> : vector<128x512xf32>
    %2 = tpu.matmul %0, %1, %cst {dimension_numbers = #tpu.dot_dimension_numbers<[1], [0], [0], [1], [0, 0, 1, 1], [], []>} : vector<128x8xbf16>, vector<8x512xbf16>, vector<128x512xf32> -> vector<128x512xf32>
    %c0_3 = arith.constant 0 : index
    %c0_4 = arith.constant 0 : index
    %3 = vector.load %arg3[%c0_3, %c0_4] : memref<1x512xf32, #tpu.memory_space<vmem>>, vector<1x512xf32>
    %4 = vector.broadcast %3 : vector<1x512xf32> to vector<128x512xf32>
    %5 = arith.addf %2, %4 : vector<128x512xf32>
    %c0_5 = arith.constant 0 : index
    %c0_6 = arith.constant 0 : index
    %6 = vector.load %arg4[%c0_5, %c0_6] : memref<128x512xf32, #tpu.memory_space<vmem>>, vector<128x512xf32>
    tpu.vector_store %arg4[%c0_5, %c0_6], %5 {strides = array<i32>} : memref<128x512xf32, #tpu.memory_space<vmem>>, vector<128x512xf32>,
    return
  }
  func.func @transform_0(%arg0: i32) -> (i32, i32) {
    %c0_i32 = arith.constant 0 : i32
    %c0_i32_0 = arith.constant 0 : i32
    return %arg0, %c0_i32 : i32, i32
  }
  func.func @transform_1(%arg0: i32) -> (i32, i32) {
    %c0_i32 = arith.constant 0 : i32
    %c0_i32_0 = arith.constant 0 : i32
    %c0_i32_1 = arith.constant 0 : i32
    return %c0_i32, %c0_i32_0 : i32, i32
  }
  func.func @transform_2(%arg0: i32) -> (i32, i32) {
    %c0_i32 = arith.constant 0 : i32
    %c0_i32_0 = arith.constant 0 : i32
    %c0_i32_1 = arith.constant 0 : i32
    return %c0_i32, %c0_i32_0 : i32, i32
  }
  func.func @transform_3(%arg0: i32) -> (i32, i32) {
    %c0_i32 = arith.constant 0 : i32
    %c0_i32_0 = arith.constant 0 : i32
    return %arg0, %c0_i32 : i32, i32
  }
}

module attributes {stable_mosaic.version = 11 : i64} {
  func.func @_conv3x3_stats_kernel(%arg0: i32, %arg1: i32, %arg2: memref<1x1x18x18x8xbf16, #tpu.memory_space<vmem>>, %arg3: memref<9x8x128xbf16, #tpu.memory_space<vmem>>, %arg4: memref<1x16x16x128xf32, #tpu.memory_space<vmem>>, %arg5: memref<1x1x2x128xf32, #tpu.memory_space<vmem>>) attributes {dimension_semantics = [#tpu.dimension_semantics<parallel>, #tpu.dimension_semantics<parallel>], iteration_bounds = array<i64: 2, 1>, scalar_prefetch = 0 : i64, scratch_operands = 0 : i64, tpu.core_type = #tpu.core_type<tc>, window_params = [{transform_indices = @transform_0, window_bounds = array<i64: 1, 1, 18, 18, 8>}, {pipeline_mode = #tpu.pipeline_mode<synchronous>, transform_indices = @transform_1, window_bounds = array<i64: 9, 8, 128>}, {transform_indices = @transform_2, window_bounds = array<i64: 1, 16, 16, 128>}, {transform_indices = @transform_3, window_bounds = array<i64: 1, 1, 2, 128>}]} {
    %c0 = arith.constant 0 : index
    %c0_0 = arith.constant 0 : index
    %c0_1 = arith.constant 0 : index
    %c0_2 = arith.constant 0 : index
    %c0_3 = arith.constant 0 : index
    %0 = vector.load %arg2[%c0, %c0_0, %c0_1, %c0_2, %c0_3] : memref<1x1x18x18x8xbf16, #tpu.memory_space<vmem>>, vector<1x1x18x18x8xbf16>
    %1 = vector.shape_cast %0 : vector<1x1x18x18x8xbf16> to vector<18x18x8xbf16>
    %cst = arith.constant 0.000000e+00 : f32
    %2 = vector.broadcast %cst : f32 to vector<256x128xf32>
    %3 = vector.extract_strided_slice %1 {offsets = [0, 0, 0], sizes = [16, 16, 8], strides = [1, 1, 1]} : vector<18x18x8xbf16> to vector<16x16x8xbf16>
    %4 = vector.shape_cast %3 : vector<16x16x8xbf16> to vector<256x8xbf16>
    %c0_4 = arith.constant 0 : index
    %c0_5 = arith.constant 0 : index
    %c0_6 = arith.constant 0 : index
    %5 = vector.load %arg3[%c0_4, %c0_5, %c0_6] : memref<9x8x128xbf16, #tpu.memory_space<vmem>>, vector<1x8x128xbf16>
    %6 = vector.shape_cast %5 : vector<1x8x128xbf16> to vector<8x128xbf16>
    %cst_7 = arith.constant dense<0.000000e+00> : vector<256x128xf32>
    %7 = tpu.matmul %4, %6, %cst_7 {dimension_numbers = #tpu.dot_dimension_numbers<[1], [0], [0], [1], [0, 0, 1, 1], [], []>} : vector<256x8xbf16>, vector<8x128xbf16>, vector<256x128xf32> -> vector<256x128xf32>
    %8 = arith.addf %2, %7 : vector<256x128xf32>
    %9 = vector.extract_strided_slice %1 {offsets = [0, 1, 0], sizes = [16, 16, 8], strides = [1, 1, 1]} : vector<18x18x8xbf16> to vector<16x16x8xbf16>
    %10 = vector.shape_cast %9 : vector<16x16x8xbf16> to vector<256x8xbf16>
    %c1 = arith.constant 1 : index
    %c0_8 = arith.constant 0 : index
    %c0_9 = arith.constant 0 : index
    %11 = vector.load %arg3[%c1, %c0_8, %c0_9] : memref<9x8x128xbf16, #tpu.memory_space<vmem>>, vector<1x8x128xbf16>
    %12 = vector.shape_cast %11 : vector<1x8x128xbf16> to vector<8x128xbf16>
    %cst_10 = arith.constant dense<0.000000e+00> : vector<256x128xf32>
    %13 = tpu.matmul %10, %12, %cst_10 {dimension_numbers = #tpu.dot_dimension_numbers<[1], [0], [0], [1], [0, 0, 1, 1], [], []>} : vector<256x8xbf16>, vector<8x128xbf16>, vector<256x128xf32> -> vector<256x128xf32>
    %14 = arith.addf %8, %13 : vector<256x128xf32>
    %15 = vector.extract_strided_slice %1 {offsets = [0, 2, 0], sizes = [16, 16, 8], strides = [1, 1, 1]} : vector<18x18x8xbf16> to vector<16x16x8xbf16>
    %16 = vector.shape_cast %15 : vector<16x16x8xbf16> to vector<256x8xbf16>
    %c2 = arith.constant 2 : index
    %c0_11 = arith.constant 0 : index
    %c0_12 = arith.constant 0 : index
    %17 = vector.load %arg3[%c2, %c0_11, %c0_12] : memref<9x8x128xbf16, #tpu.memory_space<vmem>>, vector<1x8x128xbf16>
    %18 = vector.shape_cast %17 : vector<1x8x128xbf16> to vector<8x128xbf16>
    %cst_13 = arith.constant dense<0.000000e+00> : vector<256x128xf32>
    %19 = tpu.matmul %16, %18, %cst_13 {dimension_numbers = #tpu.dot_dimension_numbers<[1], [0], [0], [1], [0, 0, 1, 1], [], []>} : vector<256x8xbf16>, vector<8x128xbf16>, vector<256x128xf32> -> vector<256x128xf32>
    %20 = arith.addf %14, %19 : vector<256x128xf32>
    %21 = vector.extract_strided_slice %1 {offsets = [1, 0, 0], sizes = [16, 16, 8], strides = [1, 1, 1]} : vector<18x18x8xbf16> to vector<16x16x8xbf16>
    %22 = vector.shape_cast %21 : vector<16x16x8xbf16> to vector<256x8xbf16>
    %c3 = arith.constant 3 : index
    %c0_14 = arith.constant 0 : index
    %c0_15 = arith.constant 0 : index
    %23 = vector.load %arg3[%c3, %c0_14, %c0_15] : memref<9x8x128xbf16, #tpu.memory_space<vmem>>, vector<1x8x128xbf16>
    %24 = vector.shape_cast %23 : vector<1x8x128xbf16> to vector<8x128xbf16>
    %cst_16 = arith.constant dense<0.000000e+00> : vector<256x128xf32>
    %25 = tpu.matmul %22, %24, %cst_16 {dimension_numbers = #tpu.dot_dimension_numbers<[1], [0], [0], [1], [0, 0, 1, 1], [], []>} : vector<256x8xbf16>, vector<8x128xbf16>, vector<256x128xf32> -> vector<256x128xf32>
    %26 = arith.addf %20, %25 : vector<256x128xf32>
    %27 = vector.extract_strided_slice %1 {offsets = [1, 1, 0], sizes = [16, 16, 8], strides = [1, 1, 1]} : vector<18x18x8xbf16> to vector<16x16x8xbf16>
    %28 = vector.shape_cast %27 : vector<16x16x8xbf16> to vector<256x8xbf16>
    %c4 = arith.constant 4 : index
    %c0_17 = arith.constant 0 : index
    %c0_18 = arith.constant 0 : index
    %29 = vector.load %arg3[%c4, %c0_17, %c0_18] : memref<9x8x128xbf16, #tpu.memory_space<vmem>>, vector<1x8x128xbf16>
    %30 = vector.shape_cast %29 : vector<1x8x128xbf16> to vector<8x128xbf16>
    %cst_19 = arith.constant dense<0.000000e+00> : vector<256x128xf32>
    %31 = tpu.matmul %28, %30, %cst_19 {dimension_numbers = #tpu.dot_dimension_numbers<[1], [0], [0], [1], [0, 0, 1, 1], [], []>} : vector<256x8xbf16>, vector<8x128xbf16>, vector<256x128xf32> -> vector<256x128xf32>
    %32 = arith.addf %26, %31 : vector<256x128xf32>
    %33 = vector.extract_strided_slice %1 {offsets = [1, 2, 0], sizes = [16, 16, 8], strides = [1, 1, 1]} : vector<18x18x8xbf16> to vector<16x16x8xbf16>
    %34 = vector.shape_cast %33 : vector<16x16x8xbf16> to vector<256x8xbf16>
    %c5 = arith.constant 5 : index
    %c0_20 = arith.constant 0 : index
    %c0_21 = arith.constant 0 : index
    %35 = vector.load %arg3[%c5, %c0_20, %c0_21] : memref<9x8x128xbf16, #tpu.memory_space<vmem>>, vector<1x8x128xbf16>
    %36 = vector.shape_cast %35 : vector<1x8x128xbf16> to vector<8x128xbf16>
    %cst_22 = arith.constant dense<0.000000e+00> : vector<256x128xf32>
    %37 = tpu.matmul %34, %36, %cst_22 {dimension_numbers = #tpu.dot_dimension_numbers<[1], [0], [0], [1], [0, 0, 1, 1], [], []>} : vector<256x8xbf16>, vector<8x128xbf16>, vector<256x128xf32> -> vector<256x128xf32>
    %38 = arith.addf %32, %37 : vector<256x128xf32>
    %39 = vector.extract_strided_slice %1 {offsets = [2, 0, 0], sizes = [16, 16, 8], strides = [1, 1, 1]} : vector<18x18x8xbf16> to vector<16x16x8xbf16>
    %40 = vector.shape_cast %39 : vector<16x16x8xbf16> to vector<256x8xbf16>
    %c6 = arith.constant 6 : index
    %c0_23 = arith.constant 0 : index
    %c0_24 = arith.constant 0 : index
    %41 = vector.load %arg3[%c6, %c0_23, %c0_24] : memref<9x8x128xbf16, #tpu.memory_space<vmem>>, vector<1x8x128xbf16>
    %42 = vector.shape_cast %41 : vector<1x8x128xbf16> to vector<8x128xbf16>
    %cst_25 = arith.constant dense<0.000000e+00> : vector<256x128xf32>
    %43 = tpu.matmul %40, %42, %cst_25 {dimension_numbers = #tpu.dot_dimension_numbers<[1], [0], [0], [1], [0, 0, 1, 1], [], []>} : vector<256x8xbf16>, vector<8x128xbf16>, vector<256x128xf32> -> vector<256x128xf32>
    %44 = arith.addf %38, %43 : vector<256x128xf32>
    %45 = vector.extract_strided_slice %1 {offsets = [2, 1, 0], sizes = [16, 16, 8], strides = [1, 1, 1]} : vector<18x18x8xbf16> to vector<16x16x8xbf16>
    %46 = vector.shape_cast %45 : vector<16x16x8xbf16> to vector<256x8xbf16>
    %c7 = arith.constant 7 : index
    %c0_26 = arith.constant 0 : index
    %c0_27 = arith.constant 0 : index
    %47 = vector.load %arg3[%c7, %c0_26, %c0_27] : memref<9x8x128xbf16, #tpu.memory_space<vmem>>, vector<1x8x128xbf16>
    %48 = vector.shape_cast %47 : vector<1x8x128xbf16> to vector<8x128xbf16>
    %cst_28 = arith.constant dense<0.000000e+00> : vector<256x128xf32>
    %49 = tpu.matmul %46, %48, %cst_28 {dimension_numbers = #tpu.dot_dimension_numbers<[1], [0], [0], [1], [0, 0, 1, 1], [], []>} : vector<256x8xbf16>, vector<8x128xbf16>, vector<256x128xf32> -> vector<256x128xf32>
    %50 = arith.addf %44, %49 : vector<256x128xf32>
    %51 = vector.extract_strided_slice %1 {offsets = [2, 2, 0], sizes = [16, 16, 8], strides = [1, 1, 1]} : vector<18x18x8xbf16> to vector<16x16x8xbf16>
    %52 = vector.shape_cast %51 : vector<16x16x8xbf16> to vector<256x8xbf16>
    %c8 = arith.constant 8 : index
    %c0_29 = arith.constant 0 : index
    %c0_30 = arith.constant 0 : index
    %53 = vector.load %arg3[%c8, %c0_29, %c0_30] : memref<9x8x128xbf16, #tpu.memory_space<vmem>>, vector<1x8x128xbf16>
    %54 = vector.shape_cast %53 : vector<1x8x128xbf16> to vector<8x128xbf16>
    %cst_31 = arith.constant dense<0.000000e+00> : vector<256x128xf32>
    %55 = tpu.matmul %52, %54, %cst_31 {dimension_numbers = #tpu.dot_dimension_numbers<[1], [0], [0], [1], [0, 0, 1, 1], [], []>} : vector<256x8xbf16>, vector<8x128xbf16>, vector<256x128xf32> -> vector<256x128xf32>
    %56 = arith.addf %50, %55 : vector<256x128xf32>
    %57 = vector.shape_cast %56 : vector<256x128xf32> to vector<16x16x128xf32>
    %c0_32 = arith.constant 0 : index
    %c0_33 = arith.constant 0 : index
    %c0_34 = arith.constant 0 : index
    %c0_35 = arith.constant 0 : index
    %58 = vector.load %arg4[%c0_32, %c0_33, %c0_34, %c0_35] : memref<1x16x16x128xf32, #tpu.memory_space<vmem>>, vector<1x16x16x128xf32>
    %59 = vector.shape_cast %58 : vector<1x16x16x128xf32> to vector<16x16x128xf32>
    %60 = vector.shape_cast %57 : vector<16x16x128xf32> to vector<1x16x16x128xf32>
    tpu.vector_store %arg4[%c0_32, %c0_33, %c0_34, %c0_35], %60 {strides = array<i32>} : memref<1x16x16x128xf32, #tpu.memory_space<vmem>>, vector<1x16x16x128xf32>,
    %cst_36 = arith.constant dense<0.000000e+00> : vector<128xf32>
    %61 = vector.multi_reduction <add>, %56, %cst_36 [0] : vector<256x128xf32> to vector<128xf32>
    %62 = vector.shape_cast %61 : vector<128xf32> to vector<1x128xf32>
    %63 = arith.mulf %56, %56 : vector<256x128xf32>
    %cst_37 = arith.constant dense<0.000000e+00> : vector<128xf32>
    %64 = vector.multi_reduction <add>, %63, %cst_37 [0] : vector<256x128xf32> to vector<128xf32>
    %65 = vector.shape_cast %64 : vector<128xf32> to vector<1x128xf32>
    %66 = tpu.concatenate %62, %65 in 0 : vector<1x128xf32>, vector<1x128xf32> -> vector<2x128xf32>
    %c0_38 = arith.constant 0 : index
    %c0_39 = arith.constant 0 : index
    %c0_40 = arith.constant 0 : index
    %c0_41 = arith.constant 0 : index
    %67 = vector.load %arg5[%c0_38, %c0_39, %c0_40, %c0_41] : memref<1x1x2x128xf32, #tpu.memory_space<vmem>>, vector<1x1x2x128xf32>
    %68 = vector.shape_cast %67 : vector<1x1x2x128xf32> to vector<2x128xf32>
    %69 = vector.shape_cast %66 : vector<2x128xf32> to vector<1x1x2x128xf32>
    tpu.vector_store %arg5[%c0_38, %c0_39, %c0_40, %c0_41], %69 {strides = array<i32>} : memref<1x1x2x128xf32, #tpu.memory_space<vmem>>, vector<1x1x2x128xf32>,
    return
  }
  func.func @transform_0(%arg0: i32, %arg1: i32) -> (i32, i32, i32, i32, i32) {
    %c0_i32 = arith.constant 0 : i32
    %c0_i32_0 = arith.constant 0 : i32
    %c0_i32_1 = arith.constant 0 : i32
    %c0_i32_2 = arith.constant 0 : i32
    return %arg0, %arg1, %c0_i32, %c0_i32_0, %c0_i32_1 : i32, i32, i32, i32, i32
  }
  func.func @transform_1(%arg0: i32, %arg1: i32) -> (i32, i32, i32) {
    %c0_i32 = arith.constant 0 : i32
    %c0_i32_0 = arith.constant 0 : i32
    %c0_i32_1 = arith.constant 0 : i32
    %c0_i32_2 = arith.constant 0 : i32
    return %c0_i32, %c0_i32_0, %c0_i32_1 : i32, i32, i32
  }
  func.func @transform_2(%arg0: i32, %arg1: i32) -> (i32, i32, i32, i32) {
    %c0_i32 = arith.constant 0 : i32
    %c0_i32_0 = arith.constant 0 : i32
    %c0_i32_1 = arith.constant 0 : i32
    return %arg0, %arg1, %c0_i32, %c0_i32_0 : i32, i32, i32, i32
  }
  func.func @transform_3(%arg0: i32, %arg1: i32) -> (i32, i32, i32, i32) {
    %c0_i32 = arith.constant 0 : i32
    %c0_i32_0 = arith.constant 0 : i32
    %c0_i32_1 = arith.constant 0 : i32
    return %arg0, %arg1, %c0_i32, %c0_i32_0 : i32, i32, i32, i32
  }
}

module attributes {stable_mosaic.version = 11 : i64} {
  func.func @_bn_relu_kernel(%arg0: i32, %arg1: i32, %arg2: memref<1x16x16x128xf32, #tpu.memory_space<vmem>>, %arg3: memref<1x1x128xf32, #tpu.memory_space<vmem>>, %arg4: memref<1x1x128xf32, #tpu.memory_space<vmem>>, %arg5: memref<1x16x16x128xf32, #tpu.memory_space<vmem>>) attributes {dimension_semantics = [#tpu.dimension_semantics<parallel>, #tpu.dimension_semantics<parallel>], iteration_bounds = array<i64: 2, 1>, scalar_prefetch = 0 : i64, scratch_operands = 0 : i64, tpu.core_type = #tpu.core_type<tc>, window_params = [{transform_indices = @transform_0, window_bounds = array<i64: 1, 16, 16, 128>}, {pipeline_mode = #tpu.pipeline_mode<synchronous>, transform_indices = @transform_1, window_bounds = array<i64: 1, 1, 128>}, {pipeline_mode = #tpu.pipeline_mode<synchronous>, transform_indices = @transform_2, window_bounds = array<i64: 1, 1, 128>}, {transform_indices = @transform_3, window_bounds = array<i64: 1, 16, 16, 128>}]} {
    %c0 = arith.constant 0 : index
    %c0_0 = arith.constant 0 : index
    %c0_1 = arith.constant 0 : index
    %c0_2 = arith.constant 0 : index
    %0 = vector.load %arg2[%c0, %c0_0, %c0_1, %c0_2] : memref<1x16x16x128xf32, #tpu.memory_space<vmem>>, vector<1x16x16x128xf32>
    %1 = vector.shape_cast %0 : vector<1x16x16x128xf32> to vector<16x16x128xf32>
    %c0_3 = arith.constant 0 : index
    %c0_4 = arith.constant 0 : index
    %c0_5 = arith.constant 0 : index
    %2 = vector.load %arg3[%c0_3, %c0_4, %c0_5] : memref<1x1x128xf32, #tpu.memory_space<vmem>>, vector<1x1x128xf32>
    %3 = vector.broadcast %2 : vector<1x1x128xf32> to vector<16x16x128xf32>
    %4 = arith.mulf %1, %3 : vector<16x16x128xf32>
    %c0_6 = arith.constant 0 : index
    %c0_7 = arith.constant 0 : index
    %c0_8 = arith.constant 0 : index
    %5 = vector.load %arg4[%c0_6, %c0_7, %c0_8] : memref<1x1x128xf32, #tpu.memory_space<vmem>>, vector<1x1x128xf32>
    %6 = vector.broadcast %5 : vector<1x1x128xf32> to vector<16x16x128xf32>
    %7 = arith.addf %4, %6 : vector<16x16x128xf32>
    %cst = arith.constant 0.000000e+00 : f32
    %8 = vector.broadcast %cst : f32 to vector<16x16x128xf32>
    %9 = arith.maximumf %7, %8 : vector<16x16x128xf32>
    %c0_9 = arith.constant 0 : index
    %c0_10 = arith.constant 0 : index
    %c0_11 = arith.constant 0 : index
    %c0_12 = arith.constant 0 : index
    %10 = vector.load %arg5[%c0_9, %c0_10, %c0_11, %c0_12] : memref<1x16x16x128xf32, #tpu.memory_space<vmem>>, vector<1x16x16x128xf32>
    %11 = vector.shape_cast %10 : vector<1x16x16x128xf32> to vector<16x16x128xf32>
    %12 = vector.shape_cast %9 : vector<16x16x128xf32> to vector<1x16x16x128xf32>
    tpu.vector_store %arg5[%c0_9, %c0_10, %c0_11, %c0_12], %12 {strides = array<i32>} : memref<1x16x16x128xf32, #tpu.memory_space<vmem>>, vector<1x16x16x128xf32>,
    return
  }
  func.func @transform_0(%arg0: i32, %arg1: i32) -> (i32, i32, i32, i32) {
    %c0_i32 = arith.constant 0 : i32
    %c0_i32_0 = arith.constant 0 : i32
    %c0_i32_1 = arith.constant 0 : i32
    return %arg0, %arg1, %c0_i32, %c0_i32_0 : i32, i32, i32, i32
  }
  func.func @transform_1(%arg0: i32, %arg1: i32) -> (i32, i32, i32) {
    %c0_i32 = arith.constant 0 : i32
    %c0_i32_0 = arith.constant 0 : i32
    %c0_i32_1 = arith.constant 0 : i32
    %c0_i32_2 = arith.constant 0 : i32
    return %c0_i32, %c0_i32_0, %c0_i32_1 : i32, i32, i32
  }
  func.func @transform_2(%arg0: i32, %arg1: i32) -> (i32, i32, i32) {
    %c0_i32 = arith.constant 0 : i32
    %c0_i32_0 = arith.constant 0 : i32
    %c0_i32_1 = arith.constant 0 : i32
    %c0_i32_2 = arith.constant 0 : i32
    return %c0_i32, %c0_i32_0, %c0_i32_1 : i32, i32, i32
  }
  func.func @transform_3(%arg0: i32, %arg1: i32) -> (i32, i32, i32, i32) {
    %c0_i32 = arith.constant 0 : i32
    %c0_i32_0 = arith.constant 0 : i32
    %c0_i32_1 = arith.constant 0 : i32
    return %arg0, %arg1, %c0_i32, %c0_i32_0 : i32, i32, i32, i32
  }
}

module attributes {stable_mosaic.version = 11 : i64} {
  func.func @_conv3x3_stats_kernel(%arg0: i32, %arg1: i32, %arg2: memref<1x1x18x18x128xbf16, #tpu.memory_space<vmem>>, %arg3: memref<9x128x128xbf16, #tpu.memory_space<vmem>>, %arg4: memref<1x16x16x128xf32, #tpu.memory_space<vmem>>, %arg5: memref<1x1x2x128xf32, #tpu.memory_space<vmem>>) attributes {dimension_semantics = [#tpu.dimension_semantics<parallel>, #tpu.dimension_semantics<parallel>], iteration_bounds = array<i64: 2, 1>, scalar_prefetch = 0 : i64, scratch_operands = 0 : i64, tpu.core_type = #tpu.core_type<tc>, window_params = [{transform_indices = @transform_0, window_bounds = array<i64: 1, 1, 18, 18, 128>}, {pipeline_mode = #tpu.pipeline_mode<synchronous>, transform_indices = @transform_1, window_bounds = array<i64: 9, 128, 128>}, {transform_indices = @transform_2, window_bounds = array<i64: 1, 16, 16, 128>}, {transform_indices = @transform_3, window_bounds = array<i64: 1, 1, 2, 128>}]} {
    %c0 = arith.constant 0 : index
    %c0_0 = arith.constant 0 : index
    %c0_1 = arith.constant 0 : index
    %c0_2 = arith.constant 0 : index
    %c0_3 = arith.constant 0 : index
    %0 = vector.load %arg2[%c0, %c0_0, %c0_1, %c0_2, %c0_3] : memref<1x1x18x18x128xbf16, #tpu.memory_space<vmem>>, vector<1x1x18x18x128xbf16>
    %1 = vector.shape_cast %0 : vector<1x1x18x18x128xbf16> to vector<18x18x128xbf16>
    %cst = arith.constant 0.000000e+00 : f32
    %2 = vector.broadcast %cst : f32 to vector<256x128xf32>
    %3 = vector.extract_strided_slice %1 {offsets = [0, 0, 0], sizes = [16, 16, 128], strides = [1, 1, 1]} : vector<18x18x128xbf16> to vector<16x16x128xbf16>
    %4 = vector.shape_cast %3 : vector<16x16x128xbf16> to vector<256x128xbf16>
    %c0_4 = arith.constant 0 : index
    %c0_5 = arith.constant 0 : index
    %c0_6 = arith.constant 0 : index
    %5 = vector.load %arg3[%c0_4, %c0_5, %c0_6] : memref<9x128x128xbf16, #tpu.memory_space<vmem>>, vector<1x128x128xbf16>
    %6 = vector.shape_cast %5 : vector<1x128x128xbf16> to vector<128x128xbf16>
    %cst_7 = arith.constant dense<0.000000e+00> : vector<256x128xf32>
    %7 = tpu.matmul %4, %6, %cst_7 {dimension_numbers = #tpu.dot_dimension_numbers<[1], [0], [0], [1], [0, 0, 1, 1], [], []>} : vector<256x128xbf16>, vector<128x128xbf16>, vector<256x128xf32> -> vector<256x128xf32>
    %8 = arith.addf %2, %7 : vector<256x128xf32>
    %9 = vector.extract_strided_slice %1 {offsets = [0, 1, 0], sizes = [16, 16, 128], strides = [1, 1, 1]} : vector<18x18x128xbf16> to vector<16x16x128xbf16>
    %10 = vector.shape_cast %9 : vector<16x16x128xbf16> to vector<256x128xbf16>
    %c1 = arith.constant 1 : index
    %c0_8 = arith.constant 0 : index
    %c0_9 = arith.constant 0 : index
    %11 = vector.load %arg3[%c1, %c0_8, %c0_9] : memref<9x128x128xbf16, #tpu.memory_space<vmem>>, vector<1x128x128xbf16>
    %12 = vector.shape_cast %11 : vector<1x128x128xbf16> to vector<128x128xbf16>
    %cst_10 = arith.constant dense<0.000000e+00> : vector<256x128xf32>
    %13 = tpu.matmul %10, %12, %cst_10 {dimension_numbers = #tpu.dot_dimension_numbers<[1], [0], [0], [1], [0, 0, 1, 1], [], []>} : vector<256x128xbf16>, vector<128x128xbf16>, vector<256x128xf32> -> vector<256x128xf32>
    %14 = arith.addf %8, %13 : vector<256x128xf32>
    %15 = vector.extract_strided_slice %1 {offsets = [0, 2, 0], sizes = [16, 16, 128], strides = [1, 1, 1]} : vector<18x18x128xbf16> to vector<16x16x128xbf16>
    %16 = vector.shape_cast %15 : vector<16x16x128xbf16> to vector<256x128xbf16>
    %c2 = arith.constant 2 : index
    %c0_11 = arith.constant 0 : index
    %c0_12 = arith.constant 0 : index
    %17 = vector.load %arg3[%c2, %c0_11, %c0_12] : memref<9x128x128xbf16, #tpu.memory_space<vmem>>, vector<1x128x128xbf16>
    %18 = vector.shape_cast %17 : vector<1x128x128xbf16> to vector<128x128xbf16>
    %cst_13 = arith.constant dense<0.000000e+00> : vector<256x128xf32>
    %19 = tpu.matmul %16, %18, %cst_13 {dimension_numbers = #tpu.dot_dimension_numbers<[1], [0], [0], [1], [0, 0, 1, 1], [], []>} : vector<256x128xbf16>, vector<128x128xbf16>, vector<256x128xf32> -> vector<256x128xf32>
    %20 = arith.addf %14, %19 : vector<256x128xf32>
    %21 = vector.extract_strided_slice %1 {offsets = [1, 0, 0], sizes = [16, 16, 128], strides = [1, 1, 1]} : vector<18x18x128xbf16> to vector<16x16x128xbf16>
    %22 = vector.shape_cast %21 : vector<16x16x128xbf16> to vector<256x128xbf16>
    %c3 = arith.constant 3 : index
    %c0_14 = arith.constant 0 : index
    %c0_15 = arith.constant 0 : index
    %23 = vector.load %arg3[%c3, %c0_14, %c0_15] : memref<9x128x128xbf16, #tpu.memory_space<vmem>>, vector<1x128x128xbf16>
    %24 = vector.shape_cast %23 : vector<1x128x128xbf16> to vector<128x128xbf16>
    %cst_16 = arith.constant dense<0.000000e+00> : vector<256x128xf32>
    %25 = tpu.matmul %22, %24, %cst_16 {dimension_numbers = #tpu.dot_dimension_numbers<[1], [0], [0], [1], [0, 0, 1, 1], [], []>} : vector<256x128xbf16>, vector<128x128xbf16>, vector<256x128xf32> -> vector<256x128xf32>
    %26 = arith.addf %20, %25 : vector<256x128xf32>
    %27 = vector.extract_strided_slice %1 {offsets = [1, 1, 0], sizes = [16, 16, 128], strides = [1, 1, 1]} : vector<18x18x128xbf16> to vector<16x16x128xbf16>
    %28 = vector.shape_cast %27 : vector<16x16x128xbf16> to vector<256x128xbf16>
    %c4 = arith.constant 4 : index
    %c0_17 = arith.constant 0 : index
    %c0_18 = arith.constant 0 : index
    %29 = vector.load %arg3[%c4, %c0_17, %c0_18] : memref<9x128x128xbf16, #tpu.memory_space<vmem>>, vector<1x128x128xbf16>
    %30 = vector.shape_cast %29 : vector<1x128x128xbf16> to vector<128x128xbf16>
    %cst_19 = arith.constant dense<0.000000e+00> : vector<256x128xf32>
    %31 = tpu.matmul %28, %30, %cst_19 {dimension_numbers = #tpu.dot_dimension_numbers<[1], [0], [0], [1], [0, 0, 1, 1], [], []>} : vector<256x128xbf16>, vector<128x128xbf16>, vector<256x128xf32> -> vector<256x128xf32>
    %32 = arith.addf %26, %31 : vector<256x128xf32>
    %33 = vector.extract_strided_slice %1 {offsets = [1, 2, 0], sizes = [16, 16, 128], strides = [1, 1, 1]} : vector<18x18x128xbf16> to vector<16x16x128xbf16>
    %34 = vector.shape_cast %33 : vector<16x16x128xbf16> to vector<256x128xbf16>
    %c5 = arith.constant 5 : index
    %c0_20 = arith.constant 0 : index
    %c0_21 = arith.constant 0 : index
    %35 = vector.load %arg3[%c5, %c0_20, %c0_21] : memref<9x128x128xbf16, #tpu.memory_space<vmem>>, vector<1x128x128xbf16>
    %36 = vector.shape_cast %35 : vector<1x128x128xbf16> to vector<128x128xbf16>
    %cst_22 = arith.constant dense<0.000000e+00> : vector<256x128xf32>
    %37 = tpu.matmul %34, %36, %cst_22 {dimension_numbers = #tpu.dot_dimension_numbers<[1], [0], [0], [1], [0, 0, 1, 1], [], []>} : vector<256x128xbf16>, vector<128x128xbf16>, vector<256x128xf32> -> vector<256x128xf32>
    %38 = arith.addf %32, %37 : vector<256x128xf32>
    %39 = vector.extract_strided_slice %1 {offsets = [2, 0, 0], sizes = [16, 16, 128], strides = [1, 1, 1]} : vector<18x18x128xbf16> to vector<16x16x128xbf16>
    %40 = vector.shape_cast %39 : vector<16x16x128xbf16> to vector<256x128xbf16>
    %c6 = arith.constant 6 : index
    %c0_23 = arith.constant 0 : index
    %c0_24 = arith.constant 0 : index
    %41 = vector.load %arg3[%c6, %c0_23, %c0_24] : memref<9x128x128xbf16, #tpu.memory_space<vmem>>, vector<1x128x128xbf16>
    %42 = vector.shape_cast %41 : vector<1x128x128xbf16> to vector<128x128xbf16>
    %cst_25 = arith.constant dense<0.000000e+00> : vector<256x128xf32>
    %43 = tpu.matmul %40, %42, %cst_25 {dimension_numbers = #tpu.dot_dimension_numbers<[1], [0], [0], [1], [0, 0, 1, 1], [], []>} : vector<256x128xbf16>, vector<128x128xbf16>, vector<256x128xf32> -> vector<256x128xf32>
    %44 = arith.addf %38, %43 : vector<256x128xf32>
    %45 = vector.extract_strided_slice %1 {offsets = [2, 1, 0], sizes = [16, 16, 128], strides = [1, 1, 1]} : vector<18x18x128xbf16> to vector<16x16x128xbf16>
    %46 = vector.shape_cast %45 : vector<16x16x128xbf16> to vector<256x128xbf16>
    %c7 = arith.constant 7 : index
    %c0_26 = arith.constant 0 : index
    %c0_27 = arith.constant 0 : index
    %47 = vector.load %arg3[%c7, %c0_26, %c0_27] : memref<9x128x128xbf16, #tpu.memory_space<vmem>>, vector<1x128x128xbf16>
    %48 = vector.shape_cast %47 : vector<1x128x128xbf16> to vector<128x128xbf16>
    %cst_28 = arith.constant dense<0.000000e+00> : vector<256x128xf32>
    %49 = tpu.matmul %46, %48, %cst_28 {dimension_numbers = #tpu.dot_dimension_numbers<[1], [0], [0], [1], [0, 0, 1, 1], [], []>} : vector<256x128xbf16>, vector<128x128xbf16>, vector<256x128xf32> -> vector<256x128xf32>
    %50 = arith.addf %44, %49 : vector<256x128xf32>
    %51 = vector.extract_strided_slice %1 {offsets = [2, 2, 0], sizes = [16, 16, 128], strides = [1, 1, 1]} : vector<18x18x128xbf16> to vector<16x16x128xbf16>
    %52 = vector.shape_cast %51 : vector<16x16x128xbf16> to vector<256x128xbf16>
    %c8 = arith.constant 8 : index
    %c0_29 = arith.constant 0 : index
    %c0_30 = arith.constant 0 : index
    %53 = vector.load %arg3[%c8, %c0_29, %c0_30] : memref<9x128x128xbf16, #tpu.memory_space<vmem>>, vector<1x128x128xbf16>
    %54 = vector.shape_cast %53 : vector<1x128x128xbf16> to vector<128x128xbf16>
    %cst_31 = arith.constant dense<0.000000e+00> : vector<256x128xf32>
    %55 = tpu.matmul %52, %54, %cst_31 {dimension_numbers = #tpu.dot_dimension_numbers<[1], [0], [0], [1], [0, 0, 1, 1], [], []>} : vector<256x128xbf16>, vector<128x128xbf16>, vector<256x128xf32> -> vector<256x128xf32>
    %56 = arith.addf %50, %55 : vector<256x128xf32>
    %57 = vector.shape_cast %56 : vector<256x128xf32> to vector<16x16x128xf32>
    %c0_32 = arith.constant 0 : index
    %c0_33 = arith.constant 0 : index
    %c0_34 = arith.constant 0 : index
    %c0_35 = arith.constant 0 : index
    %58 = vector.load %arg4[%c0_32, %c0_33, %c0_34, %c0_35] : memref<1x16x16x128xf32, #tpu.memory_space<vmem>>, vector<1x16x16x128xf32>
    %59 = vector.shape_cast %58 : vector<1x16x16x128xf32> to vector<16x16x128xf32>
    %60 = vector.shape_cast %57 : vector<16x16x128xf32> to vector<1x16x16x128xf32>
    tpu.vector_store %arg4[%c0_32, %c0_33, %c0_34, %c0_35], %60 {strides = array<i32>} : memref<1x16x16x128xf32, #tpu.memory_space<vmem>>, vector<1x16x16x128xf32>,
    %cst_36 = arith.constant dense<0.000000e+00> : vector<128xf32>
    %61 = vector.multi_reduction <add>, %56, %cst_36 [0] : vector<256x128xf32> to vector<128xf32>
    %62 = vector.shape_cast %61 : vector<128xf32> to vector<1x128xf32>
    %63 = arith.mulf %56, %56 : vector<256x128xf32>
    %cst_37 = arith.constant dense<0.000000e+00> : vector<128xf32>
    %64 = vector.multi_reduction <add>, %63, %cst_37 [0] : vector<256x128xf32> to vector<128xf32>
    %65 = vector.shape_cast %64 : vector<128xf32> to vector<1x128xf32>
    %66 = tpu.concatenate %62, %65 in 0 : vector<1x128xf32>, vector<1x128xf32> -> vector<2x128xf32>
    %c0_38 = arith.constant 0 : index
    %c0_39 = arith.constant 0 : index
    %c0_40 = arith.constant 0 : index
    %c0_41 = arith.constant 0 : index
    %67 = vector.load %arg5[%c0_38, %c0_39, %c0_40, %c0_41] : memref<1x1x2x128xf32, #tpu.memory_space<vmem>>, vector<1x1x2x128xf32>
    %68 = vector.shape_cast %67 : vector<1x1x2x128xf32> to vector<2x128xf32>
    %69 = vector.shape_cast %66 : vector<2x128xf32> to vector<1x1x2x128xf32>
    tpu.vector_store %arg5[%c0_38, %c0_39, %c0_40, %c0_41], %69 {strides = array<i32>} : memref<1x1x2x128xf32, #tpu.memory_space<vmem>>, vector<1x1x2x128xf32>,
    return
  }
  func.func @transform_0(%arg0: i32, %arg1: i32) -> (i32, i32, i32, i32, i32) {
    %c0_i32 = arith.constant 0 : i32
    %c0_i32_0 = arith.constant 0 : i32
    %c0_i32_1 = arith.constant 0 : i32
    %c0_i32_2 = arith.constant 0 : i32
    return %arg0, %arg1, %c0_i32, %c0_i32_0, %c0_i32_1 : i32, i32, i32, i32, i32
  }
  func.func @transform_1(%arg0: i32, %arg1: i32) -> (i32, i32, i32) {
    %c0_i32 = arith.constant 0 : i32
    %c0_i32_0 = arith.constant 0 : i32
    %c0_i32_1 = arith.constant 0 : i32
    %c0_i32_2 = arith.constant 0 : i32
    return %c0_i32, %c0_i32_0, %c0_i32_1 : i32, i32, i32
  }
  func.func @transform_2(%arg0: i32, %arg1: i32) -> (i32, i32, i32, i32) {
    %c0_i32 = arith.constant 0 : i32
    %c0_i32_0 = arith.constant 0 : i32
    %c0_i32_1 = arith.constant 0 : i32
    return %arg0, %arg1, %c0_i32, %c0_i32_0 : i32, i32, i32, i32
  }
  func.func @transform_3(%arg0: i32, %arg1: i32) -> (i32, i32, i32, i32) {
    %c0_i32 = arith.constant 0 : i32
    %c0_i32_0 = arith.constant 0 : i32
    %c0_i32_1 = arith.constant 0 : i32
    return %arg0, %arg1, %c0_i32, %c0_i32_0 : i32, i32, i32, i32
  }
}

</mosaic_0001>

<llo_original>
// kernel: tile.8
$region0: #{tile.8}
  #allocation0 [shape = 's32[1]{0}', space=sflag, size = 0x4, scoped, tag = 'scoped memory for tile.8']
  %s0 = inlined_call_operand.vmem [shape: f32[128], index: 0, kind: input, shape index: {}]
  %s1 = inlined_call_operand.vmem [shape: f32[4,128], index: 1, kind: output, shape index: {}]
  // Predicated region
  $region2: #{tile.8} parent=0 // pred_check
    _
  $region3: #{tile.8} parent=0 // pred_check_branch
    %3 = sbr.rel (0) target = $region5
  $region4: #{tile.8} parent=0 // pred_region
    _
  $region5: #{tile.8} parent=0 // pred_fallthru
    _
  %v4 = vld [vmem:[%s0] ss:$0 sm:$0xff]
  %5 = vst [vmem:[%s1] sm:$0xf] %v4

// kernel: up_layer_forward.5
$region0: #{up_layer_forward.5}
  #allocation0 [shape = 'u32[]', space=smem, size = 0x4, offset = 0x4, fixed_abs, tag = 'smem constant byte address 0x4 - core index']
  #allocation1 [shape = 'u32[144,128]{1,0:T(1,128)}', space=vmem, size = 0x12000, scoped, tag = 'internal scratch']
  %s0 = inlined_call_operand.vmem [shape: bf16[128,8], index: 0, kind: input, shape index: {}]
  %s1 = inlined_call_operand.vmem [shape: bf16[8,512], index: 1, kind: input, shape index: {}]
  %s2 = inlined_call_operand.vmem [shape: f32[1,512], index: 2, kind: input, shape index: {}]
  %s3 = inlined_call_operand.vmem [shape: f32[128,512], index: 3, kind: output, shape index: {}]
  %s4 = sld [smem:[#allocation0]]
  $region22: #{up_layer_forward.5} parent=0
    _
  %s6 = ssub.s32 1, %s4
  %s7 = scalar_select 0, %s6, %s4
  // Predicated region
  $region2: #{up_layer_forward.5} parent=0 // pred_check
    _
  $region3: #{up_layer_forward.5} parent=0 // pred_check_branch
    %9 = sbr.rel (0) target = $region5
  $region4: #{up_layer_forward.5} parent=0 // pred_region
    _
  $region5: #{up_layer_forward.5} parent=0 // pred_fallthru
    _
  // Predicated region
  $region6: #{up_layer_forward.5} parent=0 // pred_check
    _
  $region7: #{up_layer_forward.5} parent=0 // pred_check_branch
    %11 = sbr.rel (0) target = $region9
  $region8: #{up_layer_forward.5} parent=0 // pred_region
    _
  $region9: #{up_layer_forward.5} parent=0 // pred_fallthru
    _
  // Predicated region
  $region10: #{up_layer_forward.5} parent=0 // pred_check
    _
  $region11: #{up_layer_forward.5} parent=0 // pred_check_branch
    %13 = sbr.rel (0) target = $region13
  $region12: #{up_layer_forward.5} parent=0 // pred_region
    _
  $region13: #{up_layer_forward.5} parent=0 // pred_fallthru
    _
  %v15 = vld [vmem:[%s0] sm:$0xf]
  %v16 = vld [vmem:[%s0 + $0x4] sm:$0xf]
  %v17 = vld [vmem:[%s0 + $0x8] sm:$0xf]
  %v18 = vld [vmem:[%s0 + $0xc] sm:$0xf]
  %v19 = vld [vmem:[%s0 + $0x10] sm:$0xf]
  %v20 = vld [vmem:[%s0 + $0x14] sm:$0xf]
  %v21 = vld [vmem:[%s0 + $0x18] sm:$0xf]
  %v22 = vld [vmem:[%s0 + $0x1c] sm:$0xf]
  %v23 = vld [vmem:[%s0 + $0x20] sm:$0xf]
  %v24 = vld [vmem:[%s0 + $0x24] sm:$0xf]
  %v25 = vld [vmem:[%s0 + $0x28] sm:$0xf]
  %v26 = vld [vmem:[%s0 + $0x2c] sm:$0xf]
  %v27 = vld [vmem:[%s0 + $0x30] sm:$0xf]
  %v28 = vld [vmem:[%s0 + $0x34] sm:$0xf]
  %v29 = vld [vmem:[%s0 + $0x38] sm:$0xf]
  %v30 = vld [vmem:[%s0 + $0x3c] sm:$0xf]
  %v31 = vld [vmem:[%s1] sm:$0xff]
  %v32 = vld [vmem:[%s1 + $0x8] sm:$0xff]
  %v33 = vld [vmem:[%s2] sm:$0xf]
  %v35 = vlaneseq
  %v36 = vshrl.u32 %v35, 7
  %v37 = vsub.s32 0, %v36
  %v38 = vrot.slane %v33, %v37
  %v39 = vlaneseq
  %v40 = vshrl.u32 %v39, 7
  %v41 = vsub.s32 1, %v40
  %v42 = vrot.slane %v33, %v41
  %v43 = vlaneseq
  %v44 = vshrl.u32 %v43, 7
  %v45 = vsub.s32 2, %v44
  %v46 = vrot.slane %v33, %v45
  %v47 = vlaneseq
  %v48 = vshrl.u32 %v47, 7
  %v49 = vsub.s32 3, %v48
  %v50 = vrot.slane %v33, %v49
  %v71 = vunpack.c.l.b16 %v15
  %v72 = vunpack.c.l.b16 %v16
  %v73 = vunpack.c.l.b16 %v17
  %v74 = vunpack.c.l.b16 %v18
  %v75 = vunpack.c.l.b16 %v19
  %v76 = vunpack.c.l.b16 %v20
  %v77 = vunpack.c.l.b16 %v21
  %v78 = vunpack.c.l.b16 %v22
  %v79 = vunpack.c.l.b16 %v23
  %v80 = vunpack.c.l.b16 %v24
  %v81 = vunpack.c.l.b16 %v25
  %v82 = vunpack.c.l.b16 %v26
  %v83 = vunpack.c.l.b16 %v27
  %v84 = vunpack.c.l.b16 %v28
  %v85 = vunpack.c.l.b16 %v29
  %v86 = vunpack.c.l.b16 %v30
  %v87 = vpack.c.b16 %v72, %v71
  %v88 = vpack.c.b16 %v74, %v73
  %v89 = vpack.c.b16 %v76, %v75
  %v90 = vpack.c.b16 %v78, %v77
  %v91 = vpack.c.b16 %v80, %v79
  %v92 = vpack.c.b16 %v82, %v81
  %v93 = vpack.c.b16 %v84, %v83
  %v94 = vpack.c.b16 %v86, %v85
  %v97 = vunpack.c.l.b16 %v31
  %v98 = vunpack.c.h.b16 %v31
  %v99 = vunpack.c.l.b16 %v32
  %v100 = vunpack.c.h.b16 %v32
  %v101 = vpack.c.b16 %v97, %v97
  %v102 = vpack.c.b16 %v98, %v98
  %v103 = vpack.c.b16 %v99, %v99
  %v104 = vpack.c.b16 %v100, %v100
  %vm105 = vcmask 64512
  %v107 = vsel %vm105, %v87, 0
  %v110 = vsel %vm105, %v88, 0
  %v113 = vsel %vm105, %v89, 0
  %v116 = vsel %vm105, %v90, 0
  %v119 = vsel %vm105, %v91, 0
  %v122 = vsel %vm105, %v92, 0
  %v125 = vsel %vm105, %v93, 0
  %v128 = vsel %vm105, %v94, 0
  %vm130 = vcmask 1043456
  %v132 = vsel %vm130, %v101, 0
  %v135 = vsel %vm130, %v102, 0
  %v138 = vsel %vm130, %v103, 0
  %v141 = vsel %vm130, %v104, 0
  %143 = vmatprep.subr.bf16.mxu0 %v135
  %144 = vmatpush1.bf16.msra.mxu0 %v132
  %145 = vmatprep.subr.bf16.mxu0 0
  %146 = vmatpush1.bf16.msra.mxu0 0
  %147 = vmatprep.subr.bf16.mxu0 0
  %148 = vmatpush1.bf16.msra.mxu0 0
  %149 = vmatprep.subr.bf16.mxu0 0
  %150 = vmatpush1.bf16.msra.mxu0 0
  %151 = vmatprep.subr.bf16.mxu0 0
  %152 = vmatpush1.bf16.msra.mxu0 0
  %153 = vmatprep.subr.bf16.mxu0 0
  %154 = vmatpush1.bf16.msra.mxu0 0
  %155 = vmatprep.subr.bf16.mxu0 0
  %156 = vmatpush1.bf16.msra.mxu0 0
  %157 = vmatprep.subr.bf16.mxu0 0
  %158 = vmatpush1.bf16.msra.mxu0 0
  %159 = vmatprep.subr.bf16.mxu0 0
  %160 = vmatpush1.bf16.msra.mxu0 0
  %161 = vmatprep.subr.bf16.mxu0 0
  %162 = vmatpush1.bf16.msra.mxu0 0
  %163 = vmatprep.subr.bf16.mxu0 0
  %164 = vmatpush1.bf16.msra.mxu0 0
  %165 = vmatprep.subr.bf16.mxu0 0
  %166 = vmatpush1.bf16.msra.mxu0 0
  %167 = vmatprep.subr.bf16.mxu0 0
  %168 = vmatpush1.bf16.msra.mxu0 0
  %169 = vmatprep.subr.bf16.mxu0 0
  %170 = vmatpush1.bf16.msra.mxu0 0
  %171 = vmatprep.subr.bf16.mxu0 0
  %172 = vmatpush1.bf16.msra.mxu0 0
  %173 = vmatprep.subr.bf16.mxu0 0
  %174 = vmatpush1.bf16.msra.mxu0 0
  %175 = vmatprep.mubr.bf16.mxu0 0
  %176 = vmatmul.mubr.bf16.gmra.mrb[0].mxu0 %v107
  %v177 = vpop.f32.mrb[0].mxu0
  %v178 = vadd.f32 %v38, %v177
  %v179 = vpop.f32.mrb[0].mxu0
  %v180 = vadd.f32 %v42, %v179
  %v181 = vpop.f32.mrb[0].mxu0
  %v182 = vadd.f32 %v38, %v181
  %v183 = vpop.f32.mrb[0].mxu0
  %v184 = vadd.f32 %v42, %v183
  %185 = vmatprep.mubr.bf16.mxu0 0
  %186 = vmatmul.mubr.bf16.gmra.mrb[0].mxu0 %v110
  %v187 = vpop.f32.mrb[0].mxu0
  %v188 = vadd.f32 %v38, %v187
  %v189 = vpop.f32.mrb[0].mxu0
  %v190 = vadd.f32 %v42, %v189
  %v191 = vpop.f32.mrb[0].mxu0
  %v192 = vadd.f32 %v38, %v191
  %v193 = vpop.f32.mrb[0].mxu0
  %v194 = vadd.f32 %v42, %v193
  %195 = vmatprep.mubr.bf16.mxu0 0
  %196 = vmatmul.mubr.bf16.gmra.mrb[0].mxu0 %v113
  %v197 = vpop.f32.mrb[0].mxu0
  %v198 = vadd.f32 %v38, %v197
  %v199 = vpop.f32.mrb[0].mxu0
  %v200 = vadd.f32 %v42, %v199
  %v201 = vpop.f32.mrb[0].mxu0
  %v202 = vadd.f32 %v38, %v201
  %v203 = vpop.f32.mrb[0].mxu0
  %v204 = vadd.f32 %v42, %v203
  %205 = vmatprep.mubr.bf16.mxu0 0
  %206 = vmatmul.mubr.bf16.gmra.mrb[0].mxu0 %v116
  %v207 = vpop.f32.mrb[0].mxu0
  %v208 = vadd.f32 %v38, %v207
  %v209 = vpop.f32.mrb[0].mxu0
  %v210 = vadd.f32 %v42, %v209
  %v211 = vpop.f32.mrb[0].mxu0
  %v212 = vadd.f32 %v38, %v211
  %v213 = vpop.f32.mrb[0].mxu0
  %v214 = vadd.f32 %v42, %v213
  %215 = vmatprep.mubr.bf16.mxu0 0
  %216 = vmatmul.mubr.bf16.gmra.mrb[0].mxu0 %v119
  %v217 = vpop.f32.mrb[0].mxu0
  %v218 = vadd.f32 %v38, %v217
  %v219 = vpop.f32.mrb[0].mxu0
  %v220 = vadd.f32 %v42, %v219
  %v221 = vpop.f32.mrb[0].mxu0
  %v222 = vadd.f32 %v38, %v221
  %v223 = vpop.f32.mrb[0].mxu0
  %v224 = vadd.f32 %v42, %v223
  %225 = vmatprep.mubr.bf16.mxu0 0
  %226 = vmatmul.mubr.bf16.gmra.mrb[0].mxu0 %v122
  %v227 = vpop.f32.mrb[0].mxu0
  %v228 = vadd.f32 %v38, %v227
  %v229 = vpop.f32.mrb[0].mxu0
  %v230 = vadd.f32 %v42, %v229
  %v231 = vpop.f32.mrb[0].mxu0
  %v232 = vadd.f32 %v38, %v231
  %v233 = vpop.f32.mrb[0].mxu0
  %v234 = vadd.f32 %v42, %v233
  %235 = vmatprep.mubr.bf16.mxu0 0
  %236 = vmatmul.mubr.bf16.gmra.mrb[0].mxu0 %v125
  %v237 = vpop.f32.mrb[0].mxu0
  %v238 = vadd.f32 %v38, %v237
  %v239 = vpop.f32.mrb[0].mxu0
  %v240 = vadd.f32 %v42, %v239
  %v241 = vpop.f32.mrb[0].mxu0
  %v242 = vadd.f32 %v38, %v241
  %v243 = vpop.f32.mrb[0].mxu0
  %v244 = vadd.f32 %v42, %v243
  %245 = vmatprep.mubr.bf16.mxu0 0
  %246 = vmatmul.mubr.bf16.gmra.mrb[0].mxu0 %v128
  %v247 = vpop.f32.mrb[0].mxu0
  %v248 = vadd.f32 %v38, %v247
  %v249 = vpop.f32.mrb[0].mxu0
  %v250 = vadd.f32 %v42, %v249
  %v251 = vpop.f32.mrb[0].mxu0
  %v252 = vadd.f32 %v38, %v251
  %v253 = vpop.f32.mrb[0].mxu0
  %v254 = vadd.f32 %v42, %v253
  %255 = vdwg.mxu0
  %256 = vmatprep.subr.bf16.mxu0 %v141
  %257 = vmatpush1.bf16.msra.mxu0 %v138
  %258 = vmatprep.subr.bf16.mxu0 0
  %259 = vmatpush1.bf16.msra.mxu0 0
  %260 = vmatprep.subr.bf16.mxu0 0
  %261 = vmatpush1.bf16.msra.mxu0 0
  %262 = vmatprep.subr.bf16.mxu0 0
  %263 = vmatpush1.bf16.msra.mxu0 0
  %264 = vmatprep.subr.bf16.mxu0 0
  %265 = vmatpush1.bf16.msra.mxu0 0
  %266 = vmatprep.subr.bf16.mxu0 0
  %267 = vmatpush1.bf16.msra.mxu0 0
  %268 = vmatprep.subr.bf16.mxu0 0
  %269 = vmatpush1.bf16.msra.mxu0 0
  %270 = vmatprep.subr.bf16.mxu0 0
  %271 = vmatpush1.bf16.msra.mxu0 0
  %272 = vmatprep.subr.bf16.mxu0 0
  %273 = vmatpush1.bf16.msra.mxu0 0
  %274 = vmatprep.subr.bf16.mxu0 0
  %275 = vmatpush1.bf16.msra.mxu0 0
  %276 = vmatprep.subr.bf16.mxu0 0
  %277 = vmatpush1.bf16.msra.mxu0 0
  %278 = vmatprep.subr.bf16.mxu0 0
  %279 = vmatpush1.bf16.msra.mxu0 0
  %280 = vmatprep.subr.bf16.mxu0 0
  %281 = vmatpush1.bf16.msra.mxu0 0
  %282 = vmatprep.subr.bf16.mxu0 0
  %283 = vmatpush1.bf16.msra.mxu0 0
  %284 = vmatprep.subr.bf16.mxu0 0
  %285 = vmatpush1.bf16.msra.mxu0 0
  %286 = vmatprep.subr.bf16.mxu0 0
  %287 = vmatpush1.bf16.msra.mxu0 0
  %288 = vmatprep.mubr.bf16.mxu0 0
  %289 = vmatmul.mubr.bf16.gmra.mrb[0].mxu0 %v107
  %v290 = vpop.f32.mrb[0].mxu0
  %v291 = vadd.f32 %v46, %v290
  %v292 = vpop.f32.mrb[0].mxu0
  %v293 = vadd.f32 %v50, %v292
  %v294 = vpop.f32.mrb[0].mxu0
  %v295 = vadd.f32 %v46, %v294
  %v296 = vpop.f32.mrb[0].mxu0
  %v297 = vadd.f32 %v50, %v296
  %298 = vmatprep.mubr.bf16.mxu0 0
  %299 = vmatmul.mubr.bf16.gmra.mrb[0].mxu0 %v110
  %v300 = vpop.f32.mrb[0].mxu0
  %v301 = vadd.f32 %v46, %v300
  %v302 = vpop.f32.mrb[0].mxu0
  %v303 = vadd.f32 %v50, %v302
  %v304 = vpop.f32.mrb[0].mxu0
  %v305 = vadd.f32 %v46, %v304
  %v306 = vpop.f32.mrb[0].mxu0
  %v307 = vadd.f32 %v50, %v306
  %308 = vmatprep.mubr.bf16.mxu0 0
  %309 = vmatmul.mubr.bf16.gmra.mrb[0].mxu0 %v113
  %v310 = vpop.f32.mrb[0].mxu0
  %v311 = vadd.f32 %v46, %v310
  %v312 = vpop.f32.mrb[0].mxu0
  %v313 = vadd.f32 %v50, %v312
  %v314 = vpop.f32.mrb[0].mxu0
  %v315 = vadd.f32 %v46, %v314
  %v316 = vpop.f32.mrb[0].mxu0
  %v317 = vadd.f32 %v50, %v316
  %318 = vmatprep.mubr.bf16.mxu0 0
  %319 = vmatmul.mubr.bf16.gmra.mrb[0].mxu0 %v116
  %v320 = vpop.f32.mrb[0].mxu0
  %v321 = vadd.f32 %v46, %v320
  %v322 = vpop.f32.mrb[0].mxu0
  %v323 = vadd.f32 %v50, %v322
  %v324 = vpop.f32.mrb[0].mxu0
  %v325 = vadd.f32 %v46, %v324
  %v326 = vpop.f32.mrb[0].mxu0
  %v327 = vadd.f32 %v50, %v326
  %328 = vmatprep.mubr.bf16.mxu0 0
  %329 = vmatmul.mubr.bf16.gmra.mrb[0].mxu0 %v119
  %v330 = vpop.f32.mrb[0].mxu0
  %v331 = vadd.f32 %v46, %v330
  %v332 = vpop.f32.mrb[0].mxu0
  %v333 = vadd.f32 %v50, %v332
  %v334 = vpop.f32.mrb[0].mxu0
  %v335 = vadd.f32 %v46, %v334
  %v336 = vpop.f32.mrb[0].mxu0
  %v337 = vadd.f32 %v50, %v336
  %338 = vmatprep.mubr.bf16.mxu0 0
  %339 = vmatmul.mubr.bf16.gmra.mrb[0].mxu0 %v122
  %v340 = vpop.f32.mrb[0].mxu0
  %v341 = vadd.f32 %v46, %v340
  %v342 = vpop.f32.mrb[0].mxu0
  %v343 = vadd.f32 %v50, %v342
  %v344 = vpop.f32.mrb[0].mxu0
  %v345 = vadd.f32 %v46, %v344
  %v346 = vpop.f32.mrb[0].mxu0
  %v347 = vadd.f32 %v50, %v346
  %348 = vmatprep.mubr.bf16.mxu0 0
  %349 = vmatmul.mubr.bf16.gmra.mrb[0].mxu0 %v125
  %v350 = vpop.f32.mrb[0].mxu0
  %v351 = vadd.f32 %v46, %v350
  %v352 = vpop.f32.mrb[0].mxu0
  %v353 = vadd.f32 %v50, %v352
  %v354 = vpop.f32.mrb[0].mxu0
  %v355 = vadd.f32 %v46, %v354
  %v356 = vpop.f32.mrb[0].mxu0
  %v357 = vadd.f32 %v50, %v356
  %358 = vmatprep.mubr.bf16.mxu0 0
  %359 = vmatmul.mubr.bf16.gmra.mrb[0].mxu0 %v128
  %v360 = vpop.f32.mrb[0].mxu0
  %v361 = vadd.f32 %v46, %v360
  %v362 = vpop.f32.mrb[0].mxu0
  %v363 = vadd.f32 %v50, %v362
  %v364 = vpop.f32.mrb[0].mxu0
  %v365 = vadd.f32 %v46, %v364
  %v366 = vpop.f32.mrb[0].mxu0
  %v367 = vadd.f32 %v50, %v366
  %368 = vdwg.mxu0
  %369 = vst [vmem:[%s3] sm:$0xff] %v178
  %370 = vst [vmem:[%s3 + $0x8] sm:$0xff] %v180
  %371 = vst [vmem:[%s3 + $0x10] sm:$0xff] %v291
  %372 = vst [vmem:[%s3 + $0x18] sm:$0xff] %v293
  %373 = vst [vmem:[%s3 + $0x20] sm:$0xff] %v182
  %374 = vst [vmem:[%s3 + $0x28] sm:$0xff] %v184
  %375 = vst [vmem:[%s3 + $0x30] sm:$0xff] %v295
  %376 = vst [vmem:[%s3 + $0x38] sm:$0xff] %v297
  %377 = vst [vmem:[%s3 + $0x40] sm:$0xff] %v188
  %378 = vst [vmem:[%s3 + $0x48] sm:$0xff] %v190
  %379 = vst [vmem:[%s3 + $0x50] sm:$0xff] %v301
  %380 = vst [vmem:[%s3 + $0x58] sm:$0xff] %v303
  %381 = vst [vmem:[%s3 + $0x60] sm:$0xff] %v192
  %382 = vst [vmem:[%s3 + $0x68] sm:$0xff] %v194
  %383 = vst [vmem:[%s3 + $0x70] sm:$0xff] %v305
  %384 = vst [vmem:[%s3 + $0x78] sm:$0xff] %v307
  %385 = vst [vmem:[%s3 + $0x80] sm:$0xff] %v198
  %386 = vst [vmem:[%s3 + $0x88] sm:$0xff] %v200
  %387 = vst [vmem:[%s3 + $0x90] sm:$0xff] %v311
  %388 = vst [vmem:[%s3 + $0x98] sm:$0xff] %v313
  %389 = vst [vmem:[%s3 + $0xa0] sm:$0xff] %v202
  %390 = vst [vmem:[%s3 + $0xa8] sm:$0xff] %v204
  %391 = vst [vmem:[%s3 + $0xb0] sm:$0xff] %v315
  %392 = vst [vmem:[%s3 + $0xb8] sm:$0xff] %v317
  %393 = vst [vmem:[%s3 + $0xc0] sm:$0xff] %v208
  %394 = vst [vmem:[%s3 + $0xc8] sm:$0xff] %v210
  %395 = vst [vmem:[%s3 + $0xd0] sm:$0xff] %v321
  %396 = vst [vmem:[%s3 + $0xd8] sm:$0xff] %v323
  %397 = vst [vmem:[%s3 + $0xe0] sm:$0xff] %v212
  %398 = vst [vmem:[%s3 + $0xe8] sm:$0xff] %v214
  %399 = vst [vmem:[%s3 + $0xf0] sm:$0xff] %v325
  %400 = vst [vmem:[%s3 + $0xf8] sm:$0xff] %v327
  %401 = vst [vmem:[%s3 + $0x100] sm:$0xff] %v218
  %402 = vst [vmem:[%s3 + $0x108] sm:$0xff] %v220
  %403 = vst [vmem:[%s3 + $0x110] sm:$0xff] %v331
  %404 = vst [vmem:[%s3 + $0x118] sm:$0xff] %v333
  %405 = vst [vmem:[%s3 + $0x120] sm:$0xff] %v222
  %406 = vst [vmem:[%s3 + $0x128] sm:$0xff] %v224
  %407 = vst [vmem:[%s3 + $0x130] sm:$0xff] %v335
  %408 = vst [vmem:[%s3 + $0x138] sm:$0xff] %v337
  %409 = vst [vmem:[%s3 + $0x140] sm:$0xff] %v228
  %410 = vst [vmem:[%s3 + $0x148] sm:$0xff] %v230
  %411 = vst [vmem:[%s3 + $0x150] sm:$0xff] %v341
  %412 = vst [vmem:[%s3 + $0x158] sm:$0xff] %v343
  %413 = vst [vmem:[%s3 + $0x160] sm:$0xff] %v232
  %414 = vst [vmem:[%s3 + $0x168] sm:$0xff] %v234
  %415 = vst [vmem:[%s3 + $0x170] sm:$0xff] %v345
  %416 = vst [vmem:[%s3 + $0x178] sm:$0xff] %v347
  %417 = vst [vmem:[%s3 + $0x180] sm:$0xff] %v238
  %418 = vst [vmem:[%s3 + $0x188] sm:$0xff] %v240
  %419 = vst [vmem:[%s3 + $0x190] sm:$0xff] %v351
  %420 = vst [vmem:[%s3 + $0x198] sm:$0xff] %v353
  %421 = vst [vmem:[%s3 + $0x1a0] sm:$0xff] %v242
  %422 = vst [vmem:[%s3 + $0x1a8] sm:$0xff] %v244
  %423 = vst [vmem:[%s3 + $0x1b0] sm:$0xff] %v355
  %424 = vst [vmem:[%s3 + $0x1b8] sm:$0xff] %v357
  %425 = vst [vmem:[%s3 + $0x1c0] sm:$0xff] %v248
  %426 = vst [vmem:[%s3 + $0x1c8] sm:$0xff] %v250
  %427 = vst [vmem:[%s3 + $0x1d0] sm:$0xff] %v361
  %428 = vst [vmem:[%s3 + $0x1d8] sm:$0xff] %v363
  %429 = vst [vmem:[%s3 + $0x1e0] sm:$0xff] %v252
  %430 = vst [vmem:[%s3 + $0x1e8] sm:$0xff] %v254
  %431 = vst [vmem:[%s3 + $0x1f0] sm:$0xff] %v365
  %432 = vst [vmem:[%s3 + $0x1f8] sm:$0xff] %v367
  // Predicated region
  $region14: #{up_layer_forward.5} parent=0 // pred_check
    _
  $region15: #{up_layer_forward.5} parent=0 // pred_check_branch
    %434 = sbr.rel (0) target = $region17
  $region16: #{up_layer_forward.5} parent=0 // pred_region
    _
  $region17: #{up_layer_forward.5} parent=0 // pred_fallthru
    _
  // Predicated region
  $region18: #{up_layer_forward.5} parent=0 // pred_check
    _
  $region19: #{up_layer_forward.5} parent=0 // pred_check_branch
    %436 = sbr.rel (0) target = $region21
  $region20: #{up_layer_forward.5} parent=0 // pred_region
    _
  $region21: #{up_layer_forward.5} parent=0 // pred_fallthru
    _

// kernel: up_layer_forward.7
$region0: #{up_layer_forward.7}
  #allocation0 [shape = 'u32[]', space=smem, size = 0x4, offset = 0x4, fixed_abs, tag = 'smem constant byte address 0x4 - core index']
  #allocation1 [shape = 'u32[144,128]{1,0:T(1,128)}', space=vmem, size = 0x12000, scoped, tag = 'internal scratch']
  %s0 = inlined_call_operand.vmem [shape: f32[2,16,16,128], index: 0, kind: input, shape index: {}]
  %s1 = inlined_call_operand.vmem [shape: f32[1,1,128], index: 1, kind: input, shape index: {}]
  %s2 = inlined_call_operand.vmem [shape: f32[1,1,128], index: 2, kind: input, shape index: {}]
  %s3 = inlined_call_operand.vmem [shape: f32[2,16,16,128], index: 3, kind: output, shape index: {}]
  %s4 = sld [smem:[#allocation0]]
  $region45: #{up_layer_forward.7} parent=0
    _
  %s6 = ssub.s32 1, %s4
  %s7 = scalar_select 0, %s6, %s4
  loop: start=0, step=1, limit=4
  $region2: #{up_layer_forward.7} parent=0 // loop_pre_header
    _
  $region3: #{up_layer_forward.7} parent=0 // loop_header
    %s9 = sphi 0, %s13
    %p10 = scmp.ge.s32.totalorder %s9, 4
    %s16 = sphi 0, %s28
    %s17 = sphi 0, %s24
    %s18 = sphi 0, %s16
    %s19 = sphi 0, %s17
    %s20 = sphi 0, %s18
    %s21 = sphi 0, %s19
    %s33 = sphi 0, %s35
    %s36 = sphi 0, %s33
    %s37 = sphi 0, %s36
    %s53 = sphi 0, %s37
    %s57 = sphi 0, %s57
    %s59 = sphi 0, %s57
    %s60 = sphi 0, %s59
    %s74 = sphi 0, %s60
    %s78 = sphi 0, %s78
    %s80 = sphi 0, %s78
    %s81 = sphi 0, %s80
    %s95 = sphi 0, %s81
    %s103 = sphi 0, %s105
    %s106 = sphi 0, %s103
    %s107 = sphi 0, %s106
    %s123 = sphi 0, %s107
  $region4: #{up_layer_forward.7} parent=0 // loop_header_branch
    %12 = sbr.rel (%p10) target = $region8
  $region5: #{up_layer_forward.7} parent=0 // loop_body
    %s14 = ssub.s32 %s9, 1
    %s15 = ssub.s32 %s9, 2
    %s22 = sadd.s32 1, %s17
    %p23 = scmp.ge.s32.totalorder %s22, 1
    %s24 = scalar_select %p23, 0, %s22
    %s25 = sadd.s32 1, %s16
    %s26 = scalar_select %p23, %s25, %s16
    %p27 = scmp.ge.s32.totalorder %s26, 2
    %s28 = scalar_select %p27, 0, %s26
    %s29 = ssub.s32 %s16, %s28
    %s30 = ssub.s32 %s17, %s24
    %s31 = sor.u32 %s29, %s30
    %p32 = scmp.eq.s32.totalorder %s31, 0
    %s34 = sadd.s32 %s33, 1
    %s35 = scalar_select %p32, %s33, %s34
    %p38 = pneg %p32
    %p39 = scmp.eq.s32.totalorder %s9, 1
    %p40 = por %p38, %p39
    %p41 = scmp.ne.s32.totalorder %s33, %s36
    %p42 = scmp.eq.s32.totalorder %s9, 0
    %p43 = por %p41, %p42
    %p44 = scmp.ne.s32.totalorder %s33, %s36
    %p45 = scmp.eq.s32.totalorder %s14, 1
    %p46 = por %p44, %p45
    %p47 = scmp.ne.s32.totalorder %s36, %s37
    %p48 = scmp.eq.s32.totalorder %s14, 0
    %p49 = por %p47, %p48
    %p50 = scmp.ne.s32.totalorder %s36, %s37
    %p51 = scmp.eq.s32.totalorder %s15, 1
    %p52 = por %p50, %p51
    %p54 = scmp.ne.s32.totalorder %s37, %s53
    %p55 = scmp.eq.s32.totalorder %s15, 0
    %p56 = por %p54, %p55
    %s58 = sadd.s32 %s57, 1
    %p61 = scmp.eq.s32.totalorder %s9, 1
    %p62 = scmp.ne.s32.totalorder %s57, %s59
    %p63 = scmp.eq.s32.totalorder %s9, 0
    %p64 = por %p62, %p63
    %p65 = scmp.ne.s32.totalorder %s57, %s59
    %p66 = scmp.eq.s32.totalorder %s14, 1
    %p67 = por %p65, %p66
    %p68 = scmp.ne.s32.totalorder %s59, %s60
    %p69 = scmp.eq.s32.totalorder %s14, 0
    %p70 = por %p68, %p69
    %p71 = scmp.ne.s32.totalorder %s59, %s60
    %p72 = scmp.eq.s32.totalorder %s15, 1
    %p73 = por %p71, %p72
    %p75 = scmp.ne.s32.totalorder %s60, %s74
    %p76 = scmp.eq.s32.totalorder %s15, 0
    %p77 = por %p75, %p76
    %s79 = sadd.s32 %s78, 1
    %p82 = scmp.eq.s32.totalorder %s9, 1
    %p83 = scmp.ne.s32.totalorder %s78, %s80
    %p84 = scmp.eq.s32.totalorder %s9, 0
    %p85 = por %p83, %p84
    %p86 = scmp.ne.s32.totalorder %s78, %s80
    %p87 = scmp.eq.s32.totalorder %s14, 1
    %p88 = por %p86, %p87
    %p89 = scmp.ne.s32.totalorder %s80, %s81
    %p90 = scmp.eq.s32.totalorder %s14, 0
    %p91 = por %p89, %p90
    %p92 = scmp.ne.s32.totalorder %s80, %s81
    %p93 = scmp.eq.s32.totalorder %s15, 1
    %p94 = por %p92, %p93
    %p96 = scmp.ne.s32.totalorder %s81, %s95
    %p97 = scmp.eq.s32.totalorder %s15, 0
    %p98 = por %p96, %p97
    %s99 = ssub.s32 %s16, %s28
    %s100 = ssub.s32 %s17, %s24
    %s101 = sor.u32 %s99, %s100
    %p102 = scmp.eq.s32.totalorder %s101, 0
    %s104 = sadd.s32 %s103, 1
    %s105 = scalar_select %p102, %s103, %s104
    %p108 = pneg %p102
    %p109 = scmp.eq.s32.totalorder %s9, 1
    %p110 = por %p108, %p109
    %p111 = scmp.ne.s32.totalorder %s103, %s106
    %p112 = scmp.eq.s32.totalorder %s9, 0
    %p113 = por %p111, %p112
    %p114 = scmp.ne.s32.totalorder %s103, %s106
    %p115 = scmp.eq.s32.totalorder %s14, 1
    %p116 = por %p114, %p115
    %p117 = scmp.ne.s32.totalorder %s106, %s107
    %p118 = scmp.eq.s32.totalorder %s14, 0
    %p119 = por %p117, %p118
    %p120 = scmp.ne.s32.totalorder %s106, %s107
    %p121 = scmp.eq.s32.totalorder %s15, 1
    %p122 = por %p120, %p121
    %p124 = scmp.ne.s32.totalorder %s107, %s123
    %p125 = scmp.eq.s32.totalorder %s15, 0
    %p126 = por %p124, %p125
    %p127 = scmp.le.s32.totalorder 1, %s9
    %p128 = scmp.lt.s32.totalorder %s9, 3
    %p129 = pnand %p127, %p128
    %p130 = pneg %p129
    // Predicated region
    $region9: #{up_layer_forward.7} parent=5 // pred_check
      _
    $region10: #{up_layer_forward.7} parent=5 // pred_check_branch
      %132 = sbr.rel (%p129) target = $region12
    $region11: #{up_layer_forward.7} parent=5 // pred_region
      %s133 = ssub.s32 %s9, 1
      // Predicated region
      $region13: #{up_layer_forward.7} parent=11 // pred_check
        %p134 = pneg %p70
      $region14: #{up_layer_forward.7} parent=11 // pred_check_branch
        %136 = sbr.rel (%p134) target = $region16
      $region15: #{up_layer_forward.7} parent=11 // pred_region
        _
      $region16: #{up_layer_forward.7} parent=11 // pred_fallthru
        _
      // Predicated region
      $region17: #{up_layer_forward.7} parent=11 // pred_check
        %p137 = pneg %p91
      $region18: #{up_layer_forward.7} parent=11 // pred_check_branch
        %139 = sbr.rel (%p137) target = $region20
      $region19: #{up_layer_forward.7} parent=11 // pred_region
        _
      $region20: #{up_layer_forward.7} parent=11 // pred_fallthru
        _
    $region12: #{up_layer_forward.7} parent=5 // pred_fallthru
      _
    %p140 = scmp.lt.s32.totalorder %s9, 2
    // Predicated region
    $region21: #{up_layer_forward.7} parent=5 // pred_check
      %p141 = pneg %p140
    $region22: #{up_layer_forward.7} parent=5 // pred_check_branch
      %143 = sbr.rel (%p141) target = $region24
    $region23: #{up_layer_forward.7} parent=5 // pred_region
      // Predicated region
      $region25: #{up_layer_forward.7} parent=23 // pred_check
        %p144 = pneg %p43
      $region26: #{up_layer_forward.7} parent=23 // pred_check_branch
        %146 = sbr.rel (%p144) target = $region28
      $region27: #{up_layer_forward.7} parent=23 // pred_region
        %s147 = smul.u32 16, %s17
        %p148 = scmp.lt.s32.totalorder %s16, 1
        %s149 = scalar_select %p148, %s16, 1
        %p150 = scmp.lt.s32.totalorder %s147, 15
        %s151 = scalar_select %p150, %s147, 15
        %s152 = smul.addr %s151, 2
        %s153 = smul.addr %s149, 32
        %s154 = sadd.s32 %s152, %s153
        %s155 = smul.addr %s154, 8
        %s156 = scalar_lea.vmem %s0, %s155
        %s157 = smul.u32 16, %s17
      $region28: #{up_layer_forward.7} parent=23 // pred_fallthru
        _
    $region24: #{up_layer_forward.7} parent=5 // pred_fallthru
      _
    %p158 = scmp.le.s32.totalorder 1, %s9
    %p159 = scmp.lt.s32.totalorder %s9, 3
    %p160 = pnand %p158, %p159
    %p161 = pneg %p160
    // Predicated region
    $region29: #{up_layer_forward.7} parent=5 // pred_check
      _
    $region30: #{up_layer_forward.7} parent=5 // pred_check_branch
      %163 = sbr.rel (%p160) target = $region32
    $region31: #{up_layer_forward.7} parent=5 // pred_region
      %s164 = ssub.s32 %s9, 1
      %s165 = smul.u32 16, %s19
      %p166 = scmp.lt.s32.totalorder %s18, 1
      %s167 = scalar_select %p166, %s18, 1
      %p168 = scmp.lt.s32.totalorder %s165, 15
      %s169 = scalar_select %p168, %s165, 15
      %s170 = smul.addr %s169, 2
      %s171 = smul.addr %s167, 32
      %s172 = sadd.s32 %s170, %s171
      %s173 = smul.addr %s172, 8
      %s174 = scalar_lea.vmem %s0, %s173
      %p175 = pneg %p49
      %p176 = pneg %p46
      %p177 = pneg %p70
      %p178 = pneg %p67
      %p179 = pneg %p91
      %p180 = pneg %p88
      %p181 = pneg %p119
      %p182 = pneg %p116
      %s183 = smul.u32 16, %s19
      %p184 = scmp.lt.s32.totalorder %s18, 1
      %s185 = scalar_select %p184, %s18, 1
      %p186 = scmp.lt.s32.totalorder %s183, 15
      %s187 = scalar_select %p186, %s183, 15
      %s188 = smul.addr %s187, 2
      %s189 = smul.addr %s185, 32
      %s190 = sadd.s32 %s188, %s189
      %s191 = smul.addr %s190, 8
      %s192 = scalar_lea.vmem %s3, %s191
      %s193 = smul.u32 16, %s19
      %p194 = scmp.lt.s32.totalorder %s18, 1
      %s195 = scalar_select %p194, %s18, 1
      %p196 = scmp.lt.s32.totalorder %s193, 15
      %s197 = scalar_select %p196, %s193, 15
      %s198 = smul.addr %s197, 2
      %s199 = smul.addr %s195, 32
      %s200 = sadd.s32 %s198, %s199
      %s201 = smul.addr %s200, 8
      %s202 = scalar_lea.vmem %s0, %s201
      %s203 = smul.u32 16, %s19
      %s204 = smul.u32 16, %s19
      %p205 = scmp.lt.s32.totalorder %s18, 1
      %s206 = scalar_select %p205, %s18, 1
      %p207 = scmp.lt.s32.totalorder %s204, 15
      %s208 = scalar_select %p207, %s204, 15
      %s209 = smul.addr %s208, 2
      %s210 = smul.addr %s206, 32
      %s211 = sadd.s32 %s209, %s210
      %s212 = smul.addr %s211, 8
      %s213 = scalar_lea.vmem %s3, %s212
      %s214 = smul.u32 16, %s19
      %v215 = vld [vmem:[%s202] sm:$0xff]
      %v216 = vld [vmem:[%s202 + $0x8] sm:$0xff]
      %v217 = vld [vmem:[%s202 + $0x10] sm:$0xff]
      %v218 = vld [vmem:[%s202 + $0x18] sm:$0xff]
      %v219 = vld [vmem:[%s202 + $0x20] sm:$0xff]
      %v220 = vld [vmem:[%s202 + $0x28] sm:$0xff]
      %v221 = vld [vmem:[%s202 + $0x30] sm:$0xff]
      %v222 = vld [vmem:[%s202 + $0x38] sm:$0xff]
      %v223 = vld [vmem:[%s202 + $0x40] sm:$0xff]
      %v224 = vld [vmem:[%s202 + $0x48] sm:$0xff]
      %v225 = vld [vmem:[%s202 + $0x50] sm:$0xff]
      %v226 = vld [vmem:[%s202 + $0x58] sm:$0xff]
      %v227 = vld [vmem:[%s202 + $0x60] sm:$0xff]
      %v228 = vld [vmem:[%s202 + $0x68] sm:$0xff]
      %v229 = vld [vmem:[%s202 + $0x70] sm:$0xff]
      %v230 = vld [vmem:[%s202 + $0x78] sm:$0xff]
      %v231 = vld [vmem:[%s202 + $0x80] sm:$0xff]
      %v232 = vld [vmem:[%s202 + $0x88] sm:$0xff]
      %v233 = vld [vmem:[%s202 + $0x90] sm:$0xff]
      %v234 = vld [vmem:[%s202 + $0x98] sm:$0xff]
      %v235 = vld [vmem:[%s202 + $0xa0] sm:$0xff]
      %v236 = vld [vmem:[%s202 + $0xa8] sm:$0xff]
      %v237 = vld [vmem:[%s202 + $0xb0] sm:$0xff]
      %v238 = vld [vmem:[%s202 + $0xb8] sm:$0xff]
      %v239 = vld [vmem:[%s202 + $0xc0] sm:$0xff]
      %v240 = vld [vmem:[%s202 + $0xc8] sm:$0xff]
      %v241 = vld [vmem:[%s202 + $0xd0] sm:$0xff]
      %v242 = vld [vmem:[%s202 + $0xd8] sm:$0xff]
      %v243 = vld [vmem:[%s202 + $0xe0] sm:$0xff]
      %v244 = vld [vmem:[%s202 + $0xe8] sm:$0xff]
      %v245 = vld [vmem:[%s202 + $0xf0] sm:$0xff]
      %v246 = vld [vmem:[%s202 + $0xf8] sm:$0xff]
      %v247 = vld [vmem:[%s1] sm:$0x1]
      %v249 = vlaneseq
      %v250 = vshrl.u32 %v249, 7
      %v251 = vsub.s32 0, %v250
      %v252 = vrot.slane %v247, %v251
      %v254 = vmul.f32 %v215, %v252
      %v255 = vmul.f32 %v216, %v252
      %v256 = vmul.f32 %v217, %v252
      %v257 = vmul.f32 %v218, %v252
      %v258 = vmul.f32 %v219, %v252
      %v259 = vmul.f32 %v220, %v252
      %v260 = vmul.f32 %v221, %v252
      %v261 = vmul.f32 %v222, %v252
      %v262 = vmul.f32 %v223, %v252
      %v263 = vmul.f32 %v224, %v252
      %v264 = vmul.f32 %v225, %v252
      %v265 = vmul.f32 %v226, %v252
      %v266 = vmul.f32 %v227, %v252
      %v267 = vmul.f32 %v228, %v252
      %v268 = vmul.f32 %v229, %v252
      %v269 = vmul.f32 %v230, %v252
      %v270 = vmul.f32 %v231, %v252
      %v271 = vmul.f32 %v232, %v252
      %v272 = vmul.f32 %v233, %v252
      %v273 = vmul.f32 %v234, %v252
      %v274 = vmul.f32 %v235, %v252
      %v275 = vmul.f32 %v236, %v252
      %v276 = vmul.f32 %v237, %v252
      %v277 = vmul.f32 %v238, %v252
      %v278 = vmul.f32 %v239, %v252
      %v279 = vmul.f32 %v240, %v252
      %v280 = vmul.f32 %v241, %v252
      %v281 = vmul.f32 %v242, %v252
      %v282 = vmul.f32 %v243, %v252
      %v283 = vmul.f32 %v244, %v252
      %v284 = vmul.f32 %v245, %v252
      %v285 = vmul.f32 %v246, %v252
      %v286 = vld [vmem:[%s2] sm:$0x1]
      %v288 = vlaneseq
      %v289 = vshrl.u32 %v288, 7
      %v290 = vsub.s32 0, %v289
      %v291 = vrot.slane %v286, %v290
      %v293 = vadd.f32 %v254, %v291
      %v294 = vadd.f32 %v255, %v291
      %v295 = vadd.f32 %v256, %v291
      %v296 = vadd.f32 %v257, %v291
      %v297 = vadd.f32 %v258, %v291
      %v298 = vadd.f32 %v259, %v291
      %v299 = vadd.f32 %v260, %v291
      %v300 = vadd.f32 %v261, %v291
      %v301 = vadd.f32 %v262, %v291
      %v302 = vadd.f32 %v263, %v291
      %v303 = vadd.f32 %v264, %v291
      %v304 = vadd.f32 %v265, %v291
      %v305 = vadd.f32 %v266, %v291
      %v306 = vadd.f32 %v267, %v291
      %v307 = vadd.f32 %v268, %v291
      %v308 = vadd.f32 %v269, %v291
      %v309 = vadd.f32 %v270, %v291
      %v310 = vadd.f32 %v271, %v291
      %v311 = vadd.f32 %v272, %v291
      %v312 = vadd.f32 %v273, %v291
      %v313 = vadd.f32 %v274, %v291
      %v314 = vadd.f32 %v275, %v291
      %v315 = vadd.f32 %v276, %v291
      %v316 = vadd.f32 %v277, %v291
      %v317 = vadd.f32 %v278, %v291
      %v318 = vadd.f32 %v279, %v291
      %v319 = vadd.f32 %v280, %v291
      %v320 = vadd.f32 %v281, %v291
      %v321 = vadd.f32 %v282, %v291
      %v322 = vadd.f32 %v283, %v291
      %v323 = vadd.f32 %v284, %v291
      %v324 = vadd.f32 %v285, %v291
      %v325 = vmax.f32 %v293, 0.0
      %v326 = vmax.f32 %v294, 0.0
      %v327 = vmax.f32 %v295, 0.0
      %v328 = vmax.f32 %v296, 0.0
      %v329 = vmax.f32 %v297, 0.0
      %v330 = vmax.f32 %v298, 0.0
      %v331 = vmax.f32 %v299, 0.0
      %v332 = vmax.f32 %v300, 0.0
      %v333 = vmax.f32 %v301, 0.0
      %v334 = vmax.f32 %v302, 0.0
      %v335 = vmax.f32 %v303, 0.0
      %v336 = vmax.f32 %v304, 0.0
      %v337 = vmax.f32 %v305, 0.0
      %v338 = vmax.f32 %v306, 0.0
      %v339 = vmax.f32 %v307, 0.0
      %v340 = vmax.f32 %v308, 0.0
      %v341 = vmax.f32 %v309, 0.0
      %v342 = vmax.f32 %v310, 0.0
      %v343 = vmax.f32 %v311, 0.0
      %v344 = vmax.f32 %v312, 0.0
      %v345 = vmax.f32 %v313, 0.0
      %v346 = vmax.f32 %v314, 0.0
      %v347 = vmax.f32 %v315, 0.0
      %v348 = vmax.f32 %v316, 0.0
      %v349 = vmax.f32 %v317, 0.0
      %v350 = vmax.f32 %v318, 0.0
      %v351 = vmax.f32 %v319, 0.0
      %v352 = vmax.f32 %v320, 0.0
      %v353 = vmax.f32 %v321, 0.0
      %v354 = vmax.f32 %v322, 0.0
      %v355 = vmax.f32 %v323, 0.0
      %v356 = vmax.f32 %v324, 0.0
      %357 = vst [vmem:[%s213] sm:$0xff] %v325
      %358 = vst [vmem:[%s213 + $0x8] sm:$0xff] %v326
      %359 = vst [vmem:[%s213 + $0x10] sm:$0xff] %v327
      %360 = vst [vmem:[%s213 + $0x18] sm:$0xff] %v328
      %361 = vst [vmem:[%s213 + $0x20] sm:$0xff] %v329
      %362 = vst [vmem:[%s213 + $0x28] sm:$0xff] %v330
      %363 = vst [vmem:[%s213 + $0x30] sm:$0xff] %v331
      %364 = vst [vmem:[%s213 + $0x38] sm:$0xff] %v332
      %365 = vst [vmem:[%s213 + $0x40] sm:$0xff] %v333
      %366 = vst [vmem:[%s213 + $0x48] sm:$0xff] %v334
      %367 = vst [vmem:[%s213 + $0x50] sm:$0xff] %v335
      %368 = vst [vmem:[%s213 + $0x58] sm:$0xff] %v336
      %369 = vst [vmem:[%s213 + $0x60] sm:$0xff] %v337
      %370 = vst [vmem:[%s213 + $0x68] sm:$0xff] %v338
      %371 = vst [vmem:[%s213 + $0x70] sm:$0xff] %v339
      %372 = vst [vmem:[%s213 + $0x78] sm:$0xff] %v340
      %373 = vst [vmem:[%s213 + $0x80] sm:$0xff] %v341
      %374 = vst [vmem:[%s213 + $0x88] sm:$0xff] %v342
      %375 = vst [vmem:[%s213 + $0x90] sm:$0xff] %v343
      %376 = vst [vmem:[%s213 + $0x98] sm:$0xff] %v344
      %377 = vst [vmem:[%s213 + $0xa0] sm:$0xff] %v345
      %378 = vst [vmem:[%s213 + $0xa8] sm:$0xff] %v346
      %379 = vst [vmem:[%s213 + $0xb0] sm:$0xff] %v347
      %380 = vst [vmem:[%s213 + $0xb8] sm:$0xff] %v348
      %381 = vst [vmem:[%s213 + $0xc0] sm:$0xff] %v349
      %382 = vst [vmem:[%s213 + $0xc8] sm:$0xff] %v350
      %383 = vst [vmem:[%s213 + $0xd0] sm:$0xff] %v351
      %384 = vst [vmem:[%s213 + $0xd8] sm:$0xff] %v352
      %385 = vst [vmem:[%s213 + $0xe0] sm:$0xff] %v353
      %386 = vst [vmem:[%s213 + $0xe8] sm:$0xff] %v354
      %387 = vst [vmem:[%s213 + $0xf0] sm:$0xff] %v355
      %388 = vst [vmem:[%s213 + $0xf8] sm:$0xff] %v356
      %s389 = smul.u32 16, %s19
      %p390 = scmp.lt.s32.totalorder %s18, 1
      %s391 = scalar_select %p390, %s18, 1
      %p392 = scmp.lt.s32.totalorder %s389, 15
      %s393 = scalar_select %p392, %s389, 15
      %s394 = smul.addr %s393, 2
      %s395 = smul.addr %s391, 32
      %s396 = sadd.s32 %s394, %s395
      %s397 = smul.addr %s396, 8
      %s398 = scalar_lea.vmem %s3, %s397
      // Predicated region
      $region33: #{up_layer_forward.7} parent=31 // pred_check
        %p399 = pneg %p116
      $region34: #{up_layer_forward.7} parent=31 // pred_check_branch
        %401 = sbr.rel (%p399) target = $region36
      $region35: #{up_layer_forward.7} parent=31 // pred_region
        %s402 = smul.u32 16, %s19
      $region36: #{up_layer_forward.7} parent=31 // pred_fallthru
        _
    $region32: #{up_layer_forward.7} parent=5 // pred_fallthru
      _
    %p403 = scmp.le.s32.totalorder 2, %s9
    // Predicated region
    $region37: #{up_layer_forward.7} parent=5 // pred_check
      %p404 = pneg %p403
    $region38: #{up_layer_forward.7} parent=5 // pred_check_branch
      %406 = sbr.rel (%p404) target = $region40
    $region39: #{up_layer_forward.7} parent=5 // pred_region
      %s407 = ssub.s32 %s9, 2
      // Predicated region
      $region41: #{up_layer_forward.7} parent=39 // pred_check
        %p408 = pneg %p122
      $region42: #{up_layer_forward.7} parent=39 // pred_check_branch
        %410 = sbr.rel (%p408) target = $region44
      $region43: #{up_layer_forward.7} parent=39 // pred_region
        %s411 = smul.u32 16, %s21
        %p412 = scmp.lt.s32.totalorder %s20, 1
        %s413 = scalar_select %p412, %s20, 1
        %p414 = scmp.lt.s32.totalorder %s411, 15
        %s415 = scalar_select %p414, %s411, 15
        %s416 = smul.addr %s415, 2
        %s417 = smul.addr %s413, 32
        %s418 = sadd.s32 %s416, %s417
        %s419 = smul.addr %s418, 8
        %s420 = scalar_lea.vmem %s3, %s419
      $region44: #{up_layer_forward.7} parent=39 // pred_fallthru
        _
    $region40: #{up_layer_forward.7} parent=5 // pred_fallthru
      _
  $region6: #{up_layer_forward.7} parent=0 // loop_footer
    %s13 = sadd.s32 1, %s9
  $region7: #{up_layer_forward.7} parent=0 // loop_footer_branch
    %8 = sbr.rel target = $region3
  $region8: #{up_layer_forward.7} parent=0 // loop_exit
    _

// kernel: up_layer_forward.6
$region0: #{up_layer_forward.6}
  #allocation0 [shape = 'u32[]', space=smem, size = 0x4, offset = 0x4, fixed_abs, tag = 'smem constant byte address 0x4 - core index']
  #allocation1 [shape = 'u32[144,128]{1,0:T(1,128)}', space=vmem, size = 0x12000, scoped, tag = 'internal scratch']
  %s0 = inlined_call_operand.vmem [shape: bf16[2,1,18,18,8], index: 0, kind: input, shape index: {}]
  %s1 = inlined_call_operand.vmem [shape: bf16[9,8,128], index: 1, kind: input, shape index: {}]
  %s2 = inlined_call_operand.vmem [shape: f32[2,16,16,128], index: 2, kind: output, shape index: {0}]
  %s3 = inlined_call_operand.vmem [shape: f32[2,1,2,128], index: 3, kind: output, shape index: {1}]
  %4 = xla_tuple %s2, %s3
  %s5 = sld [smem:[#allocation0]]
  $region49: #{up_layer_forward.6} parent=0
    _
  %s7 = ssub.s32 1, %s5
  %s8 = scalar_select 0, %s7, %s5
  loop: start=0, step=1, limit=4
  $region2: #{up_layer_forward.6} parent=0 // loop_pre_header
    _
  $region3: #{up_layer_forward.6} parent=0 // loop_header
    %s10 = sphi 0, %s14
    %p11 = scmp.ge.s32.totalorder %s10, 4
    %s17 = sphi 0, %s29
    %s18 = sphi 0, %s25
    %s19 = sphi 0, %s17
    %s20 = sphi 0, %s18
    %s21 = sphi 0, %s19
    %s22 = sphi 0, %s20
    %s34 = sphi 0, %s36
    %s37 = sphi 0, %s34
    %s38 = sphi 0, %s37
    %s54 = sphi 0, %s38
    %s58 = sphi 0, %s58
    %s60 = sphi 0, %s58
    %s61 = sphi 0, %s60
    %s75 = sphi 0, %s61
    %s83 = sphi 0, %s85
    %s86 = sphi 0, %s83
    %s87 = sphi 0, %s86
    %s103 = sphi 0, %s87
    %s111 = sphi 0, %s113
    %s114 = sphi 0, %s111
    %s115 = sphi 0, %s114
    %s131 = sphi 0, %s115
  $region4: #{up_layer_forward.6} parent=0 // loop_header_branch
    %13 = sbr.rel (%p11) target = $region8
  $region5: #{up_layer_forward.6} parent=0 // loop_body
    %s15 = ssub.s32 %s10, 1
    %s16 = ssub.s32 %s10, 2
    %s23 = sadd.s32 1, %s18
    %p24 = scmp.ge.s32.totalorder %s23, 1
    %s25 = scalar_select %p24, 0, %s23
    %s26 = sadd.s32 1, %s17
    %s27 = scalar_select %p24, %s26, %s17
    %p28 = scmp.ge.s32.totalorder %s27, 2
    %s29 = scalar_select %p28, 0, %s27
    %s30 = ssub.s32 %s17, %s29
    %s31 = ssub.s32 %s18, %s25
    %s32 = sor.u32 %s30, %s31
    %p33 = scmp.eq.s32.totalorder %s32, 0
    %s35 = sadd.s32 %s34, 1
    %s36 = scalar_select %p33, %s34, %s35
    %p39 = pneg %p33
    %p40 = scmp.eq.s32.totalorder %s10, 1
    %p41 = por %p39, %p40
    %p42 = scmp.ne.s32.totalorder %s34, %s37
    %p43 = scmp.eq.s32.totalorder %s10, 0
    %p44 = por %p42, %p43
    %p45 = scmp.ne.s32.totalorder %s34, %s37
    %p46 = scmp.eq.s32.totalorder %s15, 1
    %p47 = por %p45, %p46
    %p48 = scmp.ne.s32.totalorder %s37, %s38
    %p49 = scmp.eq.s32.totalorder %s15, 0
    %p50 = por %p48, %p49
    %p51 = scmp.ne.s32.totalorder %s37, %s38
    %p52 = scmp.eq.s32.totalorder %s16, 1
    %p53 = por %p51, %p52
    %p55 = scmp.ne.s32.totalorder %s38, %s54
    %p56 = scmp.eq.s32.totalorder %s16, 0
    %p57 = por %p55, %p56
    %s59 = sadd.s32 %s58, 1
    %p62 = scmp.eq.s32.totalorder %s10, 1
    %p63 = scmp.ne.s32.totalorder %s58, %s60
    %p64 = scmp.eq.s32.totalorder %s10, 0
    %p65 = por %p63, %p64
    %p66 = scmp.ne.s32.totalorder %s58, %s60
    %p67 = scmp.eq.s32.totalorder %s15, 1
    %p68 = por %p66, %p67
    %p69 = scmp.ne.s32.totalorder %s60, %s61
    %p70 = scmp.eq.s32.totalorder %s15, 0
    %p71 = por %p69, %p70
    %p72 = scmp.ne.s32.totalorder %s60, %s61
    %p73 = scmp.eq.s32.totalorder %s16, 1
    %p74 = por %p72, %p73
    %p76 = scmp.ne.s32.totalorder %s61, %s75
    %p77 = scmp.eq.s32.totalorder %s16, 0
    %p78 = por %p76, %p77
    %s79 = ssub.s32 %s17, %s29
    %s80 = ssub.s32 %s18, %s25
    %s81 = sor.u32 %s79, %s80
    %p82 = scmp.eq.s32.totalorder %s81, 0
    %s84 = sadd.s32 %s83, 1
    %s85 = scalar_select %p82, %s83, %s84
    %p88 = pneg %p82
    %p89 = scmp.eq.s32.totalorder %s10, 1
    %p90 = por %p88, %p89
    %p91 = scmp.ne.s32.totalorder %s83, %s86
    %p92 = scmp.eq.s32.totalorder %s10, 0
    %p93 = por %p91, %p92
    %p94 = scmp.ne.s32.totalorder %s83, %s86
    %p95 = scmp.eq.s32.totalorder %s15, 1
    %p96 = por %p94, %p95
    %p97 = scmp.ne.s32.totalorder %s86, %s87
    %p98 = scmp.eq.s32.totalorder %s15, 0
    %p99 = por %p97, %p98
    %p100 = scmp.ne.s32.totalorder %s86, %s87
    %p101 = scmp.eq.s32.totalorder %s16, 1
    %p102 = por %p100, %p101
    %p104 = scmp.ne.s32.totalorder %s87, %s103
    %p105 = scmp.eq.s32.totalorder %s16, 0
    %p106 = por %p104, %p105
    %s107 = ssub.s32 %s17, %s29
    %s108 = ssub.s32 %s18, %s25
    %s109 = sor.u32 %s107, %s108
    %p110 = scmp.eq.s32.totalorder %s109, 0
    %s112 = sadd.s32 %s111, 1
    %s113 = scalar_select %p110, %s111, %s112
    %p116 = pneg %p110
    %p117 = scmp.eq.s32.totalorder %s10, 1
    %p118 = por %p116, %p117
    %p119 = scmp.ne.s32.totalorder %s111, %s114
    %p120 = scmp.eq.s32.totalorder %s10, 0
    %p121 = por %p119, %p120
    %p122 = scmp.ne.s32.totalorder %s111, %s114
    %p123 = scmp.eq.s32.totalorder %s15, 1
    %p124 = por %p122, %p123
    %p125 = scmp.ne.s32.totalorder %s114, %s115
    %p126 = scmp.eq.s32.totalorder %s15, 0
    %p127 = por %p125, %p126
    %p128 = scmp.ne.s32.totalorder %s114, %s115
    %p129 = scmp.eq.s32.totalorder %s16, 1
    %p130 = por %p128, %p129
    %p132 = scmp.ne.s32.totalorder %s115, %s131
    %p133 = scmp.eq.s32.totalorder %s16, 0
    %p134 = por %p132, %p133
    %p135 = scmp.le.s32.totalorder 1, %s10
    %p136 = scmp.lt.s32.totalorder %s10, 3
    %p137 = pnand %p135, %p136
    %p138 = pneg %p137
    // Predicated region
    $region9: #{up_layer_forward.6} parent=5 // pred_check
      _
    $region10: #{up_layer_forward.6} parent=5 // pred_check_branch
      %140 = sbr.rel (%p137) target = $region12
    $region11: #{up_layer_forward.6} parent=5 // pred_region
      %s141 = ssub.s32 %s10, 1
      // Predicated region
      $region13: #{up_layer_forward.6} parent=11 // pred_check
        %p142 = pneg %p71
      $region14: #{up_layer_forward.6} parent=11 // pred_check_branch
        %144 = sbr.rel (%p142) target = $region16
      $region15: #{up_layer_forward.6} parent=11 // pred_region
        _
      $region16: #{up_layer_forward.6} parent=11 // pred_fallthru
        _
    $region12: #{up_layer_forward.6} parent=5 // pred_fallthru
      _
    %p145 = scmp.lt.s32.totalorder %s10, 2
    // Predicated region
    $region17: #{up_layer_forward.6} parent=5 // pred_check
      %p146 = pneg %p145
    $region18: #{up_layer_forward.6} parent=5 // pred_check_branch
      %148 = sbr.rel (%p146) target = $region20
    $region19: #{up_layer_forward.6} parent=5 // pred_region
      // Predicated region
      $region21: #{up_layer_forward.6} parent=19 // pred_check
        %p149 = pneg %p44
      $region22: #{up_layer_forward.6} parent=19 // pred_check_branch
        %151 = sbr.rel (%p149) target = $region24
      $region23: #{up_layer_forward.6} parent=19 // pred_region
        %p152 = scmp.lt.s32.totalorder %s17, 1
        %s153 = scalar_select %p152, %s17, 1
        %p154 = scmp.lt.s32.totalorder %s18, 0
        %s155 = scalar_select %p154, %s18, 0
        %s156 = smul.addr %s155, 54
        %s157 = smul.addr %s153, 54
        %s158 = sadd.s32 %s156, %s157
        %s159 = smul.addr %s158, 4
        %s160 = scalar_lea.vmem %s0, %s159
      $region24: #{up_layer_forward.6} parent=19 // pred_fallthru
        _
    $region20: #{up_layer_forward.6} parent=5 // pred_fallthru
      _
    %p161 = scmp.le.s32.totalorder 1, %s10
    %p162 = scmp.lt.s32.totalorder %s10, 3
    %p163 = pnand %p161, %p162
    %p164 = pneg %p163
    // Predicated region
    $region25: #{up_layer_forward.6} parent=5 // pred_check
      _
    $region26: #{up_layer_forward.6} parent=5 // pred_check_branch
      %166 = sbr.rel (%p163) target = $region28
    $region27: #{up_layer_forward.6} parent=5 // pred_region
      %s167 = ssub.s32 %s10, 1
      %p168 = scmp.lt.s32.totalorder %s19, 1
      %s169 = scalar_select %p168, %s19, 1
      %p170 = scmp.lt.s32.totalorder %s20, 0
      %s171 = scalar_select %p170, %s20, 0
      %s172 = smul.addr %s171, 54
      %s173 = smul.addr %s169, 54
      %s174 = sadd.s32 %s172, %s173
      %s175 = smul.addr %s174, 4
      %s176 = scalar_lea.vmem %s0, %s175
      %p177 = pneg %p50
      %p178 = pneg %p47
      %p179 = pneg %p71
      %p180 = pneg %p68
      %p181 = pneg %p99
      %p182 = pneg %p96
      %s183 = smul.u32 16, %s20
      %p184 = scmp.lt.s32.totalorder %s19, 1
      %s185 = scalar_select %p184, %s19, 1
      %p186 = scmp.lt.s32.totalorder %s183, 15
      %s187 = scalar_select %p186, %s183, 15
      %s188 = smul.addr %s187, 2
      %s189 = smul.addr %s185, 32
      %s190 = sadd.s32 %s188, %s189
      %s191 = smul.addr %s190, 8
      %s192 = scalar_lea.vmem %s2, %s191
      %p193 = pneg %p127
      %p194 = pneg %p124
      %p195 = scmp.lt.s32.totalorder %s19, 1
      %s196 = scalar_select %p195, %s19, 1
      %p197 = scmp.lt.s32.totalorder %s20, 0
      %s198 = scalar_select %p197, %s20, 0
      %s199 = sadd.s32 %s198, %s196
      %s200 = smul.addr %s199, 2
      %s201 = scalar_lea.vmem %s3, %s200
      %p202 = scmp.lt.s32.totalorder %s19, 1
      %s203 = scalar_select %p202, %s19, 1
      %p204 = scmp.lt.s32.totalorder %s20, 0
      %s205 = scalar_select %p204, %s20, 0
      %s206 = smul.addr %s205, 54
      %s207 = smul.addr %s203, 54
      %s208 = sadd.s32 %s206, %s207
      %s209 = smul.addr %s208, 4
      %s210 = scalar_lea.vmem %s0, %s209
      %s211 = smul.u32 16, %s20
      %p212 = scmp.lt.s32.totalorder %s19, 1
      %s213 = scalar_select %p212, %s19, 1
      %p214 = scmp.lt.s32.totalorder %s211, 15
      %s215 = scalar_select %p214, %s211, 15
      %s216 = smul.addr %s215, 2
      %s217 = smul.addr %s213, 32
      %s218 = sadd.s32 %s216, %s217
      %s219 = smul.addr %s218, 8
      %s220 = scalar_lea.vmem %s2, %s219
      %s221 = smul.u32 16, %s20
      %p222 = scmp.lt.s32.totalorder %s19, 1
      %s223 = scalar_select %p222, %s19, 1
      %p224 = scmp.lt.s32.totalorder %s20, 0
      %s225 = scalar_select %p224, %s20, 0
      %s226 = sadd.s32 %s225, %s223
      %s227 = smul.addr %s226, 2
      %s228 = scalar_lea.vmem %s3, %s227
      %v230 = vld [vmem:[%s210] sm:$0xf]
      %v231 = vld [vmem:[%s210 + $0x4] sm:$0xf]
      %v232 = vld [vmem:[%s210 + $0x8] sm:$0x1]
      %v233 = vld [vmem:[%s210 + $0xc] sm:$0xf]
      %v234 = vld [vmem:[%s210 + $0x10] sm:$0xf]
      %v235 = vld [vmem:[%s210 + $0x14] sm:$0x1]
      %v236 = vld [vmem:[%s210 + $0x18] sm:$0xf]
      %v237 = vld [vmem:[%s210 + $0x1c] sm:$0xf]
      %v238 = vld [vmem:[%s210 + $0x20] sm:$0x1]
      %v239 = vld [vmem:[%s210 + $0x24] sm:$0xf]
      %v240 = vld [vmem:[%s210 + $0x28] sm:$0xf]
      %v241 = vld [vmem:[%s210 + $0x2c] sm:$0x1]
      %v242 = vld [vmem:[%s210 + $0x30] sm:$0xf]
      %v243 = vld [vmem:[%s210 + $0x34] sm:$0xf]
      %v244 = vld [vmem:[%s210 + $0x38] sm:$0x1]
      %v245 = vld [vmem:[%s210 + $0x3c] sm:$0xf]
      %v246 = vld [vmem:[%s210 + $0x40] sm:$0xf]
      %v247 = vld [vmem:[%s210 + $0x44] sm:$0x1]
      %v248 = vld [vmem:[%s210 + $0x48] sm:$0xf]
      %v249 = vld [vmem:[%s210 + $0x4c] sm:$0xf]
      %v250 = vld [vmem:[%s210 + $0x50] sm:$0x1]
      %v251 = vld [vmem:[%s210 + $0x54] sm:$0xf]
      %v252 = vld [vmem:[%s210 + $0x58] sm:$0xf]
      %v253 = vld [vmem:[%s210 + $0x5c] sm:$0x1]
      %v254 = vld [vmem:[%s210 + $0x60] sm:$0xf]
      %v255 = vld [vmem:[%s210 + $0x64] sm:$0xf]
      %v256 = vld [vmem:[%s210 + $0x68] sm:$0x1]
      %v257 = vld [vmem:[%s210 + $0x6c] sm:$0xf]
      %v258 = vld [vmem:[%s210 + $0x70] sm:$0xf]
      %v259 = vld [vmem:[%s210 + $0x74] sm:$0x1]
      %v260 = vld [vmem:[%s210 + $0x78] sm:$0xf]
      %v261 = vld [vmem:[%s210 + $0x7c] sm:$0xf]
      %v262 = vld [vmem:[%s210 + $0x80] sm:$0x1]
      %v263 = vld [vmem:[%s210 + $0x84] sm:$0xf]
      %v264 = vld [vmem:[%s210 + $0x88] sm:$0xf]
      %v265 = vld [vmem:[%s210 + $0x8c] sm:$0x1]
      %v266 = vld [vmem:[%s210 + $0x90] sm:$0xf]
      %v267 = vld [vmem:[%s210 + $0x94] sm:$0xf]
      %v268 = vld [vmem:[%s210 + $0x98] sm:$0x1]
      %v269 = vld [vmem:[%s210 + $0x9c] sm:$0xf]
      %v270 = vld [vmem:[%s210 + $0xa0] sm:$0xf]
      %v271 = vld [vmem:[%s210 + $0xa4] sm:$0x1]
      %v272 = vld [vmem:[%s210 + $0xa8] sm:$0xf]
      %v273 = vld [vmem:[%s210 + $0xac] sm:$0xf]
      %v274 = vld [vmem:[%s210 + $0xb0] sm:$0x1]
      %v275 = vld [vmem:[%s210 + $0xb4] sm:$0xf]
      %v276 = vld [vmem:[%s210 + $0xb8] sm:$0xf]
      %v277 = vld [vmem:[%s210 + $0xbc] sm:$0x1]
      %v278 = vld [vmem:[%s210 + $0xc0] sm:$0xf]
      %v279 = vld [vmem:[%s210 + $0xc4] sm:$0xf]
      %v280 = vld [vmem:[%s210 + $0xc8] sm:$0x1]
      %v281 = vld [vmem:[%s210 + $0xcc] sm:$0xf]
      %v282 = vld [vmem:[%s210 + $0xd0] sm:$0xf]
      %v283 = vld [vmem:[%s210 + $0xd4] sm:$0x1]
      %v284 = vld [vmem:[%s1] sm:$0xf]
      %vm285 = vsmask.f32 3328
      %vm286 = vsmask.f32 7440
      %vm287 = vmor %vm285, %vm286
      %v289 = vshrl.u32 %v230, 16
      %v291 = vrot.slane %v289, 4
      %v292 = vshll.u32 %v230, 16
      %v294 = vrot.slane %v292, 5
      %v295 = vor.u32 %v291, %v294
      %v296 = vrot.slane %v295, 4
      %v298 = vshll.u32 %v231, 16
      %v300 = vrot.slane %v298, 5
      %v301 = vsel %vm287, %v296, %v300
      %v302 = vshrl.u32 %v231, 16
      %v304 = vrot.slane %v302, 4
      %v305 = vor.u32 %v304, %v300
      %v306 = vrot.slane %v305, 4
      %v308 = vshll.u32 %v232, 16
      %v310 = vrot.slane %v308, 5
      %v311 = vsel %vm287, %v306, %v310
      %v313 = vshrl.u32 %v233, 16
      %v315 = vrot.slane %v313, 4
      %v316 = vshll.u32 %v233, 16
      %v318 = vrot.slane %v316, 5
      %v319 = vor.u32 %v315, %v318
      %v320 = vrot.slane %v319, 4
      %v322 = vshll.u32 %v234, 16
      %v324 = vrot.slane %v322, 5
      %v325 = vsel %vm287, %v320, %v324
      %v326 = vshrl.u32 %v234, 16
      %v328 = vrot.slane %v326, 4
      %v329 = vor.u32 %v328, %v324
      %v330 = vrot.slane %v329, 4
      %v332 = vshll.u32 %v235, 16
      %v334 = vrot.slane %v332, 5
      %v335 = vsel %vm287, %v330, %v334
      %v337 = vshrl.u32 %v236, 16
      %v339 = vrot.slane %v337, 4
      %v340 = vshll.u32 %v236, 16
      %v342 = vrot.slane %v340, 5
      %v343 = vor.u32 %v339, %v342
      %v344 = vrot.slane %v343, 4
      %v346 = vshll.u32 %v237, 16
      %v348 = vrot.slane %v346, 5
      %v349 = vsel %vm287, %v344, %v348
      %v350 = vshrl.u32 %v237, 16
      %v352 = vrot.slane %v350, 4
      %v353 = vor.u32 %v352, %v348
      %v354 = vrot.slane %v353, 4
      %v356 = vshll.u32 %v238, 16
      %v358 = vrot.slane %v356, 5
      %v359 = vsel %vm287, %v354, %v358
      %v361 = vshrl.u32 %v239, 16
      %v363 = vrot.slane %v361, 4
      %v364 = vshll.u32 %v239, 16
      %v366 = vrot.slane %v364, 5
      %v367 = vor.u32 %v363, %v366
      %v368 = vrot.slane %v367, 4
      %v370 = vshll.u32 %v240, 16
      %v372 = vrot.slane %v370, 5
      %v373 = vsel %vm287, %v368, %v372
      %v374 = vshrl.u32 %v240, 16
      %v376 = vrot.slane %v374, 4
      %v377 = vor.u32 %v376, %v372
      %v378 = vrot.slane %v377, 4
      %v380 = vshll.u32 %v241, 16
      %v382 = vrot.slane %v380, 5
      %v383 = vsel %vm287, %v378, %v382
      %v385 = vshrl.u32 %v242, 16
      %v387 = vrot.slane %v385, 4
      %v388 = vshll.u32 %v242, 16
      %v390 = vrot.slane %v388, 5
      %v391 = vor.u32 %v387, %v390
      %v392 = vrot.slane %v391, 4
      %v394 = vshll.u32 %v243, 16
      %v396 = vrot.slane %v394, 5
      %v397 = vsel %vm287, %v392, %v396
      %v398 = vshrl.u32 %v243, 16
      %v400 = vrot.slane %v398, 4
      %v401 = vor.u32 %v400, %v396
      %v402 = vrot.slane %v401, 4
      %v404 = vshll.u32 %v244, 16
      %v406 = vrot.slane %v404, 5
      %v407 = vsel %vm287, %v402, %v406
      %v409 = vshrl.u32 %v245, 16
      %v411 = vrot.slane %v409, 4
      %v412 = vshll.u32 %v245, 16
      %v414 = vrot.slane %v412, 5
      %v415 = vor.u32 %v411, %v414
      %v416 = vrot.slane %v415, 4
      %v418 = vshll.u32 %v246, 16
      %v420 = vrot.slane %v418, 5
      %v421 = vsel %vm287, %v416, %v420
      %v422 = vshrl.u32 %v246, 16
      %v424 = vrot.slane %v422, 4
      %v425 = vor.u32 %v424, %v420
      %v426 = vrot.slane %v425, 4
      %v428 = vshll.u32 %v247, 16
      %v430 = vrot.slane %v428, 5
      %v431 = vsel %vm287, %v426, %v430
      %v433 = vshrl.u32 %v248, 16
      %v435 = vrot.slane %v433, 4
      %v436 = vshll.u32 %v248, 16
      %v438 = vrot.slane %v436, 5
      %v439 = vor.u32 %v435, %v438
      %v440 = vrot.slane %v439, 4
      %v442 = vshll.u32 %v249, 16
      %v444 = vrot.slane %v442, 5
      %v445 = vsel %vm287, %v440, %v444
      %v446 = vshrl.u32 %v249, 16
      %v448 = vrot.slane %v446, 4
      %v449 = vor.u32 %v448, %v444
      %v450 = vrot.slane %v449, 4
      %v452 = vshll.u32 %v250, 16
      %v454 = vrot.slane %v452, 5
      %v455 = vsel %vm287, %v450, %v454
      %v457 = vshrl.u32 %v251, 16
      %v459 = vrot.slane %v457, 4
      %v460 = vshll.u32 %v251, 16
      %v462 = vrot.slane %v460, 5
      %v463 = vor.u32 %v459, %v462
      %v464 = vrot.slane %v463, 4
      %v466 = vshll.u32 %v252, 16
      %v468 = vrot.slane %v466, 5
      %v469 = vsel %vm287, %v464, %v468
      %v470 = vshrl.u32 %v252, 16
      %v472 = vrot.slane %v470, 4
      %v473 = vor.u32 %v472, %v468
      %v474 = vrot.slane %v473, 4
      %v476 = vshll.u32 %v253, 16
      %v478 = vrot.slane %v476, 5
      %v479 = vsel %vm287, %v474, %v478
      %v481 = vshrl.u32 %v254, 16
      %v483 = vrot.slane %v481, 4
      %v484 = vshll.u32 %v254, 16
      %v486 = vrot.slane %v484, 5
      %v487 = vor.u32 %v483, %v486
      %v488 = vrot.slane %v487, 4
      %v490 = vshll.u32 %v255, 16
      %v492 = vrot.slane %v490, 5
      %v493 = vsel %vm287, %v488, %v492
      %v494 = vshrl.u32 %v255, 16
      %v496 = vrot.slane %v494, 4
      %v497 = vor.u32 %v496, %v492
      %v498 = vrot.slane %v497, 4
      %v500 = vshll.u32 %v256, 16
      %v502 = vrot.slane %v500, 5
      %v503 = vsel %vm287, %v498, %v502
      %v505 = vshrl.u32 %v257, 16
      %v507 = vrot.slane %v505, 4
      %v508 = vshll.u32 %v257, 16
      %v510 = vrot.slane %v508, 5
      %v511 = vor.u32 %v507, %v510
      %v512 = vrot.slane %v511, 4
      %v514 = vshll.u32 %v258, 16
      %v516 = vrot.slane %v514, 5
      %v517 = vsel %vm287, %v512, %v516
      %v518 = vshrl.u32 %v258, 16
      %v520 = vrot.slane %v518, 4
      %v521 = vor.u32 %v520, %v516
      %v522 = vrot.slane %v521, 4
      %v524 = vshll.u32 %v259, 16
      %v526 = vrot.slane %v524, 5
      %v527 = vsel %vm287, %v522, %v526
      %v529 = vshrl.u32 %v260, 16
      %v531 = vrot.slane %v529, 4
      %v532 = vshll.u32 %v260, 16
      %v534 = vrot.slane %v532, 5
      %v535 = vor.u32 %v531, %v534
      %v536 = vrot.slane %v535, 4
      %v538 = vshll.u32 %v261, 16
      %v540 = vrot.slane %v538, 5
      %v541 = vsel %vm287, %v536, %v540
      %v542 = vshrl.u32 %v261, 16
      %v544 = vrot.slane %v542, 4
      %v545 = vor.u32 %v544, %v540
      %v546 = vrot.slane %v545, 4
      %v548 = vshll.u32 %v262, 16
      %v550 = vrot.slane %v548, 5
      %v551 = vsel %vm287, %v546, %v550
      %v553 = vshrl.u32 %v263, 16
      %v555 = vrot.slane %v553, 4
      %v556 = vshll.u32 %v263, 16
      %v558 = vrot.slane %v556, 5
      %v559 = vor.u32 %v555, %v558
      %v560 = vrot.slane %v559, 4
      %v562 = vshll.u32 %v264, 16
      %v564 = vrot.slane %v562, 5
      %v565 = vsel %vm287, %v560, %v564
      %v566 = vshrl.u32 %v264, 16
      %v568 = vrot.slane %v566, 4
      %v569 = vor.u32 %v568, %v564
      %v570 = vrot.slane %v569, 4
      %v572 = vshll.u32 %v265, 16
      %v574 = vrot.slane %v572, 5
      %v575 = vsel %vm287, %v570, %v574
      %v577 = vshrl.u32 %v266, 16
      %v579 = vrot.slane %v577, 4
      %v580 = vshll.u32 %v266, 16
      %v582 = vrot.slane %v580, 5
      %v583 = vor.u32 %v579, %v582
      %v584 = vrot.slane %v583, 4
      %v586 = vshll.u32 %v267, 16
      %v588 = vrot.slane %v586, 5
      %v589 = vsel %vm287, %v584, %v588
      %v590 = vshrl.u32 %v267, 16
      %v592 = vrot.slane %v590, 4
      %v593 = vor.u32 %v592, %v588
      %v594 = vrot.slane %v593, 4
      %v596 = vshll.u32 %v268, 16
      %v598 = vrot.slane %v596, 5
      %v599 = vsel %vm287, %v594, %v598
      %v601 = vshrl.u32 %v269, 16
      %v603 = vrot.slane %v601, 4
      %v604 = vshll.u32 %v269, 16
      %v606 = vrot.slane %v604, 5
      %v607 = vor.u32 %v603, %v606
      %v608 = vrot.slane %v607, 4
      %v610 = vshll.u32 %v270, 16
      %v612 = vrot.slane %v610, 5
      %v613 = vsel %vm287, %v608, %v612
      %v614 = vshrl.u32 %v270, 16
      %v616 = vrot.slane %v614, 4
      %v617 = vor.u32 %v616, %v612
      %v618 = vrot.slane %v617, 4
      %v620 = vshll.u32 %v271, 16
      %v622 = vrot.slane %v620, 5
      %v623 = vsel %vm287, %v618, %v622
      %v625 = vshrl.u32 %v272, 16
      %v627 = vrot.slane %v625, 4
      %v628 = vshll.u32 %v272, 16
      %v630 = vrot.slane %v628, 5
      %v631 = vor.u32 %v627, %v630
      %v632 = vrot.slane %v631, 4
      %v634 = vshll.u32 %v273, 16
      %v636 = vrot.slane %v634, 5
      %v637 = vsel %vm287, %v632, %v636
      %v638 = vshrl.u32 %v273, 16
      %v640 = vrot.slane %v638, 4
      %v641 = vor.u32 %v640, %v636
      %v642 = vrot.slane %v641, 4
      %v644 = vshll.u32 %v274, 16
      %v646 = vrot.slane %v644, 5
      %v647 = vsel %vm287, %v642, %v646
      %v649 = vshrl.u32 %v275, 16
      %v651 = vrot.slane %v649, 4
      %v652 = vshll.u32 %v275, 16
      %v654 = vrot.slane %v652, 5
      %v655 = vor.u32 %v651, %v654
      %v656 = vrot.slane %v655, 4
      %v658 = vshll.u32 %v276, 16
      %v660 = vrot.slane %v658, 5
      %v661 = vsel %vm287, %v656, %v660
      %v662 = vshrl.u32 %v276, 16
      %v664 = vrot.slane %v662, 4
      %v665 = vor.u32 %v664, %v660
      %v666 = vrot.slane %v665, 4
      %v668 = vshll.u32 %v277, 16
      %v670 = vrot.slane %v668, 5
      %v671 = vsel %vm287, %v666, %v670
      %s672 = scalar_lea.vmem %s1, 4
      %v673 = vld [vmem:[%s672] sm:$0xf]
      %v674 = vunpack.c.l.b16 %v301
      %v675 = vunpack.c.l.b16 %v311
      %v676 = vunpack.c.l.b16 %v325
      %v677 = vunpack.c.l.b16 %v335
      %v678 = vunpack.c.l.b16 %v349
      %v679 = vunpack.c.l.b16 %v359
      %v680 = vunpack.c.l.b16 %v373
      %v681 = vunpack.c.l.b16 %v383
      %v682 = vunpack.c.l.b16 %v397
      %v683 = vunpack.c.l.b16 %v407
      %v684 = vunpack.c.l.b16 %v421
      %v685 = vunpack.c.l.b16 %v431
      %v686 = vunpack.c.l.b16 %v445
      %v687 = vunpack.c.l.b16 %v455
      %v688 = vunpack.c.l.b16 %v469
      %v689 = vunpack.c.l.b16 %v479
      %v690 = vunpack.c.l.b16 %v493
      %v691 = vunpack.c.l.b16 %v503
      %v692 = vunpack.c.l.b16 %v517
      %v693 = vunpack.c.l.b16 %v527
      %v694 = vunpack.c.l.b16 %v541
      %v695 = vunpack.c.l.b16 %v551
      %v696 = vunpack.c.l.b16 %v565
      %v697 = vunpack.c.l.b16 %v575
      %v698 = vunpack.c.l.b16 %v589
      %v699 = vunpack.c.l.b16 %v599
      %v700 = vunpack.c.l.b16 %v613
      %v701 = vunpack.c.l.b16 %v623
      %v702 = vunpack.c.l.b16 %v637
      %v703 = vunpack.c.l.b16 %v647
      %v704 = vunpack.c.l.b16 %v661
      %v705 = vunpack.c.l.b16 %v671
      %v706 = vpack.c.b16 %v675, %v674
      %v707 = vpack.c.b16 %v677, %v676
      %v708 = vpack.c.b16 %v679, %v678
      %v709 = vpack.c.b16 %v681, %v680
      %v710 = vpack.c.b16 %v683, %v682
      %v711 = vpack.c.b16 %v685, %v684
      %v712 = vpack.c.b16 %v687, %v686
      %v713 = vpack.c.b16 %v689, %v688
      %v714 = vpack.c.b16 %v691, %v690
      %v715 = vpack.c.b16 %v693, %v692
      %v716 = vpack.c.b16 %v695, %v694
      %v717 = vpack.c.b16 %v697, %v696
      %v718 = vpack.c.b16 %v699, %v698
      %v719 = vpack.c.b16 %v701, %v700
      %v720 = vpack.c.b16 %v703, %v702
      %v721 = vpack.c.b16 %v705, %v704
      %vm722 = vcmask 64512
      %v724 = vsel %vm722, %v706, 0
      %v727 = vsel %vm722, %v707, 0
      %v730 = vsel %vm722, %v708, 0
      %v733 = vsel %vm722, %v709, 0
      %v736 = vsel %vm722, %v710, 0
      %v739 = vsel %vm722, %v711, 0
      %v742 = vsel %vm722, %v712, 0
      %v745 = vsel %vm722, %v713, 0
      %v748 = vsel %vm722, %v714, 0
      %v751 = vsel %vm722, %v715, 0
      %v754 = vsel %vm722, %v716, 0
      %v757 = vsel %vm722, %v717, 0
      %v760 = vsel %vm722, %v718, 0
      %v763 = vsel %vm722, %v719, 0
      %v766 = vsel %vm722, %v720, 0
      %v769 = vsel %vm722, %v721, 0
      %vm771 = vcmask 1043456
      %v773 = vsel %vm771, %v673, 0
      %775 = vmatprep.subr.bf16.mxu0 0
      %776 = vmatpush1.bf16.msra.mxu0 %v773
      %777 = vmatprep.subr.bf16.mxu0 0
      %778 = vmatpush1.bf16.msra.mxu0 0
      %779 = vmatprep.subr.bf16.mxu0 0
      %780 = vmatpush1.bf16.msra.mxu0 0
      %781 = vmatprep.subr.bf16.mxu0 0
      %782 = vmatpush1.bf16.msra.mxu0 0
      %783 = vmatprep.subr.bf16.mxu0 0
      %784 = vmatpush1.bf16.msra.mxu0 0
      %785 = vmatprep.subr.bf16.mxu0 0
      %786 = vmatpush1.bf16.msra.mxu0 0
      %787 = vmatprep.subr.bf16.mxu0 0
      %788 = vmatpush1.bf16.msra.mxu0 0
      %789 = vmatprep.subr.bf16.mxu0 0
      %790 = vmatpush1.bf16.msra.mxu0 0
      %791 = vmatprep.subr.bf16.mxu0 0
      %792 = vmatpush1.bf16.msra.mxu0 0
      %793 = vmatprep.subr.bf16.mxu0 0
      %794 = vmatpush1.bf16.msra.mxu0 0
      %795 = vmatprep.subr.bf16.mxu0 0
      %796 = vmatpush1.bf16.msra.mxu0 0
      %797 = vmatprep.subr.bf16.mxu0 0
      %798 = vmatpush1.bf16.msra.mxu0 0
      %799 = vmatprep.subr.bf16.mxu0 0
      %800 = vmatpush1.bf16.msra.mxu0 0
      %801 = vmatprep.subr.bf16.mxu0 0
      %802 = vmatpush1.bf16.msra.mxu0 0
      %803 = vmatprep.subr.bf16.mxu0 0
      %804 = vmatpush1.bf16.msra.mxu0 0
      %805 = vmatprep.subr.bf16.mxu0 0
      %806 = vmatpush1.bf16.msra.mxu0 0
      %807 = vmatprep.mubr.bf16.mxu0 0
      %808 = vmatmul.mubr.bf16.gmra.mrb[0].mxu0 %v724
      %v809 = vpop.f32.mrb[0].mxu0
      %v810 = vadd.f32 0.0, %v809
      %v811 = vpop.f32.mrb[0].mxu0
      %v812 = vpop.f32.mrb[0].mxu0
      %v813 = vadd.f32 0.0, %v812
      %v814 = vpop.f32.mrb[0].mxu0
      %815 = vmatprep.mubr.bf16.mxu0 0
      %816 = vmatmul.mubr.bf16.gmra.mrb[0].mxu0 %v727
      %v817 = vpop.f32.mrb[0].mxu0
      %v818 = vadd.f32 0.0, %v817
      %v819 = vpop.f32.mrb[0].mxu0
      %v820 = vpop.f32.mrb[0].mxu0
      %v821 = vadd.f32 0.0, %v820
      %v822 = vpop.f32.mrb[0].mxu0
      %823 = vmatprep.mubr.bf16.mxu0 0
      %824 = vmatmul.mubr.bf16.gmra.mrb[0].mxu0 %v730
      %v825 = vpop.f32.mrb[0].mxu0
      %v826 = vadd.f32 0.0, %v825
      %v827 = vpop.f32.mrb[0].mxu0
      %v828 = vpop.f32.mrb[0].mxu0
      %v829 = vadd.f32 0.0, %v828
      %v830 = vpop.f32.mrb[0].mxu0
      %831 = vmatprep.mubr.bf16.mxu0 0
      %832 = vmatmul.mubr.bf16.gmra.mrb[0].mxu0 %v733
      %v833 = vpop.f32.mrb[0].mxu0
      %v834 = vadd.f32 0.0, %v833
      %v835 = vpop.f32.mrb[0].mxu0
      %v836 = vpop.f32.mrb[0].mxu0
      %v837 = vadd.f32 0.0, %v836
      %v838 = vpop.f32.mrb[0].mxu0
      %839 = vmatprep.mubr.bf16.mxu0 0
      %840 = vmatmul.mubr.bf16.gmra.mrb[0].mxu0 %v736
      %v841 = vpop.f32.mrb[0].mxu0
      %v842 = vadd.f32 0.0, %v841
      %v843 = vpop.f32.mrb[0].mxu0
      %v844 = vpop.f32.mrb[0].mxu0
      %v845 = vadd.f32 0.0, %v844
      %v846 = vpop.f32.mrb[0].mxu0
      %847 = vmatprep.mubr.bf16.mxu0 0
      %848 = vmatmul.mubr.bf16.gmra.mrb[0].mxu0 %v739
      %v849 = vpop.f32.mrb[0].mxu0
      %v850 = vadd.f32 0.0, %v849
      %v851 = vpop.f32.mrb[0].mxu0
      %v852 = vpop.f32.mrb[0].mxu0
      %v853 = vadd.f32 0.0, %v852
      %v854 = vpop.f32.mrb[0].mxu0
      %855 = vmatprep.mubr.bf16.mxu0 0
      %856 = vmatmul.mubr.bf16.gmra.mrb[0].mxu0 %v742
      %v857 = vpop.f32.mrb[0].mxu0
      %v858 = vadd.f32 0.0, %v857
      %v859 = vpop.f32.mrb[0].mxu0
      %v860 = vpop.f32.mrb[0].mxu0
      %v861 = vadd.f32 0.0, %v860
      %v862 = vpop.f32.mrb[0].mxu0
      %863 = vmatprep.mubr.bf16.mxu0 0
      %864 = vmatmul.mubr.bf16.gmra.mrb[0].mxu0 %v745
      %v865 = vpop.f32.mrb[0].mxu0
      %v866 = vadd.f32 0.0, %v865
      %v867 = vpop.f32.mrb[0].mxu0
      %v868 = vpop.f32.mrb[0].mxu0
      %v869 = vadd.f32 0.0, %v868
      %v870 = vpop.f32.mrb[0].mxu0
      %871 = vmatprep.mubr.bf16.mxu0 0
      %872 = vmatmul.mubr.bf16.gmra.mrb[0].mxu0 %v748
      %v873 = vpop.f32.mrb[0].mxu0
      %v874 = vadd.f32 0.0, %v873
      %v875 = vpop.f32.mrb[0].mxu0
      %v876 = vpop.f32.mrb[0].mxu0
      %v877 = vadd.f32 0.0, %v876
      %v878 = vpop.f32.mrb[0].mxu0
      %879 = vmatprep.mubr.bf16.mxu0 0
      %880 = vmatmul.mubr.bf16.gmra.mrb[0].mxu0 %v751
      %v881 = vpop.f32.mrb[0].mxu0
      %v882 = vadd.f32 0.0, %v881
      %v883 = vpop.f32.mrb[0].mxu0
      %v884 = vpop.f32.mrb[0].mxu0
      %v885 = vadd.f32 0.0, %v884
      %v886 = vpop.f32.mrb[0].mxu0
      %887 = vmatprep.mubr.bf16.mxu0 0
      %888 = vmatmul.mubr.bf16.gmra.mrb[0].mxu0 %v754
      %v889 = vpop.f32.mrb[0].mxu0
      %v890 = vadd.f32 0.0, %v889
      %v891 = vpop.f32.mrb[0].mxu0
      %v892 = vpop.f32.mrb[0].mxu0
      %v893 = vadd.f32 0.0, %v892
      %v894 = vpop.f32.mrb[0].mxu0
      %895 = vmatprep.mubr.bf16.mxu0 0
      %896 = vmatmul.mubr.bf16.gmra.mrb[0].mxu0 %v757
      %v897 = vpop.f32.mrb[0].mxu0
      %v898 = vadd.f32 0.0, %v897
      %v899 = vpop.f32.mrb[0].mxu0
      %v900 = vpop.f32.mrb[0].mxu0
      %v901 = vadd.f32 0.0, %v900
      %v902 = vpop.f32.mrb[0].mxu0
      %903 = vmatprep.mubr.bf16.mxu0 0
      %904 = vmatmul.mubr.bf16.gmra.mrb[0].mxu0 %v760
      %v905 = vpop.f32.mrb[0].mxu0
      %v906 = vadd.f32 0.0, %v905
      %v907 = vpop.f32.mrb[0].mxu0
      %v908 = vpop.f32.mrb[0].mxu0
      %v909 = vadd.f32 0.0, %v908
      %v910 = vpop.f32.mrb[0].mxu0
      %911 = vmatprep.mubr.bf16.mxu0 0
      %912 = vmatmul.mubr.bf16.gmra.mrb[0].mxu0 %v763
      %v913 = vpop.f32.mrb[0].mxu0
      %v914 = vadd.f32 0.0, %v913
      %v915 = vpop.f32.mrb[0].mxu0
      %v916 = vpop.f32.mrb[0].mxu0
      %v917 = vadd.f32 0.0, %v916
      %v918 = vpop.f32.mrb[0].mxu0
      %919 = vmatprep.mubr.bf16.mxu0 0
      %920 = vmatmul.mubr.bf16.gmra.mrb[0].mxu0 %v766
      %v921 = vpop.f32.mrb[0].mxu0
      %v922 = vadd.f32 0.0, %v921
      %v923 = vpop.f32.mrb[0].mxu0
      %v924 = vpop.f32.mrb[0].mxu0
      %v925 = vadd.f32 0.0, %v924
      %v926 = vpop.f32.mrb[0].mxu0
      %927 = vmatprep.mubr.bf16.mxu0 0
      %928 = vmatmul.mubr.bf16.gmra.mrb[0].mxu0 %v769
      %v929 = vpop.f32.mrb[0].mxu0
      %v930 = vadd.f32 0.0, %v929
      %v931 = vpop.f32.mrb[0].mxu0
      %v932 = vpop.f32.mrb[0].mxu0
      %v933 = vadd.f32 0.0, %v932
      %v934 = vpop.f32.mrb[0].mxu0
      %935 = vdwg.mxu0
      %v968 = vunpack.c.l.b16 %v230
      %v969 = vunpack.c.l.b16 %v231
      %v970 = vunpack.c.l.b16 %v233
      %v971 = vunpack.c.l.b16 %v234
      %v972 = vunpack.c.l.b16 %v236
      %v973 = vunpack.c.l.b16 %v237
      %v974 = vunpack.c.l.b16 %v239
      %v975 = vunpack.c.l.b16 %v240
      %v976 = vunpack.c.l.b16 %v242
      %v977 = vunpack.c.l.b16 %v243
      %v978 = vunpack.c.l.b16 %v245
      %v979 = vunpack.c.l.b16 %v246
      %v980 = vunpack.c.l.b16 %v248
      %v981 = vunpack.c.l.b16 %v249
      %v982 = vunpack.c.l.b16 %v251
      %v983 = vunpack.c.l.b16 %v252
      %v984 = vunpack.c.l.b16 %v254
      %v985 = vunpack.c.l.b16 %v255
      %v986 = vunpack.c.l.b16 %v257
      %v987 = vunpack.c.l.b16 %v258
      %v988 = vunpack.c.l.b16 %v260
      %v989 = vunpack.c.l.b16 %v261
      %v990 = vunpack.c.l.b16 %v263
      %v991 = vunpack.c.l.b16 %v264
      %v992 = vunpack.c.l.b16 %v266
      %v993 = vunpack.c.l.b16 %v267
      %v994 = vunpack.c.l.b16 %v269
      %v995 = vunpack.c.l.b16 %v270
      %v996 = vunpack.c.l.b16 %v272
      %v997 = vunpack.c.l.b16 %v273
      %v998 = vunpack.c.l.b16 %v275
      %v999 = vunpack.c.l.b16 %v276
      %v1000 = vpack.c.b16 %v969, %v968
      %v1001 = vpack.c.b16 %v971, %v970
      %v1002 = vpack.c.b16 %v973, %v972
      %v1003 = vpack.c.b16 %v975, %v974
      %v1004 = vpack.c.b16 %v977, %v976
      %v1005 = vpack.c.b16 %v979, %v978
      %v1006 = vpack.c.b16 %v981, %v980
      %v1007 = vpack.c.b16 %v983, %v982
      %v1008 = vpack.c.b16 %v985, %v984
      %v1009 = vpack.c.b16 %v987, %v986
      %v1010 = vpack.c.b16 %v989, %v988
      %v1011 = vpack.c.b16 %v991, %v990
      %v1012 = vpack.c.b16 %v993, %v992
      %v1013 = vpack.c.b16 %v995, %v994
      %v1014 = vpack.c.b16 %v997, %v996
      %v1015 = vpack.c.b16 %v999, %v998
      %v1017 = vsel %vm722, %v1000, 0
      %v1020 = vsel %vm722, %v1001, 0
      %v1023 = vsel %vm722, %v1002, 0
      %v1026 = vsel %vm722, %v1003, 0
      %v1029 = vsel %vm722, %v1004, 0
      %v1032 = vsel %vm722, %v1005, 0
      %v1035 = vsel %vm722, %v1006, 0
      %v1038 = vsel %vm722, %v1007, 0
      %v1041 = vsel %vm722, %v1008, 0
      %v1044 = vsel %vm722, %v1009, 0
      %v1047 = vsel %vm722, %v1010, 0
      %v1050 = vsel %vm722, %v1011, 0
      %v1053 = vsel %vm722, %v1012, 0
      %v1056 = vsel %vm722, %v1013, 0
      %v1059 = vsel %vm722, %v1014, 0
      %v1062 = vsel %vm722, %v1015, 0
      %v1065 = vsel %vm771, %v284, 0
      %1067 = vmatprep.subr.bf16.mxu0 0
      %1068 = vmatpush1.bf16.msra.mxu0 %v1065
      %1069 = vmatprep.subr.bf16.mxu0 0
      %1070 = vmatpush1.bf16.msra.mxu0 0
      %1071 = vmatprep.subr.bf16.mxu0 0
      %1072 = vmatpush1.bf16.msra.mxu0 0
      %1073 = vmatprep.subr.bf16.mxu0 0
      %1074 = vmatpush1.bf16.msra.mxu0 0
      %1075 = vmatprep.subr.bf16.mxu0 0
      %1076 = vmatpush1.bf16.msra.mxu0 0
      %1077 = vmatprep.subr.bf16.mxu0 0
      %1078 = vmatpush1.bf16.msra.mxu0 0
      %1079 = vmatprep.subr.bf16.mxu0 0
      %1080 = vmatpush1.bf16.msra.mxu0 0
      %1081 = vmatprep.subr.bf16.mxu0 0
      %1082 = vmatpush1.bf16.msra.mxu0 0
      %1083 = vmatprep.subr.bf16.mxu0 0
      %1084 = vmatpush1.bf16.msra.mxu0 0
      %1085 = vmatprep.subr.bf16.mxu0 0
      %1086 = vmatpush1.bf16.msra.mxu0 0
      %1087 = vmatprep.subr.bf16.mxu0 0
      %1088 = vmatpush1.bf16.msra.mxu0 0
      %1089 = vmatprep.subr.bf16.mxu0 0
      %1090 = vmatpush1.bf16.msra.mxu0 0
      %1091 = vmatprep.subr.bf16.mxu0 0
      %1092 = vmatpush1.bf16.msra.mxu0 0
      %1093 = vmatprep.subr.bf16.mxu0 0
      %1094 = vmatpush1.bf16.msra.mxu0 0
      %1095 = vmatprep.subr.bf16.mxu0 0
      %1096 = vmatpush1.bf16.msra.mxu0 0
      %1097 = vmatprep.subr.bf16.mxu0 0
      %1098 = vmatpush1.bf16.msra.mxu0 0
      %1099 = vmatprep.mubr.bf16.mxu0 0
      %1100 = vmatmul.mubr.bf16.gmra.mrb[0].mxu0 %v1017
      %v1101 = vpop.f32.mrb[0].mxu0
      %v1102 = vadd.f32 %v810, %v1101
      %v1103 = vpop.f32.mrb[0].mxu0
      %v1104 = vpop.f32.mrb[0].mxu0
      %v1105 = vadd.f32 %v813, %v1104
      %v1106 = vpop.f32.mrb[0].mxu0
      %1107 = vmatprep.mubr.bf16.mxu0 0
      %1108 = vmatmul.mubr.bf16.gmra.mrb[0].mxu0 %v1020
      %v1109 = vpop.f32.mrb[0].mxu0
      %v1110 = vadd.f32 %v818, %v1109
      %v1111 = vpop.f32.mrb[0].mxu0
      %v1112 = vpop.f32.mrb[0].mxu0
      %v1113 = vadd.f32 %v821, %v1112
      %v1114 = vpop.f32.mrb[0].mxu0
      %1115 = vmatprep.mubr.bf16.mxu0 0
      %1116 = vmatmul.mubr.bf16.gmra.mrb[0].mxu0 %v1023
      %v1117 = vpop.f32.mrb[0].mxu0
      %v1118 = vadd.f32 %v826, %v1117
      %v1119 = vpop.f32.mrb[0].mxu0
      %v1120 = vpop.f32.mrb[0].mxu0
      %v1121 = vadd.f32 %v829, %v1120
      %v1122 = vpop.f32.mrb[0].mxu0
      %1123 = vmatprep.mubr.bf16.mxu0 0
      %1124 = vmatmul.mubr.bf16.gmra.mrb[0].mxu0 %v1026
      %v1125 = vpop.f32.mrb[0].mxu0
      %v1126 = vadd.f32 %v834, %v1125
      %v1127 = vpop.f32.mrb[0].mxu0
      %v1128 = vpop.f32.mrb[0].mxu0
      %v1129 = vadd.f32 %v837, %v1128
      %v1130 = vpop.f32.mrb[0].mxu0
      %1131 = vmatprep.mubr.bf16.mxu0 0
      %1132 = vmatmul.mubr.bf16.gmra.mrb[0].mxu0 %v1029
      %v1133 = vpop.f32.mrb[0].mxu0
      %v1134 = vadd.f32 %v842, %v1133
      %v1135 = vpop.f32.mrb[0].mxu0
      %v1136 = vpop.f32.mrb[0].mxu0
      %v1137 = vadd.f32 %v845, %v1136
      %v1138 = vpop.f32.mrb[0].mxu0
      %1139 = vmatprep.mubr.bf16.mxu0 0
      %1140 = vmatmul.mubr.bf16.gmra.mrb[0].mxu0 %v1032
      %v1141 = vpop.f32.mrb[0].mxu0
      %v1142 = vadd.f32 %v850, %v1141
      %v1143 = vpop.f32.mrb[0].mxu0
      %v1144 = vpop.f32.mrb[0].mxu0
      %v1145 = vadd.f32 %v853, %v1144
      %v1146 = vpop.f32.mrb[0].mxu0
      %1147 = vmatprep.mubr.bf16.mxu0 0
      %1148 = vmatmul.mubr.bf16.gmra.mrb[0].mxu0 %v1035
      %v1149 = vpop.f32.mrb[0].mxu0
      %v1150 = vadd.f32 %v858, %v1149
      %v1151 = vpop.f32.mrb[0].mxu0
      %v1152 = vpop.f32.mrb[0].mxu0
      %v1153 = vadd.f32 %v861, %v1152
      %v1154 = vpop.f32.mrb[0].mxu0
      %1155 = vmatprep.mubr.bf16.mxu0 0
      %1156 = vmatmul.mubr.bf16.gmra.mrb[0].mxu0 %v1038
      %v1157 = vpop.f32.mrb[0].mxu0
      %v1158 = vadd.f32 %v866, %v1157
      %v1159 = vpop.f32.mrb[0].mxu0
      %v1160 = vpop.f32.mrb[0].mxu0
      %v1161 = vadd.f32 %v869, %v1160
      %v1162 = vpop.f32.mrb[0].mxu0
      %1163 = vmatprep.mubr.bf16.mxu0 0
      %1164 = vmatmul.mubr.bf16.gmra.mrb[0].mxu0 %v1041
      %v1165 = vpop.f32.mrb[0].mxu0
      %v1166 = vadd.f32 %v874, %v1165
      %v1167 = vpop.f32.mrb[0].mxu0
      %v1168 = vpop.f32.mrb[0].mxu0
      %v1169 = vadd.f32 %v877, %v1168
      %v1170 = vpop.f32.mrb[0].mxu0
      %1171 = vmatprep.mubr.bf16.mxu0 0
      %1172 = vmatmul.mubr.bf16.gmra.mrb[0].mxu0 %v1044
      %v1173 = vpop.f32.mrb[0].mxu0
      %v1174 = vadd.f32 %v882, %v1173
      %v1175 = vpop.f32.mrb[0].mxu0
      %v1176 = vpop.f32.mrb[0].mxu0
      %v1177 = vadd.f32 %v885, %v1176
      %v1178 = vpop.f32.mrb[0].mxu0
      %1179 = vmatprep.mubr.bf16.mxu0 0
      %1180 = vmatmul.mubr.bf16.gmra.mrb[0].mxu0 %v1047
      %v1181 = vpop.f32.mrb[0].mxu0
      %v1182 = vadd.f32 %v890, %v1181
      %v1183 = vpop.f32.mrb[0].mxu0
      %v1184 = vpop.f32.mrb[0].mxu0
      %v1185 = vadd.f32 %v893, %v1184
      %v1186 = vpop.f32.mrb[0].mxu0
      %1187 = vmatprep.mubr.bf16.mxu0 0
      %1188 = vmatmul.mubr.bf16.gmra.mrb[0].mxu0 %v1050
      %v1189 = vpop.f32.mrb[0].mxu0
      %v1190 = vadd.f32 %v898, %v1189
      %v1191 = vpop.f32.mrb[0].mxu0
      %v1192 = vpop.f32.mrb[0].mxu0
      %v1193 = vadd.f32 %v901, %v1192
      %v1194 = vpop.f32.mrb[0].mxu0
      %1195 = vmatprep.mubr.bf16.mxu0 0
      %1196 = vmatmul.mubr.bf16.gmra.mrb[0].mxu0 %v1053
      %v1197 = vpop.f32.mrb[0].mxu0
      %v1198 = vadd.f32 %v906, %v1197
      %v1199 = vpop.f32.mrb[0].mxu0
      %v1200 = vpop.f32.mrb[0].mxu0
      %v1201 = vadd.f32 %v909, %v1200
      %v1202 = vpop.f32.mrb[0].mxu0
      %1203 = vmatprep.mubr.bf16.mxu0 0
      %1204 = vmatmul.mubr.bf16.gmra.mrb[0].mxu0 %v1056
      %v1205 = vpop.f32.mrb[0].mxu0
      %v1206 = vadd.f32 %v914, %v1205
      %v1207 = vpop.f32.mrb[0].mxu0
      %v1208 = vpop.f32.mrb[0].mxu0
      %v1209 = vadd.f32 %v917, %v1208
      %v1210 = vpop.f32.mrb[0].mxu0
      %1211 = vmatprep.mubr.bf16.mxu0 0
      %1212 = vmatmul.mubr.bf16.gmra.mrb[0].mxu0 %v1059
      %v1213 = vpop.f32.mrb[0].mxu0
      %v1214 = vadd.f32 %v922, %v1213
      %v1215 = vpop.f32.mrb[0].mxu0
      %v1216 = vpop.f32.mrb[0].mxu0
      %v1217 = vadd.f32 %v925, %v1216
      %v1218 = vpop.f32.mrb[0].mxu0
      %1219 = vmatprep.mubr.bf16.mxu0 0
      %1220 = vmatmul.mubr.bf16.gmra.mrb[0].mxu0 %v1062
      %v1221 = vpop.f32.mrb[0].mxu0
      %v1222 = vadd.f32 %v930, %v1221
      %v1223 = vpop.f32.mrb[0].mxu0
      %v1224 = vpop.f32.mrb[0].mxu0
      %v1225 = vadd.f32 %v933, %v1224
      %v1226 = vpop.f32.mrb[0].mxu0
      %1227 = vdwg.mxu0
      %vm1244 = vcmask 1042432
      %vm1245 = vcmask 1046532
      %vm1246 = vmor %vm1244, %vm1245
      %v1247 = vrot.slane %v230, 5
      %v1248 = vrot.slane %v1247, 4
      %v1249 = vrot.slane %v231, 5
      %v1250 = vsel %vm1246, %v1248, %v1249
      %v1251 = vrot.slane %v1249, 4
      %v1252 = vrot.slane %v232, 5
      %v1253 = vsel %vm1246, %v1251, %v1252
      %v1254 = vrot.slane %v233, 5
      %v1255 = vrot.slane %v1254, 4
      %v1256 = vrot.slane %v234, 5
      %v1257 = vsel %vm1246, %v1255, %v1256
      %v1258 = vrot.slane %v1256, 4
      %v1259 = vrot.slane %v235, 5
      %v1260 = vsel %vm1246, %v1258, %v1259
      %v1261 = vrot.slane %v236, 5
      %v1262 = vrot.slane %v1261, 4
      %v1263 = vrot.slane %v237, 5
      %v1264 = vsel %vm1246, %v1262, %v1263
      %v1265 = vrot.slane %v1263, 4
      %v1266 = vrot.slane %v238, 5
      %v1267 = vsel %vm1246, %v1265, %v1266
      %v1268 = vrot.slane %v239, 5
      %v1269 = vrot.slane %v1268, 4
      %v1270 = vrot.slane %v240, 5
      %v1271 = vsel %vm1246, %v1269, %v1270
      %v1272 = vrot.slane %v1270, 4
      %v1273 = vrot.slane %v241, 5
      %v1274 = vsel %vm1246, %v1272, %v1273
      %v1275 = vrot.slane %v242, 5
      %v1276 = vrot.slane %v1275, 4
      %v1277 = vrot.slane %v243, 5
      %v1278 = vsel %vm1246, %v1276, %v1277
      %v1279 = vrot.slane %v1277, 4
      %v1280 = vrot.slane %v244, 5
      %v1281 = vsel %vm1246, %v1279, %v1280
      %v1282 = vrot.slane %v245, 5
      %v1283 = vrot.slane %v1282, 4
      %v1284 = vrot.slane %v246, 5
      %v1285 = vsel %vm1246, %v1283, %v1284
      %v1286 = vrot.slane %v1284, 4
      %v1287 = vrot.slane %v247, 5
      %v1288 = vsel %vm1246, %v1286, %v1287
      %v1289 = vrot.slane %v248, 5
      %v1290 = vrot.slane %v1289, 4
      %v1291 = vrot.slane %v249, 5
      %v1292 = vsel %vm1246, %v1290, %v1291
      %v1293 = vrot.slane %v1291, 4
      %v1294 = vrot.slane %v250, 5
      %v1295 = vsel %vm1246, %v1293, %v1294
      %v1296 = vrot.slane %v251, 5
      %v1297 = vrot.slane %v1296, 4
      %v1298 = vrot.slane %v252, 5
      %v1299 = vsel %vm1246, %v1297, %v1298
      %v1300 = vrot.slane %v1298, 4
      %v1301 = vrot.slane %v253, 5
      %v1302 = vsel %vm1246, %v1300, %v1301
      %v1303 = vrot.slane %v254, 5
      %v1304 = vrot.slane %v1303, 4
      %v1305 = vrot.slane %v255, 5
      %v1306 = vsel %vm1246, %v1304, %v1305
      %v1307 = vrot.slane %v1305, 4
      %v1308 = vrot.slane %v256, 5
      %v1309 = vsel %vm1246, %v1307, %v1308
      %v1310 = vrot.slane %v257, 5
      %v1311 = vrot.slane %v1310, 4
      %v1312 = vrot.slane %v258, 5
      %v1313 = vsel %vm1246, %v1311, %v1312
      %v1314 = vrot.slane %v1312, 4
      %v1315 = vrot.slane %v259, 5
      %v1316 = vsel %vm1246, %v1314, %v1315
      %v1317 = vrot.slane %v260, 5
      %v1318 = vrot.slane %v1317, 4
      %v1319 = vrot.slane %v261, 5
      %v1320 = vsel %vm1246, %v1318, %v1319
      %v1321 = vrot.slane %v1319, 4
      %v1322 = vrot.slane %v262, 5
      %v1323 = vsel %vm1246, %v1321, %v1322
      %v1324 = vrot.slane %v263, 5
      %v1325 = vrot.slane %v1324, 4
      %v1326 = vrot.slane %v264, 5
      %v1327 = vsel %vm1246, %v1325, %v1326
      %v1328 = vrot.slane %v1326, 4
      %v1329 = vrot.slane %v265, 5
      %v1330 = vsel %vm1246, %v1328, %v1329
      %v1331 = vrot.slane %v266, 5
      %v1332 = vrot.slane %v1331, 4
      %v1333 = vrot.slane %v267, 5
      %v1334 = vsel %vm1246, %v1332, %v1333
      %v1335 = vrot.slane %v1333, 4
      %v1336 = vrot.slane %v268, 5
      %v1337 = vsel %vm1246, %v1335, %v1336
      %v1338 = vrot.slane %v269, 5
      %v1339 = vrot.slane %v1338, 4
      %v1340 = vrot.slane %v270, 5
      %v1341 = vsel %vm1246, %v1339, %v1340
      %v1342 = vrot.slane %v1340, 4
      %v1343 = vrot.slane %v271, 5
      %v1344 = vsel %vm1246, %v1342, %v1343
      %v1345 = vrot.slane %v272, 5
      %v1346 = vrot.slane %v1345, 4
      %v1347 = vrot.slane %v273, 5
      %v1348 = vsel %vm1246, %v1346, %v1347
      %v1349 = vrot.slane %v1347, 4
      %v1350 = vrot.slane %v274, 5
      %v1351 = vsel %vm1246, %v1349, %v1350
      %v1352 = vrot.slane %v275, 5
      %v1353 = vrot.slane %v1352, 4
      %v1354 = vrot.slane %v276, 5
      %v1355 = vsel %vm1246, %v1353, %v1354
      %v1356 = vrot.slane %v1354, 4
      %v1357 = vrot.slane %v277, 5
      %v1358 = vsel %vm1246, %v1356, %v1357
      %s1359 = scalar_lea.vmem %s1, 8
      %v1360 = vld [vmem:[%s1359] sm:$0xf]
      %v1361 = vunpack.c.l.b16 %v1250
      %v1362 = vunpack.c.l.b16 %v1253
      %v1363 = vunpack.c.l.b16 %v1257
      %v1364 = vunpack.c.l.b16 %v1260
      %v1365 = vunpack.c.l.b16 %v1264
      %v1366 = vunpack.c.l.b16 %v1267
      %v1367 = vunpack.c.l.b16 %v1271
      %v1368 = vunpack.c.l.b16 %v1274
      %v1369 = vunpack.c.l.b16 %v1278
      %v1370 = vunpack.c.l.b16 %v1281
      %v1371 = vunpack.c.l.b16 %v1285
      %v1372 = vunpack.c.l.b16 %v1288
      %v1373 = vunpack.c.l.b16 %v1292
      %v1374 = vunpack.c.l.b16 %v1295
      %v1375 = vunpack.c.l.b16 %v1299
      %v1376 = vunpack.c.l.b16 %v1302
      %v1377 = vunpack.c.l.b16 %v1306
      %v1378 = vunpack.c.l.b16 %v1309
      %v1379 = vunpack.c.l.b16 %v1313
      %v1380 = vunpack.c.l.b16 %v1316
      %v1381 = vunpack.c.l.b16 %v1320
      %v1382 = vunpack.c.l.b16 %v1323
      %v1383 = vunpack.c.l.b16 %v1327
      %v1384 = vunpack.c.l.b16 %v1330
      %v1385 = vunpack.c.l.b16 %v1334
      %v1386 = vunpack.c.l.b16 %v1337
      %v1387 = vunpack.c.l.b16 %v1341
      %v1388 = vunpack.c.l.b16 %v1344
      %v1389 = vunpack.c.l.b16 %v1348
      %v1390 = vunpack.c.l.b16 %v1351
      %v1391 = vunpack.c.l.b16 %v1355
      %v1392 = vunpack.c.l.b16 %v1358
      %v1393 = vpack.c.b16 %v1362, %v1361
      %v1394 = vpack.c.b16 %v1364, %v1363
      %v1395 = vpack.c.b16 %v1366, %v1365
      %v1396 = vpack.c.b16 %v1368, %v1367
      %v1397 = vpack.c.b16 %v1370, %v1369
      %v1398 = vpack.c.b16 %v1372, %v1371
      %v1399 = vpack.c.b16 %v1374, %v1373
      %v1400 = vpack.c.b16 %v1376, %v1375
      %v1401 = vpack.c.b16 %v1378, %v1377
      %v1402 = vpack.c.b16 %v1380, %v1379
      %v1403 = vpack.c.b16 %v1382, %v1381
      %v1404 = vpack.c.b16 %v1384, %v1383
      %v1405 = vpack.c.b16 %v1386, %v1385
      %v1406 = vpack.c.b16 %v1388, %v1387
      %v1407 = vpack.c.b16 %v1390, %v1389
      %v1408 = vpack.c.b16 %v1392, %v1391
      %v1410 = vsel %vm722, %v1393, 0
      %v1413 = vsel %vm722, %v1394, 0
      %v1416 = vsel %vm722, %v1395, 0
      %v1419 = vsel %vm722, %v1396, 0
      %v1422 = vsel %vm722, %v1397, 0
      %v1425 = vsel %vm722, %v1398, 0
      %v1428 = vsel %vm722, %v1399, 0
      %v1431 = vsel %vm722, %v1400, 0
      %v1434 = vsel %vm722, %v1401, 0
      %v1437 = vsel %vm722, %v1402, 0
      %v1440 = vsel %vm722, %v1403, 0
      %v1443 = vsel %vm722, %v1404, 0
      %v1446 = vsel %vm722, %v1405, 0
      %v1449 = vsel %vm722, %v1406, 0
      %v1452 = vsel %vm722, %v1407, 0
      %v1455 = vsel %vm722, %v1408, 0
      %v1458 = vsel %vm771, %v1360, 0
      %1460 = vmatprep.subr.bf16.mxu0 0
      %1461 = vmatpush1.bf16.msra.mxu0 %v1458
      %1462 = vmatprep.subr.bf16.mxu0 0
      %1463 = vmatpush1.bf16.msra.mxu0 0
      %1464 = vmatprep.subr.bf16.mxu0 0
      %1465 = vmatpush1.bf16.msra.mxu0 0
      %1466 = vmatprep.subr.bf16.mxu0 0
      %1467 = vmatpush1.bf16.msra.mxu0 0
      %1468 = vmatprep.subr.bf16.mxu0 0
      %1469 = vmatpush1.bf16.msra.mxu0 0
      %1470 = vmatprep.subr.bf16.mxu0 0
      %1471 = vmatpush1.bf16.msra.mxu0 0
      %1472 = vmatprep.subr.bf16.mxu0 0
      %1473 = vmatpush1.bf16.msra.mxu0 0
      %1474 = vmatprep.subr.bf16.mxu0 0
      %1475 = vmatpush1.bf16.msra.mxu0 0
      %1476 = vmatprep.subr.bf16.mxu0 0
      %1477 = vmatpush1.bf16.msra.mxu0 0
      %1478 = vmatprep.subr.bf16.mxu0 0
      %1479 = vmatpush1.bf16.msra.mxu0 0
      %1480 = vmatprep.subr.bf16.mxu0 0
      %1481 = vmatpush1.bf16.msra.mxu0 0
      %1482 = vmatprep.subr.bf16.mxu0 0
      %1483 = vmatpush1.bf16.msra.mxu0 0
      %1484 = vmatprep.subr.bf16.mxu0 0
      %1485 = vmatpush1.bf16.msra.mxu0 0
      %1486 = vmatprep.subr.bf16.mxu0 0
      %1487 = vmatpush1.bf16.msra.mxu0 0
      %1488 = vmatprep.subr.bf16.mxu0 0
      %1489 = vmatpush1.bf16.msra.mxu0 0
      %1490 = vmatprep.subr.bf16.mxu0 0
      %1491 = vmatpush1.bf16.msra.mxu0 0
      %1492 = vmatprep.mubr.bf16.mxu0 0
      %1493 = vmatmul.mubr.bf16.gmra.mrb[0].mxu0 %v1410
      %v1494 = vpop.f32.mrb[0].mxu0
      %v1495 = vadd.f32 0.0, %v1494
      %v1496 = vpop.f32.mrb[0].mxu0
      %v1497 = vpop.f32.mrb[0].mxu0
      %v1498 = vadd.f32 0.0, %v1497
      %v1499 = vpop.f32.mrb[0].mxu0
      %1500 = vmatprep.mubr.bf16.mxu0 0
      %1501 = vmatmul.mubr.bf16.gmra.mrb[0].mxu0 %v1413
      %v1502 = vpop.f32.mrb[0].mxu0
      %v1503 = vadd.f32 0.0, %v1502
      %v1504 = vpop.f32.mrb[0].mxu0
      %v1505 = vpop.f32.mrb[0].mxu0
      %v1506 = vadd.f32 0.0, %v1505
      %v1507 = vpop.f32.mrb[0].mxu0
      %1508 = vmatprep.mubr.bf16.mxu0 0
      %1509 = vmatmul.mubr.bf16.gmra.mrb[0].mxu0 %v1416
      %v1510 = vpop.f32.mrb[0].mxu0
      %v1511 = vadd.f32 0.0, %v1510
      %v1512 = vpop.f32.mrb[0].mxu0
      %v1513 = vpop.f32.mrb[0].mxu0
      %v1514 = vadd.f32 0.0, %v1513
      %v1515 = vpop.f32.mrb[0].mxu0
      %1516 = vmatprep.mubr.bf16.mxu0 0
      %1517 = vmatmul.mubr.bf16.gmra.mrb[0].mxu0 %v1419
      %v1518 = vpop.f32.mrb[0].mxu0
      %v1519 = vadd.f32 0.0, %v1518
      %v1520 = vpop.f32.mrb[0].mxu0
      %v1521 = vpop.f32.mrb[0].mxu0
      %v1522 = vadd.f32 0.0, %v1521
      %v1523 = vpop.f32.mrb[0].mxu0
      %1524 = vmatprep.mubr.bf16.mxu0 0
      %1525 = vmatmul.mubr.bf16.gmra.mrb[0].mxu0 %v1422
      %v1526 = vpop.f32.mrb[0].mxu0
      %v1527 = vadd.f32 0.0, %v1526
      %v1528 = vpop.f32.mrb[0].mxu0
      %v1529 = vpop.f32.mrb[0].mxu0
      %v1530 = vadd.f32 0.0, %v1529
      %v1531 = vpop.f32.mrb[0].mxu0
      %1532 = vmatprep.mubr.bf16.mxu0 0
      %1533 = vmatmul.mubr.bf16.gmra.mrb[0].mxu0 %v1425
      %v1534 = vpop.f32.mrb[0].mxu0
      %v1535 = vadd.f32 0.0, %v1534
      %v1536 = vpop.f32.mrb[0].mxu0
      %v1537 = vpop.f32.mrb[0].mxu0
      %v1538 = vadd.f32 0.0, %v1537
      %v1539 = vpop.f32.mrb[0].mxu0
      %1540 = vmatprep.mubr.bf16.mxu0 0
      %1541 = vmatmul.mubr.bf16.gmra.mrb[0].mxu0 %v1428
      %v1542 = vpop.f32.mrb[0].mxu0
      %v1543 = vadd.f32 0.0, %v1542
      %v1544 = vpop.f32.mrb[0].mxu0
      %v1545 = vpop.f32.mrb[0].mxu0
      %v1546 = vadd.f32 0.0, %v1545
      %v1547 = vpop.f32.mrb[0].mxu0
      %1548 = vmatprep.mubr.bf16.mxu0 0
      %1549 = vmatmul.mubr.bf16.gmra.mrb[0].mxu0 %v1431
      %v1550 = vpop.f32.mrb[0].mxu0
      %v1551 = vadd.f32 0.0, %v1550
      %v1552 = vpop.f32.mrb[0].mxu0
      %v1553 = vpop.f32.mrb[0].mxu0
      %v1554 = vadd.f32 0.0, %v1553
      %v1555 = vpop.f32.mrb[0].mxu0
      %1556 = vmatprep.mubr.bf16.mxu0 0
      %1557 = vmatmul.mubr.bf16.gmra.mrb[0].mxu0 %v1434
      %v1558 = vpop.f32.mrb[0].mxu0
      %v1559 = vadd.f32 0.0, %v1558
      %v1560 = vpop.f32.mrb[0].mxu0
      %v1561 = vpop.f32.mrb[0].mxu0
      %v1562 = vadd.f32 0.0, %v1561
      %v1563 = vpop.f32.mrb[0].mxu0
      %1564 = vmatprep.mubr.bf16.mxu0 0
      %1565 = vmatmul.mubr.bf16.gmra.mrb[0].mxu0 %v1437
      %v1566 = vpop.f32.mrb[0].mxu0
      %v1567 = vadd.f32 0.0, %v1566
      %v1568 = vpop.f32.mrb[0].mxu0
      %v1569 = vpop.f32.mrb[0].mxu0
      %v1570 = vadd.f32 0.0, %v1569
      %v1571 = vpop.f32.mrb[0].mxu0
      %1572 = vmatprep.mubr.bf16.mxu0 0
      %1573 = vmatmul.mubr.bf16.gmra.mrb[0].mxu0 %v1440
      %v1574 = vpop.f32.mrb[0].mxu0
      %v1575 = vadd.f32 0.0, %v1574
      %v1576 = vpop.f32.mrb[0].mxu0
      %v1577 = vpop.f32.mrb[0].mxu0
      %v1578 = vadd.f32 0.0, %v1577
      %v1579 = vpop.f32.mrb[0].mxu0
      %1580 = vmatprep.mubr.bf16.mxu0 0
      %1581 = vmatmul.mubr.bf16.gmra.mrb[0].mxu0 %v1443
      %v1582 = vpop.f32.mrb[0].mxu0
      %v1583 = vadd.f32 0.0, %v1582
      %v1584 = vpop.f32.mrb[0].mxu0
      %v1585 = vpop.f32.mrb[0].mxu0
      %v1586 = vadd.f32 0.0, %v1585
      %v1587 = vpop.f32.mrb[0].mxu0
      %1588 = vmatprep.mubr.bf16.mxu0 0
      %1589 = vmatmul.mubr.bf16.gmra.mrb[0].mxu0 %v1446
      %v1590 = vpop.f32.mrb[0].mxu0
      %v1591 = vadd.f32 0.0, %v1590
      %v1592 = vpop.f32.mrb[0].mxu0
      %v1593 = vpop.f32.mrb[0].mxu0
      %v1594 = vadd.f32 0.0, %v1593
      %v1595 = vpop.f32.mrb[0].mxu0
      %1596 = vmatprep.mubr.bf16.mxu0 0
      %1597 = vmatmul.mubr.bf16.gmra.mrb[0].mxu0 %v1449
      %v1598 = vpop.f32.mrb[0].mxu0
      %v1599 = vadd.f32 0.0, %v1598
      %v1600 = vpop.f32.mrb[0].mxu0
      %v1601 = vpop.f32.mrb[0].mxu0
      %v1602 = vadd.f32 0.0, %v1601
      %v1603 = vpop.f32.mrb[0].mxu0
      %1604 = vmatprep.mubr.bf16.mxu0 0
      %1605 = vmatmul.mubr.bf16.gmra.mrb[0].mxu0 %v1452
      %v1606 = vpop.f32.mrb[0].mxu0
      %v1607 = vadd.f32 0.0, %v1606
      %v1608 = vpop.f32.mrb[0].mxu0
      %v1609 = vpop.f32.mrb[0].mxu0
      %v1610 = vadd.f32 0.0, %v1609
      %v1611 = vpop.f32.mrb[0].mxu0
      %1612 = vmatprep.mubr.bf16.mxu0 0
      %1613 = vmatmul.mubr.bf16.gmra.mrb[0].mxu0 %v1455
      %v1614 = vpop.f32.mrb[0].mxu0
      %v1615 = vadd.f32 0.0, %v1614
      %v1616 = vpop.f32.mrb[0].mxu0
      %v1617 = vpop.f32.mrb[0].mxu0
      %v1618 = vadd.f32 0.0, %v1617
      %v1619 = vpop.f32.mrb[0].mxu0
      %1620 = vdwg.mxu0
      %v1621 = vadd.f32 %v1102, %v1495
      %v1622 = vadd.f32 %v1105, %v1498
      %v1623 = vadd.f32 %v1110, %v1503
      %v1624 = vadd.f32 %v1113, %v1506
      %v1625 = vadd.f32 %v1118, %v1511
      %v1626 = vadd.f32 %v1121, %v1514
      %v1627 = vadd.f32 %v1126, %v1519
      %v1628 = vadd.f32 %v1129, %v1522
      %v1629 = vadd.f32 %v1134, %v1527
      %v1630 = vadd.f32 %v1137, %v1530
      %v1631 = vadd.f32 %v1142, %v1535
      %v1632 = vadd.f32 %v1145, %v1538
      %v1633 = vadd.f32 %v1150, %v1543
      %v1634 = vadd.f32 %v1153, %v1546
      %v1635 = vadd.f32 %v1158, %v1551
      %v1636 = vadd.f32 %v1161, %v1554
      %v1637 = vadd.f32 %v1166, %v1559
      %v1638 = vadd.f32 %v1169, %v1562
      %v1639 = vadd.f32 %v1174, %v1567
      %v1640 = vadd.f32 %v1177, %v1570
      %v1641 = vadd.f32 %v1182, %v1575
      %v1642 = vadd.f32 %v1185, %v1578
      %v1643 = vadd.f32 %v1190, %v1583
      %v1644 = vadd.f32 %v1193, %v1586
      %v1645 = vadd.f32 %v1198, %v1591
      %v1646 = vadd.f32 %v1201, %v1594
      %v1647 = vadd.f32 %v1206, %v1599
      %v1648 = vadd.f32 %v1209, %v1602
      %v1649 = vadd.f32 %v1214, %v1607
      %v1650 = vadd.f32 %v1217, %v1610
      %v1651 = vadd.f32 %v1222, %v1615
      %v1652 = vadd.f32 %v1225, %v1618
      %s1653 = scalar_lea.vmem %s1, 12
      %v1654 = vld [vmem:[%s1653] sm:$0xf]
      %v1657 = vunpack.c.l.b16 %v278
      %v1658 = vunpack.c.l.b16 %v279
      %v1659 = vpack.c.b16 %v1658, %v1657
      %v1661 = vsel %vm722, %v1659, 0
      %v1664 = vsel %vm771, %v1654, 0
      %1666 = vmatprep.subr.bf16.mxu0 0
      %1667 = vmatpush1.bf16.msra.mxu0 %v1664
      %1668 = vmatprep.subr.bf16.mxu0 0
      %1669 = vmatpush1.bf16.msra.mxu0 0
      %1670 = vmatprep.subr.bf16.mxu0 0
      %1671 = vmatpush1.bf16.msra.mxu0 0
      %1672 = vmatprep.subr.bf16.mxu0 0
      %1673 = vmatpush1.bf16.msra.mxu0 0
      %1674 = vmatprep.subr.bf16.mxu0 0
      %1675 = vmatpush1.bf16.msra.mxu0 0
      %1676 = vmatprep.subr.bf16.mxu0 0
      %1677 = vmatpush1.bf16.msra.mxu0 0
      %1678 = vmatprep.subr.bf16.mxu0 0
      %1679 = vmatpush1.bf16.msra.mxu0 0
      %1680 = vmatprep.subr.bf16.mxu0 0
      %1681 = vmatpush1.bf16.msra.mxu0 0
      %1682 = vmatprep.subr.bf16.mxu0 0
      %1683 = vmatpush1.bf16.msra.mxu0 0
      %1684 = vmatprep.subr.bf16.mxu0 0
      %1685 = vmatpush1.bf16.msra.mxu0 0
      %1686 = vmatprep.subr.bf16.mxu0 0
      %1687 = vmatpush1.bf16.msra.mxu0 0
      %1688 = vmatprep.subr.bf16.mxu0 0
      %1689 = vmatpush1.bf16.msra.mxu0 0
      %1690 = vmatprep.subr.bf16.mxu0 0
      %1691 = vmatpush1.bf16.msra.mxu0 0
      %1692 = vmatprep.subr.bf16.mxu0 0
      %1693 = vmatpush1.bf16.msra.mxu0 0
      %1694 = vmatprep.subr.bf16.mxu0 0
      %1695 = vmatpush1.bf16.msra.mxu0 0
      %1696 = vmatprep.subr.bf16.mxu0 0
      %1697 = vmatpush1.bf16.msra.mxu0 0
      %1698 = vmatprep.mubr.bf16.mxu0 0
      %1699 = vmatmul.mubr.bf16.gmra.mrb[0].mxu0 %v1020
      %v1700 = vpop.f32.mrb[0].mxu0
      %v1701 = vadd.f32 0.0, %v1700
      %v1702 = vpop.f32.mrb[0].mxu0
      %v1703 = vpop.f32.mrb[0].mxu0
      %v1704 = vadd.f32 0.0, %v1703
      %v1705 = vpop.f32.mrb[0].mxu0
      %1706 = vmatprep.mubr.bf16.mxu0 0
      %1707 = vmatmul.mubr.bf16.gmra.mrb[0].mxu0 %v1023
      %v1708 = vpop.f32.mrb[0].mxu0
      %v1709 = vadd.f32 0.0, %v1708
      %v1710 = vpop.f32.mrb[0].mxu0
      %v1711 = vpop.f32.mrb[0].mxu0
      %v1712 = vadd.f32 0.0, %v1711
      %v1713 = vpop.f32.mrb[0].mxu0
      %1714 = vmatprep.mubr.bf16.mxu0 0
      %1715 = vmatmul.mubr.bf16.gmra.mrb[0].mxu0 %v1026
      %v1716 = vpop.f32.mrb[0].mxu0
      %v1717 = vadd.f32 0.0, %v1716
      %v1718 = vpop.f32.mrb[0].mxu0
      %v1719 = vpop.f32.mrb[0].mxu0
      %v1720 = vadd.f32 0.0, %v1719
      %v1721 = vpop.f32.mrb[0].mxu0
      %1722 = vmatprep.mubr.bf16.mxu0 0
      %1723 = vmatmul.mubr.bf16.gmra.mrb[0].mxu0 %v1029
      %v1724 = vpop.f32.mrb[0].mxu0
      %v1725 = vadd.f32 0.0, %v1724
      %v1726 = vpop.f32.mrb[0].mxu0
      %v1727 = vpop.f32.mrb[0].mxu0
      %v1728 = vadd.f32 0.0, %v1727
      %v1729 = vpop.f32.mrb[0].mxu0
      %1730 = vmatprep.mubr.bf16.mxu0 0
      %1731 = vmatmul.mubr.bf16.gmra.mrb[0].mxu0 %v1032
      %v1732 = vpop.f32.mrb[0].mxu0
      %v1733 = vadd.f32 0.0, %v1732
      %v1734 = vpop.f32.mrb[0].mxu0
      %v1735 = vpop.f32.mrb[0].mxu0
      %v1736 = vadd.f32 0.0, %v1735
      %v1737 = vpop.f32.mrb[0].mxu0
      %1738 = vmatprep.mubr.bf16.mxu0 0
      %1739 = vmatmul.mubr.bf16.gmra.mrb[0].mxu0 %v1035
      %v1740 = vpop.f32.mrb[0].mxu0
      %v1741 = vadd.f32 0.0, %v1740
      %v1742 = vpop.f32.mrb[0].mxu0
      %v1743 = vpop.f32.mrb[0].mxu0
      %v1744 = vadd.f32 0.0, %v1743
      %v1745 = vpop.f32.mrb[0].mxu0
      %1746 = vmatprep.mubr.bf16.mxu0 0
      %1747 = vmatmul.mubr.bf16.gmra.mrb[0].mxu0 %v1038
      %v1748 = vpop.f32.mrb[0].mxu0
      %v1749 = vadd.f32 0.0, %v1748
      %v1750 = vpop.f32.mrb[0].mxu0
      %v1751 = vpop.f32.mrb[0].mxu0
      %v1752 = vadd.f32 0.0, %v1751
      %v1753 = vpop.f32.mrb[0].mxu0
      %1754 = vmatprep.mubr.bf16.mxu0 0
      %1755 = vmatmul.mubr.bf16.gmra.mrb[0].mxu0 %v1041
      %v1756 = vpop.f32.mrb[0].mxu0
      %v1757 = vadd.f32 0.0, %v1756
      %v1758 = vpop.f32.mrb[0].mxu0
      %v1759 = vpop.f32.mrb[0].mxu0
      %v1760 = vadd.f32 0.0, %v1759
      %v1761 = vpop.f32.mrb[0].mxu0
      %1762 = vmatprep.mubr.bf16.mxu0 0
      %1763 = vmatmul.mubr.bf16.gmra.mrb[0].mxu0 %v1044
      %v1764 = vpop.f32.mrb[0].mxu0
      %v1765 = vadd.f32 0.0, %v1764
      %v1766 = vpop.f32.mrb[0].mxu0
      %v1767 = vpop.f32.mrb[0].mxu0
      %v1768 = vadd.f32 0.0, %v1767
      %v1769 = vpop.f32.mrb[0].mxu0
      %1770 = vmatprep.mubr.bf16.mxu0 0
      %1771 = vmatmul.mubr.bf16.gmra.mrb[0].mxu0 %v1047
      %v1772 = vpop.f32.mrb[0].mxu0
      %v1773 = vadd.f32 0.0, %v1772
      %v1774 = vpop.f32.mrb[0].mxu0
      %v1775 = vpop.f32.mrb[0].mxu0
      %v1776 = vadd.f32 0.0, %v1775
      %v1777 = vpop.f32.mrb[0].mxu0
      %1778 = vmatprep.mubr.bf16.mxu0 0
      %1779 = vmatmul.mubr.bf16.gmra.mrb[0].mxu0 %v1050
      %v1780 = vpop.f32.mrb[0].mxu0
      %v1781 = vadd.f32 0.0, %v1780
      %v1782 = vpop.f32.mrb[0].mxu0
      %v1783 = vpop.f32.mrb[0].mxu0
      %v1784 = vadd.f32 0.0, %v1783
      %v1785 = vpop.f32.mrb[0].mxu0
      %1786 = vmatprep.mubr.bf16.mxu0 0
      %1787 = vmatmul.mubr.bf16.gmra.mrb[0].mxu0 %v1053
      %v1788 = vpop.f32.mrb[0].mxu0
      %v1789 = vadd.f32 0.0, %v1788
      %v1790 = vpop.f32.mrb[0].mxu0
      %v1791 = vpop.f32.mrb[0].mxu0
      %v1792 = vadd.f32 0.0, %v1791
      %v1793 = vpop.f32.mrb[0].mxu0
      %1794 = vmatprep.mubr.bf16.mxu0 0
      %1795 = vmatmul.mubr.bf16.gmra.mrb[0].mxu0 %v1056
      %v1796 = vpop.f32.mrb[0].mxu0
      %v1797 = vadd.f32 0.0, %v1796
      %v1798 = vpop.f32.mrb[0].mxu0
      %v1799 = vpop.f32.mrb[0].mxu0
      %v1800 = vadd.f32 0.0, %v1799
      %v1801 = vpop.f32.mrb[0].mxu0
      %1802 = vmatprep.mubr.bf16.mxu0 0
      %1803 = vmatmul.mubr.bf16.gmra.mrb[0].mxu0 %v1059
      %v1804 = vpop.f32.mrb[0].mxu0
      %v1805 = vadd.f32 0.0, %v1804
      %v1806 = vpop.f32.mrb[0].mxu0
      %v1807 = vpop.f32.mrb[0].mxu0
      %v1808 = vadd.f32 0.0, %v1807
      %v1809 = vpop.f32.mrb[0].mxu0
      %1810 = vmatprep.mubr.bf16.mxu0 0
      %1811 = vmatmul.mubr.bf16.gmra.mrb[0].mxu0 %v1062
      %v1812 = vpop.f32.mrb[0].mxu0
      %v1813 = vadd.f32 0.0, %v1812
      %v1814 = vpop.f32.mrb[0].mxu0
      %v1815 = vpop.f32.mrb[0].mxu0
      %v1816 = vadd.f32 0.0, %v1815
      %v1817 = vpop.f32.mrb[0].mxu0
      %1818 = vmatprep.mubr.bf16.mxu0 0
      %1819 = vmatmul.mubr.bf16.gmra.mrb[0].mxu0 %v1661
      %v1820 = vpop.f32.mrb[0].mxu0
      %v1821 = vadd.f32 0.0, %v1820
      %v1822 = vpop.f32.mrb[0].mxu0
      %v1823 = vpop.f32.mrb[0].mxu0
      %v1824 = vadd.f32 0.0, %v1823
      %v1825 = vpop.f32.mrb[0].mxu0
      %1826 = vdwg.mxu0
      %v1827 = vadd.f32 %v1621, %v1701
      %v1828 = vadd.f32 %v1622, %v1704
      %v1829 = vadd.f32 %v1623, %v1709
      %v1830 = vadd.f32 %v1624, %v1712
      %v1831 = vadd.f32 %v1625, %v1717
      %v1832 = vadd.f32 %v1626, %v1720
      %v1833 = vadd.f32 %v1627, %v1725
      %v1834 = vadd.f32 %v1628, %v1728
      %v1835 = vadd.f32 %v1629, %v1733
      %v1836 = vadd.f32 %v1630, %v1736
      %v1837 = vadd.f32 %v1631, %v1741
      %v1838 = vadd.f32 %v1632, %v1744
      %v1839 = vadd.f32 %v1633, %v1749
      %v1840 = vadd.f32 %v1634, %v1752
      %v1841 = vadd.f32 %v1635, %v1757
      %v1842 = vadd.f32 %v1636, %v1760
      %v1843 = vadd.f32 %v1637, %v1765
      %v1844 = vadd.f32 %v1638, %v1768
      %v1845 = vadd.f32 %v1639, %v1773
      %v1846 = vadd.f32 %v1640, %v1776
      %v1847 = vadd.f32 %v1641, %v1781
      %v1848 = vadd.f32 %v1642, %v1784
      %v1849 = vadd.f32 %v1643, %v1789
      %v1850 = vadd.f32 %v1644, %v1792
      %v1851 = vadd.f32 %v1645, %v1797
      %v1852 = vadd.f32 %v1646, %v1800
      %v1853 = vadd.f32 %v1647, %v1805
      %v1854 = vadd.f32 %v1648, %v1808
      %v1855 = vadd.f32 %v1649, %v1813
      %v1856 = vadd.f32 %v1650, %v1816
      %v1857 = vadd.f32 %v1651, %v1821
      %v1858 = vadd.f32 %v1652, %v1824
      %v1860 = vshrl.u32 %v278, 16
      %v1862 = vrot.slane %v1860, 4
      %v1863 = vshll.u32 %v278, 16
      %v1865 = vrot.slane %v1863, 5
      %v1866 = vor.u32 %v1862, %v1865
      %v1867 = vrot.slane %v1866, 4
      %v1869 = vshll.u32 %v279, 16
      %v1871 = vrot.slane %v1869, 5
      %v1872 = vsel %vm287, %v1867, %v1871
      %v1873 = vshrl.u32 %v279, 16
      %v1875 = vrot.slane %v1873, 4
      %v1876 = vor.u32 %v1875, %v1871
      %v1877 = vrot.slane %v1876, 4
      %v1879 = vshll.u32 %v280, 16
      %v1881 = vrot.slane %v1879, 5
      %v1882 = vsel %vm287, %v1877, %v1881
      %s1883 = scalar_lea.vmem %s1, 16
      %v1884 = vld [vmem:[%s1883] sm:$0xf]
      %v1885 = vunpack.c.l.b16 %v1872
      %v1886 = vunpack.c.l.b16 %v1882
      %v1887 = vpack.c.b16 %v1886, %v1885
      %v1889 = vsel %vm722, %v1887, 0
      %v1892 = vsel %vm771, %v1884, 0
      %1894 = vmatprep.subr.bf16.mxu0 0
      %1895 = vmatpush1.bf16.msra.mxu0 %v1892
      %1896 = vmatprep.subr.bf16.mxu0 0
      %1897 = vmatpush1.bf16.msra.mxu0 0
      %1898 = vmatprep.subr.bf16.mxu0 0
      %1899 = vmatpush1.bf16.msra.mxu0 0
      %1900 = vmatprep.subr.bf16.mxu0 0
      %1901 = vmatpush1.bf16.msra.mxu0 0
      %1902 = vmatprep.subr.bf16.mxu0 0
      %1903 = vmatpush1.bf16.msra.mxu0 0
      %1904 = vmatprep.subr.bf16.mxu0 0
      %1905 = vmatpush1.bf16.msra.mxu0 0
      %1906 = vmatprep.subr.bf16.mxu0 0
      %1907 = vmatpush1.bf16.msra.mxu0 0
      %1908 = vmatprep.subr.bf16.mxu0 0
      %1909 = vmatpush1.bf16.msra.mxu0 0
      %1910 = vmatprep.subr.bf16.mxu0 0
      %1911 = vmatpush1.bf16.msra.mxu0 0
      %1912 = vmatprep.subr.bf16.mxu0 0
      %1913 = vmatpush1.bf16.msra.mxu0 0
      %1914 = vmatprep.subr.bf16.mxu0 0
      %1915 = vmatpush1.bf16.msra.mxu0 0
      %1916 = vmatprep.subr.bf16.mxu0 0
      %1917 = vmatpush1.bf16.msra.mxu0 0
      %1918 = vmatprep.subr.bf16.mxu0 0
      %1919 = vmatpush1.bf16.msra.mxu0 0
      %1920 = vmatprep.subr.bf16.mxu0 0
      %1921 = vmatpush1.bf16.msra.mxu0 0
      %1922 = vmatprep.subr.bf16.mxu0 0
      %1923 = vmatpush1.bf16.msra.mxu0 0
      %1924 = vmatprep.subr.bf16.mxu0 0
      %1925 = vmatpush1.bf16.msra.mxu0 0
      %1926 = vmatprep.mubr.bf16.mxu0 0
      %1927 = vmatmul.mubr.bf16.gmra.mrb[0].mxu0 %v727
      %v1928 = vpop.f32.mrb[0].mxu0
      %v1929 = vadd.f32 0.0, %v1928
      %v1930 = vpop.f32.mrb[0].mxu0
      %v1931 = vpop.f32.mrb[0].mxu0
      %v1932 = vadd.f32 0.0, %v1931
      %v1933 = vpop.f32.mrb[0].mxu0
      %1934 = vmatprep.mubr.bf16.mxu0 0
      %1935 = vmatmul.mubr.bf16.gmra.mrb[0].mxu0 %v730
      %v1936 = vpop.f32.mrb[0].mxu0
      %v1937 = vadd.f32 0.0, %v1936
      %v1938 = vpop.f32.mrb[0].mxu0
      %v1939 = vpop.f32.mrb[0].mxu0
      %v1940 = vadd.f32 0.0, %v1939
      %v1941 = vpop.f32.mrb[0].mxu0
      %1942 = vmatprep.mubr.bf16.mxu0 0
      %1943 = vmatmul.mubr.bf16.gmra.mrb[0].mxu0 %v733
      %v1944 = vpop.f32.mrb[0].mxu0
      %v1945 = vadd.f32 0.0, %v1944
      %v1946 = vpop.f32.mrb[0].mxu0
      %v1947 = vpop.f32.mrb[0].mxu0
      %v1948 = vadd.f32 0.0, %v1947
      %v1949 = vpop.f32.mrb[0].mxu0
      %1950 = vmatprep.mubr.bf16.mxu0 0
      %1951 = vmatmul.mubr.bf16.gmra.mrb[0].mxu0 %v736
      %v1952 = vpop.f32.mrb[0].mxu0
      %v1953 = vadd.f32 0.0, %v1952
      %v1954 = vpop.f32.mrb[0].mxu0
      %v1955 = vpop.f32.mrb[0].mxu0
      %v1956 = vadd.f32 0.0, %v1955
      %v1957 = vpop.f32.mrb[0].mxu0
      %1958 = vmatprep.mubr.bf16.mxu0 0
      %1959 = vmatmul.mubr.bf16.gmra.mrb[0].mxu0 %v739
      %v1960 = vpop.f32.mrb[0].mxu0
      %v1961 = vadd.f32 0.0, %v1960
      %v1962 = vpop.f32.mrb[0].mxu0
      %v1963 = vpop.f32.mrb[0].mxu0
      %v1964 = vadd.f32 0.0, %v1963
      %v1965 = vpop.f32.mrb[0].mxu0
      %1966 = vmatprep.mubr.bf16.mxu0 0
      %1967 = vmatmul.mubr.bf16.gmra.mrb[0].mxu0 %v742
      %v1968 = vpop.f32.mrb[0].mxu0
      %v1969 = vadd.f32 0.0, %v1968
      %v1970 = vpop.f32.mrb[0].mxu0
      %v1971 = vpop.f32.mrb[0].mxu0
      %v1972 = vadd.f32 0.0, %v1971
      %v1973 = vpop.f32.mrb[0].mxu0
      %1974 = vmatprep.mubr.bf16.mxu0 0
      %1975 = vmatmul.mubr.bf16.gmra.mrb[0].mxu0 %v745
      %v1976 = vpop.f32.mrb[0].mxu0
      %v1977 = vadd.f32 0.0, %v1976
      %v1978 = vpop.f32.mrb[0].mxu0
      %v1979 = vpop.f32.mrb[0].mxu0
      %v1980 = vadd.f32 0.0, %v1979
      %v1981 = vpop.f32.mrb[0].mxu0
      %1982 = vmatprep.mubr.bf16.mxu0 0
      %1983 = vmatmul.mubr.bf16.gmra.mrb[0].mxu0 %v748
      %v1984 = vpop.f32.mrb[0].mxu0
      %v1985 = vadd.f32 0.0, %v1984
      %v1986 = vpop.f32.mrb[0].mxu0
      %v1987 = vpop.f32.mrb[0].mxu0
      %v1988 = vadd.f32 0.0, %v1987
      %v1989 = vpop.f32.mrb[0].mxu0
      %1990 = vmatprep.mubr.bf16.mxu0 0
      %1991 = vmatmul.mubr.bf16.gmra.mrb[0].mxu0 %v751
      %v1992 = vpop.f32.mrb[0].mxu0
      %v1993 = vadd.f32 0.0, %v1992
      %v1994 = vpop.f32.mrb[0].mxu0
      %v1995 = vpop.f32.mrb[0].mxu0
      %v1996 = vadd.f32 0.0, %v1995
      %v1997 = vpop.f32.mrb[0].mxu0
      %1998 = vmatprep.mubr.bf16.mxu0 0
      %1999 = vmatmul.mubr.bf16.gmra.mrb[0].mxu0 %v754
      %v2000 = vpop.f32.mrb[0].mxu0
      %v2001 = vadd.f32 0.0, %v2000
      %v2002 = vpop.f32.mrb[0].mxu0
      %v2003 = vpop.f32.mrb[0].mxu0
      %v2004 = vadd.f32 0.0, %v2003
      %v2005 = vpop.f32.mrb[0].mxu0
      %2006 = vmatprep.mubr.bf16.mxu0 0
      %2007 = vmatmul.mubr.bf16.gmra.mrb[0].mxu0 %v757
      %v2008 = vpop.f32.mrb[0].mxu0
      %v2009 = vadd.f32 0.0, %v2008
      %v2010 = vpop.f32.mrb[0].mxu0
      %v2011 = vpop.f32.mrb[0].mxu0
      %v2012 = vadd.f32 0.0, %v2011
      %v2013 = vpop.f32.mrb[0].mxu0
      %2014 = vmatprep.mubr.bf16.mxu0 0
      %2015 = vmatmul.mubr.bf16.gmra.mrb[0].mxu0 %v760
      %v2016 = vpop.f32.mrb[0].mxu0
      %v2017 = vadd.f32 0.0, %v2016
      %v2018 = vpop.f32.mrb[0].mxu0
      %v2019 = vpop.f32.mrb[0].mxu0
      %v2020 = vadd.f32 0.0, %v2019
      %v2021 = vpop.f32.mrb[0].mxu0
      %2022 = vmatprep.mubr.bf16.mxu0 0
      %2023 = vmatmul.mubr.bf16.gmra.mrb[0].mxu0 %v763
      %v2024 = vpop.f32.mrb[0].mxu0
      %v2025 = vadd.f32 0.0, %v2024
      %v2026 = vpop.f32.mrb[0].mxu0
      %v2027 = vpop.f32.mrb[0].mxu0
      %v2028 = vadd.f32 0.0, %v2027
      %v2029 = vpop.f32.mrb[0].mxu0
      %2030 = vmatprep.mubr.bf16.mxu0 0
      %2031 = vmatmul.mubr.bf16.gmra.mrb[0].mxu0 %v766
      %v2032 = vpop.f32.mrb[0].mxu0
      %v2033 = vadd.f32 0.0, %v2032
      %v2034 = vpop.f32.mrb[0].mxu0
      %v2035 = vpop.f32.mrb[0].mxu0
      %v2036 = vadd.f32 0.0, %v2035
      %v2037 = vpop.f32.mrb[0].mxu0
      %2038 = vmatprep.mubr.bf16.mxu0 0
      %2039 = vmatmul.mubr.bf16.gmra.mrb[0].mxu0 %v769
      %v2040 = vpop.f32.mrb[0].mxu0
      %v2041 = vadd.f32 0.0, %v2040
      %v2042 = vpop.f32.mrb[0].mxu0
      %v2043 = vpop.f32.mrb[0].mxu0
      %v2044 = vadd.f32 0.0, %v2043
      %v2045 = vpop.f32.mrb[0].mxu0
      %2046 = vmatprep.mubr.bf16.mxu0 0
      %2047 = vmatmul.mubr.bf16.gmra.mrb[0].mxu0 %v1889
      %v2048 = vpop.f32.mrb[0].mxu0
      %v2049 = vadd.f32 0.0, %v2048
      %v2050 = vpop.f32.mrb[0].mxu0
      %v2051 = vpop.f32.mrb[0].mxu0
      %v2052 = vadd.f32 0.0, %v2051
      %v2053 = vpop.f32.mrb[0].mxu0
      %2054 = vdwg.mxu0
      %v2055 = vadd.f32 %v1827, %v1929
      %v2056 = vadd.f32 %v1828, %v1932
      %v2057 = vadd.f32 %v1829, %v1937
      %v2058 = vadd.f32 %v1830, %v1940
      %v2059 = vadd.f32 %v1831, %v1945
      %v2060 = vadd.f32 %v1832, %v1948
      %v2061 = vadd.f32 %v1833, %v1953
      %v2062 = vadd.f32 %v1834, %v1956
      %v2063 = vadd.f32 %v1835, %v1961
      %v2064 = vadd.f32 %v1836, %v1964
      %v2065 = vadd.f32 %v1837, %v1969
      %v2066 = vadd.f32 %v1838, %v1972
      %v2067 = vadd.f32 %v1839, %v1977
      %v2068 = vadd.f32 %v1840, %v1980
      %v2069 = vadd.f32 %v1841, %v1985
      %v2070 = vadd.f32 %v1842, %v1988
      %v2071 = vadd.f32 %v1843, %v1993
      %v2072 = vadd.f32 %v1844, %v1996
      %v2073 = vadd.f32 %v1845, %v2001
      %v2074 = vadd.f32 %v1846, %v2004
      %v2075 = vadd.f32 %v1847, %v2009
      %v2076 = vadd.f32 %v1848, %v2012
      %v2077 = vadd.f32 %v1849, %v2017
      %v2078 = vadd.f32 %v1850, %v2020
      %v2079 = vadd.f32 %v1851, %v2025
      %v2080 = vadd.f32 %v1852, %v2028
      %v2081 = vadd.f32 %v1853, %v2033
      %v2082 = vadd.f32 %v1854, %v2036
      %v2083 = vadd.f32 %v1855, %v2041
      %v2084 = vadd.f32 %v1856, %v2044
      %v2085 = vadd.f32 %v1857, %v2049
      %v2086 = vadd.f32 %v1858, %v2052
      %v2088 = vrot.slane %v278, 5
      %v2089 = vrot.slane %v2088, 4
      %v2090 = vrot.slane %v279, 5
      %v2091 = vsel %vm1246, %v2089, %v2090
      %v2092 = vrot.slane %v2090, 4
      %v2093 = vrot.slane %v280, 5
      %v2094 = vsel %vm1246, %v2092, %v2093
      %s2095 = scalar_lea.vmem %s1, 20
      %v2096 = vld [vmem:[%s2095] sm:$0xf]
      %v2097 = vunpack.c.l.b16 %v2091
      %v2098 = vunpack.c.l.b16 %v2094
      %v2099 = vpack.c.b16 %v2098, %v2097
      %v2101 = vsel %vm722, %v2099, 0
      %v2104 = vsel %vm771, %v2096, 0
      %2106 = vmatprep.subr.bf16.mxu0 0
      %2107 = vmatpush1.bf16.msra.mxu0 %v2104
      %2108 = vmatprep.subr.bf16.mxu0 0
      %2109 = vmatpush1.bf16.msra.mxu0 0
      %2110 = vmatprep.subr.bf16.mxu0 0
      %2111 = vmatpush1.bf16.msra.mxu0 0
      %2112 = vmatprep.subr.bf16.mxu0 0
      %2113 = vmatpush1.bf16.msra.mxu0 0
      %2114 = vmatprep.subr.bf16.mxu0 0
      %2115 = vmatpush1.bf16.msra.mxu0 0
      %2116 = vmatprep.subr.bf16.mxu0 0
      %2117 = vmatpush1.bf16.msra.mxu0 0
      %2118 = vmatprep.subr.bf16.mxu0 0
      %2119 = vmatpush1.bf16.msra.mxu0 0
      %2120 = vmatprep.subr.bf16.mxu0 0
      %2121 = vmatpush1.bf16.msra.mxu0 0
      %2122 = vmatprep.subr.bf16.mxu0 0
      %2123 = vmatpush1.bf16.msra.mxu0 0
      %2124 = vmatprep.subr.bf16.mxu0 0
      %2125 = vmatpush1.bf16.msra.mxu0 0
      %2126 = vmatprep.subr.bf16.mxu0 0
      %2127 = vmatpush1.bf16.msra.mxu0 0
      %2128 = vmatprep.subr.bf16.mxu0 0
      %2129 = vmatpush1.bf16.msra.mxu0 0
      %2130 = vmatprep.subr.bf16.mxu0 0
      %2131 = vmatpush1.bf16.msra.mxu0 0
      %2132 = vmatprep.subr.bf16.mxu0 0
      %2133 = vmatpush1.bf16.msra.mxu0 0
      %2134 = vmatprep.subr.bf16.mxu0 0
      %2135 = vmatpush1.bf16.msra.mxu0 0
      %2136 = vmatprep.subr.bf16.mxu0 0
      %2137 = vmatpush1.bf16.msra.mxu0 0
      %2138 = vmatprep.mubr.bf16.mxu0 0
      %2139 = vmatmul.mubr.bf16.gmra.mrb[0].mxu0 %v1413
      %v2140 = vpop.f32.mrb[0].mxu0
      %v2141 = vadd.f32 0.0, %v2140
      %v2142 = vpop.f32.mrb[0].mxu0
      %v2143 = vpop.f32.mrb[0].mxu0
      %v2144 = vadd.f32 0.0, %v2143
      %v2145 = vpop.f32.mrb[0].mxu0
      %2146 = vmatprep.mubr.bf16.mxu0 0
      %2147 = vmatmul.mubr.bf16.gmra.mrb[0].mxu0 %v1416
      %v2148 = vpop.f32.mrb[0].mxu0
      %v2149 = vadd.f32 0.0, %v2148
      %v2150 = vpop.f32.mrb[0].mxu0
      %v2151 = vpop.f32.mrb[0].mxu0
      %v2152 = vadd.f32 0.0, %v2151
      %v2153 = vpop.f32.mrb[0].mxu0
      %2154 = vmatprep.mubr.bf16.mxu0 0
      %2155 = vmatmul.mubr.bf16.gmra.mrb[0].mxu0 %v1419
      %v2156 = vpop.f32.mrb[0].mxu0
      %v2157 = vadd.f32 0.0, %v2156
      %v2158 = vpop.f32.mrb[0].mxu0
      %v2159 = vpop.f32.mrb[0].mxu0
      %v2160 = vadd.f32 0.0, %v2159
      %v2161 = vpop.f32.mrb[0].mxu0
      %2162 = vmatprep.mubr.bf16.mxu0 0
      %2163 = vmatmul.mubr.bf16.gmra.mrb[0].mxu0 %v1422
      %v2164 = vpop.f32.mrb[0].mxu0
      %v2165 = vadd.f32 0.0, %v2164
      %v2166 = vpop.f32.mrb[0].mxu0
      %v2167 = vpop.f32.mrb[0].mxu0
      %v2168 = vadd.f32 0.0, %v2167
      %v2169 = vpop.f32.mrb[0].mxu0
      %2170 = vmatprep.mubr.bf16.mxu0 0
      %2171 = vmatmul.mubr.bf16.gmra.mrb[0].mxu0 %v1425
      %v2172 = vpop.f32.mrb[0].mxu0
      %v2173 = vadd.f32 0.0, %v2172
      %v2174 = vpop.f32.mrb[0].mxu0
      %v2175 = vpop.f32.mrb[0].mxu0
      %v2176 = vadd.f32 0.0, %v2175
      %v2177 = vpop.f32.mrb[0].mxu0
      %2178 = vmatprep.mubr.bf16.mxu0 0
      %2179 = vmatmul.mubr.bf16.gmra.mrb[0].mxu0 %v1428
      %v2180 = vpop.f32.mrb[0].mxu0
      %v2181 = vadd.f32 0.0, %v2180
      %v2182 = vpop.f32.mrb[0].mxu0
      %v2183 = vpop.f32.mrb[0].mxu0
      %v2184 = vadd.f32 0.0, %v2183
      %v2185 = vpop.f32.mrb[0].mxu0
      %2186 = vmatprep.mubr.bf16.mxu0 0
      %2187 = vmatmul.mubr.bf16.gmra.mrb[0].mxu0 %v1431
      %v2188 = vpop.f32.mrb[0].mxu0
      %v2189 = vadd.f32 0.0, %v2188
      %v2190 = vpop.f32.mrb[0].mxu0
      %v2191 = vpop.f32.mrb[0].mxu0
      %v2192 = vadd.f32 0.0, %v2191
      %v2193 = vpop.f32.mrb[0].mxu0
      %2194 = vmatprep.mubr.bf16.mxu0 0
      %2195 = vmatmul.mubr.bf16.gmra.mrb[0].mxu0 %v1434
      %v2196 = vpop.f32.mrb[0].mxu0
      %v2197 = vadd.f32 0.0, %v2196
      %v2198 = vpop.f32.mrb[0].mxu0
      %v2199 = vpop.f32.mrb[0].mxu0
      %v2200 = vadd.f32 0.0, %v2199
      %v2201 = vpop.f32.mrb[0].mxu0
      %2202 = vmatprep.mubr.bf16.mxu0 0
      %2203 = vmatmul.mubr.bf16.gmra.mrb[0].mxu0 %v1437
      %v2204 = vpop.f32.mrb[0].mxu0
      %v2205 = vadd.f32 0.0, %v2204
      %v2206 = vpop.f32.mrb[0].mxu0
      %v2207 = vpop.f32.mrb[0].mxu0
      %v2208 = vadd.f32 0.0, %v2207
      %v2209 = vpop.f32.mrb[0].mxu0
      %2210 = vmatprep.mubr.bf16.mxu0 0
      %2211 = vmatmul.mubr.bf16.gmra.mrb[0].mxu0 %v1440
      %v2212 = vpop.f32.mrb[0].mxu0
      %v2213 = vadd.f32 0.0, %v2212
      %v2214 = vpop.f32.mrb[0].mxu0
      %v2215 = vpop.f32.mrb[0].mxu0
      %v2216 = vadd.f32 0.0, %v2215
      %v2217 = vpop.f32.mrb[0].mxu0
      %2218 = vmatprep.mubr.bf16.mxu0 0
      %2219 = vmatmul.mubr.bf16.gmra.mrb[0].mxu0 %v1443
      %v2220 = vpop.f32.mrb[0].mxu0
      %v2221 = vadd.f32 0.0, %v2220
      %v2222 = vpop.f32.mrb[0].mxu0
      %v2223 = vpop.f32.mrb[0].mxu0
      %v2224 = vadd.f32 0.0, %v2223
      %v2225 = vpop.f32.mrb[0].mxu0
      %2226 = vmatprep.mubr.bf16.mxu0 0
      %2227 = vmatmul.mubr.bf16.gmra.mrb[0].mxu0 %v1446
      %v2228 = vpop.f32.mrb[0].mxu0
      %v2229 = vadd.f32 0.0, %v2228
      %v2230 = vpop.f32.mrb[0].mxu0
      %v2231 = vpop.f32.mrb[0].mxu0
      %v2232 = vadd.f32 0.0, %v2231
      %v2233 = vpop.f32.mrb[0].mxu0
      %2234 = vmatprep.mubr.bf16.mxu0 0
      %2235 = vmatmul.mubr.bf16.gmra.mrb[0].mxu0 %v1449
      %v2236 = vpop.f32.mrb[0].mxu0
      %v2237 = vadd.f32 0.0, %v2236
      %v2238 = vpop.f32.mrb[0].mxu0
      %v2239 = vpop.f32.mrb[0].mxu0
      %v2240 = vadd.f32 0.0, %v2239
      %v2241 = vpop.f32.mrb[0].mxu0
      %2242 = vmatprep.mubr.bf16.mxu0 0
      %2243 = vmatmul.mubr.bf16.gmra.mrb[0].mxu0 %v1452
      %v2244 = vpop.f32.mrb[0].mxu0
      %v2245 = vadd.f32 0.0, %v2244
      %v2246 = vpop.f32.mrb[0].mxu0
      %v2247 = vpop.f32.mrb[0].mxu0
      %v2248 = vadd.f32 0.0, %v2247
      %v2249 = vpop.f32.mrb[0].mxu0
      %2250 = vmatprep.mubr.bf16.mxu0 0
      %2251 = vmatmul.mubr.bf16.gmra.mrb[0].mxu0 %v1455
      %v2252 = vpop.f32.mrb[0].mxu0
      %v2253 = vadd.f32 0.0, %v2252
      %v2254 = vpop.f32.mrb[0].mxu0
      %v2255 = vpop.f32.mrb[0].mxu0
      %v2256 = vadd.f32 0.0, %v2255
      %v2257 = vpop.f32.mrb[0].mxu0
      %2258 = vmatprep.mubr.bf16.mxu0 0
      %2259 = vmatmul.mubr.bf16.gmra.mrb[0].mxu0 %v2101
      %v2260 = vpop.f32.mrb[0].mxu0
      %v2261 = vadd.f32 0.0, %v2260
      %v2262 = vpop.f32.mrb[0].mxu0
      %v2263 = vpop.f32.mrb[0].mxu0
      %v2264 = vadd.f32 0.0, %v2263
      %v2265 = vpop.f32.mrb[0].mxu0
      %2266 = vdwg.mxu0
      %v2267 = vadd.f32 %v2055, %v2141
      %v2268 = vadd.f32 %v2056, %v2144
      %v2269 = vadd.f32 %v2057, %v2149
      %v2270 = vadd.f32 %v2058, %v2152
      %v2271 = vadd.f32 %v2059, %v2157
      %v2272 = vadd.f32 %v2060, %v2160
      %v2273 = vadd.f32 %v2061, %v2165
      %v2274 = vadd.f32 %v2062, %v2168
      %v2275 = vadd.f32 %v2063, %v2173
      %v2276 = vadd.f32 %v2064, %v2176
      %v2277 = vadd.f32 %v2065, %v2181
      %v2278 = vadd.f32 %v2066, %v2184
      %v2279 = vadd.f32 %v2067, %v2189
      %v2280 = vadd.f32 %v2068, %v2192
      %v2281 = vadd.f32 %v2069, %v2197
      %v2282 = vadd.f32 %v2070, %v2200
      %v2283 = vadd.f32 %v2071, %v2205
      %v2284 = vadd.f32 %v2072, %v2208
      %v2285 = vadd.f32 %v2073, %v2213
      %v2286 = vadd.f32 %v2074, %v2216
      %v2287 = vadd.f32 %v2075, %v2221
      %v2288 = vadd.f32 %v2076, %v2224
      %v2289 = vadd.f32 %v2077, %v2229
      %v2290 = vadd.f32 %v2078, %v2232
      %v2291 = vadd.f32 %v2079, %v2237
      %v2292 = vadd.f32 %v2080, %v2240
      %v2293 = vadd.f32 %v2081, %v2245
      %v2294 = vadd.f32 %v2082, %v2248
      %v2295 = vadd.f32 %v2083, %v2253
      %v2296 = vadd.f32 %v2084, %v2256
      %v2297 = vadd.f32 %v2085, %v2261
      %v2298 = vadd.f32 %v2086, %v2264
      %s2299 = scalar_lea.vmem %s1, 24
      %v2300 = vld [vmem:[%s2299] sm:$0xf]
      %v2303 = vunpack.c.l.b16 %v281
      %v2304 = vunpack.c.l.b16 %v282
      %v2305 = vpack.c.b16 %v2304, %v2303
      %v2307 = vsel %vm722, %v2305, 0
      %v2310 = vsel %vm771, %v2300, 0
      %2312 = vmatprep.subr.bf16.mxu0 0
      %2313 = vmatpush1.bf16.msra.mxu0 %v2310
      %2314 = vmatprep.subr.bf16.mxu0 0
      %2315 = vmatpush1.bf16.msra.mxu0 0
      %2316 = vmatprep.subr.bf16.mxu0 0
      %2317 = vmatpush1.bf16.msra.mxu0 0
      %2318 = vmatprep.subr.bf16.mxu0 0
      %2319 = vmatpush1.bf16.msra.mxu0 0
      %2320 = vmatprep.subr.bf16.mxu0 0
      %2321 = vmatpush1.bf16.msra.mxu0 0
      %2322 = vmatprep.subr.bf16.mxu0 0
      %2323 = vmatpush1.bf16.msra.mxu0 0
      %2324 = vmatprep.subr.bf16.mxu0 0
      %2325 = vmatpush1.bf16.msra.mxu0 0
      %2326 = vmatprep.subr.bf16.mxu0 0
      %2327 = vmatpush1.bf16.msra.mxu0 0
      %2328 = vmatprep.subr.bf16.mxu0 0
      %2329 = vmatpush1.bf16.msra.mxu0 0
      %2330 = vmatprep.subr.bf16.mxu0 0
      %2331 = vmatpush1.bf16.msra.mxu0 0
      %2332 = vmatprep.subr.bf16.mxu0 0
      %2333 = vmatpush1.bf16.msra.mxu0 0
      %2334 = vmatprep.subr.bf16.mxu0 0
      %2335 = vmatpush1.bf16.msra.mxu0 0
      %2336 = vmatprep.subr.bf16.mxu0 0
      %2337 = vmatpush1.bf16.msra.mxu0 0
      %2338 = vmatprep.subr.bf16.mxu0 0
      %2339 = vmatpush1.bf16.msra.mxu0 0
      %2340 = vmatprep.subr.bf16.mxu0 0
      %2341 = vmatpush1.bf16.msra.mxu0 0
      %2342 = vmatprep.subr.bf16.mxu0 0
      %2343 = vmatpush1.bf16.msra.mxu0 0
      %2344 = vmatprep.mubr.bf16.mxu0 0
      %2345 = vmatmul.mubr.bf16.gmra.mrb[0].mxu0 %v1023
      %v2346 = vpop.f32.mrb[0].mxu0
      %v2347 = vadd.f32 0.0, %v2346
      %v2348 = vpop.f32.mrb[0].mxu0
      %v2349 = vpop.f32.mrb[0].mxu0
      %v2350 = vadd.f32 0.0, %v2349
      %v2351 = vpop.f32.mrb[0].mxu0
      %2352 = vmatprep.mubr.bf16.mxu0 0
      %2353 = vmatmul.mubr.bf16.gmra.mrb[0].mxu0 %v1026
      %v2354 = vpop.f32.mrb[0].mxu0
      %v2355 = vadd.f32 0.0, %v2354
      %v2356 = vpop.f32.mrb[0].mxu0
      %v2357 = vpop.f32.mrb[0].mxu0
      %v2358 = vadd.f32 0.0, %v2357
      %v2359 = vpop.f32.mrb[0].mxu0
      %2360 = vmatprep.mubr.bf16.mxu0 0
      %2361 = vmatmul.mubr.bf16.gmra.mrb[0].mxu0 %v1029
      %v2362 = vpop.f32.mrb[0].mxu0
      %v2363 = vadd.f32 0.0, %v2362
      %v2364 = vpop.f32.mrb[0].mxu0
      %v2365 = vpop.f32.mrb[0].mxu0
      %v2366 = vadd.f32 0.0, %v2365
      %v2367 = vpop.f32.mrb[0].mxu0
      %2368 = vmatprep.mubr.bf16.mxu0 0
      %2369 = vmatmul.mubr.bf16.gmra.mrb[0].mxu0 %v1032
      %v2370 = vpop.f32.mrb[0].mxu0
      %v2371 = vadd.f32 0.0, %v2370
      %v2372 = vpop.f32.mrb[0].mxu0
      %v2373 = vpop.f32.mrb[0].mxu0
      %v2374 = vadd.f32 0.0, %v2373
      %v2375 = vpop.f32.mrb[0].mxu0
      %2376 = vmatprep.mubr.bf16.mxu0 0
      %2377 = vmatmul.mubr.bf16.gmra.mrb[0].mxu0 %v1035
      %v2378 = vpop.f32.mrb[0].mxu0
      %v2379 = vadd.f32 0.0, %v2378
      %v2380 = vpop.f32.mrb[0].mxu0
      %v2381 = vpop.f32.mrb[0].mxu0
      %v2382 = vadd.f32 0.0, %v2381
      %v2383 = vpop.f32.mrb[0].mxu0
      %2384 = vmatprep.mubr.bf16.mxu0 0
      %2385 = vmatmul.mubr.bf16.gmra.mrb[0].mxu0 %v1038
      %v2386 = vpop.f32.mrb[0].mxu0
      %v2387 = vadd.f32 0.0, %v2386
      %v2388 = vpop.f32.mrb[0].mxu0
      %v2389 = vpop.f32.mrb[0].mxu0
      %v2390 = vadd.f32 0.0, %v2389
      %v2391 = vpop.f32.mrb[0].mxu0
      %2392 = vmatprep.mubr.bf16.mxu0 0
      %2393 = vmatmul.mubr.bf16.gmra.mrb[0].mxu0 %v1041
      %v2394 = vpop.f32.mrb[0].mxu0
      %v2395 = vadd.f32 0.0, %v2394
      %v2396 = vpop.f32.mrb[0].mxu0
      %v2397 = vpop.f32.mrb[0].mxu0
      %v2398 = vadd.f32 0.0, %v2397
      %v2399 = vpop.f32.mrb[0].mxu0
      %2400 = vmatprep.mubr.bf16.mxu0 0
      %2401 = vmatmul.mubr.bf16.gmra.mrb[0].mxu0 %v1044
      %v2402 = vpop.f32.mrb[0].mxu0
      %v2403 = vadd.f32 0.0, %v2402
      %v2404 = vpop.f32.mrb[0].mxu0
      %v2405 = vpop.f32.mrb[0].mxu0
      %v2406 = vadd.f32 0.0, %v2405
      %v2407 = vpop.f32.mrb[0].mxu0
      %2408 = vmatprep.mubr.bf16.mxu0 0
      %2409 = vmatmul.mubr.bf16.gmra.mrb[0].mxu0 %v1047
      %v2410 = vpop.f32.mrb[0].mxu0
      %v2411 = vadd.f32 0.0, %v2410
      %v2412 = vpop.f32.mrb[0].mxu0
      %v2413 = vpop.f32.mrb[0].mxu0
      %v2414 = vadd.f32 0.0, %v2413
      %v2415 = vpop.f32.mrb[0].mxu0
      %2416 = vmatprep.mubr.bf16.mxu0 0
      %2417 = vmatmul.mubr.bf16.gmra.mrb[0].mxu0 %v1050
      %v2418 = vpop.f32.mrb[0].mxu0
      %v2419 = vadd.f32 0.0, %v2418
      %v2420 = vpop.f32.mrb[0].mxu0
      %v2421 = vpop.f32.mrb[0].mxu0
      %v2422 = vadd.f32 0.0, %v2421
      %v2423 = vpop.f32.mrb[0].mxu0
      %2424 = vmatprep.mubr.bf16.mxu0 0
      %2425 = vmatmul.mubr.bf16.gmra.mrb[0].mxu0 %v1053
      %v2426 = vpop.f32.mrb[0].mxu0
      %v2427 = vadd.f32 0.0, %v2426
      %v2428 = vpop.f32.mrb[0].mxu0
      %v2429 = vpop.f32.mrb[0].mxu0
      %v2430 = vadd.f32 0.0, %v2429
      %v2431 = vpop.f32.mrb[0].mxu0
      %2432 = vmatprep.mubr.bf16.mxu0 0
      %2433 = vmatmul.mubr.bf16.gmra.mrb[0].mxu0 %v1056
      %v2434 = vpop.f32.mrb[0].mxu0
      %v2435 = vadd.f32 0.0, %v2434
      %v2436 = vpop.f32.mrb[0].mxu0
      %v2437 = vpop.f32.mrb[0].mxu0
      %v2438 = vadd.f32 0.0, %v2437
      %v2439 = vpop.f32.mrb[0].mxu0
      %2440 = vmatprep.mubr.bf16.mxu0 0
      %2441 = vmatmul.mubr.bf16.gmra.mrb[0].mxu0 %v1059
      %v2442 = vpop.f32.mrb[0].mxu0
      %v2443 = vadd.f32 0.0, %v2442
      %v2444 = vpop.f32.mrb[0].mxu0
      %v2445 = vpop.f32.mrb[0].mxu0
      %v2446 = vadd.f32 0.0, %v2445
      %v2447 = vpop.f32.mrb[0].mxu0
      %2448 = vmatprep.mubr.bf16.mxu0 0
      %2449 = vmatmul.mubr.bf16.gmra.mrb[0].mxu0 %v1062
      %v2450 = vpop.f32.mrb[0].mxu0
      %v2451 = vadd.f32 0.0, %v2450
      %v2452 = vpop.f32.mrb[0].mxu0
      %v2453 = vpop.f32.mrb[0].mxu0
      %v2454 = vadd.f32 0.0, %v2453
      %v2455 = vpop.f32.mrb[0].mxu0
      %2456 = vmatprep.mubr.bf16.mxu0 0
      %2457 = vmatmul.mubr.bf16.gmra.mrb[0].mxu0 %v1661
      %v2458 = vpop.f32.mrb[0].mxu0
      %v2459 = vadd.f32 0.0, %v2458
      %v2460 = vpop.f32.mrb[0].mxu0
      %v2461 = vpop.f32.mrb[0].mxu0
      %v2462 = vadd.f32 0.0, %v2461
      %v2463 = vpop.f32.mrb[0].mxu0
      %2464 = vmatprep.mubr.bf16.mxu0 0
      %2465 = vmatmul.mubr.bf16.gmra.mrb[0].mxu0 %v2307
      %v2466 = vpop.f32.mrb[0].mxu0
      %v2467 = vadd.f32 0.0, %v2466
      %v2468 = vpop.f32.mrb[0].mxu0
      %v2469 = vpop.f32.mrb[0].mxu0
      %v2470 = vadd.f32 0.0, %v2469
      %v2471 = vpop.f32.mrb[0].mxu0
      %2472 = vdwg.mxu0
      %v2473 = vadd.f32 %v2267, %v2347
      %v2474 = vadd.f32 %v2268, %v2350
      %v2475 = vadd.f32 %v2269, %v2355
      %v2476 = vadd.f32 %v2270, %v2358
      %v2477 = vadd.f32 %v2271, %v2363
      %v2478 = vadd.f32 %v2272, %v2366
      %v2479 = vadd.f32 %v2273, %v2371
      %v2480 = vadd.f32 %v2274, %v2374
      %v2481 = vadd.f32 %v2275, %v2379
      %v2482 = vadd.f32 %v2276, %v2382
      %v2483 = vadd.f32 %v2277, %v2387
      %v2484 = vadd.f32 %v2278, %v2390
      %v2485 = vadd.f32 %v2279, %v2395
      %v2486 = vadd.f32 %v2280, %v2398
      %v2487 = vadd.f32 %v2281, %v2403
      %v2488 = vadd.f32 %v2282, %v2406
      %v2489 = vadd.f32 %v2283, %v2411
      %v2490 = vadd.f32 %v2284, %v2414
      %v2491 = vadd.f32 %v2285, %v2419
      %v2492 = vadd.f32 %v2286, %v2422
      %v2493 = vadd.f32 %v2287, %v2427
      %v2494 = vadd.f32 %v2288, %v2430
      %v2495 = vadd.f32 %v2289, %v2435
      %v2496 = vadd.f32 %v2290, %v2438
      %v2497 = vadd.f32 %v2291, %v2443
      %v2498 = vadd.f32 %v2292, %v2446
      %v2499 = vadd.f32 %v2293, %v2451
      %v2500 = vadd.f32 %v2294, %v2454
      %v2501 = vadd.f32 %v2295, %v2459
      %v2502 = vadd.f32 %v2296, %v2462
      %v2503 = vadd.f32 %v2297, %v2467
      %v2504 = vadd.f32 %v2298, %v2470
      %v2506 = vshrl.u32 %v281, 16
      %v2508 = vrot.slane %v2506, 4
      %v2509 = vshll.u32 %v281, 16
      %v2511 = vrot.slane %v2509, 5
      %v2512 = vor.u32 %v2508, %v2511
      %v2513 = vrot.slane %v2512, 4
      %v2515 = vshll.u32 %v282, 16
      %v2517 = vrot.slane %v2515, 5
      %v2518 = vsel %vm287, %v2513, %v2517
      %v2519 = vshrl.u32 %v282, 16
      %v2521 = vrot.slane %v2519, 4
      %v2522 = vor.u32 %v2521, %v2517
      %v2523 = vrot.slane %v2522, 4
      %v2525 = vshll.u32 %v283, 16
      %v2527 = vrot.slane %v2525, 5
      %v2528 = vsel %vm287, %v2523, %v2527
      %s2529 = scalar_lea.vmem %s1, 28
      %v2530 = vld [vmem:[%s2529] sm:$0xf]
      %v2531 = vunpack.c.l.b16 %v2518
      %v2532 = vunpack.c.l.b16 %v2528
      %v2533 = vpack.c.b16 %v2532, %v2531
      %v2535 = vsel %vm722, %v2533, 0
      %v2538 = vsel %vm771, %v2530, 0
      %2540 = vmatprep.subr.bf16.mxu0 0
      %2541 = vmatpush1.bf16.msra.mxu0 %v2538
      %2542 = vmatprep.subr.bf16.mxu0 0
      %2543 = vmatpush1.bf16.msra.mxu0 0
      %2544 = vmatprep.subr.bf16.mxu0 0
      %2545 = vmatpush1.bf16.msra.mxu0 0
      %2546 = vmatprep.subr.bf16.mxu0 0
      %2547 = vmatpush1.bf16.msra.mxu0 0
      %2548 = vmatprep.subr.bf16.mxu0 0
      %2549 = vmatpush1.bf16.msra.mxu0 0
      %2550 = vmatprep.subr.bf16.mxu0 0
      %2551 = vmatpush1.bf16.msra.mxu0 0
      %2552 = vmatprep.subr.bf16.mxu0 0
      %2553 = vmatpush1.bf16.msra.mxu0 0
      %2554 = vmatprep.subr.bf16.mxu0 0
      %2555 = vmatpush1.bf16.msra.mxu0 0
      %2556 = vmatprep.subr.bf16.mxu0 0
      %2557 = vmatpush1.bf16.msra.mxu0 0
      %2558 = vmatprep.subr.bf16.mxu0 0
      %2559 = vmatpush1.bf16.msra.mxu0 0
      %2560 = vmatprep.subr.bf16.mxu0 0
      %2561 = vmatpush1.bf16.msra.mxu0 0
      %2562 = vmatprep.subr.bf16.mxu0 0
      %2563 = vmatpush1.bf16.msra.mxu0 0
      %2564 = vmatprep.subr.bf16.mxu0 0
      %2565 = vmatpush1.bf16.msra.mxu0 0
      %2566 = vmatprep.subr.bf16.mxu0 0
      %2567 = vmatpush1.bf16.msra.mxu0 0
      %2568 = vmatprep.subr.bf16.mxu0 0
      %2569 = vmatpush1.bf16.msra.mxu0 0
      %2570 = vmatprep.subr.bf16.mxu0 0
      %2571 = vmatpush1.bf16.msra.mxu0 0
      %2572 = vmatprep.mubr.bf16.mxu0 0
      %2573 = vmatmul.mubr.bf16.gmra.mrb[0].mxu0 %v730
      %v2574 = vpop.f32.mrb[0].mxu0
      %v2575 = vadd.f32 0.0, %v2574
      %v2576 = vpop.f32.mrb[0].mxu0
      %v2577 = vpop.f32.mrb[0].mxu0
      %v2578 = vadd.f32 0.0, %v2577
      %v2579 = vpop.f32.mrb[0].mxu0
      %2580 = vmatprep.mubr.bf16.mxu0 0
      %2581 = vmatmul.mubr.bf16.gmra.mrb[0].mxu0 %v733
      %v2582 = vpop.f32.mrb[0].mxu0
      %v2583 = vadd.f32 0.0, %v2582
      %v2584 = vpop.f32.mrb[0].mxu0
      %v2585 = vpop.f32.mrb[0].mxu0
      %v2586 = vadd.f32 0.0, %v2585
      %v2587 = vpop.f32.mrb[0].mxu0
      %2588 = vmatprep.mubr.bf16.mxu0 0
      %2589 = vmatmul.mubr.bf16.gmra.mrb[0].mxu0 %v736
      %v2590 = vpop.f32.mrb[0].mxu0
      %v2591 = vadd.f32 0.0, %v2590
      %v2592 = vpop.f32.mrb[0].mxu0
      %v2593 = vpop.f32.mrb[0].mxu0
      %v2594 = vadd.f32 0.0, %v2593
      %v2595 = vpop.f32.mrb[0].mxu0
      %2596 = vmatprep.mubr.bf16.mxu0 0
      %2597 = vmatmul.mubr.bf16.gmra.mrb[0].mxu0 %v739
      %v2598 = vpop.f32.mrb[0].mxu0
      %v2599 = vadd.f32 0.0, %v2598
      %v2600 = vpop.f32.mrb[0].mxu0
      %v2601 = vpop.f32.mrb[0].mxu0
      %v2602 = vadd.f32 0.0, %v2601
      %v2603 = vpop.f32.mrb[0].mxu0
      %2604 = vmatprep.mubr.bf16.mxu0 0
      %2605 = vmatmul.mubr.bf16.gmra.mrb[0].mxu0 %v742
      %v2606 = vpop.f32.mrb[0].mxu0
      %v2607 = vadd.f32 0.0, %v2606
      %v2608 = vpop.f32.mrb[0].mxu0
      %v2609 = vpop.f32.mrb[0].mxu0
      %v2610 = vadd.f32 0.0, %v2609
      %v2611 = vpop.f32.mrb[0].mxu0
      %2612 = vmatprep.mubr.bf16.mxu0 0
      %2613 = vmatmul.mubr.bf16.gmra.mrb[0].mxu0 %v745
      %v2614 = vpop.f32.mrb[0].mxu0
      %v2615 = vadd.f32 0.0, %v2614
      %v2616 = vpop.f32.mrb[0].mxu0
      %v2617 = vpop.f32.mrb[0].mxu0
      %v2618 = vadd.f32 0.0, %v2617
      %v2619 = vpop.f32.mrb[0].mxu0
      %2620 = vmatprep.mubr.bf16.mxu0 0
      %2621 = vmatmul.mubr.bf16.gmra.mrb[0].mxu0 %v748
      %v2622 = vpop.f32.mrb[0].mxu0
      %v2623 = vadd.f32 0.0, %v2622
      %v2624 = vpop.f32.mrb[0].mxu0
      %v2625 = vpop.f32.mrb[0].mxu0
      %v2626 = vadd.f32 0.0, %v2625
      %v2627 = vpop.f32.mrb[0].mxu0
      %2628 = vmatprep.mubr.bf16.mxu0 0
      %2629 = vmatmul.mubr.bf16.gmra.mrb[0].mxu0 %v751
      %v2630 = vpop.f32.mrb[0].mxu0
      %v2631 = vadd.f32 0.0, %v2630
      %v2632 = vpop.f32.mrb[0].mxu0
      %v2633 = vpop.f32.mrb[0].mxu0
      %v2634 = vadd.f32 0.0, %v2633
      %v2635 = vpop.f32.mrb[0].mxu0
      %2636 = vmatprep.mubr.bf16.mxu0 0
      %2637 = vmatmul.mubr.bf16.gmra.mrb[0].mxu0 %v754
      %v2638 = vpop.f32.mrb[0].mxu0
      %v2639 = vadd.f32 0.0, %v2638
      %v2640 = vpop.f32.mrb[0].mxu0
      %v2641 = vpop.f32.mrb[0].mxu0
      %v2642 = vadd.f32 0.0, %v2641
      %v2643 = vpop.f32.mrb[0].mxu0
      %2644 = vmatprep.mubr.bf16.mxu0 0
      %2645 = vmatmul.mubr.bf16.gmra.mrb[0].mxu0 %v757
      %v2646 = vpop.f32.mrb[0].mxu0
      %v2647 = vadd.f32 0.0, %v2646
      %v2648 = vpop.f32.mrb[0].mxu0
      %v2649 = vpop.f32.mrb[0].mxu0
      %v2650 = vadd.f32 0.0, %v2649
      %v2651 = vpop.f32.mrb[0].mxu0
      %2652 = vmatprep.mubr.bf16.mxu0 0
      %2653 = vmatmul.mubr.bf16.gmra.mrb[0].mxu0 %v760
      %v2654 = vpop.f32.mrb[0].mxu0
      %v2655 = vadd.f32 0.0, %v2654
      %v2656 = vpop.f32.mrb[0].mxu0
      %v2657 = vpop.f32.mrb[0].mxu0
      %v2658 = vadd.f32 0.0, %v2657
      %v2659 = vpop.f32.mrb[0].mxu0
      %2660 = vmatprep.mubr.bf16.mxu0 0
      %2661 = vmatmul.mubr.bf16.gmra.mrb[0].mxu0 %v763
      %v2662 = vpop.f32.mrb[0].mxu0
      %v2663 = vadd.f32 0.0, %v2662
      %v2664 = vpop.f32.mrb[0].mxu0
      %v2665 = vpop.f32.mrb[0].mxu0
      %v2666 = vadd.f32 0.0, %v2665
      %v2667 = vpop.f32.mrb[0].mxu0
      %2668 = vmatprep.mubr.bf16.mxu0 0
      %2669 = vmatmul.mubr.bf16.gmra.mrb[0].mxu0 %v766
      %v2670 = vpop.f32.mrb[0].mxu0
      %v2671 = vadd.f32 0.0, %v2670
      %v2672 = vpop.f32.mrb[0].mxu0
      %v2673 = vpop.f32.mrb[0].mxu0
      %v2674 = vadd.f32 0.0, %v2673
      %v2675 = vpop.f32.mrb[0].mxu0
      %2676 = vmatprep.mubr.bf16.mxu0 0
      %2677 = vmatmul.mubr.bf16.gmra.mrb[0].mxu0 %v769
      %v2678 = vpop.f32.mrb[0].mxu0
      %v2679 = vadd.f32 0.0, %v2678
      %v2680 = vpop.f32.mrb[0].mxu0
      %v2681 = vpop.f32.mrb[0].mxu0
      %v2682 = vadd.f32 0.0, %v2681
      %v2683 = vpop.f32.mrb[0].mxu0
      %2684 = vmatprep.mubr.bf16.mxu0 0
      %2685 = vmatmul.mubr.bf16.gmra.mrb[0].mxu0 %v1889
      %v2686 = vpop.f32.mrb[0].mxu0
      %v2687 = vadd.f32 0.0, %v2686
      %v2688 = vpop.f32.mrb[0].mxu0
      %v2689 = vpop.f32.mrb[0].mxu0
      %v2690 = vadd.f32 0.0, %v2689
      %v2691 = vpop.f32.mrb[0].mxu0
      %2692 = vmatprep.mubr.bf16.mxu0 0
      %2693 = vmatmul.mubr.bf16.gmra.mrb[0].mxu0 %v2535
      %v2694 = vpop.f32.mrb[0].mxu0
      %v2695 = vadd.f32 0.0, %v2694
      %v2696 = vpop.f32.mrb[0].mxu0
      %v2697 = vpop.f32.mrb[0].mxu0
      %v2698 = vadd.f32 0.0, %v2697
      %v2699 = vpop.f32.mrb[0].mxu0
      %2700 = vdwg.mxu0
      %v2701 = vadd.f32 %v2473, %v2575
      %v2702 = vadd.f32 %v2474, %v2578
      %v2703 = vadd.f32 %v2475, %v2583
      %v2704 = vadd.f32 %v2476, %v2586
      %v2705 = vadd.f32 %v2477, %v2591
      %v2706 = vadd.f32 %v2478, %v2594
      %v2707 = vadd.f32 %v2479, %v2599
      %v2708 = vadd.f32 %v2480, %v2602
      %v2709 = vadd.f32 %v2481, %v2607
      %v2710 = vadd.f32 %v2482, %v2610
      %v2711 = vadd.f32 %v2483, %v2615
      %v2712 = vadd.f32 %v2484, %v2618
      %v2713 = vadd.f32 %v2485, %v2623
      %v2714 = vadd.f32 %v2486, %v2626
      %v2715 = vadd.f32 %v2487, %v2631
      %v2716 = vadd.f32 %v2488, %v2634
      %v2717 = vadd.f32 %v2489, %v2639
      %v2718 = vadd.f32 %v2490, %v2642
      %v2719 = vadd.f32 %v2491, %v2647
      %v2720 = vadd.f32 %v2492, %v2650
      %v2721 = vadd.f32 %v2493, %v2655
      %v2722 = vadd.f32 %v2494, %v2658
      %v2723 = vadd.f32 %v2495, %v2663
      %v2724 = vadd.f32 %v2496, %v2666
      %v2725 = vadd.f32 %v2497, %v2671
      %v2726 = vadd.f32 %v2498, %v2674
      %v2727 = vadd.f32 %v2499, %v2679
      %v2728 = vadd.f32 %v2500, %v2682
      %v2729 = vadd.f32 %v2501, %v2687
      %v2730 = vadd.f32 %v2502, %v2690
      %v2731 = vadd.f32 %v2503, %v2695
      %v2732 = vadd.f32 %v2504, %v2698
      %v2734 = vrot.slane %v281, 5
      %v2735 = vrot.slane %v2734, 4
      %v2736 = vrot.slane %v282, 5
      %v2737 = vsel %vm1246, %v2735, %v2736
      %v2738 = vrot.slane %v2736, 4
      %v2739 = vrot.slane %v283, 5
      %v2740 = vsel %vm1246, %v2738, %v2739
      %s2741 = scalar_lea.vmem %s1, 32
      %v2742 = vld [vmem:[%s2741] sm:$0xf]
      %v2743 = vunpack.c.l.b16 %v2737
      %v2744 = vunpack.c.l.b16 %v2740
      %v2745 = vpack.c.b16 %v2744, %v2743
      %v2747 = vsel %vm722, %v2745, 0
      %v2750 = vsel %vm771, %v2742, 0
      %2752 = vmatprep.subr.bf16.mxu0 0
      %2753 = vmatpush1.bf16.msra.mxu0 %v2750
      %2754 = vmatprep.subr.bf16.mxu0 0
      %2755 = vmatpush1.bf16.msra.mxu0 0
      %2756 = vmatprep.subr.bf16.mxu0 0
      %2757 = vmatpush1.bf16.msra.mxu0 0
      %2758 = vmatprep.subr.bf16.mxu0 0
      %2759 = vmatpush1.bf16.msra.mxu0 0
      %2760 = vmatprep.subr.bf16.mxu0 0
      %2761 = vmatpush1.bf16.msra.mxu0 0
      %2762 = vmatprep.subr.bf16.mxu0 0
      %2763 = vmatpush1.bf16.msra.mxu0 0
      %2764 = vmatprep.subr.bf16.mxu0 0
      %2765 = vmatpush1.bf16.msra.mxu0 0
      %2766 = vmatprep.subr.bf16.mxu0 0
      %2767 = vmatpush1.bf16.msra.mxu0 0
      %2768 = vmatprep.subr.bf16.mxu0 0
      %2769 = vmatpush1.bf16.msra.mxu0 0
      %2770 = vmatprep.subr.bf16.mxu0 0
      %2771 = vmatpush1.bf16.msra.mxu0 0
      %2772 = vmatprep.subr.bf16.mxu0 0
      %2773 = vmatpush1.bf16.msra.mxu0 0
      %2774 = vmatprep.subr.bf16.mxu0 0
      %2775 = vmatpush1.bf16.msra.mxu0 0
      %2776 = vmatprep.subr.bf16.mxu0 0
      %2777 = vmatpush1.bf16.msra.mxu0 0
      %2778 = vmatprep.subr.bf16.mxu0 0
      %2779 = vmatpush1.bf16.msra.mxu0 0
      %2780 = vmatprep.subr.bf16.mxu0 0
      %2781 = vmatpush1.bf16.msra.mxu0 0
      %2782 = vmatprep.subr.bf16.mxu0 0
      %2783 = vmatpush1.bf16.msra.mxu0 0
      %2784 = vmatprep.mubr.bf16.mxu0 0
      %2785 = vmatmul.mubr.bf16.gmra.mrb[0].mxu0 %v1416
      %v2786 = vpop.f32.mrb[0].mxu0
      %v2787 = vadd.f32 0.0, %v2786
      %v2788 = vpop.f32.mrb[0].mxu0
      %v2789 = vpop.f32.mrb[0].mxu0
      %v2790 = vadd.f32 0.0, %v2789
      %v2791 = vpop.f32.mrb[0].mxu0
      %2792 = vmatprep.mubr.bf16.mxu0 0
      %2793 = vmatmul.mubr.bf16.gmra.mrb[0].mxu0 %v1419
      %v2794 = vpop.f32.mrb[0].mxu0
      %v2795 = vadd.f32 0.0, %v2794
      %v2796 = vpop.f32.mrb[0].mxu0
      %v2797 = vpop.f32.mrb[0].mxu0
      %v2798 = vadd.f32 0.0, %v2797
      %v2799 = vpop.f32.mrb[0].mxu0
      %2800 = vmatprep.mubr.bf16.mxu0 0
      %2801 = vmatmul.mubr.bf16.gmra.mrb[0].mxu0 %v1422
      %v2802 = vpop.f32.mrb[0].mxu0
      %v2803 = vadd.f32 0.0, %v2802
      %v2804 = vpop.f32.mrb[0].mxu0
      %v2805 = vpop.f32.mrb[0].mxu0
      %v2806 = vadd.f32 0.0, %v2805
      %v2807 = vpop.f32.mrb[0].mxu0
      %2808 = vmatprep.mubr.bf16.mxu0 0
      %2809 = vmatmul.mubr.bf16.gmra.mrb[0].mxu0 %v1425
      %v2810 = vpop.f32.mrb[0].mxu0
      %v2811 = vadd.f32 0.0, %v2810
      %v2812 = vpop.f32.mrb[0].mxu0
      %v2813 = vpop.f32.mrb[0].mxu0
      %v2814 = vadd.f32 0.0, %v2813
      %v2815 = vpop.f32.mrb[0].mxu0
      %2816 = vmatprep.mubr.bf16.mxu0 0
      %2817 = vmatmul.mubr.bf16.gmra.mrb[0].mxu0 %v1428
      %v2818 = vpop.f32.mrb[0].mxu0
      %v2819 = vadd.f32 0.0, %v2818
      %v2820 = vpop.f32.mrb[0].mxu0
      %v2821 = vpop.f32.mrb[0].mxu0
      %v2822 = vadd.f32 0.0, %v2821
      %v2823 = vpop.f32.mrb[0].mxu0
      %2824 = vmatprep.mubr.bf16.mxu0 0
      %2825 = vmatmul.mubr.bf16.gmra.mrb[0].mxu0 %v1431
      %v2826 = vpop.f32.mrb[0].mxu0
      %v2827 = vadd.f32 0.0, %v2826
      %v2828 = vpop.f32.mrb[0].mxu0
      %v2829 = vpop.f32.mrb[0].mxu0
      %v2830 = vadd.f32 0.0, %v2829
      %v2831 = vpop.f32.mrb[0].mxu0
      %2832 = vmatprep.mubr.bf16.mxu0 0
      %2833 = vmatmul.mubr.bf16.gmra.mrb[0].mxu0 %v1434
      %v2834 = vpop.f32.mrb[0].mxu0
      %v2835 = vadd.f32 0.0, %v2834
      %v2836 = vpop.f32.mrb[0].mxu0
      %v2837 = vpop.f32.mrb[0].mxu0
      %v2838 = vadd.f32 0.0, %v2837
      %v2839 = vpop.f32.mrb[0].mxu0
      %2840 = vmatprep.mubr.bf16.mxu0 0
      %2841 = vmatmul.mubr.bf16.gmra.mrb[0].mxu0 %v1437
      %v2842 = vpop.f32.mrb[0].mxu0
      %v2843 = vadd.f32 0.0, %v2842
      %v2844 = vpop.f32.mrb[0].mxu0
      %v2845 = vpop.f32.mrb[0].mxu0
      %v2846 = vadd.f32 0.0, %v2845
      %v2847 = vpop.f32.mrb[0].mxu0
      %2848 = vmatprep.mubr.bf16.mxu0 0
      %2849 = vmatmul.mubr.bf16.gmra.mrb[0].mxu0 %v1440
      %v2850 = vpop.f32.mrb[0].mxu0
      %v2851 = vadd.f32 0.0, %v2850
      %v2852 = vpop.f32.mrb[0].mxu0
      %v2853 = vpop.f32.mrb[0].mxu0
      %v2854 = vadd.f32 0.0, %v2853
      %v2855 = vpop.f32.mrb[0].mxu0
      %2856 = vmatprep.mubr.bf16.mxu0 0
      %2857 = vmatmul.mubr.bf16.gmra.mrb[0].mxu0 %v1443
      %v2858 = vpop.f32.mrb[0].mxu0
      %v2859 = vadd.f32 0.0, %v2858
      %v2860 = vpop.f32.mrb[0].mxu0
      %v2861 = vpop.f32.mrb[0].mxu0
      %v2862 = vadd.f32 0.0, %v2861
      %v2863 = vpop.f32.mrb[0].mxu0
      %2864 = vmatprep.mubr.bf16.mxu0 0
      %2865 = vmatmul.mubr.bf16.gmra.mrb[0].mxu0 %v1446
      %v2866 = vpop.f32.mrb[0].mxu0
      %v2867 = vadd.f32 0.0, %v2866
      %v2868 = vpop.f32.mrb[0].mxu0
      %v2869 = vpop.f32.mrb[0].mxu0
      %v2870 = vadd.f32 0.0, %v2869
      %v2871 = vpop.f32.mrb[0].mxu0
      %2872 = vmatprep.mubr.bf16.mxu0 0
      %2873 = vmatmul.mubr.bf16.gmra.mrb[0].mxu0 %v1449
      %v2874 = vpop.f32.mrb[0].mxu0
      %v2875 = vadd.f32 0.0, %v2874
      %v2876 = vpop.f32.mrb[0].mxu0
      %v2877 = vpop.f32.mrb[0].mxu0
      %v2878 = vadd.f32 0.0, %v2877
      %v2879 = vpop.f32.mrb[0].mxu0
      %2880 = vmatprep.mubr.bf16.mxu0 0
      %2881 = vmatmul.mubr.bf16.gmra.mrb[0].mxu0 %v1452
      %v2882 = vpop.f32.mrb[0].mxu0
      %v2883 = vadd.f32 0.0, %v2882
      %v2884 = vpop.f32.mrb[0].mxu0
      %v2885 = vpop.f32.mrb[0].mxu0
      %v2886 = vadd.f32 0.0, %v2885
      %v2887 = vpop.f32.mrb[0].mxu0
      %2888 = vmatprep.mubr.bf16.mxu0 0
      %2889 = vmatmul.mubr.bf16.gmra.mrb[0].mxu0 %v1455
      %v2890 = vpop.f32.mrb[0].mxu0
      %v2891 = vadd.f32 0.0, %v2890
      %v2892 = vpop.f32.mrb[0].mxu0
      %v2893 = vpop.f32.mrb[0].mxu0
      %v2894 = vadd.f32 0.0, %v2893
      %v2895 = vpop.f32.mrb[0].mxu0
      %2896 = vmatprep.mubr.bf16.mxu0 0
      %2897 = vmatmul.mubr.bf16.gmra.mrb[0].mxu0 %v2101
      %v2898 = vpop.f32.mrb[0].mxu0
      %v2899 = vadd.f32 0.0, %v2898
      %v2900 = vpop.f32.mrb[0].mxu0
      %v2901 = vpop.f32.mrb[0].mxu0
      %v2902 = vadd.f32 0.0, %v2901
      %v2903 = vpop.f32.mrb[0].mxu0
      %2904 = vmatprep.mubr.bf16.mxu0 0
      %2905 = vmatmul.mubr.bf16.gmra.mrb[0].mxu0 %v2747
      %v2906 = vpop.f32.mrb[0].mxu0
      %v2907 = vadd.f32 0.0, %v2906
      %v2908 = vpop.f32.mrb[0].mxu0
      %v2909 = vpop.f32.mrb[0].mxu0
      %v2910 = vadd.f32 0.0, %v2909
      %v2911 = vpop.f32.mrb[0].mxu0
      %2912 = vdwg.mxu0
      %v2913 = vadd.f32 %v2701, %v2787
      %v2914 = vadd.f32 %v2702, %v2790
      %v2915 = vadd.f32 %v2703, %v2795
      %v2916 = vadd.f32 %v2704, %v2798
      %v2917 = vadd.f32 %v2705, %v2803
      %v2918 = vadd.f32 %v2706, %v2806
      %v2919 = vadd.f32 %v2707, %v2811
      %v2920 = vadd.f32 %v2708, %v2814
      %v2921 = vadd.f32 %v2709, %v2819
      %v2922 = vadd.f32 %v2710, %v2822
      %v2923 = vadd.f32 %v2711, %v2827
      %v2924 = vadd.f32 %v2712, %v2830
      %v2925 = vadd.f32 %v2713, %v2835
      %v2926 = vadd.f32 %v2714, %v2838
      %v2927 = vadd.f32 %v2715, %v2843
      %v2928 = vadd.f32 %v2716, %v2846
      %v2929 = vadd.f32 %v2717, %v2851
      %v2930 = vadd.f32 %v2718, %v2854
      %v2931 = vadd.f32 %v2719, %v2859
      %v2932 = vadd.f32 %v2720, %v2862
      %v2933 = vadd.f32 %v2721, %v2867
      %v2934 = vadd.f32 %v2722, %v2870
      %v2935 = vadd.f32 %v2723, %v2875
      %v2936 = vadd.f32 %v2724, %v2878
      %v2937 = vadd.f32 %v2725, %v2883
      %v2938 = vadd.f32 %v2726, %v2886
      %v2939 = vadd.f32 %v2727, %v2891
      %v2940 = vadd.f32 %v2728, %v2894
      %v2941 = vadd.f32 %v2729, %v2899
      %v2942 = vadd.f32 %v2730, %v2902
      %v2943 = vadd.f32 %v2731, %v2907
      %v2944 = vadd.f32 %v2732, %v2910
      %2945 = vst [vmem:[%s220] sm:$0xff] %v2913
      %2946 = vst [vmem:[%s220 + $0x8] sm:$0xff] %v2914
      %2947 = vst [vmem:[%s220 + $0x10] sm:$0xff] %v2915
      %2948 = vst [vmem:[%s220 + $0x18] sm:$0xff] %v2916
      %2949 = vst [vmem:[%s220 + $0x20] sm:$0xff] %v2917
      %2950 = vst [vmem:[%s220 + $0x28] sm:$0xff] %v2918
      %2951 = vst [vmem:[%s220 + $0x30] sm:$0xff] %v2919
      %2952 = vst [vmem:[%s220 + $0x38] sm:$0xff] %v2920
      %2953 = vst [vmem:[%s220 + $0x40] sm:$0xff] %v2921
      %2954 = vst [vmem:[%s220 + $0x48] sm:$0xff] %v2922
      %2955 = vst [vmem:[%s220 + $0x50] sm:$0xff] %v2923
      %2956 = vst [vmem:[%s220 + $0x58] sm:$0xff] %v2924
      %2957 = vst [vmem:[%s220 + $0x60] sm:$0xff] %v2925
      %2958 = vst [vmem:[%s220 + $0x68] sm:$0xff] %v2926
      %2959 = vst [vmem:[%s220 + $0x70] sm:$0xff] %v2927
      %2960 = vst [vmem:[%s220 + $0x78] sm:$0xff] %v2928
      %2961 = vst [vmem:[%s220 + $0x80] sm:$0xff] %v2929
      %2962 = vst [vmem:[%s220 + $0x88] sm:$0xff] %v2930
      %2963 = vst [vmem:[%s220 + $0x90] sm:$0xff] %v2931
      %2964 = vst [vmem:[%s220 + $0x98] sm:$0xff] %v2932
      %2965 = vst [vmem:[%s220 + $0xa0] sm:$0xff] %v2933
      %2966 = vst [vmem:[%s220 + $0xa8] sm:$0xff] %v2934
      %2967 = vst [vmem:[%s220 + $0xb0] sm:$0xff] %v2935
      %2968 = vst [vmem:[%s220 + $0xb8] sm:$0xff] %v2936
      %2969 = vst [vmem:[%s220 + $0xc0] sm:$0xff] %v2937
      %2970 = vst [vmem:[%s220 + $0xc8] sm:$0xff] %v2938
      %2971 = vst [vmem:[%s220 + $0xd0] sm:$0xff] %v2939
      %2972 = vst [vmem:[%s220 + $0xd8] sm:$0xff] %v2940
      %2973 = vst [vmem:[%s220 + $0xe0] sm:$0xff] %v2941
      %2974 = vst [vmem:[%s220 + $0xe8] sm:$0xff] %v2942
      %2975 = vst [vmem:[%s220 + $0xf0] sm:$0xff] %v2943
      %2976 = vst [vmem:[%s220 + $0xf8] sm:$0xff] %v2944
      %v2977 = vadd.f32 %v2913, %v2914
      %v2978 = vadd.f32 %v2977, %v2915
      %v2979 = vadd.f32 %v2978, %v2916
      %v2980 = vadd.f32 %v2979, %v2917
      %v2981 = vadd.f32 %v2980, %v2918
      %v2982 = vadd.f32 %v2981, %v2919
      %v2983 = vadd.f32 %v2982, %v2920
      %v2984 = vadd.f32 %v2983, %v2921
      %v2985 = vadd.f32 %v2984, %v2922
      %v2986 = vadd.f32 %v2985, %v2923
      %v2987 = vadd.f32 %v2986, %v2924
      %v2988 = vadd.f32 %v2987, %v2925
      %v2989 = vadd.f32 %v2988, %v2926
      %v2990 = vadd.f32 %v2989, %v2927
      %v2991 = vadd.f32 %v2990, %v2928
      %v2992 = vadd.f32 %v2991, %v2929
      %v2993 = vadd.f32 %v2992, %v2930
      %v2994 = vadd.f32 %v2993, %v2931
      %v2995 = vadd.f32 %v2994, %v2932
      %v2996 = vadd.f32 %v2995, %v2933
      %v2997 = vadd.f32 %v2996, %v2934
      %v2998 = vadd.f32 %v2997, %v2935
      %v2999 = vadd.f32 %v2998, %v2936
      %v3000 = vadd.f32 %v2999, %v2937
      %v3001 = vadd.f32 %v3000, %v2938
      %v3002 = vadd.f32 %v3001, %v2939
      %v3003 = vadd.f32 %v3002, %v2940
      %v3004 = vadd.f32 %v3003, %v2941
      %v3005 = vadd.f32 %v3004, %v2942
      %v3006 = vadd.f32 %v3005, %v2943
      %v3007 = vadd.f32 %v3006, %v2944
      %v3008 = vrot.slane %v3007, 4
      %v3009 = vadd.f32 %v3007, %v3008
      %v3010 = vrot.slane %v3009, 2
      %v3011 = vadd.f32 %v3009, %v3010
      %v3012 = vrot.slane %v3011, 1
      %v3013 = vadd.f32 %v3011, %v3012
      %v3014 = vmul.f32 %v2913, %v2913
      %v3015 = vmul.f32 %v2914, %v2914
      %v3016 = vmul.f32 %v2915, %v2915
      %v3017 = vmul.f32 %v2916, %v2916
      %v3018 = vmul.f32 %v2917, %v2917
      %v3019 = vmul.f32 %v2918, %v2918
      %v3020 = vmul.f32 %v2919, %v2919
      %v3021 = vmul.f32 %v2920, %v2920
      %v3022 = vmul.f32 %v2921, %v2921
      %v3023 = vmul.f32 %v2922, %v2922
      %v3024 = vmul.f32 %v2923, %v2923
      %v3025 = vmul.f32 %v2924, %v2924
      %v3026 = vmul.f32 %v2925, %v2925
      %v3027 = vmul.f32 %v2926, %v2926
      %v3028 = vmul.f32 %v2927, %v2927
      %v3029 = vmul.f32 %v2928, %v2928
      %v3030 = vmul.f32 %v2929, %v2929
      %v3031 = vmul.f32 %v2930, %v2930
      %v3032 = vmul.f32 %v2931, %v2931
      %v3033 = vmul.f32 %v2932, %v2932
      %v3034 = vmul.f32 %v2933, %v2933
      %v3035 = vmul.f32 %v2934, %v2934
      %v3036 = vmul.f32 %v2935, %v2935
      %v3037 = vmul.f32 %v2936, %v2936
      %v3038 = vmul.f32 %v2937, %v2937
      %v3039 = vmul.f32 %v2938, %v2938
      %v3040 = vmul.f32 %v2939, %v2939
      %v3041 = vmul.f32 %v2940, %v2940
      %v3042 = vmul.f32 %v2941, %v2941
      %v3043 = vmul.f32 %v2942, %v2942
      %v3044 = vmul.f32 %v2943, %v2943
      %v3045 = vmul.f32 %v2944, %v2944
      %v3046 = vadd.f32 %v3014, %v3015
      %v3047 = vadd.f32 %v3046, %v3016
      %v3048 = vadd.f32 %v3047, %v3017
      %v3049 = vadd.f32 %v3048, %v3018
      %v3050 = vadd.f32 %v3049, %v3019
      %v3051 = vadd.f32 %v3050, %v3020
      %v3052 = vadd.f32 %v3051, %v3021
      %v3053 = vadd.f32 %v3052, %v3022
      %v3054 = vadd.f32 %v3053, %v3023
      %v3055 = vadd.f32 %v3054, %v3024
      %v3056 = vadd.f32 %v3055, %v3025
      %v3057 = vadd.f32 %v3056, %v3026
      %v3058 = vadd.f32 %v3057, %v3027
      %v3059 = vadd.f32 %v3058, %v3028
      %v3060 = vadd.f32 %v3059, %v3029
      %v3061 = vadd.f32 %v3060, %v3030
      %v3062 = vadd.f32 %v3061, %v3031
      %v3063 = vadd.f32 %v3062, %v3032
      %v3064 = vadd.f32 %v3063, %v3033
      %v3065 = vadd.f32 %v3064, %v3034
      %v3066 = vadd.f32 %v3065, %v3035
      %v3067 = vadd.f32 %v3066, %v3036
      %v3068 = vadd.f32 %v3067, %v3037
      %v3069 = vadd.f32 %v3068, %v3038
      %v3070 = vadd.f32 %v3069, %v3039
      %v3071 = vadd.f32 %v3070, %v3040
      %v3072 = vadd.f32 %v3071, %v3041
      %v3073 = vadd.f32 %v3072, %v3042
      %v3074 = vadd.f32 %v3073, %v3043
      %v3075 = vadd.f32 %v3074, %v3044
      %v3076 = vadd.f32 %v3075, %v3045
      %v3077 = vrot.slane %v3076, 4
      %v3078 = vadd.f32 %v3076, %v3077
      %v3079 = vrot.slane %v3078, 2
      %v3080 = vadd.f32 %v3078, %v3079
      %v3081 = vrot.slane %v3080, 1
      %v3082 = vadd.f32 %v3080, %v3081
      %vm3083 = vcmask 1040384
      %v3084 = vsel %vm3083, %v3013, %v3082
      %3085 = vst [vmem:[%s228] sm:$0x3] %v3084
      %s3086 = smul.u32 16, %s20
      %p3087 = scmp.lt.s32.totalorder %s19, 1
      %s3088 = scalar_select %p3087, %s19, 1
      %p3089 = scmp.lt.s32.totalorder %s3086, 15
      %s3090 = scalar_select %p3089, %s3086, 15
      %s3091 = smul.addr %s3090, 2
      %s3092 = smul.addr %s3088, 32
      %s3093 = sadd.s32 %s3091, %s3092
      %s3094 = smul.addr %s3093, 8
      %s3095 = scalar_lea.vmem %s2, %s3094
      %p3096 = scmp.lt.s32.totalorder %s19, 1
      %s3097 = scalar_select %p3096, %s19, 1
      %p3098 = scmp.lt.s32.totalorder %s20, 0
      %s3099 = scalar_select %p3098, %s20, 0
      %s3100 = sadd.s32 %s3099, %s3097
      %s3101 = smul.addr %s3100, 2
      %s3102 = scalar_lea.vmem %s3, %s3101
      // Predicated region
      $region29: #{up_layer_forward.6} parent=27 // pred_check
        %p3103 = pneg %p96
      $region30: #{up_layer_forward.6} parent=27 // pred_check_branch
        %3105 = sbr.rel (%p3103) target = $region32
      $region31: #{up_layer_forward.6} parent=27 // pred_region
        %s3106 = smul.u32 16, %s20
      $region32: #{up_layer_forward.6} parent=27 // pred_fallthru
        _
      // Predicated region
      $region33: #{up_layer_forward.6} parent=27 // pred_check
        %p3107 = pneg %p124
      $region34: #{up_layer_forward.6} parent=27 // pred_check_branch
        %3109 = sbr.rel (%p3107) target = $region36
      $region35: #{up_layer_forward.6} parent=27 // pred_region
        _
      $region36: #{up_layer_forward.6} parent=27 // pred_fallthru
        _
    $region28: #{up_layer_forward.6} parent=5 // pred_fallthru
      _
    %p3110 = scmp.le.s32.totalorder 2, %s10
    // Predicated region
    $region37: #{up_layer_forward.6} parent=5 // pred_check
      %p3111 = pneg %p3110
    $region38: #{up_layer_forward.6} parent=5 // pred_check_branch
      %3113 = sbr.rel (%p3111) target = $region40
    $region39: #{up_layer_forward.6} parent=5 // pred_region
      %s3114 = ssub.s32 %s10, 2
      // Predicated region
      $region41: #{up_layer_forward.6} parent=39 // pred_check
        %p3115 = pneg %p102
      $region42: #{up_layer_forward.6} parent=39 // pred_check_branch
        %3117 = sbr.rel (%p3115) target = $region44
      $region43: #{up_layer_forward.6} parent=39 // pred_region
        %s3118 = smul.u32 16, %s22
        %p3119 = scmp.lt.s32.totalorder %s21, 1
        %s3120 = scalar_select %p3119, %s21, 1
        %p3121 = scmp.lt.s32.totalorder %s3118, 15
        %s3122 = scalar_select %p3121, %s3118, 15
        %s3123 = smul.addr %s3122, 2
        %s3124 = smul.addr %s3120, 32
        %s3125 = sadd.s32 %s3123, %s3124
        %s3126 = smul.addr %s3125, 8
        %s3127 = scalar_lea.vmem %s2, %s3126
      $region44: #{up_layer_forward.6} parent=39 // pred_fallthru
        _
      // Predicated region
      $region45: #{up_layer_forward.6} parent=39 // pred_check
        %p3128 = pneg %p130
      $region46: #{up_layer_forward.6} parent=39 // pred_check_branch
        %3130 = sbr.rel (%p3128) target = $region48
      $region47: #{up_layer_forward.6} parent=39 // pred_region
        %p3131 = scmp.lt.s32.totalorder %s21, 1
        %s3132 = scalar_select %p3131, %s21, 1
        %p3133 = scmp.lt.s32.totalorder %s22, 0
        %s3134 = scalar_select %p3133, %s22, 0
        %s3135 = sadd.s32 %s3134, %s3132
        %s3136 = smul.addr %s3135, 2
        %s3137 = scalar_lea.vmem %s3, %s3136
      $region48: #{up_layer_forward.6} parent=39 // pred_fallthru
        _
    $region40: #{up_layer_forward.6} parent=5 // pred_fallthru
      _
  $region6: #{up_layer_forward.6} parent=0 // loop_footer
    %s14 = sadd.s32 1, %s10
  $region7: #{up_layer_forward.6} parent=0 // loop_footer_branch
    %9 = sbr.rel target = $region3
  $region8: #{up_layer_forward.6} parent=0 // loop_exit
    _

// kernel: up_layer_forward.8
$region0: #{up_layer_forward.8}
  #allocation0 [shape = 'u32[]', space=smem, size = 0x4, offset = 0x4, fixed_abs, tag = 'smem constant byte address 0x4 - core index']
  #allocation1 [shape = 'u32[144,128]{1,0:T(1,128)}', space=vmem, size = 0x12000, scoped, tag = 'internal scratch']
  %s0 = inlined_call_operand.vmem [shape: bf16[2,1,18,18,128], index: 0, kind: input, shape index: {}]
  %s1 = inlined_call_operand.vmem [shape: bf16[9,128,128], index: 1, kind: input, shape index: {}]
  %s2 = inlined_call_operand.vmem [shape: f32[2,16,16,128], index: 2, kind: output, shape index: {0}]
  %s3 = inlined_call_operand.vmem [shape: f32[2,1,2,128], index: 3, kind: output, shape index: {1}]
  %4 = xla_tuple %s2, %s3
  %s5 = sld [smem:[#allocation0]]
  $region49: #{up_layer_forward.8} parent=0
    _
  %s7 = ssub.s32 1, %s5
  %s8 = scalar_select 0, %s7, %s5
  loop: start=0, step=1, limit=4
  $region2: #{up_layer_forward.8} parent=0 // loop_pre_header
    _
  $region3: #{up_layer_forward.8} parent=0 // loop_header
    %s10 = sphi 0, %s14
    %p11 = scmp.ge.s32.totalorder %s10, 4
    %s17 = sphi 0, %s29
    %s18 = sphi 0, %s25
    %s19 = sphi 0, %s17
    %s20 = sphi 0, %s18
    %s21 = sphi 0, %s19
    %s22 = sphi 0, %s20
    %s34 = sphi 0, %s36
    %s37 = sphi 0, %s34
    %s38 = sphi 0, %s37
    %s54 = sphi 0, %s38
    %s58 = sphi 0, %s58
    %s60 = sphi 0, %s58
    %s61 = sphi 0, %s60
    %s75 = sphi 0, %s61
    %s83 = sphi 0, %s85
    %s86 = sphi 0, %s83
    %s87 = sphi 0, %s86
    %s103 = sphi 0, %s87
    %s111 = sphi 0, %s113
    %s114 = sphi 0, %s111
    %s115 = sphi 0, %s114
    %s131 = sphi 0, %s115
  $region4: #{up_layer_forward.8} parent=0 // loop_header_branch
    %13 = sbr.rel (%p11) target = $region8
  $region5: #{up_layer_forward.8} parent=0 // loop_body
    %s15 = ssub.s32 %s10, 1
    %s16 = ssub.s32 %s10, 2
    %s23 = sadd.s32 1, %s18
    %p24 = scmp.ge.s32.totalorder %s23, 1
    %s25 = scalar_select %p24, 0, %s23
    %s26 = sadd.s32 1, %s17
    %s27 = scalar_select %p24, %s26, %s17
    %p28 = scmp.ge.s32.totalorder %s27, 2
    %s29 = scalar_select %p28, 0, %s27
    %s30 = ssub.s32 %s17, %s29
    %s31 = ssub.s32 %s18, %s25
    %s32 = sor.u32 %s30, %s31
    %p33 = scmp.eq.s32.totalorder %s32, 0
    %s35 = sadd.s32 %s34, 1
    %s36 = scalar_select %p33, %s34, %s35
    %p39 = pneg %p33
    %p40 = scmp.eq.s32.totalorder %s10, 1
    %p41 = por %p39, %p40
    %p42 = scmp.ne.s32.totalorder %s34, %s37
    %p43 = scmp.eq.s32.totalorder %s10, 0
    %p44 = por %p42, %p43
    %p45 = scmp.ne.s32.totalorder %s34, %s37
    %p46 = scmp.eq.s32.totalorder %s15, 1
    %p47 = por %p45, %p46
    %p48 = scmp.ne.s32.totalorder %s37, %s38
    %p49 = scmp.eq.s32.totalorder %s15, 0
    %p50 = por %p48, %p49
    %p51 = scmp.ne.s32.totalorder %s37, %s38
    %p52 = scmp.eq.s32.totalorder %s16, 1
    %p53 = por %p51, %p52
    %p55 = scmp.ne.s32.totalorder %s38, %s54
    %p56 = scmp.eq.s32.totalorder %s16, 0
    %p57 = por %p55, %p56
    %s59 = sadd.s32 %s58, 1
    %p62 = scmp.eq.s32.totalorder %s10, 1
    %p63 = scmp.ne.s32.totalorder %s58, %s60
    %p64 = scmp.eq.s32.totalorder %s10, 0
    %p65 = por %p63, %p64
    %p66 = scmp.ne.s32.totalorder %s58, %s60
    %p67 = scmp.eq.s32.totalorder %s15, 1
    %p68 = por %p66, %p67
    %p69 = scmp.ne.s32.totalorder %s60, %s61
    %p70 = scmp.eq.s32.totalorder %s15, 0
    %p71 = por %p69, %p70
    %p72 = scmp.ne.s32.totalorder %s60, %s61
    %p73 = scmp.eq.s32.totalorder %s16, 1
    %p74 = por %p72, %p73
    %p76 = scmp.ne.s32.totalorder %s61, %s75
    %p77 = scmp.eq.s32.totalorder %s16, 0
    %p78 = por %p76, %p77
    %s79 = ssub.s32 %s17, %s29
    %s80 = ssub.s32 %s18, %s25
    %s81 = sor.u32 %s79, %s80
    %p82 = scmp.eq.s32.totalorder %s81, 0
    %s84 = sadd.s32 %s83, 1
    %s85 = scalar_select %p82, %s83, %s84
    %p88 = pneg %p82
    %p89 = scmp.eq.s32.totalorder %s10, 1
    %p90 = por %p88, %p89
    %p91 = scmp.ne.s32.totalorder %s83, %s86
    %p92 = scmp.eq.s32.totalorder %s10, 0
    %p93 = por %p91, %p92
    %p94 = scmp.ne.s32.totalorder %s83, %s86
    %p95 = scmp.eq.s32.totalorder %s15, 1
    %p96 = por %p94, %p95
    %p97 = scmp.ne.s32.totalorder %s86, %s87
    %p98 = scmp.eq.s32.totalorder %s15, 0
    %p99 = por %p97, %p98
    %p100 = scmp.ne.s32.totalorder %s86, %s87
    %p101 = scmp.eq.s32.totalorder %s16, 1
    %p102 = por %p100, %p101
    %p104 = scmp.ne.s32.totalorder %s87, %s103
    %p105 = scmp.eq.s32.totalorder %s16, 0
    %p106 = por %p104, %p105
    %s107 = ssub.s32 %s17, %s29
    %s108 = ssub.s32 %s18, %s25
    %s109 = sor.u32 %s107, %s108
    %p110 = scmp.eq.s32.totalorder %s109, 0
    %s112 = sadd.s32 %s111, 1
    %s113 = scalar_select %p110, %s111, %s112
    %p116 = pneg %p110
    %p117 = scmp.eq.s32.totalorder %s10, 1
    %p118 = por %p116, %p117
    %p119 = scmp.ne.s32.totalorder %s111, %s114
    %p120 = scmp.eq.s32.totalorder %s10, 0
    %p121 = por %p119, %p120
    %p122 = scmp.ne.s32.totalorder %s111, %s114
    %p123 = scmp.eq.s32.totalorder %s15, 1
    %p124 = por %p122, %p123
    %p125 = scmp.ne.s32.totalorder %s114, %s115
    %p126 = scmp.eq.s32.totalorder %s15, 0
    %p127 = por %p125, %p126
    %p128 = scmp.ne.s32.totalorder %s114, %s115
    %p129 = scmp.eq.s32.totalorder %s16, 1
    %p130 = por %p128, %p129
    %p132 = scmp.ne.s32.totalorder %s115, %s131
    %p133 = scmp.eq.s32.totalorder %s16, 0
    %p134 = por %p132, %p133
    %p135 = scmp.le.s32.totalorder 1, %s10
    %p136 = scmp.lt.s32.totalorder %s10, 3
    %p137 = pnand %p135, %p136
    %p138 = pneg %p137
    // Predicated region
    $region9: #{up_layer_forward.8} parent=5 // pred_check
      _
    $region10: #{up_layer_forward.8} parent=5 // pred_check_branch
      %140 = sbr.rel (%p137) target = $region12
    $region11: #{up_layer_forward.8} parent=5 // pred_region
      %s141 = ssub.s32 %s10, 1
      // Predicated region
      $region13: #{up_layer_forward.8} parent=11 // pred_check
        %p142 = pneg %p71
      $region14: #{up_layer_forward.8} parent=11 // pred_check_branch
        %144 = sbr.rel (%p142) target = $region16
      $region15: #{up_layer_forward.8} parent=11 // pred_region
        _
      $region16: #{up_layer_forward.8} parent=11 // pred_fallthru
        _
    $region12: #{up_layer_forward.8} parent=5 // pred_fallthru
      _
    %p145 = scmp.lt.s32.totalorder %s10, 2
    // Predicated region
    $region17: #{up_layer_forward.8} parent=5 // pred_check
      %p146 = pneg %p145
    $region18: #{up_layer_forward.8} parent=5 // pred_check_branch
      %148 = sbr.rel (%p146) target = $region20
    $region19: #{up_layer_forward.8} parent=5 // pred_region
      // Predicated region
      $region21: #{up_layer_forward.8} parent=19 // pred_check
        %p149 = pneg %p44
      $region22: #{up_layer_forward.8} parent=19 // pred_check_branch
        %151 = sbr.rel (%p149) target = $region24
      $region23: #{up_layer_forward.8} parent=19 // pred_region
        %p152 = scmp.lt.s32.totalorder %s17, 1
        %s153 = scalar_select %p152, %s17, 1
        %p154 = scmp.lt.s32.totalorder %s18, 0
        %s155 = scalar_select %p154, %s18, 0
        %s156 = smul.addr %s155, 54
        %s157 = smul.addr %s153, 54
        %s158 = sadd.s32 %s156, %s157
        %s159 = smul.addr %s158, 4
        %s160 = scalar_lea.vmem %s0, %s159
      $region24: #{up_layer_forward.8} parent=19 // pred_fallthru
        _
    $region20: #{up_layer_forward.8} parent=5 // pred_fallthru
      _
    %p161 = scmp.le.s32.totalorder 1, %s10
    %p162 = scmp.lt.s32.totalorder %s10, 3
    %p163 = pnand %p161, %p162
    %p164 = pneg %p163
    // Predicated region
    $region25: #{up_layer_forward.8} parent=5 // pred_check
      _
    $region26: #{up_layer_forward.8} parent=5 // pred_check_branch
      %166 = sbr.rel (%p163) target = $region28
    $region27: #{up_layer_forward.8} parent=5 // pred_region
      %s167 = ssub.s32 %s10, 1
      %p168 = scmp.lt.s32.totalorder %s19, 1
      %s169 = scalar_select %p168, %s19, 1
      %p170 = scmp.lt.s32.totalorder %s20, 0
      %s171 = scalar_select %p170, %s20, 0
      %s172 = smul.addr %s171, 54
      %s173 = smul.addr %s169, 54
      %s174 = sadd.s32 %s172, %s173
      %s175 = smul.addr %s174, 4
      %s176 = scalar_lea.vmem %s0, %s175
      %p177 = pneg %p50
      %p178 = pneg %p47
      %p179 = pneg %p71
      %p180 = pneg %p68
      %p181 = pneg %p99
      %p182 = pneg %p96
      %s183 = smul.u32 16, %s20
      %p184 = scmp.lt.s32.totalorder %s19, 1
      %s185 = scalar_select %p184, %s19, 1
      %p186 = scmp.lt.s32.totalorder %s183, 15
      %s187 = scalar_select %p186, %s183, 15
      %s188 = smul.addr %s187, 2
      %s189 = smul.addr %s185, 32
      %s190 = sadd.s32 %s188, %s189
      %s191 = smul.addr %s190, 8
      %s192 = scalar_lea.vmem %s2, %s191
      %p193 = pneg %p127
      %p194 = pneg %p124
      %p195 = scmp.lt.s32.totalorder %s19, 1
      %s196 = scalar_select %p195, %s19, 1
      %p197 = scmp.lt.s32.totalorder %s20, 0
      %s198 = scalar_select %p197, %s20, 0
      %s199 = sadd.s32 %s198, %s196
      %s200 = smul.addr %s199, 2
      %s201 = scalar_lea.vmem %s3, %s200
      %p202 = scmp.lt.s32.totalorder %s19, 1
      %s203 = scalar_select %p202, %s19, 1
      %p204 = scmp.lt.s32.totalorder %s20, 0
      %s205 = scalar_select %p204, %s20, 0
      %s206 = smul.addr %s205, 54
      %s207 = smul.addr %s203, 54
      %s208 = sadd.s32 %s206, %s207
      %s209 = smul.addr %s208, 4
      %s210 = scalar_lea.vmem %s0, %s209
      %s211 = smul.u32 16, %s20
      %p212 = scmp.lt.s32.totalorder %s19, 1
      %s213 = scalar_select %p212, %s19, 1
      %p214 = scmp.lt.s32.totalorder %s211, 15
      %s215 = scalar_select %p214, %s211, 15
      %s216 = smul.addr %s215, 2
      %s217 = smul.addr %s213, 32
      %s218 = sadd.s32 %s216, %s217
      %s219 = smul.addr %s218, 8
      %s220 = scalar_lea.vmem %s2, %s219
      %s221 = smul.u32 16, %s20
      %p222 = scmp.lt.s32.totalorder %s19, 1
      %s223 = scalar_select %p222, %s19, 1
      %p224 = scmp.lt.s32.totalorder %s20, 0
      %s225 = scalar_select %p224, %s20, 0
      %s226 = sadd.s32 %s225, %s223
      %s227 = smul.addr %s226, 2
      %s228 = scalar_lea.vmem %s3, %s227
      %v230 = vld [vmem:[%s210] sm:$0xf]
      %v231 = vld [vmem:[%s210 + $0x4] sm:$0xf]
      %v232 = vld [vmem:[%s210 + $0x8] sm:$0x1]
      %v233 = vld [vmem:[%s210 + $0xc] sm:$0xf]
      %v234 = vld [vmem:[%s210 + $0x10] sm:$0xf]
      %v235 = vld [vmem:[%s210 + $0x14] sm:$0x1]
      %v236 = vld [vmem:[%s210 + $0x18] sm:$0xf]
      %v237 = vld [vmem:[%s210 + $0x1c] sm:$0xf]
      %v238 = vld [vmem:[%s210 + $0x20] sm:$0x1]
      %v239 = vld [vmem:[%s210 + $0x24] sm:$0xf]
      %v240 = vld [vmem:[%s210 + $0x28] sm:$0xf]
      %v241 = vld [vmem:[%s210 + $0x2c] sm:$0x1]
      %v242 = vld [vmem:[%s210 + $0x30] sm:$0xf]
      %v243 = vld [vmem:[%s210 + $0x34] sm:$0xf]
      %v244 = vld [vmem:[%s210 + $0x38] sm:$0x1]
      %v245 = vld [vmem:[%s210 + $0x3c] sm:$0xf]
      %v246 = vld [vmem:[%s210 + $0x40] sm:$0xf]
      %v247 = vld [vmem:[%s210 + $0x44] sm:$0x1]
      %v248 = vld [vmem:[%s210 + $0x48] sm:$0xf]
      %v249 = vld [vmem:[%s210 + $0x4c] sm:$0xf]
      %v250 = vld [vmem:[%s210 + $0x50] sm:$0x1]
      %v251 = vld [vmem:[%s210 + $0x54] sm:$0xf]
      %v252 = vld [vmem:[%s210 + $0x58] sm:$0xf]
      %v253 = vld [vmem:[%s210 + $0x5c] sm:$0x1]
      %v254 = vld [vmem:[%s210 + $0x60] sm:$0xf]
      %v255 = vld [vmem:[%s210 + $0x64] sm:$0xf]
      %v256 = vld [vmem:[%s210 + $0x68] sm:$0x1]
      %v257 = vld [vmem:[%s210 + $0x6c] sm:$0xf]
      %v258 = vld [vmem:[%s210 + $0x70] sm:$0xf]
      %v259 = vld [vmem:[%s210 + $0x74] sm:$0x1]
      %v260 = vld [vmem:[%s210 + $0x78] sm:$0xf]
      %v261 = vld [vmem:[%s210 + $0x7c] sm:$0xf]
      %v262 = vld [vmem:[%s210 + $0x80] sm:$0x1]
      %v263 = vld [vmem:[%s210 + $0x84] sm:$0xf]
      %v264 = vld [vmem:[%s210 + $0x88] sm:$0xf]
      %v265 = vld [vmem:[%s210 + $0x8c] sm:$0x1]
      %v266 = vld [vmem:[%s210 + $0x90] sm:$0xf]
      %v267 = vld [vmem:[%s210 + $0x94] sm:$0xf]
      %v268 = vld [vmem:[%s210 + $0x98] sm:$0x1]
      %v269 = vld [vmem:[%s210 + $0x9c] sm:$0xf]
      %v270 = vld [vmem:[%s210 + $0xa0] sm:$0xf]
      %v271 = vld [vmem:[%s210 + $0xa4] sm:$0x1]
      %v272 = vld [vmem:[%s210 + $0xa8] sm:$0xf]
      %v273 = vld [vmem:[%s210 + $0xac] sm:$0xf]
      %v274 = vld [vmem:[%s210 + $0xb0] sm:$0x1]
      %v275 = vld [vmem:[%s210 + $0xb4] sm:$0xf]
      %v276 = vld [vmem:[%s210 + $0xb8] sm:$0xf]
      %v277 = vld [vmem:[%s210 + $0xbc] sm:$0x1]
      %v278 = vld [vmem:[%s210 + $0xc0] sm:$0xf]
      %v279 = vld [vmem:[%s210 + $0xc4] sm:$0xf]
      %v280 = vld [vmem:[%s210 + $0xc8] sm:$0x1]
      %v281 = vld [vmem:[%s210 + $0xcc] sm:$0xf]
      %v282 = vld [vmem:[%s210 + $0xd0] sm:$0xf]
      %v283 = vld [vmem:[%s210 + $0xd4] sm:$0x1]
      %v284 = vld [vmem:[%s1] sm:$0xf]
      %v285 = vld [vmem:[%s1 + $0x4] sm:$0xf]
      %v286 = vld [vmem:[%s1 + $0x8] sm:$0xf]
      %v287 = vld [vmem:[%s1 + $0xc] sm:$0xf]
      %v288 = vld [vmem:[%s1 + $0x10] sm:$0xf]
      %v289 = vld [vmem:[%s1 + $0x14] sm:$0xf]
      %v290 = vld [vmem:[%s1 + $0x18] sm:$0xf]
      %v291 = vld [vmem:[%s1 + $0x1c] sm:$0xf]
      %v292 = vld [vmem:[%s1 + $0x20] sm:$0xf]
      %v293 = vld [vmem:[%s1 + $0x24] sm:$0xf]
      %v294 = vld [vmem:[%s1 + $0x28] sm:$0xf]
      %v295 = vld [vmem:[%s1 + $0x2c] sm:$0xf]
      %v296 = vld [vmem:[%s1 + $0x30] sm:$0xf]
      %v297 = vld [vmem:[%s1 + $0x34] sm:$0xf]
      %v298 = vld [vmem:[%s1 + $0x38] sm:$0xf]
      %v299 = vld [vmem:[%s1 + $0x3c] sm:$0xf]
      %vm300 = vsmask.f32 3328
      %vm301 = vsmask.f32 7440
      %vm302 = vmor %vm300, %vm301
      %v304 = vshrl.u32 %v230, 16
      %v306 = vrot.slane %v304, 4
      %v307 = vshll.u32 %v230, 16
      %v309 = vrot.slane %v307, 5
      %v310 = vor.u32 %v306, %v309
      %v311 = vrot.slane %v310, 4
      %v313 = vshll.u32 %v231, 16
      %v315 = vrot.slane %v313, 5
      %v316 = vsel %vm302, %v311, %v315
      %v317 = vshrl.u32 %v231, 16
      %v319 = vrot.slane %v317, 4
      %v320 = vor.u32 %v319, %v315
      %v321 = vrot.slane %v320, 4
      %v323 = vshll.u32 %v232, 16
      %v325 = vrot.slane %v323, 5
      %v326 = vsel %vm302, %v321, %v325
      %v328 = vshrl.u32 %v233, 16
      %v330 = vrot.slane %v328, 4
      %v331 = vshll.u32 %v233, 16
      %v333 = vrot.slane %v331, 5
      %v334 = vor.u32 %v330, %v333
      %v335 = vrot.slane %v334, 4
      %v337 = vshll.u32 %v234, 16
      %v339 = vrot.slane %v337, 5
      %v340 = vsel %vm302, %v335, %v339
      %v341 = vshrl.u32 %v234, 16
      %v343 = vrot.slane %v341, 4
      %v344 = vor.u32 %v343, %v339
      %v345 = vrot.slane %v344, 4
      %v347 = vshll.u32 %v235, 16
      %v349 = vrot.slane %v347, 5
      %v350 = vsel %vm302, %v345, %v349
      %v352 = vshrl.u32 %v236, 16
      %v354 = vrot.slane %v352, 4
      %v355 = vshll.u32 %v236, 16
      %v357 = vrot.slane %v355, 5
      %v358 = vor.u32 %v354, %v357
      %v359 = vrot.slane %v358, 4
      %v361 = vshll.u32 %v237, 16
      %v363 = vrot.slane %v361, 5
      %v364 = vsel %vm302, %v359, %v363
      %v365 = vshrl.u32 %v237, 16
      %v367 = vrot.slane %v365, 4
      %v368 = vor.u32 %v367, %v363
      %v369 = vrot.slane %v368, 4
      %v371 = vshll.u32 %v238, 16
      %v373 = vrot.slane %v371, 5
      %v374 = vsel %vm302, %v369, %v373
      %v376 = vshrl.u32 %v239, 16
      %v378 = vrot.slane %v376, 4
      %v379 = vshll.u32 %v239, 16
      %v381 = vrot.slane %v379, 5
      %v382 = vor.u32 %v378, %v381
      %v383 = vrot.slane %v382, 4
      %v385 = vshll.u32 %v240, 16
      %v387 = vrot.slane %v385, 5
      %v388 = vsel %vm302, %v383, %v387
      %v389 = vshrl.u32 %v240, 16
      %v391 = vrot.slane %v389, 4
      %v392 = vor.u32 %v391, %v387
      %v393 = vrot.slane %v392, 4
      %v395 = vshll.u32 %v241, 16
      %v397 = vrot.slane %v395, 5
      %v398 = vsel %vm302, %v393, %v397
      %v400 = vshrl.u32 %v242, 16
      %v402 = vrot.slane %v400, 4
      %v403 = vshll.u32 %v242, 16
      %v405 = vrot.slane %v403, 5
      %v406 = vor.u32 %v402, %v405
      %v407 = vrot.slane %v406, 4
      %v409 = vshll.u32 %v243, 16
      %v411 = vrot.slane %v409, 5
      %v412 = vsel %vm302, %v407, %v411
      %v413 = vshrl.u32 %v243, 16
      %v415 = vrot.slane %v413, 4
      %v416 = vor.u32 %v415, %v411
      %v417 = vrot.slane %v416, 4
      %v419 = vshll.u32 %v244, 16
      %v421 = vrot.slane %v419, 5
      %v422 = vsel %vm302, %v417, %v421
      %v424 = vshrl.u32 %v245, 16
      %v426 = vrot.slane %v424, 4
      %v427 = vshll.u32 %v245, 16
      %v429 = vrot.slane %v427, 5
      %v430 = vor.u32 %v426, %v429
      %v431 = vrot.slane %v430, 4
      %v433 = vshll.u32 %v246, 16
      %v435 = vrot.slane %v433, 5
      %v436 = vsel %vm302, %v431, %v435
      %v437 = vshrl.u32 %v246, 16
      %v439 = vrot.slane %v437, 4
      %v440 = vor.u32 %v439, %v435
      %v441 = vrot.slane %v440, 4
      %v443 = vshll.u32 %v247, 16
      %v445 = vrot.slane %v443, 5
      %v446 = vsel %vm302, %v441, %v445
      %v448 = vshrl.u32 %v248, 16
      %v450 = vrot.slane %v448, 4
      %v451 = vshll.u32 %v248, 16
      %v453 = vrot.slane %v451, 5
      %v454 = vor.u32 %v450, %v453
      %v455 = vrot.slane %v454, 4
      %v457 = vshll.u32 %v249, 16
      %v459 = vrot.slane %v457, 5
      %v460 = vsel %vm302, %v455, %v459
      %v461 = vshrl.u32 %v249, 16
      %v463 = vrot.slane %v461, 4
      %v464 = vor.u32 %v463, %v459
      %v465 = vrot.slane %v464, 4
      %v467 = vshll.u32 %v250, 16
      %v469 = vrot.slane %v467, 5
      %v470 = vsel %vm302, %v465, %v469
      %v472 = vshrl.u32 %v251, 16
      %v474 = vrot.slane %v472, 4
      %v475 = vshll.u32 %v251, 16
      %v477 = vrot.slane %v475, 5
      %v478 = vor.u32 %v474, %v477
      %v479 = vrot.slane %v478, 4
      %v481 = vshll.u32 %v252, 16
      %v483 = vrot.slane %v481, 5
      %v484 = vsel %vm302, %v479, %v483
      %v485 = vshrl.u32 %v252, 16
      %v487 = vrot.slane %v485, 4
      %v488 = vor.u32 %v487, %v483
      %v489 = vrot.slane %v488, 4
      %v491 = vshll.u32 %v253, 16
      %v493 = vrot.slane %v491, 5
      %v494 = vsel %vm302, %v489, %v493
      %v496 = vshrl.u32 %v254, 16
      %v498 = vrot.slane %v496, 4
      %v499 = vshll.u32 %v254, 16
      %v501 = vrot.slane %v499, 5
      %v502 = vor.u32 %v498, %v501
      %v503 = vrot.slane %v502, 4
      %v505 = vshll.u32 %v255, 16
      %v507 = vrot.slane %v505, 5
      %v508 = vsel %vm302, %v503, %v507
      %v509 = vshrl.u32 %v255, 16
      %v511 = vrot.slane %v509, 4
      %v512 = vor.u32 %v511, %v507
      %v513 = vrot.slane %v512, 4
      %v515 = vshll.u32 %v256, 16
      %v517 = vrot.slane %v515, 5
      %v518 = vsel %vm302, %v513, %v517
      %v520 = vshrl.u32 %v257, 16
      %v522 = vrot.slane %v520, 4
      %v523 = vshll.u32 %v257, 16
      %v525 = vrot.slane %v523, 5
      %v526 = vor.u32 %v522, %v525
      %v527 = vrot.slane %v526, 4
      %v529 = vshll.u32 %v258, 16
      %v531 = vrot.slane %v529, 5
      %v532 = vsel %vm302, %v527, %v531
      %v533 = vshrl.u32 %v258, 16
      %v535 = vrot.slane %v533, 4
      %v536 = vor.u32 %v535, %v531
      %v537 = vrot.slane %v536, 4
      %v539 = vshll.u32 %v259, 16
      %v541 = vrot.slane %v539, 5
      %v542 = vsel %vm302, %v537, %v541
      %v544 = vshrl.u32 %v260, 16
      %v546 = vrot.slane %v544, 4
      %v547 = vshll.u32 %v260, 16
      %v549 = vrot.slane %v547, 5
      %v550 = vor.u32 %v546, %v549
      %v551 = vrot.slane %v550, 4
      %v553 = vshll.u32 %v261, 16
      %v555 = vrot.slane %v553, 5
      %v556 = vsel %vm302, %v551, %v555
      %v557 = vshrl.u32 %v261, 16
      %v559 = vrot.slane %v557, 4
      %v560 = vor.u32 %v559, %v555
      %v561 = vrot.slane %v560, 4
      %v563 = vshll.u32 %v262, 16
      %v565 = vrot.slane %v563, 5
      %v566 = vsel %vm302, %v561, %v565
      %v568 = vshrl.u32 %v263, 16
      %v570 = vrot.slane %v568, 4
      %v571 = vshll.u32 %v263, 16
      %v573 = vrot.slane %v571, 5
      %v574 = vor.u32 %v570, %v573
      %v575 = vrot.slane %v574, 4
      %v577 = vshll.u32 %v264, 16
      %v579 = vrot.slane %v577, 5
      %v580 = vsel %vm302, %v575, %v579
      %v581 = vshrl.u32 %v264, 16
      %v583 = vrot.slane %v581, 4
      %v584 = vor.u32 %v583, %v579
      %v585 = vrot.slane %v584, 4
      %v587 = vshll.u32 %v265, 16
      %v589 = vrot.slane %v587, 5
      %v590 = vsel %vm302, %v585, %v589
      %v592 = vshrl.u32 %v266, 16
      %v594 = vrot.slane %v592, 4
      %v595 = vshll.u32 %v266, 16
      %v597 = vrot.slane %v595, 5
      %v598 = vor.u32 %v594, %v597
      %v599 = vrot.slane %v598, 4
      %v601 = vshll.u32 %v267, 16
      %v603 = vrot.slane %v601, 5
      %v604 = vsel %vm302, %v599, %v603
      %v605 = vshrl.u32 %v267, 16
      %v607 = vrot.slane %v605, 4
      %v608 = vor.u32 %v607, %v603
      %v609 = vrot.slane %v608, 4
      %v611 = vshll.u32 %v268, 16
      %v613 = vrot.slane %v611, 5
      %v614 = vsel %vm302, %v609, %v613
      %v616 = vshrl.u32 %v269, 16
      %v618 = vrot.slane %v616, 4
      %v619 = vshll.u32 %v269, 16
      %v621 = vrot.slane %v619, 5
      %v622 = vor.u32 %v618, %v621
      %v623 = vrot.slane %v622, 4
      %v625 = vshll.u32 %v270, 16
      %v627 = vrot.slane %v625, 5
      %v628 = vsel %vm302, %v623, %v627
      %v629 = vshrl.u32 %v270, 16
      %v631 = vrot.slane %v629, 4
      %v632 = vor.u32 %v631, %v627
      %v633 = vrot.slane %v632, 4
      %v635 = vshll.u32 %v271, 16
      %v637 = vrot.slane %v635, 5
      %v638 = vsel %vm302, %v633, %v637
      %v640 = vshrl.u32 %v272, 16
      %v642 = vrot.slane %v640, 4
      %v643 = vshll.u32 %v272, 16
      %v645 = vrot.slane %v643, 5
      %v646 = vor.u32 %v642, %v645
      %v647 = vrot.slane %v646, 4
      %v649 = vshll.u32 %v273, 16
      %v651 = vrot.slane %v649, 5
      %v652 = vsel %vm302, %v647, %v651
      %v653 = vshrl.u32 %v273, 16
      %v655 = vrot.slane %v653, 4
      %v656 = vor.u32 %v655, %v651
      %v657 = vrot.slane %v656, 4
      %v659 = vshll.u32 %v274, 16
      %v661 = vrot.slane %v659, 5
      %v662 = vsel %vm302, %v657, %v661
      %v664 = vshrl.u32 %v275, 16
      %v666 = vrot.slane %v664, 4
      %v667 = vshll.u32 %v275, 16
      %v669 = vrot.slane %v667, 5
      %v670 = vor.u32 %v666, %v669
      %v671 = vrot.slane %v670, 4
      %v673 = vshll.u32 %v276, 16
      %v675 = vrot.slane %v673, 5
      %v676 = vsel %vm302, %v671, %v675
      %v677 = vshrl.u32 %v276, 16
      %v679 = vrot.slane %v677, 4
      %v680 = vor.u32 %v679, %v675
      %v681 = vrot.slane %v680, 4
      %v683 = vshll.u32 %v277, 16
      %v685 = vrot.slane %v683, 5
      %v686 = vsel %vm302, %v681, %v685
      %s687 = scalar_lea.vmem %s1, 64
      %v688 = vld [vmem:[%s687] sm:$0xf]
      %v689 = vld [vmem:[%s687 + $0x4] sm:$0xf]
      %v690 = vld [vmem:[%s687 + $0x8] sm:$0xf]
      %v691 = vld [vmem:[%s687 + $0xc] sm:$0xf]
      %v692 = vld [vmem:[%s687 + $0x10] sm:$0xf]
      %v693 = vld [vmem:[%s687 + $0x14] sm:$0xf]
      %v694 = vld [vmem:[%s687 + $0x18] sm:$0xf]
      %v695 = vld [vmem:[%s687 + $0x1c] sm:$0xf]
      %v696 = vld [vmem:[%s687 + $0x20] sm:$0xf]
      %v697 = vld [vmem:[%s687 + $0x24] sm:$0xf]
      %v698 = vld [vmem:[%s687 + $0x28] sm:$0xf]
      %v699 = vld [vmem:[%s687 + $0x2c] sm:$0xf]
      %v700 = vld [vmem:[%s687 + $0x30] sm:$0xf]
      %v701 = vld [vmem:[%s687 + $0x34] sm:$0xf]
      %v702 = vld [vmem:[%s687 + $0x38] sm:$0xf]
      %v703 = vld [vmem:[%s687 + $0x3c] sm:$0xf]
      %v704 = vunpack.c.l.b16 %v316
      %v705 = vunpack.c.l.b16 %v326
      %v706 = vunpack.c.l.b16 %v340
      %v707 = vunpack.c.l.b16 %v350
      %v708 = vunpack.c.l.b16 %v364
      %v709 = vunpack.c.l.b16 %v374
      %v710 = vunpack.c.l.b16 %v388
      %v711 = vunpack.c.l.b16 %v398
      %v712 = vunpack.c.l.b16 %v412
      %v713 = vunpack.c.l.b16 %v422
      %v714 = vunpack.c.l.b16 %v436
      %v715 = vunpack.c.l.b16 %v446
      %v716 = vunpack.c.l.b16 %v460
      %v717 = vunpack.c.l.b16 %v470
      %v718 = vunpack.c.l.b16 %v484
      %v719 = vunpack.c.l.b16 %v494
      %v720 = vunpack.c.l.b16 %v508
      %v721 = vunpack.c.l.b16 %v518
      %v722 = vunpack.c.l.b16 %v532
      %v723 = vunpack.c.l.b16 %v542
      %v724 = vunpack.c.l.b16 %v556
      %v725 = vunpack.c.l.b16 %v566
      %v726 = vunpack.c.l.b16 %v580
      %v727 = vunpack.c.l.b16 %v590
      %v728 = vunpack.c.l.b16 %v604
      %v729 = vunpack.c.l.b16 %v614
      %v730 = vunpack.c.l.b16 %v628
      %v731 = vunpack.c.l.b16 %v638
      %v732 = vunpack.c.l.b16 %v652
      %v733 = vunpack.c.l.b16 %v662
      %v734 = vunpack.c.l.b16 %v676
      %v735 = vunpack.c.l.b16 %v686
      %v736 = vpack.c.b16 %v705, %v704
      %v737 = vpack.c.b16 %v707, %v706
      %v738 = vpack.c.b16 %v709, %v708
      %v739 = vpack.c.b16 %v711, %v710
      %v740 = vpack.c.b16 %v713, %v712
      %v741 = vpack.c.b16 %v715, %v714
      %v742 = vpack.c.b16 %v717, %v716
      %v743 = vpack.c.b16 %v719, %v718
      %v744 = vpack.c.b16 %v721, %v720
      %v745 = vpack.c.b16 %v723, %v722
      %v746 = vpack.c.b16 %v725, %v724
      %v747 = vpack.c.b16 %v727, %v726
      %v748 = vpack.c.b16 %v729, %v728
      %v749 = vpack.c.b16 %v731, %v730
      %v750 = vpack.c.b16 %v733, %v732
      %v751 = vpack.c.b16 %v735, %v734
      %v784 = vunpack.c.l.b16 %v688
      %v785 = vunpack.c.l.b16 %v689
      %v786 = vunpack.c.l.b16 %v690
      %v787 = vunpack.c.l.b16 %v691
      %v788 = vunpack.c.l.b16 %v692
      %v789 = vunpack.c.l.b16 %v693
      %v790 = vunpack.c.l.b16 %v694
      %v791 = vunpack.c.l.b16 %v695
      %v792 = vunpack.c.l.b16 %v696
      %v793 = vunpack.c.l.b16 %v697
      %v794 = vunpack.c.l.b16 %v698
      %v795 = vunpack.c.l.b16 %v699
      %v796 = vunpack.c.l.b16 %v700
      %v797 = vunpack.c.l.b16 %v701
      %v798 = vunpack.c.l.b16 %v702
      %v799 = vunpack.c.l.b16 %v703
      %v800 = vpack.c.b16 %v785, %v784
      %v801 = vpack.c.b16 %v787, %v786
      %v802 = vpack.c.b16 %v789, %v788
      %v803 = vpack.c.b16 %v791, %v790
      %v804 = vpack.c.b16 %v793, %v792
      %v805 = vpack.c.b16 %v795, %v794
      %v806 = vpack.c.b16 %v797, %v796
      %v807 = vpack.c.b16 %v799, %v798
      %816 = vmatprep.subr.bf16.mxu0 0
      %817 = vmatpush1.bf16.msra.mxu0 %v800
      %818 = vmatprep.subr.bf16.mxu0 0
      %819 = vmatpush1.bf16.msra.mxu0 %v801
      %820 = vmatprep.subr.bf16.mxu0 0
      %821 = vmatpush1.bf16.msra.mxu0 %v802
      %822 = vmatprep.subr.bf16.mxu0 0
      %823 = vmatpush1.bf16.msra.mxu0 %v803
      %824 = vmatprep.subr.bf16.mxu0 0
      %825 = vmatpush1.bf16.msra.mxu0 %v804
      %826 = vmatprep.subr.bf16.mxu0 0
      %827 = vmatpush1.bf16.msra.mxu0 %v805
      %828 = vmatprep.subr.bf16.mxu0 0
      %829 = vmatpush1.bf16.msra.mxu0 %v806
      %830 = vmatprep.subr.bf16.mxu0 0
      %831 = vmatpush1.bf16.msra.mxu0 %v807
      %832 = vmatprep.subr.bf16.mxu0 0
      %833 = vmatpush1.bf16.msra.mxu0 0
      %834 = vmatprep.subr.bf16.mxu0 0
      %835 = vmatpush1.bf16.msra.mxu0 0
      %836 = vmatprep.subr.bf16.mxu0 0
      %837 = vmatpush1.bf16.msra.mxu0 0
      %838 = vmatprep.subr.bf16.mxu0 0
      %839 = vmatpush1.bf16.msra.mxu0 0
      %840 = vmatprep.subr.bf16.mxu0 0
      %841 = vmatpush1.bf16.msra.mxu0 0
      %842 = vmatprep.subr.bf16.mxu0 0
      %843 = vmatpush1.bf16.msra.mxu0 0
      %844 = vmatprep.subr.bf16.mxu0 0
      %845 = vmatpush1.bf16.msra.mxu0 0
      %846 = vmatprep.subr.bf16.mxu0 0
      %847 = vmatpush1.bf16.msra.mxu0 0
      %848 = vmatprep.mubr.bf16.mxu0 0
      %849 = vmatmul.mubr.bf16.gmra.mrb[0].mxu0 %v736
      %v850 = vpop.f32.mrb[0].mxu0
      %v851 = vadd.f32 0.0, %v850
      %v852 = vpop.f32.mrb[0].mxu0
      %v853 = vpop.f32.mrb[0].mxu0
      %v854 = vadd.f32 0.0, %v853
      %v855 = vpop.f32.mrb[0].mxu0
      %856 = vmatprep.mubr.bf16.mxu0 0
      %857 = vmatmul.mubr.bf16.gmra.mrb[0].mxu0 %v737
      %v858 = vpop.f32.mrb[0].mxu0
      %v859 = vadd.f32 0.0, %v858
      %v860 = vpop.f32.mrb[0].mxu0
      %v861 = vpop.f32.mrb[0].mxu0
      %v862 = vadd.f32 0.0, %v861
      %v863 = vpop.f32.mrb[0].mxu0
      %864 = vmatprep.mubr.bf16.mxu0 0
      %865 = vmatmul.mubr.bf16.gmra.mrb[0].mxu0 %v738
      %v866 = vpop.f32.mrb[0].mxu0
      %v867 = vadd.f32 0.0, %v866
      %v868 = vpop.f32.mrb[0].mxu0
      %v869 = vpop.f32.mrb[0].mxu0
      %v870 = vadd.f32 0.0, %v869
      %v871 = vpop.f32.mrb[0].mxu0
      %872 = vmatprep.mubr.bf16.mxu0 0
      %873 = vmatmul.mubr.bf16.gmra.mrb[0].mxu0 %v739
      %v874 = vpop.f32.mrb[0].mxu0
      %v875 = vadd.f32 0.0, %v874
      %v876 = vpop.f32.mrb[0].mxu0
      %v877 = vpop.f32.mrb[0].mxu0
      %v878 = vadd.f32 0.0, %v877
      %v879 = vpop.f32.mrb[0].mxu0
      %880 = vmatprep.mubr.bf16.mxu0 0
      %881 = vmatmul.mubr.bf16.gmra.mrb[0].mxu0 %v740
      %v882 = vpop.f32.mrb[0].mxu0
      %v883 = vadd.f32 0.0, %v882
      %v884 = vpop.f32.mrb[0].mxu0
      %v885 = vpop.f32.mrb[0].mxu0
      %v886 = vadd.f32 0.0, %v885
      %v887 = vpop.f32.mrb[0].mxu0
      %888 = vmatprep.mubr.bf16.mxu0 0
      %889 = vmatmul.mubr.bf16.gmra.mrb[0].mxu0 %v741
      %v890 = vpop.f32.mrb[0].mxu0
      %v891 = vadd.f32 0.0, %v890
      %v892 = vpop.f32.mrb[0].mxu0
      %v893 = vpop.f32.mrb[0].mxu0
      %v894 = vadd.f32 0.0, %v893
      %v895 = vpop.f32.mrb[0].mxu0
      %896 = vmatprep.mubr.bf16.mxu0 0
      %897 = vmatmul.mubr.bf16.gmra.mrb[0].mxu0 %v742
      %v898 = vpop.f32.mrb[0].mxu0
      %v899 = vadd.f32 0.0, %v898
      %v900 = vpop.f32.mrb[0].mxu0
      %v901 = vpop.f32.mrb[0].mxu0
      %v902 = vadd.f32 0.0, %v901
      %v903 = vpop.f32.mrb[0].mxu0
      %904 = vmatprep.mubr.bf16.mxu0 0
      %905 = vmatmul.mubr.bf16.gmra.mrb[0].mxu0 %v743
      %v906 = vpop.f32.mrb[0].mxu0
      %v907 = vadd.f32 0.0, %v906
      %v908 = vpop.f32.mrb[0].mxu0
      %v909 = vpop.f32.mrb[0].mxu0
      %v910 = vadd.f32 0.0, %v909
      %v911 = vpop.f32.mrb[0].mxu0
      %912 = vmatprep.mubr.bf16.mxu0 0
      %913 = vmatmul.mubr.bf16.gmra.mrb[0].mxu0 %v744
      %v914 = vpop.f32.mrb[0].mxu0
      %v915 = vadd.f32 0.0, %v914
      %v916 = vpop.f32.mrb[0].mxu0
      %v917 = vpop.f32.mrb[0].mxu0
      %v918 = vadd.f32 0.0, %v917
      %v919 = vpop.f32.mrb[0].mxu0
      %920 = vmatprep.mubr.bf16.mxu0 0
      %921 = vmatmul.mubr.bf16.gmra.mrb[0].mxu0 %v745
      %v922 = vpop.f32.mrb[0].mxu0
      %v923 = vadd.f32 0.0, %v922
      %v924 = vpop.f32.mrb[0].mxu0
      %v925 = vpop.f32.mrb[0].mxu0
      %v926 = vadd.f32 0.0, %v925
      %v927 = vpop.f32.mrb[0].mxu0
      %928 = vmatprep.mubr.bf16.mxu0 0
      %929 = vmatmul.mubr.bf16.gmra.mrb[0].mxu0 %v746
      %v930 = vpop.f32.mrb[0].mxu0
      %v931 = vadd.f32 0.0, %v930
      %v932 = vpop.f32.mrb[0].mxu0
      %v933 = vpop.f32.mrb[0].mxu0
      %v934 = vadd.f32 0.0, %v933
      %v935 = vpop.f32.mrb[0].mxu0
      %936 = vmatprep.mubr.bf16.mxu0 0
      %937 = vmatmul.mubr.bf16.gmra.mrb[0].mxu0 %v747
      %v938 = vpop.f32.mrb[0].mxu0
      %v939 = vadd.f32 0.0, %v938
      %v940 = vpop.f32.mrb[0].mxu0
      %v941 = vpop.f32.mrb[0].mxu0
      %v942 = vadd.f32 0.0, %v941
      %v943 = vpop.f32.mrb[0].mxu0
      %944 = vmatprep.mubr.bf16.mxu0 0
      %945 = vmatmul.mubr.bf16.gmra.mrb[0].mxu0 %v748
      %v946 = vpop.f32.mrb[0].mxu0
      %v947 = vadd.f32 0.0, %v946
      %v948 = vpop.f32.mrb[0].mxu0
      %v949 = vpop.f32.mrb[0].mxu0
      %v950 = vadd.f32 0.0, %v949
      %v951 = vpop.f32.mrb[0].mxu0
      %952 = vmatprep.mubr.bf16.mxu0 0
      %953 = vmatmul.mubr.bf16.gmra.mrb[0].mxu0 %v749
      %v954 = vpop.f32.mrb[0].mxu0
      %v955 = vadd.f32 0.0, %v954
      %v956 = vpop.f32.mrb[0].mxu0
      %v957 = vpop.f32.mrb[0].mxu0
      %v958 = vadd.f32 0.0, %v957
      %v959 = vpop.f32.mrb[0].mxu0
      %960 = vmatprep.mubr.bf16.mxu0 0
      %961 = vmatmul.mubr.bf16.gmra.mrb[0].mxu0 %v750
      %v962 = vpop.f32.mrb[0].mxu0
      %v963 = vadd.f32 0.0, %v962
      %v964 = vpop.f32.mrb[0].mxu0
      %v965 = vpop.f32.mrb[0].mxu0
      %v966 = vadd.f32 0.0, %v965
      %v967 = vpop.f32.mrb[0].mxu0
      %968 = vmatprep.mubr.bf16.mxu0 0
      %969 = vmatmul.mubr.bf16.gmra.mrb[0].mxu0 %v751
      %v970 = vpop.f32.mrb[0].mxu0
      %v971 = vadd.f32 0.0, %v970
      %v972 = vpop.f32.mrb[0].mxu0
      %v973 = vpop.f32.mrb[0].mxu0
      %v974 = vadd.f32 0.0, %v973
      %v975 = vpop.f32.mrb[0].mxu0
      %976 = vdwg.mxu0
      %v1009 = vunpack.c.l.b16 %v230
      %v1010 = vunpack.c.l.b16 %v231
      %v1011 = vunpack.c.l.b16 %v233
      %v1012 = vunpack.c.l.b16 %v234
      %v1013 = vunpack.c.l.b16 %v236
      %v1014 = vunpack.c.l.b16 %v237
      %v1015 = vunpack.c.l.b16 %v239
      %v1016 = vunpack.c.l.b16 %v240
      %v1017 = vunpack.c.l.b16 %v242
      %v1018 = vunpack.c.l.b16 %v243
      %v1019 = vunpack.c.l.b16 %v245
      %v1020 = vunpack.c.l.b16 %v246
      %v1021 = vunpack.c.l.b16 %v248
      %v1022 = vunpack.c.l.b16 %v249
      %v1023 = vunpack.c.l.b16 %v251
      %v1024 = vunpack.c.l.b16 %v252
      %v1025 = vunpack.c.l.b16 %v254
      %v1026 = vunpack.c.l.b16 %v255
      %v1027 = vunpack.c.l.b16 %v257
      %v1028 = vunpack.c.l.b16 %v258
      %v1029 = vunpack.c.l.b16 %v260
      %v1030 = vunpack.c.l.b16 %v261
      %v1031 = vunpack.c.l.b16 %v263
      %v1032 = vunpack.c.l.b16 %v264
      %v1033 = vunpack.c.l.b16 %v266
      %v1034 = vunpack.c.l.b16 %v267
      %v1035 = vunpack.c.l.b16 %v269
      %v1036 = vunpack.c.l.b16 %v270
      %v1037 = vunpack.c.l.b16 %v272
      %v1038 = vunpack.c.l.b16 %v273
      %v1039 = vunpack.c.l.b16 %v275
      %v1040 = vunpack.c.l.b16 %v276
      %v1041 = vpack.c.b16 %v1010, %v1009
      %v1042 = vpack.c.b16 %v1012, %v1011
      %v1043 = vpack.c.b16 %v1014, %v1013
      %v1044 = vpack.c.b16 %v1016, %v1015
      %v1045 = vpack.c.b16 %v1018, %v1017
      %v1046 = vpack.c.b16 %v1020, %v1019
      %v1047 = vpack.c.b16 %v1022, %v1021
      %v1048 = vpack.c.b16 %v1024, %v1023
      %v1049 = vpack.c.b16 %v1026, %v1025
      %v1050 = vpack.c.b16 %v1028, %v1027
      %v1051 = vpack.c.b16 %v1030, %v1029
      %v1052 = vpack.c.b16 %v1032, %v1031
      %v1053 = vpack.c.b16 %v1034, %v1033
      %v1054 = vpack.c.b16 %v1036, %v1035
      %v1055 = vpack.c.b16 %v1038, %v1037
      %v1056 = vpack.c.b16 %v1040, %v1039
      %v1089 = vunpack.c.l.b16 %v284
      %v1090 = vunpack.c.l.b16 %v285
      %v1091 = vunpack.c.l.b16 %v286
      %v1092 = vunpack.c.l.b16 %v287
      %v1093 = vunpack.c.l.b16 %v288
      %v1094 = vunpack.c.l.b16 %v289
      %v1095 = vunpack.c.l.b16 %v290
      %v1096 = vunpack.c.l.b16 %v291
      %v1097 = vunpack.c.l.b16 %v292
      %v1098 = vunpack.c.l.b16 %v293
      %v1099 = vunpack.c.l.b16 %v294
      %v1100 = vunpack.c.l.b16 %v295
      %v1101 = vunpack.c.l.b16 %v296
      %v1102 = vunpack.c.l.b16 %v297
      %v1103 = vunpack.c.l.b16 %v298
      %v1104 = vunpack.c.l.b16 %v299
      %v1105 = vpack.c.b16 %v1090, %v1089
      %v1106 = vpack.c.b16 %v1092, %v1091
      %v1107 = vpack.c.b16 %v1094, %v1093
      %v1108 = vpack.c.b16 %v1096, %v1095
      %v1109 = vpack.c.b16 %v1098, %v1097
      %v1110 = vpack.c.b16 %v1100, %v1099
      %v1111 = vpack.c.b16 %v1102, %v1101
      %v1112 = vpack.c.b16 %v1104, %v1103
      %1121 = vmatprep.subr.bf16.mxu0 0
      %1122 = vmatpush1.bf16.msra.mxu0 %v1105
      %1123 = vmatprep.subr.bf16.mxu0 0
      %1124 = vmatpush1.bf16.msra.mxu0 %v1106
      %1125 = vmatprep.subr.bf16.mxu0 0
      %1126 = vmatpush1.bf16.msra.mxu0 %v1107
      %1127 = vmatprep.subr.bf16.mxu0 0
      %1128 = vmatpush1.bf16.msra.mxu0 %v1108
      %1129 = vmatprep.subr.bf16.mxu0 0
      %1130 = vmatpush1.bf16.msra.mxu0 %v1109
      %1131 = vmatprep.subr.bf16.mxu0 0
      %1132 = vmatpush1.bf16.msra.mxu0 %v1110
      %1133 = vmatprep.subr.bf16.mxu0 0
      %1134 = vmatpush1.bf16.msra.mxu0 %v1111
      %1135 = vmatprep.subr.bf16.mxu0 0
      %1136 = vmatpush1.bf16.msra.mxu0 %v1112
      %1137 = vmatprep.subr.bf16.mxu0 0
      %1138 = vmatpush1.bf16.msra.mxu0 0
      %1139 = vmatprep.subr.bf16.mxu0 0
      %1140 = vmatpush1.bf16.msra.mxu0 0
      %1141 = vmatprep.subr.bf16.mxu0 0
      %1142 = vmatpush1.bf16.msra.mxu0 0
      %1143 = vmatprep.subr.bf16.mxu0 0
      %1144 = vmatpush1.bf16.msra.mxu0 0
      %1145 = vmatprep.subr.bf16.mxu0 0
      %1146 = vmatpush1.bf16.msra.mxu0 0
      %1147 = vmatprep.subr.bf16.mxu0 0
      %1148 = vmatpush1.bf16.msra.mxu0 0
      %1149 = vmatprep.subr.bf16.mxu0 0
      %1150 = vmatpush1.bf16.msra.mxu0 0
      %1151 = vmatprep.subr.bf16.mxu0 0
      %1152 = vmatpush1.bf16.msra.mxu0 0
      %1153 = vmatprep.mubr.bf16.mxu0 0
      %1154 = vmatmul.mubr.bf16.gmra.mrb[0].mxu0 %v1041
      %v1155 = vpop.f32.mrb[0].mxu0
      %v1156 = vadd.f32 %v851, %v1155
      %v1157 = vpop.f32.mrb[0].mxu0
      %v1158 = vpop.f32.mrb[0].mxu0
      %v1159 = vadd.f32 %v854, %v1158
      %v1160 = vpop.f32.mrb[0].mxu0
      %1161 = vmatprep.mubr.bf16.mxu0 0
      %1162 = vmatmul.mubr.bf16.gmra.mrb[0].mxu0 %v1042
      %v1163 = vpop.f32.mrb[0].mxu0
      %v1164 = vadd.f32 %v859, %v1163
      %v1165 = vpop.f32.mrb[0].mxu0
      %v1166 = vpop.f32.mrb[0].mxu0
      %v1167 = vadd.f32 %v862, %v1166
      %v1168 = vpop.f32.mrb[0].mxu0
      %1169 = vmatprep.mubr.bf16.mxu0 0
      %1170 = vmatmul.mubr.bf16.gmra.mrb[0].mxu0 %v1043
      %v1171 = vpop.f32.mrb[0].mxu0
      %v1172 = vadd.f32 %v867, %v1171
      %v1173 = vpop.f32.mrb[0].mxu0
      %v1174 = vpop.f32.mrb[0].mxu0
      %v1175 = vadd.f32 %v870, %v1174
      %v1176 = vpop.f32.mrb[0].mxu0
      %1177 = vmatprep.mubr.bf16.mxu0 0
      %1178 = vmatmul.mubr.bf16.gmra.mrb[0].mxu0 %v1044
      %v1179 = vpop.f32.mrb[0].mxu0
      %v1180 = vadd.f32 %v875, %v1179
      %v1181 = vpop.f32.mrb[0].mxu0
      %v1182 = vpop.f32.mrb[0].mxu0
      %v1183 = vadd.f32 %v878, %v1182
      %v1184 = vpop.f32.mrb[0].mxu0
      %1185 = vmatprep.mubr.bf16.mxu0 0
      %1186 = vmatmul.mubr.bf16.gmra.mrb[0].mxu0 %v1045
      %v1187 = vpop.f32.mrb[0].mxu0
      %v1188 = vadd.f32 %v883, %v1187
      %v1189 = vpop.f32.mrb[0].mxu0
      %v1190 = vpop.f32.mrb[0].mxu0
      %v1191 = vadd.f32 %v886, %v1190
      %v1192 = vpop.f32.mrb[0].mxu0
      %1193 = vmatprep.mubr.bf16.mxu0 0
      %1194 = vmatmul.mubr.bf16.gmra.mrb[0].mxu0 %v1046
      %v1195 = vpop.f32.mrb[0].mxu0
      %v1196 = vadd.f32 %v891, %v1195
      %v1197 = vpop.f32.mrb[0].mxu0
      %v1198 = vpop.f32.mrb[0].mxu0
      %v1199 = vadd.f32 %v894, %v1198
      %v1200 = vpop.f32.mrb[0].mxu0
      %1201 = vmatprep.mubr.bf16.mxu0 0
      %1202 = vmatmul.mubr.bf16.gmra.mrb[0].mxu0 %v1047
      %v1203 = vpop.f32.mrb[0].mxu0
      %v1204 = vadd.f32 %v899, %v1203
      %v1205 = vpop.f32.mrb[0].mxu0
      %v1206 = vpop.f32.mrb[0].mxu0
      %v1207 = vadd.f32 %v902, %v1206
      %v1208 = vpop.f32.mrb[0].mxu0
      %1209 = vmatprep.mubr.bf16.mxu0 0
      %1210 = vmatmul.mubr.bf16.gmra.mrb[0].mxu0 %v1048
      %v1211 = vpop.f32.mrb[0].mxu0
      %v1212 = vadd.f32 %v907, %v1211
      %v1213 = vpop.f32.mrb[0].mxu0
      %v1214 = vpop.f32.mrb[0].mxu0
      %v1215 = vadd.f32 %v910, %v1214
      %v1216 = vpop.f32.mrb[0].mxu0
      %1217 = vmatprep.mubr.bf16.mxu0 0
      %1218 = vmatmul.mubr.bf16.gmra.mrb[0].mxu0 %v1049
      %v1219 = vpop.f32.mrb[0].mxu0
      %v1220 = vadd.f32 %v915, %v1219
      %v1221 = vpop.f32.mrb[0].mxu0
      %v1222 = vpop.f32.mrb[0].mxu0
      %v1223 = vadd.f32 %v918, %v1222
      %v1224 = vpop.f32.mrb[0].mxu0
      %1225 = vmatprep.mubr.bf16.mxu0 0
      %1226 = vmatmul.mubr.bf16.gmra.mrb[0].mxu0 %v1050
      %v1227 = vpop.f32.mrb[0].mxu0
      %v1228 = vadd.f32 %v923, %v1227
      %v1229 = vpop.f32.mrb[0].mxu0
      %v1230 = vpop.f32.mrb[0].mxu0
      %v1231 = vadd.f32 %v926, %v1230
      %v1232 = vpop.f32.mrb[0].mxu0
      %1233 = vmatprep.mubr.bf16.mxu0 0
      %1234 = vmatmul.mubr.bf16.gmra.mrb[0].mxu0 %v1051
      %v1235 = vpop.f32.mrb[0].mxu0
      %v1236 = vadd.f32 %v931, %v1235
      %v1237 = vpop.f32.mrb[0].mxu0
      %v1238 = vpop.f32.mrb[0].mxu0
      %v1239 = vadd.f32 %v934, %v1238
      %v1240 = vpop.f32.mrb[0].mxu0
      %1241 = vmatprep.mubr.bf16.mxu0 0
      %1242 = vmatmul.mubr.bf16.gmra.mrb[0].mxu0 %v1052
      %v1243 = vpop.f32.mrb[0].mxu0
      %v1244 = vadd.f32 %v939, %v1243
      %v1245 = vpop.f32.mrb[0].mxu0
      %v1246 = vpop.f32.mrb[0].mxu0
      %v1247 = vadd.f32 %v942, %v1246
      %v1248 = vpop.f32.mrb[0].mxu0
      %1249 = vmatprep.mubr.bf16.mxu0 0
      %1250 = vmatmul.mubr.bf16.gmra.mrb[0].mxu0 %v1053
      %v1251 = vpop.f32.mrb[0].mxu0
      %v1252 = vadd.f32 %v947, %v1251
      %v1253 = vpop.f32.mrb[0].mxu0
      %v1254 = vpop.f32.mrb[0].mxu0
      %v1255 = vadd.f32 %v950, %v1254
      %v1256 = vpop.f32.mrb[0].mxu0
      %1257 = vmatprep.mubr.bf16.mxu0 0
      %1258 = vmatmul.mubr.bf16.gmra.mrb[0].mxu0 %v1054
      %v1259 = vpop.f32.mrb[0].mxu0
      %v1260 = vadd.f32 %v955, %v1259
      %v1261 = vpop.f32.mrb[0].mxu0
      %v1262 = vpop.f32.mrb[0].mxu0
      %v1263 = vadd.f32 %v958, %v1262
      %v1264 = vpop.f32.mrb[0].mxu0
      %1265 = vmatprep.mubr.bf16.mxu0 0
      %1266 = vmatmul.mubr.bf16.gmra.mrb[0].mxu0 %v1055
      %v1267 = vpop.f32.mrb[0].mxu0
      %v1268 = vadd.f32 %v963, %v1267
      %v1269 = vpop.f32.mrb[0].mxu0
      %v1270 = vpop.f32.mrb[0].mxu0
      %v1271 = vadd.f32 %v966, %v1270
      %v1272 = vpop.f32.mrb[0].mxu0
      %1273 = vmatprep.mubr.bf16.mxu0 0
      %1274 = vmatmul.mubr.bf16.gmra.mrb[0].mxu0 %v1056
      %v1275 = vpop.f32.mrb[0].mxu0
      %v1276 = vadd.f32 %v971, %v1275
      %v1277 = vpop.f32.mrb[0].mxu0
      %v1278 = vpop.f32.mrb[0].mxu0
      %v1279 = vadd.f32 %v974, %v1278
      %v1280 = vpop.f32.mrb[0].mxu0
      %1281 = vdwg.mxu0
      %vm1298 = vcmask 1042432
      %vm1299 = vcmask 1046532
      %vm1300 = vmor %vm1298, %vm1299
      %v1301 = vrot.slane %v230, 5
      %v1302 = vrot.slane %v1301, 4
      %v1303 = vrot.slane %v231, 5
      %v1304 = vsel %vm1300, %v1302, %v1303
      %v1305 = vrot.slane %v1303, 4
      %v1306 = vrot.slane %v232, 5
      %v1307 = vsel %vm1300, %v1305, %v1306
      %v1308 = vrot.slane %v233, 5
      %v1309 = vrot.slane %v1308, 4
      %v1310 = vrot.slane %v234, 5
      %v1311 = vsel %vm1300, %v1309, %v1310
      %v1312 = vrot.slane %v1310, 4
      %v1313 = vrot.slane %v235, 5
      %v1314 = vsel %vm1300, %v1312, %v1313
      %v1315 = vrot.slane %v236, 5
      %v1316 = vrot.slane %v1315, 4
      %v1317 = vrot.slane %v237, 5
      %v1318 = vsel %vm1300, %v1316, %v1317
      %v1319 = vrot.slane %v1317, 4
      %v1320 = vrot.slane %v238, 5
      %v1321 = vsel %vm1300, %v1319, %v1320
      %v1322 = vrot.slane %v239, 5
      %v1323 = vrot.slane %v1322, 4
      %v1324 = vrot.slane %v240, 5
      %v1325 = vsel %vm1300, %v1323, %v1324
      %v1326 = vrot.slane %v1324, 4
      %v1327 = vrot.slane %v241, 5
      %v1328 = vsel %vm1300, %v1326, %v1327
      %v1329 = vrot.slane %v242, 5
      %v1330 = vrot.slane %v1329, 4
      %v1331 = vrot.slane %v243, 5
      %v1332 = vsel %vm1300, %v1330, %v1331
      %v1333 = vrot.slane %v1331, 4
      %v1334 = vrot.slane %v244, 5
      %v1335 = vsel %vm1300, %v1333, %v1334
      %v1336 = vrot.slane %v245, 5
      %v1337 = vrot.slane %v1336, 4
      %v1338 = vrot.slane %v246, 5
      %v1339 = vsel %vm1300, %v1337, %v1338
      %v1340 = vrot.slane %v1338, 4
      %v1341 = vrot.slane %v247, 5
      %v1342 = vsel %vm1300, %v1340, %v1341
      %v1343 = vrot.slane %v248, 5
      %v1344 = vrot.slane %v1343, 4
      %v1345 = vrot.slane %v249, 5
      %v1346 = vsel %vm1300, %v1344, %v1345
      %v1347 = vrot.slane %v1345, 4
      %v1348 = vrot.slane %v250, 5
      %v1349 = vsel %vm1300, %v1347, %v1348
      %v1350 = vrot.slane %v251, 5
      %v1351 = vrot.slane %v1350, 4
      %v1352 = vrot.slane %v252, 5
      %v1353 = vsel %vm1300, %v1351, %v1352
      %v1354 = vrot.slane %v1352, 4
      %v1355 = vrot.slane %v253, 5
      %v1356 = vsel %vm1300, %v1354, %v1355
      %v1357 = vrot.slane %v254, 5
      %v1358 = vrot.slane %v1357, 4
      %v1359 = vrot.slane %v255, 5
      %v1360 = vsel %vm1300, %v1358, %v1359
      %v1361 = vrot.slane %v1359, 4
      %v1362 = vrot.slane %v256, 5
      %v1363 = vsel %vm1300, %v1361, %v1362
      %v1364 = vrot.slane %v257, 5
      %v1365 = vrot.slane %v1364, 4
      %v1366 = vrot.slane %v258, 5
      %v1367 = vsel %vm1300, %v1365, %v1366
      %v1368 = vrot.slane %v1366, 4
      %v1369 = vrot.slane %v259, 5
      %v1370 = vsel %vm1300, %v1368, %v1369
      %v1371 = vrot.slane %v260, 5
      %v1372 = vrot.slane %v1371, 4
      %v1373 = vrot.slane %v261, 5
      %v1374 = vsel %vm1300, %v1372, %v1373
      %v1375 = vrot.slane %v1373, 4
      %v1376 = vrot.slane %v262, 5
      %v1377 = vsel %vm1300, %v1375, %v1376
      %v1378 = vrot.slane %v263, 5
      %v1379 = vrot.slane %v1378, 4
      %v1380 = vrot.slane %v264, 5
      %v1381 = vsel %vm1300, %v1379, %v1380
      %v1382 = vrot.slane %v1380, 4
      %v1383 = vrot.slane %v265, 5
      %v1384 = vsel %vm1300, %v1382, %v1383
      %v1385 = vrot.slane %v266, 5
      %v1386 = vrot.slane %v1385, 4
      %v1387 = vrot.slane %v267, 5
      %v1388 = vsel %vm1300, %v1386, %v1387
      %v1389 = vrot.slane %v1387, 4
      %v1390 = vrot.slane %v268, 5
      %v1391 = vsel %vm1300, %v1389, %v1390
      %v1392 = vrot.slane %v269, 5
      %v1393 = vrot.slane %v1392, 4
      %v1394 = vrot.slane %v270, 5
      %v1395 = vsel %vm1300, %v1393, %v1394
      %v1396 = vrot.slane %v1394, 4
      %v1397 = vrot.slane %v271, 5
      %v1398 = vsel %vm1300, %v1396, %v1397
      %v1399 = vrot.slane %v272, 5
      %v1400 = vrot.slane %v1399, 4
      %v1401 = vrot.slane %v273, 5
      %v1402 = vsel %vm1300, %v1400, %v1401
      %v1403 = vrot.slane %v1401, 4
      %v1404 = vrot.slane %v274, 5
      %v1405 = vsel %vm1300, %v1403, %v1404
      %v1406 = vrot.slane %v275, 5
      %v1407 = vrot.slane %v1406, 4
      %v1408 = vrot.slane %v276, 5
      %v1409 = vsel %vm1300, %v1407, %v1408
      %v1410 = vrot.slane %v1408, 4
      %v1411 = vrot.slane %v277, 5
      %v1412 = vsel %vm1300, %v1410, %v1411
      %s1413 = scalar_lea.vmem %s1, 128
      %v1414 = vld [vmem:[%s1413] sm:$0xf]
      %v1415 = vld [vmem:[%s1413 + $0x4] sm:$0xf]
      %v1416 = vld [vmem:[%s1413 + $0x8] sm:$0xf]
      %v1417 = vld [vmem:[%s1413 + $0xc] sm:$0xf]
      %v1418 = vld [vmem:[%s1413 + $0x10] sm:$0xf]
      %v1419 = vld [vmem:[%s1413 + $0x14] sm:$0xf]
      %v1420 = vld [vmem:[%s1413 + $0x18] sm:$0xf]
      %v1421 = vld [vmem:[%s1413 + $0x1c] sm:$0xf]
      %v1422 = vld [vmem:[%s1413 + $0x20] sm:$0xf]
      %v1423 = vld [vmem:[%s1413 + $0x24] sm:$0xf]
      %v1424 = vld [vmem:[%s1413 + $0x28] sm:$0xf]
      %v1425 = vld [vmem:[%s1413 + $0x2c] sm:$0xf]
      %v1426 = vld [vmem:[%s1413 + $0x30] sm:$0xf]
      %v1427 = vld [vmem:[%s1413 + $0x34] sm:$0xf]
      %v1428 = vld [vmem:[%s1413 + $0x38] sm:$0xf]
      %v1429 = vld [vmem:[%s1413 + $0x3c] sm:$0xf]
      %v1430 = vunpack.c.l.b16 %v1304
      %v1431 = vunpack.c.l.b16 %v1307
      %v1432 = vunpack.c.l.b16 %v1311
      %v1433 = vunpack.c.l.b16 %v1314
      %v1434 = vunpack.c.l.b16 %v1318
      %v1435 = vunpack.c.l.b16 %v1321
      %v1436 = vunpack.c.l.b16 %v1325
      %v1437 = vunpack.c.l.b16 %v1328
      %v1438 = vunpack.c.l.b16 %v1332
      %v1439 = vunpack.c.l.b16 %v1335
      %v1440 = vunpack.c.l.b16 %v1339
      %v1441 = vunpack.c.l.b16 %v1342
      %v1442 = vunpack.c.l.b16 %v1346
      %v1443 = vunpack.c.l.b16 %v1349
      %v1444 = vunpack.c.l.b16 %v1353
      %v1445 = vunpack.c.l.b16 %v1356
      %v1446 = vunpack.c.l.b16 %v1360
      %v1447 = vunpack.c.l.b16 %v1363
      %v1448 = vunpack.c.l.b16 %v1367
      %v1449 = vunpack.c.l.b16 %v1370
      %v1450 = vunpack.c.l.b16 %v1374
      %v1451 = vunpack.c.l.b16 %v1377
      %v1452 = vunpack.c.l.b16 %v1381
      %v1453 = vunpack.c.l.b16 %v1384
      %v1454 = vunpack.c.l.b16 %v1388
      %v1455 = vunpack.c.l.b16 %v1391
      %v1456 = vunpack.c.l.b16 %v1395
      %v1457 = vunpack.c.l.b16 %v1398
      %v1458 = vunpack.c.l.b16 %v1402
      %v1459 = vunpack.c.l.b16 %v1405
      %v1460 = vunpack.c.l.b16 %v1409
      %v1461 = vunpack.c.l.b16 %v1412
      %v1462 = vpack.c.b16 %v1431, %v1430
      %v1463 = vpack.c.b16 %v1433, %v1432
      %v1464 = vpack.c.b16 %v1435, %v1434
      %v1465 = vpack.c.b16 %v1437, %v1436
      %v1466 = vpack.c.b16 %v1439, %v1438
      %v1467 = vpack.c.b16 %v1441, %v1440
      %v1468 = vpack.c.b16 %v1443, %v1442
      %v1469 = vpack.c.b16 %v1445, %v1444
      %v1470 = vpack.c.b16 %v1447, %v1446
      %v1471 = vpack.c.b16 %v1449, %v1448
      %v1472 = vpack.c.b16 %v1451, %v1450
      %v1473 = vpack.c.b16 %v1453, %v1452
      %v1474 = vpack.c.b16 %v1455, %v1454
      %v1475 = vpack.c.b16 %v1457, %v1456
      %v1476 = vpack.c.b16 %v1459, %v1458
      %v1477 = vpack.c.b16 %v1461, %v1460
      %v1510 = vunpack.c.l.b16 %v1414
      %v1511 = vunpack.c.l.b16 %v1415
      %v1512 = vunpack.c.l.b16 %v1416
      %v1513 = vunpack.c.l.b16 %v1417
      %v1514 = vunpack.c.l.b16 %v1418
      %v1515 = vunpack.c.l.b16 %v1419
      %v1516 = vunpack.c.l.b16 %v1420
      %v1517 = vunpack.c.l.b16 %v1421
      %v1518 = vunpack.c.l.b16 %v1422
      %v1519 = vunpack.c.l.b16 %v1423
      %v1520 = vunpack.c.l.b16 %v1424
      %v1521 = vunpack.c.l.b16 %v1425
      %v1522 = vunpack.c.l.b16 %v1426
      %v1523 = vunpack.c.l.b16 %v1427
      %v1524 = vunpack.c.l.b16 %v1428
      %v1525 = vunpack.c.l.b16 %v1429
      %v1526 = vpack.c.b16 %v1511, %v1510
      %v1527 = vpack.c.b16 %v1513, %v1512
      %v1528 = vpack.c.b16 %v1515, %v1514
      %v1529 = vpack.c.b16 %v1517, %v1516
      %v1530 = vpack.c.b16 %v1519, %v1518
      %v1531 = vpack.c.b16 %v1521, %v1520
      %v1532 = vpack.c.b16 %v1523, %v1522
      %v1533 = vpack.c.b16 %v1525, %v1524
      %1542 = vmatprep.subr.bf16.mxu0 0
      %1543 = vmatpush1.bf16.msra.mxu0 %v1526
      %1544 = vmatprep.subr.bf16.mxu0 0
      %1545 = vmatpush1.bf16.msra.mxu0 %v1527
      %1546 = vmatprep.subr.bf16.mxu0 0
      %1547 = vmatpush1.bf16.msra.mxu0 %v1528
      %1548 = vmatprep.subr.bf16.mxu0 0
      %1549 = vmatpush1.bf16.msra.mxu0 %v1529
      %1550 = vmatprep.subr.bf16.mxu0 0
      %1551 = vmatpush1.bf16.msra.mxu0 %v1530
      %1552 = vmatprep.subr.bf16.mxu0 0
      %1553 = vmatpush1.bf16.msra.mxu0 %v1531
      %1554 = vmatprep.subr.bf16.mxu0 0
      %1555 = vmatpush1.bf16.msra.mxu0 %v1532
      %1556 = vmatprep.subr.bf16.mxu0 0
      %1557 = vmatpush1.bf16.msra.mxu0 %v1533
      %1558 = vmatprep.subr.bf16.mxu0 0
      %1559 = vmatpush1.bf16.msra.mxu0 0
      %1560 = vmatprep.subr.bf16.mxu0 0
      %1561 = vmatpush1.bf16.msra.mxu0 0
      %1562 = vmatprep.subr.bf16.mxu0 0
      %1563 = vmatpush1.bf16.msra.mxu0 0
      %1564 = vmatprep.subr.bf16.mxu0 0
      %1565 = vmatpush1.bf16.msra.mxu0 0
      %1566 = vmatprep.subr.bf16.mxu0 0
      %1567 = vmatpush1.bf16.msra.mxu0 0
      %1568 = vmatprep.subr.bf16.mxu0 0
      %1569 = vmatpush1.bf16.msra.mxu0 0
      %1570 = vmatprep.subr.bf16.mxu0 0
      %1571 = vmatpush1.bf16.msra.mxu0 0
      %1572 = vmatprep.subr.bf16.mxu0 0
      %1573 = vmatpush1.bf16.msra.mxu0 0
      %1574 = vmatprep.mubr.bf16.mxu0 0
      %1575 = vmatmul.mubr.bf16.gmra.mrb[0].mxu0 %v1462
      %v1576 = vpop.f32.mrb[0].mxu0
      %v1577 = vadd.f32 0.0, %v1576
      %v1578 = vpop.f32.mrb[0].mxu0
      %v1579 = vpop.f32.mrb[0].mxu0
      %v1580 = vadd.f32 0.0, %v1579
      %v1581 = vpop.f32.mrb[0].mxu0
      %1582 = vmatprep.mubr.bf16.mxu0 0
      %1583 = vmatmul.mubr.bf16.gmra.mrb[0].mxu0 %v1463
      %v1584 = vpop.f32.mrb[0].mxu0
      %v1585 = vadd.f32 0.0, %v1584
      %v1586 = vpop.f32.mrb[0].mxu0
      %v1587 = vpop.f32.mrb[0].mxu0
      %v1588 = vadd.f32 0.0, %v1587
      %v1589 = vpop.f32.mrb[0].mxu0
      %1590 = vmatprep.mubr.bf16.mxu0 0
      %1591 = vmatmul.mubr.bf16.gmra.mrb[0].mxu0 %v1464
      %v1592 = vpop.f32.mrb[0].mxu0
      %v1593 = vadd.f32 0.0, %v1592
      %v1594 = vpop.f32.mrb[0].mxu0
      %v1595 = vpop.f32.mrb[0].mxu0
      %v1596 = vadd.f32 0.0, %v1595
      %v1597 = vpop.f32.mrb[0].mxu0
      %1598 = vmatprep.mubr.bf16.mxu0 0
      %1599 = vmatmul.mubr.bf16.gmra.mrb[0].mxu0 %v1465
      %v1600 = vpop.f32.mrb[0].mxu0
      %v1601 = vadd.f32 0.0, %v1600
      %v1602 = vpop.f32.mrb[0].mxu0
      %v1603 = vpop.f32.mrb[0].mxu0
      %v1604 = vadd.f32 0.0, %v1603
      %v1605 = vpop.f32.mrb[0].mxu0
      %1606 = vmatprep.mubr.bf16.mxu0 0
      %1607 = vmatmul.mubr.bf16.gmra.mrb[0].mxu0 %v1466
      %v1608 = vpop.f32.mrb[0].mxu0
      %v1609 = vadd.f32 0.0, %v1608
      %v1610 = vpop.f32.mrb[0].mxu0
      %v1611 = vpop.f32.mrb[0].mxu0
      %v1612 = vadd.f32 0.0, %v1611
      %v1613 = vpop.f32.mrb[0].mxu0
      %1614 = vmatprep.mubr.bf16.mxu0 0
      %1615 = vmatmul.mubr.bf16.gmra.mrb[0].mxu0 %v1467
      %v1616 = vpop.f32.mrb[0].mxu0
      %v1617 = vadd.f32 0.0, %v1616
      %v1618 = vpop.f32.mrb[0].mxu0
      %v1619 = vpop.f32.mrb[0].mxu0
      %v1620 = vadd.f32 0.0, %v1619
      %v1621 = vpop.f32.mrb[0].mxu0
      %1622 = vmatprep.mubr.bf16.mxu0 0
      %1623 = vmatmul.mubr.bf16.gmra.mrb[0].mxu0 %v1468
      %v1624 = vpop.f32.mrb[0].mxu0
      %v1625 = vadd.f32 0.0, %v1624
      %v1626 = vpop.f32.mrb[0].mxu0
      %v1627 = vpop.f32.mrb[0].mxu0
      %v1628 = vadd.f32 0.0, %v1627
      %v1629 = vpop.f32.mrb[0].mxu0
      %1630 = vmatprep.mubr.bf16.mxu0 0
      %1631 = vmatmul.mubr.bf16.gmra.mrb[0].mxu0 %v1469
      %v1632 = vpop.f32.mrb[0].mxu0
      %v1633 = vadd.f32 0.0, %v1632
      %v1634 = vpop.f32.mrb[0].mxu0
      %v1635 = vpop.f32.mrb[0].mxu0
      %v1636 = vadd.f32 0.0, %v1635
      %v1637 = vpop.f32.mrb[0].mxu0
      %1638 = vmatprep.mubr.bf16.mxu0 0
      %1639 = vmatmul.mubr.bf16.gmra.mrb[0].mxu0 %v1470
      %v1640 = vpop.f32.mrb[0].mxu0
      %v1641 = vadd.f32 0.0, %v1640
      %v1642 = vpop.f32.mrb[0].mxu0
      %v1643 = vpop.f32.mrb[0].mxu0
      %v1644 = vadd.f32 0.0, %v1643
      %v1645 = vpop.f32.mrb[0].mxu0
      %1646 = vmatprep.mubr.bf16.mxu0 0
      %1647 = vmatmul.mubr.bf16.gmra.mrb[0].mxu0 %v1471
      %v1648 = vpop.f32.mrb[0].mxu0
      %v1649 = vadd.f32 0.0, %v1648
      %v1650 = vpop.f32.mrb[0].mxu0
      %v1651 = vpop.f32.mrb[0].mxu0
      %v1652 = vadd.f32 0.0, %v1651
      %v1653 = vpop.f32.mrb[0].mxu0
      %1654 = vmatprep.mubr.bf16.mxu0 0
      %1655 = vmatmul.mubr.bf16.gmra.mrb[0].mxu0 %v1472
      %v1656 = vpop.f32.mrb[0].mxu0
      %v1657 = vadd.f32 0.0, %v1656
      %v1658 = vpop.f32.mrb[0].mxu0
      %v1659 = vpop.f32.mrb[0].mxu0
      %v1660 = vadd.f32 0.0, %v1659
      %v1661 = vpop.f32.mrb[0].mxu0
      %1662 = vmatprep.mubr.bf16.mxu0 0
      %1663 = vmatmul.mubr.bf16.gmra.mrb[0].mxu0 %v1473
      %v1664 = vpop.f32.mrb[0].mxu0
      %v1665 = vadd.f32 0.0, %v1664
      %v1666 = vpop.f32.mrb[0].mxu0
      %v1667 = vpop.f32.mrb[0].mxu0
      %v1668 = vadd.f32 0.0, %v1667
      %v1669 = vpop.f32.mrb[0].mxu0
      %1670 = vmatprep.mubr.bf16.mxu0 0
      %1671 = vmatmul.mubr.bf16.gmra.mrb[0].mxu0 %v1474
      %v1672 = vpop.f32.mrb[0].mxu0
      %v1673 = vadd.f32 0.0, %v1672
      %v1674 = vpop.f32.mrb[0].mxu0
      %v1675 = vpop.f32.mrb[0].mxu0
      %v1676 = vadd.f32 0.0, %v1675
      %v1677 = vpop.f32.mrb[0].mxu0
      %1678 = vmatprep.mubr.bf16.mxu0 0
      %1679 = vmatmul.mubr.bf16.gmra.mrb[0].mxu0 %v1475
      %v1680 = vpop.f32.mrb[0].mxu0
      %v1681 = vadd.f32 0.0, %v1680
      %v1682 = vpop.f32.mrb[0].mxu0
      %v1683 = vpop.f32.mrb[0].mxu0
      %v1684 = vadd.f32 0.0, %v1683
      %v1685 = vpop.f32.mrb[0].mxu0
      %1686 = vmatprep.mubr.bf16.mxu0 0
      %1687 = vmatmul.mubr.bf16.gmra.mrb[0].mxu0 %v1476
      %v1688 = vpop.f32.mrb[0].mxu0
      %v1689 = vadd.f32 0.0, %v1688
      %v1690 = vpop.f32.mrb[0].mxu0
      %v1691 = vpop.f32.mrb[0].mxu0
      %v1692 = vadd.f32 0.0, %v1691
      %v1693 = vpop.f32.mrb[0].mxu0
      %1694 = vmatprep.mubr.bf16.mxu0 0
      %1695 = vmatmul.mubr.bf16.gmra.mrb[0].mxu0 %v1477
      %v1696 = vpop.f32.mrb[0].mxu0
      %v1697 = vadd.f32 0.0, %v1696
      %v1698 = vpop.f32.mrb[0].mxu0
      %v1699 = vpop.f32.mrb[0].mxu0
      %v1700 = vadd.f32 0.0, %v1699
      %v1701 = vpop.f32.mrb[0].mxu0
      %1702 = vdwg.mxu0
      %v1703 = vadd.f32 %v1156, %v1577
      %v1704 = vadd.f32 %v1159, %v1580
      %v1705 = vadd.f32 %v1164, %v1585
      %v1706 = vadd.f32 %v1167, %v1588
      %v1707 = vadd.f32 %v1172, %v1593
      %v1708 = vadd.f32 %v1175, %v1596
      %v1709 = vadd.f32 %v1180, %v1601
      %v1710 = vadd.f32 %v1183, %v1604
      %v1711 = vadd.f32 %v1188, %v1609
      %v1712 = vadd.f32 %v1191, %v1612
      %v1713 = vadd.f32 %v1196, %v1617
      %v1714 = vadd.f32 %v1199, %v1620
      %v1715 = vadd.f32 %v1204, %v1625
      %v1716 = vadd.f32 %v1207, %v1628
      %v1717 = vadd.f32 %v1212, %v1633
      %v1718 = vadd.f32 %v1215, %v1636
      %v1719 = vadd.f32 %v1220, %v1641
      %v1720 = vadd.f32 %v1223, %v1644
      %v1721 = vadd.f32 %v1228, %v1649
      %v1722 = vadd.f32 %v1231, %v1652
      %v1723 = vadd.f32 %v1236, %v1657
      %v1724 = vadd.f32 %v1239, %v1660
      %v1725 = vadd.f32 %v1244, %v1665
      %v1726 = vadd.f32 %v1247, %v1668
      %v1727 = vadd.f32 %v1252, %v1673
      %v1728 = vadd.f32 %v1255, %v1676
      %v1729 = vadd.f32 %v1260, %v1681
      %v1730 = vadd.f32 %v1263, %v1684
      %v1731 = vadd.f32 %v1268, %v1689
      %v1732 = vadd.f32 %v1271, %v1692
      %v1733 = vadd.f32 %v1276, %v1697
      %v1734 = vadd.f32 %v1279, %v1700
      %s1735 = scalar_lea.vmem %s1, 192
      %v1736 = vld [vmem:[%s1735] sm:$0xf]
      %v1737 = vld [vmem:[%s1735 + $0x4] sm:$0xf]
      %v1738 = vld [vmem:[%s1735 + $0x8] sm:$0xf]
      %v1739 = vld [vmem:[%s1735 + $0xc] sm:$0xf]
      %v1740 = vld [vmem:[%s1735 + $0x10] sm:$0xf]
      %v1741 = vld [vmem:[%s1735 + $0x14] sm:$0xf]
      %v1742 = vld [vmem:[%s1735 + $0x18] sm:$0xf]
      %v1743 = vld [vmem:[%s1735 + $0x1c] sm:$0xf]
      %v1744 = vld [vmem:[%s1735 + $0x20] sm:$0xf]
      %v1745 = vld [vmem:[%s1735 + $0x24] sm:$0xf]
      %v1746 = vld [vmem:[%s1735 + $0x28] sm:$0xf]
      %v1747 = vld [vmem:[%s1735 + $0x2c] sm:$0xf]
      %v1748 = vld [vmem:[%s1735 + $0x30] sm:$0xf]
      %v1749 = vld [vmem:[%s1735 + $0x34] sm:$0xf]
      %v1750 = vld [vmem:[%s1735 + $0x38] sm:$0xf]
      %v1751 = vld [vmem:[%s1735 + $0x3c] sm:$0xf]
      %v1754 = vunpack.c.l.b16 %v278
      %v1755 = vunpack.c.l.b16 %v279
      %v1756 = vpack.c.b16 %v1755, %v1754
      %v1774 = vunpack.c.l.b16 %v1736
      %v1775 = vunpack.c.l.b16 %v1737
      %v1776 = vunpack.c.l.b16 %v1738
      %v1777 = vunpack.c.l.b16 %v1739
      %v1778 = vunpack.c.l.b16 %v1740
      %v1779 = vunpack.c.l.b16 %v1741
      %v1780 = vunpack.c.l.b16 %v1742
      %v1781 = vunpack.c.l.b16 %v1743
      %v1782 = vunpack.c.l.b16 %v1744
      %v1783 = vunpack.c.l.b16 %v1745
      %v1784 = vunpack.c.l.b16 %v1746
      %v1785 = vunpack.c.l.b16 %v1747
      %v1786 = vunpack.c.l.b16 %v1748
      %v1787 = vunpack.c.l.b16 %v1749
      %v1788 = vunpack.c.l.b16 %v1750
      %v1789 = vunpack.c.l.b16 %v1751
      %v1790 = vpack.c.b16 %v1775, %v1774
      %v1791 = vpack.c.b16 %v1777, %v1776
      %v1792 = vpack.c.b16 %v1779, %v1778
      %v1793 = vpack.c.b16 %v1781, %v1780
      %v1794 = vpack.c.b16 %v1783, %v1782
      %v1795 = vpack.c.b16 %v1785, %v1784
      %v1796 = vpack.c.b16 %v1787, %v1786
      %v1797 = vpack.c.b16 %v1789, %v1788
      %1806 = vmatprep.subr.bf16.mxu0 0
      %1807 = vmatpush1.bf16.msra.mxu0 %v1790
      %1808 = vmatprep.subr.bf16.mxu0 0
      %1809 = vmatpush1.bf16.msra.mxu0 %v1791
      %1810 = vmatprep.subr.bf16.mxu0 0
      %1811 = vmatpush1.bf16.msra.mxu0 %v1792
      %1812 = vmatprep.subr.bf16.mxu0 0
      %1813 = vmatpush1.bf16.msra.mxu0 %v1793
      %1814 = vmatprep.subr.bf16.mxu0 0
      %1815 = vmatpush1.bf16.msra.mxu0 %v1794
      %1816 = vmatprep.subr.bf16.mxu0 0
      %1817 = vmatpush1.bf16.msra.mxu0 %v1795
      %1818 = vmatprep.subr.bf16.mxu0 0
      %1819 = vmatpush1.bf16.msra.mxu0 %v1796
      %1820 = vmatprep.subr.bf16.mxu0 0
      %1821 = vmatpush1.bf16.msra.mxu0 %v1797
      %1822 = vmatprep.subr.bf16.mxu0 0
      %1823 = vmatpush1.bf16.msra.mxu0 0
      %1824 = vmatprep.subr.bf16.mxu0 0
      %1825 = vmatpush1.bf16.msra.mxu0 0
      %1826 = vmatprep.subr.bf16.mxu0 0
      %1827 = vmatpush1.bf16.msra.mxu0 0
      %1828 = vmatprep.subr.bf16.mxu0 0
      %1829 = vmatpush1.bf16.msra.mxu0 0
      %1830 = vmatprep.subr.bf16.mxu0 0
      %1831 = vmatpush1.bf16.msra.mxu0 0
      %1832 = vmatprep.subr.bf16.mxu0 0
      %1833 = vmatpush1.bf16.msra.mxu0 0
      %1834 = vmatprep.subr.bf16.mxu0 0
      %1835 = vmatpush1.bf16.msra.mxu0 0
      %1836 = vmatprep.subr.bf16.mxu0 0
      %1837 = vmatpush1.bf16.msra.mxu0 0
      %1838 = vmatprep.mubr.bf16.mxu0 0
      %1839 = vmatmul.mubr.bf16.gmra.mrb[0].mxu0 %v1042
      %v1840 = vpop.f32.mrb[0].mxu0
      %v1841 = vadd.f32 0.0, %v1840
      %v1842 = vpop.f32.mrb[0].mxu0
      %v1843 = vpop.f32.mrb[0].mxu0
      %v1844 = vadd.f32 0.0, %v1843
      %v1845 = vpop.f32.mrb[0].mxu0
      %1846 = vmatprep.mubr.bf16.mxu0 0
      %1847 = vmatmul.mubr.bf16.gmra.mrb[0].mxu0 %v1043
      %v1848 = vpop.f32.mrb[0].mxu0
      %v1849 = vadd.f32 0.0, %v1848
      %v1850 = vpop.f32.mrb[0].mxu0
      %v1851 = vpop.f32.mrb[0].mxu0
      %v1852 = vadd.f32 0.0, %v1851
      %v1853 = vpop.f32.mrb[0].mxu0
      %1854 = vmatprep.mubr.bf16.mxu0 0
      %1855 = vmatmul.mubr.bf16.gmra.mrb[0].mxu0 %v1044
      %v1856 = vpop.f32.mrb[0].mxu0
      %v1857 = vadd.f32 0.0, %v1856
      %v1858 = vpop.f32.mrb[0].mxu0
      %v1859 = vpop.f32.mrb[0].mxu0
      %v1860 = vadd.f32 0.0, %v1859
      %v1861 = vpop.f32.mrb[0].mxu0
      %1862 = vmatprep.mubr.bf16.mxu0 0
      %1863 = vmatmul.mubr.bf16.gmra.mrb[0].mxu0 %v1045
      %v1864 = vpop.f32.mrb[0].mxu0
      %v1865 = vadd.f32 0.0, %v1864
      %v1866 = vpop.f32.mrb[0].mxu0
      %v1867 = vpop.f32.mrb[0].mxu0
      %v1868 = vadd.f32 0.0, %v1867
      %v1869 = vpop.f32.mrb[0].mxu0
      %1870 = vmatprep.mubr.bf16.mxu0 0
      %1871 = vmatmul.mubr.bf16.gmra.mrb[0].mxu0 %v1046
      %v1872 = vpop.f32.mrb[0].mxu0
      %v1873 = vadd.f32 0.0, %v1872
      %v1874 = vpop.f32.mrb[0].mxu0
      %v1875 = vpop.f32.mrb[0].mxu0
      %v1876 = vadd.f32 0.0, %v1875
      %v1877 = vpop.f32.mrb[0].mxu0
      %1878 = vmatprep.mubr.bf16.mxu0 0
      %1879 = vmatmul.mubr.bf16.gmra.mrb[0].mxu0 %v1047
      %v1880 = vpop.f32.mrb[0].mxu0
      %v1881 = vadd.f32 0.0, %v1880
      %v1882 = vpop.f32.mrb[0].mxu0
      %v1883 = vpop.f32.mrb[0].mxu0
      %v1884 = vadd.f32 0.0, %v1883
      %v1885 = vpop.f32.mrb[0].mxu0
      %1886 = vmatprep.mubr.bf16.mxu0 0
      %1887 = vmatmul.mubr.bf16.gmra.mrb[0].mxu0 %v1048
      %v1888 = vpop.f32.mrb[0].mxu0
      %v1889 = vadd.f32 0.0, %v1888
      %v1890 = vpop.f32.mrb[0].mxu0
      %v1891 = vpop.f32.mrb[0].mxu0
      %v1892 = vadd.f32 0.0, %v1891
      %v1893 = vpop.f32.mrb[0].mxu0
      %1894 = vmatprep.mubr.bf16.mxu0 0
      %1895 = vmatmul.mubr.bf16.gmra.mrb[0].mxu0 %v1049
      %v1896 = vpop.f32.mrb[0].mxu0
      %v1897 = vadd.f32 0.0, %v1896
      %v1898 = vpop.f32.mrb[0].mxu0
      %v1899 = vpop.f32.mrb[0].mxu0
      %v1900 = vadd.f32 0.0, %v1899
      %v1901 = vpop.f32.mrb[0].mxu0
      %1902 = vmatprep.mubr.bf16.mxu0 0
      %1903 = vmatmul.mubr.bf16.gmra.mrb[0].mxu0 %v1050
      %v1904 = vpop.f32.mrb[0].mxu0
      %v1905 = vadd.f32 0.0, %v1904
      %v1906 = vpop.f32.mrb[0].mxu0
      %v1907 = vpop.f32.mrb[0].mxu0
      %v1908 = vadd.f32 0.0, %v1907
      %v1909 = vpop.f32.mrb[0].mxu0
      %1910 = vmatprep.mubr.bf16.mxu0 0
      %1911 = vmatmul.mubr.bf16.gmra.mrb[0].mxu0 %v1051
      %v1912 = vpop.f32.mrb[0].mxu0
      %v1913 = vadd.f32 0.0, %v1912
      %v1914 = vpop.f32.mrb[0].mxu0
      %v1915 = vpop.f32.mrb[0].mxu0
      %v1916 = vadd.f32 0.0, %v1915
      %v1917 = vpop.f32.mrb[0].mxu0
      %1918 = vmatprep.mubr.bf16.mxu0 0
      %1919 = vmatmul.mubr.bf16.gmra.mrb[0].mxu0 %v1052
      %v1920 = vpop.f32.mrb[0].mxu0
      %v1921 = vadd.f32 0.0, %v1920
      %v1922 = vpop.f32.mrb[0].mxu0
      %v1923 = vpop.f32.mrb[0].mxu0
      %v1924 = vadd.f32 0.0, %v1923
      %v1925 = vpop.f32.mrb[0].mxu0
      %1926 = vmatprep.mubr.bf16.mxu0 0
      %1927 = vmatmul.mubr.bf16.gmra.mrb[0].mxu0 %v1053
      %v1928 = vpop.f32.mrb[0].mxu0
      %v1929 = vadd.f32 0.0, %v1928
      %v1930 = vpop.f32.mrb[0].mxu0
      %v1931 = vpop.f32.mrb[0].mxu0
      %v1932 = vadd.f32 0.0, %v1931
      %v1933 = vpop.f32.mrb[0].mxu0
      %1934 = vmatprep.mubr.bf16.mxu0 0
      %1935 = vmatmul.mubr.bf16.gmra.mrb[0].mxu0 %v1054
      %v1936 = vpop.f32.mrb[0].mxu0
      %v1937 = vadd.f32 0.0, %v1936
      %v1938 = vpop.f32.mrb[0].mxu0
      %v1939 = vpop.f32.mrb[0].mxu0
      %v1940 = vadd.f32 0.0, %v1939
      %v1941 = vpop.f32.mrb[0].mxu0
      %1942 = vmatprep.mubr.bf16.mxu0 0
      %1943 = vmatmul.mubr.bf16.gmra.mrb[0].mxu0 %v1055
      %v1944 = vpop.f32.mrb[0].mxu0
      %v1945 = vadd.f32 0.0, %v1944
      %v1946 = vpop.f32.mrb[0].mxu0
      %v1947 = vpop.f32.mrb[0].mxu0
      %v1948 = vadd.f32 0.0, %v1947
      %v1949 = vpop.f32.mrb[0].mxu0
      %1950 = vmatprep.mubr.bf16.mxu0 0
      %1951 = vmatmul.mubr.bf16.gmra.mrb[0].mxu0 %v1056
      %v1952 = vpop.f32.mrb[0].mxu0
      %v1953 = vadd.f32 0.0, %v1952
      %v1954 = vpop.f32.mrb[0].mxu0
      %v1955 = vpop.f32.mrb[0].mxu0
      %v1956 = vadd.f32 0.0, %v1955
      %v1957 = vpop.f32.mrb[0].mxu0
      %1958 = vmatprep.mubr.bf16.mxu0 0
      %1959 = vmatmul.mubr.bf16.gmra.mrb[0].mxu0 %v1756
      %v1960 = vpop.f32.mrb[0].mxu0
      %v1961 = vadd.f32 0.0, %v1960
      %v1962 = vpop.f32.mrb[0].mxu0
      %v1963 = vpop.f32.mrb[0].mxu0
      %v1964 = vadd.f32 0.0, %v1963
      %v1965 = vpop.f32.mrb[0].mxu0
      %1966 = vdwg.mxu0
      %v1967 = vadd.f32 %v1703, %v1841
      %v1968 = vadd.f32 %v1704, %v1844
      %v1969 = vadd.f32 %v1705, %v1849
      %v1970 = vadd.f32 %v1706, %v1852
      %v1971 = vadd.f32 %v1707, %v1857
      %v1972 = vadd.f32 %v1708, %v1860
      %v1973 = vadd.f32 %v1709, %v1865
      %v1974 = vadd.f32 %v1710, %v1868
      %v1975 = vadd.f32 %v1711, %v1873
      %v1976 = vadd.f32 %v1712, %v1876
      %v1977 = vadd.f32 %v1713, %v1881
      %v1978 = vadd.f32 %v1714, %v1884
      %v1979 = vadd.f32 %v1715, %v1889
      %v1980 = vadd.f32 %v1716, %v1892
      %v1981 = vadd.f32 %v1717, %v1897
      %v1982 = vadd.f32 %v1718, %v1900
      %v1983 = vadd.f32 %v1719, %v1905
      %v1984 = vadd.f32 %v1720, %v1908
      %v1985 = vadd.f32 %v1721, %v1913
      %v1986 = vadd.f32 %v1722, %v1916
      %v1987 = vadd.f32 %v1723, %v1921
      %v1988 = vadd.f32 %v1724, %v1924
      %v1989 = vadd.f32 %v1725, %v1929
      %v1990 = vadd.f32 %v1726, %v1932
      %v1991 = vadd.f32 %v1727, %v1937
      %v1992 = vadd.f32 %v1728, %v1940
      %v1993 = vadd.f32 %v1729, %v1945
      %v1994 = vadd.f32 %v1730, %v1948
      %v1995 = vadd.f32 %v1731, %v1953
      %v1996 = vadd.f32 %v1732, %v1956
      %v1997 = vadd.f32 %v1733, %v1961
      %v1998 = vadd.f32 %v1734, %v1964
      %v2000 = vshrl.u32 %v278, 16
      %v2002 = vrot.slane %v2000, 4
      %v2003 = vshll.u32 %v278, 16
      %v2005 = vrot.slane %v2003, 5
      %v2006 = vor.u32 %v2002, %v2005
      %v2007 = vrot.slane %v2006, 4
      %v2009 = vshll.u32 %v279, 16
      %v2011 = vrot.slane %v2009, 5
      %v2012 = vsel %vm302, %v2007, %v2011
      %v2013 = vshrl.u32 %v279, 16
      %v2015 = vrot.slane %v2013, 4
      %v2016 = vor.u32 %v2015, %v2011
      %v2017 = vrot.slane %v2016, 4
      %v2019 = vshll.u32 %v280, 16
      %v2021 = vrot.slane %v2019, 5
      %v2022 = vsel %vm302, %v2017, %v2021
      %s2023 = scalar_lea.vmem %s1, 256
      %v2024 = vld [vmem:[%s2023] sm:$0xf]
      %v2025 = vld [vmem:[%s2023 + $0x4] sm:$0xf]
      %v2026 = vld [vmem:[%s2023 + $0x8] sm:$0xf]
      %v2027 = vld [vmem:[%s2023 + $0xc] sm:$0xf]
      %v2028 = vld [vmem:[%s2023 + $0x10] sm:$0xf]
      %v2029 = vld [vmem:[%s2023 + $0x14] sm:$0xf]
      %v2030 = vld [vmem:[%s2023 + $0x18] sm:$0xf]
      %v2031 = vld [vmem:[%s2023 + $0x1c] sm:$0xf]
      %v2032 = vld [vmem:[%s2023 + $0x20] sm:$0xf]
      %v2033 = vld [vmem:[%s2023 + $0x24] sm:$0xf]
      %v2034 = vld [vmem:[%s2023 + $0x28] sm:$0xf]
      %v2035 = vld [vmem:[%s2023 + $0x2c] sm:$0xf]
      %v2036 = vld [vmem:[%s2023 + $0x30] sm:$0xf]
      %v2037 = vld [vmem:[%s2023 + $0x34] sm:$0xf]
      %v2038 = vld [vmem:[%s2023 + $0x38] sm:$0xf]
      %v2039 = vld [vmem:[%s2023 + $0x3c] sm:$0xf]
      %v2040 = vunpack.c.l.b16 %v2012
      %v2041 = vunpack.c.l.b16 %v2022
      %v2042 = vpack.c.b16 %v2041, %v2040
      %v2060 = vunpack.c.l.b16 %v2024
      %v2061 = vunpack.c.l.b16 %v2025
      %v2062 = vunpack.c.l.b16 %v2026
      %v2063 = vunpack.c.l.b16 %v2027
      %v2064 = vunpack.c.l.b16 %v2028
      %v2065 = vunpack.c.l.b16 %v2029
      %v2066 = vunpack.c.l.b16 %v2030
      %v2067 = vunpack.c.l.b16 %v2031
      %v2068 = vunpack.c.l.b16 %v2032
      %v2069 = vunpack.c.l.b16 %v2033
      %v2070 = vunpack.c.l.b16 %v2034
      %v2071 = vunpack.c.l.b16 %v2035
      %v2072 = vunpack.c.l.b16 %v2036
      %v2073 = vunpack.c.l.b16 %v2037
      %v2074 = vunpack.c.l.b16 %v2038
      %v2075 = vunpack.c.l.b16 %v2039
      %v2076 = vpack.c.b16 %v2061, %v2060
      %v2077 = vpack.c.b16 %v2063, %v2062
      %v2078 = vpack.c.b16 %v2065, %v2064
      %v2079 = vpack.c.b16 %v2067, %v2066
      %v2080 = vpack.c.b16 %v2069, %v2068
      %v2081 = vpack.c.b16 %v2071, %v2070
      %v2082 = vpack.c.b16 %v2073, %v2072
      %v2083 = vpack.c.b16 %v2075, %v2074
      %2092 = vmatprep.subr.bf16.mxu0 0
      %2093 = vmatpush1.bf16.msra.mxu0 %v2076
      %2094 = vmatprep.subr.bf16.mxu0 0
      %2095 = vmatpush1.bf16.msra.mxu0 %v2077
      %2096 = vmatprep.subr.bf16.mxu0 0
      %2097 = vmatpush1.bf16.msra.mxu0 %v2078
      %2098 = vmatprep.subr.bf16.mxu0 0
      %2099 = vmatpush1.bf16.msra.mxu0 %v2079
      %2100 = vmatprep.subr.bf16.mxu0 0
      %2101 = vmatpush1.bf16.msra.mxu0 %v2080
      %2102 = vmatprep.subr.bf16.mxu0 0
      %2103 = vmatpush1.bf16.msra.mxu0 %v2081
      %2104 = vmatprep.subr.bf16.mxu0 0
      %2105 = vmatpush1.bf16.msra.mxu0 %v2082
      %2106 = vmatprep.subr.bf16.mxu0 0
      %2107 = vmatpush1.bf16.msra.mxu0 %v2083
      %2108 = vmatprep.subr.bf16.mxu0 0
      %2109 = vmatpush1.bf16.msra.mxu0 0
      %2110 = vmatprep.subr.bf16.mxu0 0
      %2111 = vmatpush1.bf16.msra.mxu0 0
      %2112 = vmatprep.subr.bf16.mxu0 0
      %2113 = vmatpush1.bf16.msra.mxu0 0
      %2114 = vmatprep.subr.bf16.mxu0 0
      %2115 = vmatpush1.bf16.msra.mxu0 0
      %2116 = vmatprep.subr.bf16.mxu0 0
      %2117 = vmatpush1.bf16.msra.mxu0 0
      %2118 = vmatprep.subr.bf16.mxu0 0
      %2119 = vmatpush1.bf16.msra.mxu0 0
      %2120 = vmatprep.subr.bf16.mxu0 0
      %2121 = vmatpush1.bf16.msra.mxu0 0
      %2122 = vmatprep.subr.bf16.mxu0 0
      %2123 = vmatpush1.bf16.msra.mxu0 0
      %2124 = vmatprep.mubr.bf16.mxu0 0
      %2125 = vmatmul.mubr.bf16.gmra.mrb[0].mxu0 %v737
      %v2126 = vpop.f32.mrb[0].mxu0
      %v2127 = vadd.f32 0.0, %v2126
      %v2128 = vpop.f32.mrb[0].mxu0
      %v2129 = vpop.f32.mrb[0].mxu0
      %v2130 = vadd.f32 0.0, %v2129
      %v2131 = vpop.f32.mrb[0].mxu0
      %2132 = vmatprep.mubr.bf16.mxu0 0
      %2133 = vmatmul.mubr.bf16.gmra.mrb[0].mxu0 %v738
      %v2134 = vpop.f32.mrb[0].mxu0
      %v2135 = vadd.f32 0.0, %v2134
      %v2136 = vpop.f32.mrb[0].mxu0
      %v2137 = vpop.f32.mrb[0].mxu0
      %v2138 = vadd.f32 0.0, %v2137
      %v2139 = vpop.f32.mrb[0].mxu0
      %2140 = vmatprep.mubr.bf16.mxu0 0
      %2141 = vmatmul.mubr.bf16.gmra.mrb[0].mxu0 %v739
      %v2142 = vpop.f32.mrb[0].mxu0
      %v2143 = vadd.f32 0.0, %v2142
      %v2144 = vpop.f32.mrb[0].mxu0
      %v2145 = vpop.f32.mrb[0].mxu0
      %v2146 = vadd.f32 0.0, %v2145
      %v2147 = vpop.f32.mrb[0].mxu0
      %2148 = vmatprep.mubr.bf16.mxu0 0
      %2149 = vmatmul.mubr.bf16.gmra.mrb[0].mxu0 %v740
      %v2150 = vpop.f32.mrb[0].mxu0
      %v2151 = vadd.f32 0.0, %v2150
      %v2152 = vpop.f32.mrb[0].mxu0
      %v2153 = vpop.f32.mrb[0].mxu0
      %v2154 = vadd.f32 0.0, %v2153
      %v2155 = vpop.f32.mrb[0].mxu0
      %2156 = vmatprep.mubr.bf16.mxu0 0
      %2157 = vmatmul.mubr.bf16.gmra.mrb[0].mxu0 %v741
      %v2158 = vpop.f32.mrb[0].mxu0
      %v2159 = vadd.f32 0.0, %v2158
      %v2160 = vpop.f32.mrb[0].mxu0
      %v2161 = vpop.f32.mrb[0].mxu0
      %v2162 = vadd.f32 0.0, %v2161
      %v2163 = vpop.f32.mrb[0].mxu0
      %2164 = vmatprep.mubr.bf16.mxu0 0
      %2165 = vmatmul.mubr.bf16.gmra.mrb[0].mxu0 %v742
      %v2166 = vpop.f32.mrb[0].mxu0
      %v2167 = vadd.f32 0.0, %v2166
      %v2168 = vpop.f32.mrb[0].mxu0
      %v2169 = vpop.f32.mrb[0].mxu0
      %v2170 = vadd.f32 0.0, %v2169
      %v2171 = vpop.f32.mrb[0].mxu0
      %2172 = vmatprep.mubr.bf16.mxu0 0
      %2173 = vmatmul.mubr.bf16.gmra.mrb[0].mxu0 %v743
      %v2174 = vpop.f32.mrb[0].mxu0
      %v2175 = vadd.f32 0.0, %v2174
      %v2176 = vpop.f32.mrb[0].mxu0
      %v2177 = vpop.f32.mrb[0].mxu0
      %v2178 = vadd.f32 0.0, %v2177
      %v2179 = vpop.f32.mrb[0].mxu0
      %2180 = vmatprep.mubr.bf16.mxu0 0
      %2181 = vmatmul.mubr.bf16.gmra.mrb[0].mxu0 %v744
      %v2182 = vpop.f32.mrb[0].mxu0
      %v2183 = vadd.f32 0.0, %v2182
      %v2184 = vpop.f32.mrb[0].mxu0
      %v2185 = vpop.f32.mrb[0].mxu0
      %v2186 = vadd.f32 0.0, %v2185
      %v2187 = vpop.f32.mrb[0].mxu0
      %2188 = vmatprep.mubr.bf16.mxu0 0
      %2189 = vmatmul.mubr.bf16.gmra.mrb[0].mxu0 %v745
      %v2190 = vpop.f32.mrb[0].mxu0
      %v2191 = vadd.f32 0.0, %v2190
      %v2192 = vpop.f32.mrb[0].mxu0
      %v2193 = vpop.f32.mrb[0].mxu0
      %v2194 = vadd.f32 0.0, %v2193
      %v2195 = vpop.f32.mrb[0].mxu0
      %2196 = vmatprep.mubr.bf16.mxu0 0
      %2197 = vmatmul.mubr.bf16.gmra.mrb[0].mxu0 %v746
      %v2198 = vpop.f32.mrb[0].mxu0
      %v2199 = vadd.f32 0.0, %v2198
      %v2200 = vpop.f32.mrb[0].mxu0
      %v2201 = vpop.f32.mrb[0].mxu0
      %v2202 = vadd.f32 0.0, %v2201
      %v2203 = vpop.f32.mrb[0].mxu0
      %2204 = vmatprep.mubr.bf16.mxu0 0
      %2205 = vmatmul.mubr.bf16.gmra.mrb[0].mxu0 %v747
      %v2206 = vpop.f32.mrb[0].mxu0
      %v2207 = vadd.f32 0.0, %v2206
      %v2208 = vpop.f32.mrb[0].mxu0
      %v2209 = vpop.f32.mrb[0].mxu0
      %v2210 = vadd.f32 0.0, %v2209
      %v2211 = vpop.f32.mrb[0].mxu0
      %2212 = vmatprep.mubr.bf16.mxu0 0
      %2213 = vmatmul.mubr.bf16.gmra.mrb[0].mxu0 %v748
      %v2214 = vpop.f32.mrb[0].mxu0
      %v2215 = vadd.f32 0.0, %v2214
      %v2216 = vpop.f32.mrb[0].mxu0
      %v2217 = vpop.f32.mrb[0].mxu0
      %v2218 = vadd.f32 0.0, %v2217
      %v2219 = vpop.f32.mrb[0].mxu0
      %2220 = vmatprep.mubr.bf16.mxu0 0
      %2221 = vmatmul.mubr.bf16.gmra.mrb[0].mxu0 %v749
      %v2222 = vpop.f32.mrb[0].mxu0
      %v2223 = vadd.f32 0.0, %v2222
      %v2224 = vpop.f32.mrb[0].mxu0
      %v2225 = vpop.f32.mrb[0].mxu0
      %v2226 = vadd.f32 0.0, %v2225
      %v2227 = vpop.f32.mrb[0].mxu0
      %2228 = vmatprep.mubr.bf16.mxu0 0
      %2229 = vmatmul.mubr.bf16.gmra.mrb[0].mxu0 %v750
      %v2230 = vpop.f32.mrb[0].mxu0
      %v2231 = vadd.f32 0.0, %v2230
      %v2232 = vpop.f32.mrb[0].mxu0
      %v2233 = vpop.f32.mrb[0].mxu0
      %v2234 = vadd.f32 0.0, %v2233
      %v2235 = vpop.f32.mrb[0].mxu0
      %2236 = vmatprep.mubr.bf16.mxu0 0
      %2237 = vmatmul.mubr.bf16.gmra.mrb[0].mxu0 %v751
      %v2238 = vpop.f32.mrb[0].mxu0
      %v2239 = vadd.f32 0.0, %v2238
      %v2240 = vpop.f32.mrb[0].mxu0
      %v2241 = vpop.f32.mrb[0].mxu0
      %v2242 = vadd.f32 0.0, %v2241
      %v2243 = vpop.f32.mrb[0].mxu0
      %2244 = vmatprep.mubr.bf16.mxu0 0
      %2245 = vmatmul.mubr.bf16.gmra.mrb[0].mxu0 %v2042
      %v2246 = vpop.f32.mrb[0].mxu0
      %v2247 = vadd.f32 0.0, %v2246
      %v2248 = vpop.f32.mrb[0].mxu0
      %v2249 = vpop.f32.mrb[0].mxu0
      %v2250 = vadd.f32 0.0, %v2249
      %v2251 = vpop.f32.mrb[0].mxu0
      %2252 = vdwg.mxu0
      %v2253 = vadd.f32 %v1967, %v2127
      %v2254 = vadd.f32 %v1968, %v2130
      %v2255 = vadd.f32 %v1969, %v2135
      %v2256 = vadd.f32 %v1970, %v2138
      %v2257 = vadd.f32 %v1971, %v2143
      %v2258 = vadd.f32 %v1972, %v2146
      %v2259 = vadd.f32 %v1973, %v2151
      %v2260 = vadd.f32 %v1974, %v2154
      %v2261 = vadd.f32 %v1975, %v2159
      %v2262 = vadd.f32 %v1976, %v2162
      %v2263 = vadd.f32 %v1977, %v2167
      %v2264 = vadd.f32 %v1978, %v2170
      %v2265 = vadd.f32 %v1979, %v2175
      %v2266 = vadd.f32 %v1980, %v2178
      %v2267 = vadd.f32 %v1981, %v2183
      %v2268 = vadd.f32 %v1982, %v2186
      %v2269 = vadd.f32 %v1983, %v2191
      %v2270 = vadd.f32 %v1984, %v2194
      %v2271 = vadd.f32 %v1985, %v2199
      %v2272 = vadd.f32 %v1986, %v2202
      %v2273 = vadd.f32 %v1987, %v2207
      %v2274 = vadd.f32 %v1988, %v2210
      %v2275 = vadd.f32 %v1989, %v2215
      %v2276 = vadd.f32 %v1990, %v2218
      %v2277 = vadd.f32 %v1991, %v2223
      %v2278 = vadd.f32 %v1992, %v2226
      %v2279 = vadd.f32 %v1993, %v2231
      %v2280 = vadd.f32 %v1994, %v2234
      %v2281 = vadd.f32 %v1995, %v2239
      %v2282 = vadd.f32 %v1996, %v2242
      %v2283 = vadd.f32 %v1997, %v2247
      %v2284 = vadd.f32 %v1998, %v2250
      %v2286 = vrot.slane %v278, 5
      %v2287 = vrot.slane %v2286, 4
      %v2288 = vrot.slane %v279, 5
      %v2289 = vsel %vm1300, %v2287, %v2288
      %v2290 = vrot.slane %v2288, 4
      %v2291 = vrot.slane %v280, 5
      %v2292 = vsel %vm1300, %v2290, %v2291
      %s2293 = scalar_lea.vmem %s1, 320
      %v2294 = vld [vmem:[%s2293] sm:$0xf]
      %v2295 = vld [vmem:[%s2293 + $0x4] sm:$0xf]
      %v2296 = vld [vmem:[%s2293 + $0x8] sm:$0xf]
      %v2297 = vld [vmem:[%s2293 + $0xc] sm:$0xf]
      %v2298 = vld [vmem:[%s2293 + $0x10] sm:$0xf]
      %v2299 = vld [vmem:[%s2293 + $0x14] sm:$0xf]
      %v2300 = vld [vmem:[%s2293 + $0x18] sm:$0xf]
      %v2301 = vld [vmem:[%s2293 + $0x1c] sm:$0xf]
      %v2302 = vld [vmem:[%s2293 + $0x20] sm:$0xf]
      %v2303 = vld [vmem:[%s2293 + $0x24] sm:$0xf]
      %v2304 = vld [vmem:[%s2293 + $0x28] sm:$0xf]
      %v2305 = vld [vmem:[%s2293 + $0x2c] sm:$0xf]
      %v2306 = vld [vmem:[%s2293 + $0x30] sm:$0xf]
      %v2307 = vld [vmem:[%s2293 + $0x34] sm:$0xf]
      %v2308 = vld [vmem:[%s2293 + $0x38] sm:$0xf]
      %v2309 = vld [vmem:[%s2293 + $0x3c] sm:$0xf]
      %v2310 = vunpack.c.l.b16 %v2289
      %v2311 = vunpack.c.l.b16 %v2292
      %v2312 = vpack.c.b16 %v2311, %v2310
      %v2330 = vunpack.c.l.b16 %v2294
      %v2331 = vunpack.c.l.b16 %v2295
      %v2332 = vunpack.c.l.b16 %v2296
      %v2333 = vunpack.c.l.b16 %v2297
      %v2334 = vunpack.c.l.b16 %v2298
      %v2335 = vunpack.c.l.b16 %v2299
      %v2336 = vunpack.c.l.b16 %v2300
      %v2337 = vunpack.c.l.b16 %v2301
      %v2338 = vunpack.c.l.b16 %v2302
      %v2339 = vunpack.c.l.b16 %v2303
      %v2340 = vunpack.c.l.b16 %v2304
      %v2341 = vunpack.c.l.b16 %v2305
      %v2342 = vunpack.c.l.b16 %v2306
      %v2343 = vunpack.c.l.b16 %v2307
      %v2344 = vunpack.c.l.b16 %v2308
      %v2345 = vunpack.c.l.b16 %v2309
      %v2346 = vpack.c.b16 %v2331, %v2330
      %v2347 = vpack.c.b16 %v2333, %v2332
      %v2348 = vpack.c.b16 %v2335, %v2334
      %v2349 = vpack.c.b16 %v2337, %v2336
      %v2350 = vpack.c.b16 %v2339, %v2338
      %v2351 = vpack.c.b16 %v2341, %v2340
      %v2352 = vpack.c.b16 %v2343, %v2342
      %v2353 = vpack.c.b16 %v2345, %v2344
      %2362 = vmatprep.subr.bf16.mxu0 0
      %2363 = vmatpush1.bf16.msra.mxu0 %v2346
      %2364 = vmatprep.subr.bf16.mxu0 0
      %2365 = vmatpush1.bf16.msra.mxu0 %v2347
      %2366 = vmatprep.subr.bf16.mxu0 0
      %2367 = vmatpush1.bf16.msra.mxu0 %v2348
      %2368 = vmatprep.subr.bf16.mxu0 0
      %2369 = vmatpush1.bf16.msra.mxu0 %v2349
      %2370 = vmatprep.subr.bf16.mxu0 0
      %2371 = vmatpush1.bf16.msra.mxu0 %v2350
      %2372 = vmatprep.subr.bf16.mxu0 0
      %2373 = vmatpush1.bf16.msra.mxu0 %v2351
      %2374 = vmatprep.subr.bf16.mxu0 0
      %2375 = vmatpush1.bf16.msra.mxu0 %v2352
      %2376 = vmatprep.subr.bf16.mxu0 0
      %2377 = vmatpush1.bf16.msra.mxu0 %v2353
      %2378 = vmatprep.subr.bf16.mxu0 0
      %2379 = vmatpush1.bf16.msra.mxu0 0
      %2380 = vmatprep.subr.bf16.mxu0 0
      %2381 = vmatpush1.bf16.msra.mxu0 0
      %2382 = vmatprep.subr.bf16.mxu0 0
      %2383 = vmatpush1.bf16.msra.mxu0 0
      %2384 = vmatprep.subr.bf16.mxu0 0
      %2385 = vmatpush1.bf16.msra.mxu0 0
      %2386 = vmatprep.subr.bf16.mxu0 0
      %2387 = vmatpush1.bf16.msra.mxu0 0
      %2388 = vmatprep.subr.bf16.mxu0 0
      %2389 = vmatpush1.bf16.msra.mxu0 0
      %2390 = vmatprep.subr.bf16.mxu0 0
      %2391 = vmatpush1.bf16.msra.mxu0 0
      %2392 = vmatprep.subr.bf16.mxu0 0
      %2393 = vmatpush1.bf16.msra.mxu0 0
      %2394 = vmatprep.mubr.bf16.mxu0 0
      %2395 = vmatmul.mubr.bf16.gmra.mrb[0].mxu0 %v1463
      %v2396 = vpop.f32.mrb[0].mxu0
      %v2397 = vadd.f32 0.0, %v2396
      %v2398 = vpop.f32.mrb[0].mxu0
      %v2399 = vpop.f32.mrb[0].mxu0
      %v2400 = vadd.f32 0.0, %v2399
      %v2401 = vpop.f32.mrb[0].mxu0
      %2402 = vmatprep.mubr.bf16.mxu0 0
      %2403 = vmatmul.mubr.bf16.gmra.mrb[0].mxu0 %v1464
      %v2404 = vpop.f32.mrb[0].mxu0
      %v2405 = vadd.f32 0.0, %v2404
      %v2406 = vpop.f32.mrb[0].mxu0
      %v2407 = vpop.f32.mrb[0].mxu0
      %v2408 = vadd.f32 0.0, %v2407
      %v2409 = vpop.f32.mrb[0].mxu0
      %2410 = vmatprep.mubr.bf16.mxu0 0
      %2411 = vmatmul.mubr.bf16.gmra.mrb[0].mxu0 %v1465
      %v2412 = vpop.f32.mrb[0].mxu0
      %v2413 = vadd.f32 0.0, %v2412
      %v2414 = vpop.f32.mrb[0].mxu0
      %v2415 = vpop.f32.mrb[0].mxu0
      %v2416 = vadd.f32 0.0, %v2415
      %v2417 = vpop.f32.mrb[0].mxu0
      %2418 = vmatprep.mubr.bf16.mxu0 0
      %2419 = vmatmul.mubr.bf16.gmra.mrb[0].mxu0 %v1466
      %v2420 = vpop.f32.mrb[0].mxu0
      %v2421 = vadd.f32 0.0, %v2420
      %v2422 = vpop.f32.mrb[0].mxu0
      %v2423 = vpop.f32.mrb[0].mxu0
      %v2424 = vadd.f32 0.0, %v2423
      %v2425 = vpop.f32.mrb[0].mxu0
      %2426 = vmatprep.mubr.bf16.mxu0 0
      %2427 = vmatmul.mubr.bf16.gmra.mrb[0].mxu0 %v1467
      %v2428 = vpop.f32.mrb[0].mxu0
      %v2429 = vadd.f32 0.0, %v2428
      %v2430 = vpop.f32.mrb[0].mxu0
      %v2431 = vpop.f32.mrb[0].mxu0
      %v2432 = vadd.f32 0.0, %v2431
      %v2433 = vpop.f32.mrb[0].mxu0
      %2434 = vmatprep.mubr.bf16.mxu0 0
      %2435 = vmatmul.mubr.bf16.gmra.mrb[0].mxu0 %v1468
      %v2436 = vpop.f32.mrb[0].mxu0
      %v2437 = vadd.f32 0.0, %v2436
      %v2438 = vpop.f32.mrb[0].mxu0
      %v2439 = vpop.f32.mrb[0].mxu0
      %v2440 = vadd.f32 0.0, %v2439
      %v2441 = vpop.f32.mrb[0].mxu0
      %2442 = vmatprep.mubr.bf16.mxu0 0
      %2443 = vmatmul.mubr.bf16.gmra.mrb[0].mxu0 %v1469
      %v2444 = vpop.f32.mrb[0].mxu0
      %v2445 = vadd.f32 0.0, %v2444
      %v2446 = vpop.f32.mrb[0].mxu0
      %v2447 = vpop.f32.mrb[0].mxu0
      %v2448 = vadd.f32 0.0, %v2447
      %v2449 = vpop.f32.mrb[0].mxu0
      %2450 = vmatprep.mubr.bf16.mxu0 0
      %2451 = vmatmul.mubr.bf16.gmra.mrb[0].mxu0 %v1470
      %v2452 = vpop.f32.mrb[0].mxu0
      %v2453 = vadd.f32 0.0, %v2452
      %v2454 = vpop.f32.mrb[0].mxu0
      %v2455 = vpop.f32.mrb[0].mxu0
      %v2456 = vadd.f32 0.0, %v2455
      %v2457 = vpop.f32.mrb[0].mxu0
      %2458 = vmatprep.mubr.bf16.mxu0 0
      %2459 = vmatmul.mubr.bf16.gmra.mrb[0].mxu0 %v1471
      %v2460 = vpop.f32.mrb[0].mxu0
      %v2461 = vadd.f32 0.0, %v2460
      %v2462 = vpop.f32.mrb[0].mxu0
      %v2463 = vpop.f32.mrb[0].mxu0
      %v2464 = vadd.f32 0.0, %v2463
      %v2465 = vpop.f32.mrb[0].mxu0
      %2466 = vmatprep.mubr.bf16.mxu0 0
      %2467 = vmatmul.mubr.bf16.gmra.mrb[0].mxu0 %v1472
      %v2468 = vpop.f32.mrb[0].mxu0
      %v2469 = vadd.f32 0.0, %v2468
      %v2470 = vpop.f32.mrb[0].mxu0
      %v2471 = vpop.f32.mrb[0].mxu0
      %v2472 = vadd.f32 0.0, %v2471
      %v2473 = vpop.f32.mrb[0].mxu0
      %2474 = vmatprep.mubr.bf16.mxu0 0
      %2475 = vmatmul.mubr.bf16.gmra.mrb[0].mxu0 %v1473
      %v2476 = vpop.f32.mrb[0].mxu0
      %v2477 = vadd.f32 0.0, %v2476
      %v2478 = vpop.f32.mrb[0].mxu0
      %v2479 = vpop.f32.mrb[0].mxu0
      %v2480 = vadd.f32 0.0, %v2479
      %v2481 = vpop.f32.mrb[0].mxu0
      %2482 = vmatprep.mubr.bf16.mxu0 0
      %2483 = vmatmul.mubr.bf16.gmra.mrb[0].mxu0 %v1474
      %v2484 = vpop.f32.mrb[0].mxu0
      %v2485 = vadd.f32 0.0, %v2484
      %v2486 = vpop.f32.mrb[0].mxu0
      %v2487 = vpop.f32.mrb[0].mxu0
      %v2488 = vadd.f32 0.0, %v2487
      %v2489 = vpop.f32.mrb[0].mxu0
      %2490 = vmatprep.mubr.bf16.mxu0 0
      %2491 = vmatmul.mubr.bf16.gmra.mrb[0].mxu0 %v1475
      %v2492 = vpop.f32.mrb[0].mxu0
      %v2493 = vadd.f32 0.0, %v2492
      %v2494 = vpop.f32.mrb[0].mxu0
      %v2495 = vpop.f32.mrb[0].mxu0
      %v2496 = vadd.f32 0.0, %v2495
      %v2497 = vpop.f32.mrb[0].mxu0
      %2498 = vmatprep.mubr.bf16.mxu0 0
      %2499 = vmatmul.mubr.bf16.gmra.mrb[0].mxu0 %v1476
      %v2500 = vpop.f32.mrb[0].mxu0
      %v2501 = vadd.f32 0.0, %v2500
      %v2502 = vpop.f32.mrb[0].mxu0
      %v2503 = vpop.f32.mrb[0].mxu0
      %v2504 = vadd.f32 0.0, %v2503
      %v2505 = vpop.f32.mrb[0].mxu0
      %2506 = vmatprep.mubr.bf16.mxu0 0
      %2507 = vmatmul.mubr.bf16.gmra.mrb[0].mxu0 %v1477
      %v2508 = vpop.f32.mrb[0].mxu0
      %v2509 = vadd.f32 0.0, %v2508
      %v2510 = vpop.f32.mrb[0].mxu0
      %v2511 = vpop.f32.mrb[0].mxu0
      %v2512 = vadd.f32 0.0, %v2511
      %v2513 = vpop.f32.mrb[0].mxu0
      %2514 = vmatprep.mubr.bf16.mxu0 0
      %2515 = vmatmul.mubr.bf16.gmra.mrb[0].mxu0 %v2312
      %v2516 = vpop.f32.mrb[0].mxu0
      %v2517 = vadd.f32 0.0, %v2516
      %v2518 = vpop.f32.mrb[0].mxu0
      %v2519 = vpop.f32.mrb[0].mxu0
      %v2520 = vadd.f32 0.0, %v2519
      %v2521 = vpop.f32.mrb[0].mxu0
      %2522 = vdwg.mxu0
      %v2523 = vadd.f32 %v2253, %v2397
      %v2524 = vadd.f32 %v2254, %v2400
      %v2525 = vadd.f32 %v2255, %v2405
      %v2526 = vadd.f32 %v2256, %v2408
      %v2527 = vadd.f32 %v2257, %v2413
      %v2528 = vadd.f32 %v2258, %v2416
      %v2529 = vadd.f32 %v2259, %v2421
      %v2530 = vadd.f32 %v2260, %v2424
      %v2531 = vadd.f32 %v2261, %v2429
      %v2532 = vadd.f32 %v2262, %v2432
      %v2533 = vadd.f32 %v2263, %v2437
      %v2534 = vadd.f32 %v2264, %v2440
      %v2535 = vadd.f32 %v2265, %v2445
      %v2536 = vadd.f32 %v2266, %v2448
      %v2537 = vadd.f32 %v2267, %v2453
      %v2538 = vadd.f32 %v2268, %v2456
      %v2539 = vadd.f32 %v2269, %v2461
      %v2540 = vadd.f32 %v2270, %v2464
      %v2541 = vadd.f32 %v2271, %v2469
      %v2542 = vadd.f32 %v2272, %v2472
      %v2543 = vadd.f32 %v2273, %v2477
      %v2544 = vadd.f32 %v2274, %v2480
      %v2545 = vadd.f32 %v2275, %v2485
      %v2546 = vadd.f32 %v2276, %v2488
      %v2547 = vadd.f32 %v2277, %v2493
      %v2548 = vadd.f32 %v2278, %v2496
      %v2549 = vadd.f32 %v2279, %v2501
      %v2550 = vadd.f32 %v2280, %v2504
      %v2551 = vadd.f32 %v2281, %v2509
      %v2552 = vadd.f32 %v2282, %v2512
      %v2553 = vadd.f32 %v2283, %v2517
      %v2554 = vadd.f32 %v2284, %v2520
      %s2555 = scalar_lea.vmem %s1, 384
      %v2556 = vld [vmem:[%s2555] sm:$0xf]
      %v2557 = vld [vmem:[%s2555 + $0x4] sm:$0xf]
      %v2558 = vld [vmem:[%s2555 + $0x8] sm:$0xf]
      %v2559 = vld [vmem:[%s2555 + $0xc] sm:$0xf]
      %v2560 = vld [vmem:[%s2555 + $0x10] sm:$0xf]
      %v2561 = vld [vmem:[%s2555 + $0x14] sm:$0xf]
      %v2562 = vld [vmem:[%s2555 + $0x18] sm:$0xf]
      %v2563 = vld [vmem:[%s2555 + $0x1c] sm:$0xf]
      %v2564 = vld [vmem:[%s2555 + $0x20] sm:$0xf]
      %v2565 = vld [vmem:[%s2555 + $0x24] sm:$0xf]
      %v2566 = vld [vmem:[%s2555 + $0x28] sm:$0xf]
      %v2567 = vld [vmem:[%s2555 + $0x2c] sm:$0xf]
      %v2568 = vld [vmem:[%s2555 + $0x30] sm:$0xf]
      %v2569 = vld [vmem:[%s2555 + $0x34] sm:$0xf]
      %v2570 = vld [vmem:[%s2555 + $0x38] sm:$0xf]
      %v2571 = vld [vmem:[%s2555 + $0x3c] sm:$0xf]
      %v2574 = vunpack.c.l.b16 %v281
      %v2575 = vunpack.c.l.b16 %v282
      %v2576 = vpack.c.b16 %v2575, %v2574
      %v2594 = vunpack.c.l.b16 %v2556
      %v2595 = vunpack.c.l.b16 %v2557
      %v2596 = vunpack.c.l.b16 %v2558
      %v2597 = vunpack.c.l.b16 %v2559
      %v2598 = vunpack.c.l.b16 %v2560
      %v2599 = vunpack.c.l.b16 %v2561
      %v2600 = vunpack.c.l.b16 %v2562
      %v2601 = vunpack.c.l.b16 %v2563
      %v2602 = vunpack.c.l.b16 %v2564
      %v2603 = vunpack.c.l.b16 %v2565
      %v2604 = vunpack.c.l.b16 %v2566
      %v2605 = vunpack.c.l.b16 %v2567
      %v2606 = vunpack.c.l.b16 %v2568
      %v2607 = vunpack.c.l.b16 %v2569
      %v2608 = vunpack.c.l.b16 %v2570
      %v2609 = vunpack.c.l.b16 %v2571
      %v2610 = vpack.c.b16 %v2595, %v2594
      %v2611 = vpack.c.b16 %v2597, %v2596
      %v2612 = vpack.c.b16 %v2599, %v2598
      %v2613 = vpack.c.b16 %v2601, %v2600
      %v2614 = vpack.c.b16 %v2603, %v2602
      %v2615 = vpack.c.b16 %v2605, %v2604
      %v2616 = vpack.c.b16 %v2607, %v2606
      %v2617 = vpack.c.b16 %v2609, %v2608
      %2626 = vmatprep.subr.bf16.mxu0 0
      %2627 = vmatpush1.bf16.msra.mxu0 %v2610
      %2628 = vmatprep.subr.bf16.mxu0 0
      %2629 = vmatpush1.bf16.msra.mxu0 %v2611
      %2630 = vmatprep.subr.bf16.mxu0 0
      %2631 = vmatpush1.bf16.msra.mxu0 %v2612
      %2632 = vmatprep.subr.bf16.mxu0 0
      %2633 = vmatpush1.bf16.msra.mxu0 %v2613
      %2634 = vmatprep.subr.bf16.mxu0 0
      %2635 = vmatpush1.bf16.msra.mxu0 %v2614
      %2636 = vmatprep.subr.bf16.mxu0 0
      %2637 = vmatpush1.bf16.msra.mxu0 %v2615
      %2638 = vmatprep.subr.bf16.mxu0 0
      %2639 = vmatpush1.bf16.msra.mxu0 %v2616
      %2640 = vmatprep.subr.bf16.mxu0 0
      %2641 = vmatpush1.bf16.msra.mxu0 %v2617
      %2642 = vmatprep.subr.bf16.mxu0 0
      %2643 = vmatpush1.bf16.msra.mxu0 0
      %2644 = vmatprep.subr.bf16.mxu0 0
      %2645 = vmatpush1.bf16.msra.mxu0 0
      %2646 = vmatprep.subr.bf16.mxu0 0
      %2647 = vmatpush1.bf16.msra.mxu0 0
      %2648 = vmatprep.subr.bf16.mxu0 0
      %2649 = vmatpush1.bf16.msra.mxu0 0
      %2650 = vmatprep.subr.bf16.mxu0 0
      %2651 = vmatpush1.bf16.msra.mxu0 0
      %2652 = vmatprep.subr.bf16.mxu0 0
      %2653 = vmatpush1.bf16.msra.mxu0 0
      %2654 = vmatprep.subr.bf16.mxu0 0
      %2655 = vmatpush1.bf16.msra.mxu0 0
      %2656 = vmatprep.subr.bf16.mxu0 0
      %2657 = vmatpush1.bf16.msra.mxu0 0
      %2658 = vmatprep.mubr.bf16.mxu0 0
      %2659 = vmatmul.mubr.bf16.gmra.mrb[0].mxu0 %v1043
      %v2660 = vpop.f32.mrb[0].mxu0
      %v2661 = vadd.f32 0.0, %v2660
      %v2662 = vpop.f32.mrb[0].mxu0
      %v2663 = vpop.f32.mrb[0].mxu0
      %v2664 = vadd.f32 0.0, %v2663
      %v2665 = vpop.f32.mrb[0].mxu0
      %2666 = vmatprep.mubr.bf16.mxu0 0
      %2667 = vmatmul.mubr.bf16.gmra.mrb[0].mxu0 %v1044
      %v2668 = vpop.f32.mrb[0].mxu0
      %v2669 = vadd.f32 0.0, %v2668
      %v2670 = vpop.f32.mrb[0].mxu0
      %v2671 = vpop.f32.mrb[0].mxu0
      %v2672 = vadd.f32 0.0, %v2671
      %v2673 = vpop.f32.mrb[0].mxu0
      %2674 = vmatprep.mubr.bf16.mxu0 0
      %2675 = vmatmul.mubr.bf16.gmra.mrb[0].mxu0 %v1045
      %v2676 = vpop.f32.mrb[0].mxu0
      %v2677 = vadd.f32 0.0, %v2676
      %v2678 = vpop.f32.mrb[0].mxu0
      %v2679 = vpop.f32.mrb[0].mxu0
      %v2680 = vadd.f32 0.0, %v2679
      %v2681 = vpop.f32.mrb[0].mxu0
      %2682 = vmatprep.mubr.bf16.mxu0 0
      %2683 = vmatmul.mubr.bf16.gmra.mrb[0].mxu0 %v1046
      %v2684 = vpop.f32.mrb[0].mxu0
      %v2685 = vadd.f32 0.0, %v2684
      %v2686 = vpop.f32.mrb[0].mxu0
      %v2687 = vpop.f32.mrb[0].mxu0
      %v2688 = vadd.f32 0.0, %v2687
      %v2689 = vpop.f32.mrb[0].mxu0
      %2690 = vmatprep.mubr.bf16.mxu0 0
      %2691 = vmatmul.mubr.bf16.gmra.mrb[0].mxu0 %v1047
      %v2692 = vpop.f32.mrb[0].mxu0
      %v2693 = vadd.f32 0.0, %v2692
      %v2694 = vpop.f32.mrb[0].mxu0
      %v2695 = vpop.f32.mrb[0].mxu0
      %v2696 = vadd.f32 0.0, %v2695
      %v2697 = vpop.f32.mrb[0].mxu0
      %2698 = vmatprep.mubr.bf16.mxu0 0
      %2699 = vmatmul.mubr.bf16.gmra.mrb[0].mxu0 %v1048
      %v2700 = vpop.f32.mrb[0].mxu0
      %v2701 = vadd.f32 0.0, %v2700
      %v2702 = vpop.f32.mrb[0].mxu0
      %v2703 = vpop.f32.mrb[0].mxu0
      %v2704 = vadd.f32 0.0, %v2703
      %v2705 = vpop.f32.mrb[0].mxu0
      %2706 = vmatprep.mubr.bf16.mxu0 0
      %2707 = vmatmul.mubr.bf16.gmra.mrb[0].mxu0 %v1049
      %v2708 = vpop.f32.mrb[0].mxu0
      %v2709 = vadd.f32 0.0, %v2708
      %v2710 = vpop.f32.mrb[0].mxu0
      %v2711 = vpop.f32.mrb[0].mxu0
      %v2712 = vadd.f32 0.0, %v2711
      %v2713 = vpop.f32.mrb[0].mxu0
      %2714 = vmatprep.mubr.bf16.mxu0 0
      %2715 = vmatmul.mubr.bf16.gmra.mrb[0].mxu0 %v1050
      %v2716 = vpop.f32.mrb[0].mxu0
      %v2717 = vadd.f32 0.0, %v2716
      %v2718 = vpop.f32.mrb[0].mxu0
      %v2719 = vpop.f32.mrb[0].mxu0
      %v2720 = vadd.f32 0.0, %v2719
      %v2721 = vpop.f32.mrb[0].mxu0
      %2722 = vmatprep.mubr.bf16.mxu0 0
      %2723 = vmatmul.mubr.bf16.gmra.mrb[0].mxu0 %v1051
      %v2724 = vpop.f32.mrb[0].mxu0
      %v2725 = vadd.f32 0.0, %v2724
      %v2726 = vpop.f32.mrb[0].mxu0
      %v2727 = vpop.f32.mrb[0].mxu0
      %v2728 = vadd.f32 0.0, %v2727
      %v2729 = vpop.f32.mrb[0].mxu0
      %2730 = vmatprep.mubr.bf16.mxu0 0
      %2731 = vmatmul.mubr.bf16.gmra.mrb[0].mxu0 %v1052
      %v2732 = vpop.f32.mrb[0].mxu0
      %v2733 = vadd.f32 0.0, %v2732
      %v2734 = vpop.f32.mrb[0].mxu0
      %v2735 = vpop.f32.mrb[0].mxu0
      %v2736 = vadd.f32 0.0, %v2735
      %v2737 = vpop.f32.mrb[0].mxu0
      %2738 = vmatprep.mubr.bf16.mxu0 0
      %2739 = vmatmul.mubr.bf16.gmra.mrb[0].mxu0 %v1053
      %v2740 = vpop.f32.mrb[0].mxu0
      %v2741 = vadd.f32 0.0, %v2740
      %v2742 = vpop.f32.mrb[0].mxu0
      %v2743 = vpop.f32.mrb[0].mxu0
      %v2744 = vadd.f32 0.0, %v2743
      %v2745 = vpop.f32.mrb[0].mxu0
      %2746 = vmatprep.mubr.bf16.mxu0 0
      %2747 = vmatmul.mubr.bf16.gmra.mrb[0].mxu0 %v1054
      %v2748 = vpop.f32.mrb[0].mxu0
      %v2749 = vadd.f32 0.0, %v2748
      %v2750 = vpop.f32.mrb[0].mxu0
      %v2751 = vpop.f32.mrb[0].mxu0
      %v2752 = vadd.f32 0.0, %v2751
      %v2753 = vpop.f32.mrb[0].mxu0
      %2754 = vmatprep.mubr.bf16.mxu0 0
      %2755 = vmatmul.mubr.bf16.gmra.mrb[0].mxu0 %v1055
      %v2756 = vpop.f32.mrb[0].mxu0
      %v2757 = vadd.f32 0.0, %v2756
      %v2758 = vpop.f32.mrb[0].mxu0
      %v2759 = vpop.f32.mrb[0].mxu0
      %v2760 = vadd.f32 0.0, %v2759
      %v2761 = vpop.f32.mrb[0].mxu0
      %2762 = vmatprep.mubr.bf16.mxu0 0
      %2763 = vmatmul.mubr.bf16.gmra.mrb[0].mxu0 %v1056
      %v2764 = vpop.f32.mrb[0].mxu0
      %v2765 = vadd.f32 0.0, %v2764
      %v2766 = vpop.f32.mrb[0].mxu0
      %v2767 = vpop.f32.mrb[0].mxu0
      %v2768 = vadd.f32 0.0, %v2767
      %v2769 = vpop.f32.mrb[0].mxu0
      %2770 = vmatprep.mubr.bf16.mxu0 0
      %2771 = vmatmul.mubr.bf16.gmra.mrb[0].mxu0 %v1756
      %v2772 = vpop.f32.mrb[0].mxu0
      %v2773 = vadd.f32 0.0, %v2772
      %v2774 = vpop.f32.mrb[0].mxu0
      %v2775 = vpop.f32.mrb[0].mxu0
      %v2776 = vadd.f32 0.0, %v2775
      %v2777 = vpop.f32.mrb[0].mxu0
      %2778 = vmatprep.mubr.bf16.mxu0 0
      %2779 = vmatmul.mubr.bf16.gmra.mrb[0].mxu0 %v2576
      %v2780 = vpop.f32.mrb[0].mxu0
      %v2781 = vadd.f32 0.0, %v2780
      %v2782 = vpop.f32.mrb[0].mxu0
      %v2783 = vpop.f32.mrb[0].mxu0
      %v2784 = vadd.f32 0.0, %v2783
      %v2785 = vpop.f32.mrb[0].mxu0
      %2786 = vdwg.mxu0
      %v2787 = vadd.f32 %v2523, %v2661
      %v2788 = vadd.f32 %v2524, %v2664
      %v2789 = vadd.f32 %v2525, %v2669
      %v2790 = vadd.f32 %v2526, %v2672
      %v2791 = vadd.f32 %v2527, %v2677
      %v2792 = vadd.f32 %v2528, %v2680
      %v2793 = vadd.f32 %v2529, %v2685
      %v2794 = vadd.f32 %v2530, %v2688
      %v2795 = vadd.f32 %v2531, %v2693
      %v2796 = vadd.f32 %v2532, %v2696
      %v2797 = vadd.f32 %v2533, %v2701
      %v2798 = vadd.f32 %v2534, %v2704
      %v2799 = vadd.f32 %v2535, %v2709
      %v2800 = vadd.f32 %v2536, %v2712
      %v2801 = vadd.f32 %v2537, %v2717
      %v2802 = vadd.f32 %v2538, %v2720
      %v2803 = vadd.f32 %v2539, %v2725
      %v2804 = vadd.f32 %v2540, %v2728
      %v2805 = vadd.f32 %v2541, %v2733
      %v2806 = vadd.f32 %v2542, %v2736
      %v2807 = vadd.f32 %v2543, %v2741
      %v2808 = vadd.f32 %v2544, %v2744
      %v2809 = vadd.f32 %v2545, %v2749
      %v2810 = vadd.f32 %v2546, %v2752
      %v2811 = vadd.f32 %v2547, %v2757
      %v2812 = vadd.f32 %v2548, %v2760
      %v2813 = vadd.f32 %v2549, %v2765
      %v2814 = vadd.f32 %v2550, %v2768
      %v2815 = vadd.f32 %v2551, %v2773
      %v2816 = vadd.f32 %v2552, %v2776
      %v2817 = vadd.f32 %v2553, %v2781
      %v2818 = vadd.f32 %v2554, %v2784
      %v2820 = vshrl.u32 %v281, 16
      %v2822 = vrot.slane %v2820, 4
      %v2823 = vshll.u32 %v281, 16
      %v2825 = vrot.slane %v2823, 5
      %v2826 = vor.u32 %v2822, %v2825
      %v2827 = vrot.slane %v2826, 4
      %v2829 = vshll.u32 %v282, 16
      %v2831 = vrot.slane %v2829, 5
      %v2832 = vsel %vm302, %v2827, %v2831
      %v2833 = vshrl.u32 %v282, 16
      %v2835 = vrot.slane %v2833, 4
      %v2836 = vor.u32 %v2835, %v2831
      %v2837 = vrot.slane %v2836, 4
      %v2839 = vshll.u32 %v283, 16
      %v2841 = vrot.slane %v2839, 5
      %v2842 = vsel %vm302, %v2837, %v2841
      %s2843 = scalar_lea.vmem %s1, 448
      %v2844 = vld [vmem:[%s2843] sm:$0xf]
      %v2845 = vld [vmem:[%s2843 + $0x4] sm:$0xf]
      %v2846 = vld [vmem:[%s2843 + $0x8] sm:$0xf]
      %v2847 = vld [vmem:[%s2843 + $0xc] sm:$0xf]
      %v2848 = vld [vmem:[%s2843 + $0x10] sm:$0xf]
      %v2849 = vld [vmem:[%s2843 + $0x14] sm:$0xf]
      %v2850 = vld [vmem:[%s2843 + $0x18] sm:$0xf]
      %v2851 = vld [vmem:[%s2843 + $0x1c] sm:$0xf]
      %v2852 = vld [vmem:[%s2843 + $0x20] sm:$0xf]
      %v2853 = vld [vmem:[%s2843 + $0x24] sm:$0xf]
      %v2854 = vld [vmem:[%s2843 + $0x28] sm:$0xf]
      %v2855 = vld [vmem:[%s2843 + $0x2c] sm:$0xf]
      %v2856 = vld [vmem:[%s2843 + $0x30] sm:$0xf]
      %v2857 = vld [vmem:[%s2843 + $0x34] sm:$0xf]
      %v2858 = vld [vmem:[%s2843 + $0x38] sm:$0xf]
      %v2859 = vld [vmem:[%s2843 + $0x3c] sm:$0xf]
      %v2860 = vunpack.c.l.b16 %v2832
      %v2861 = vunpack.c.l.b16 %v2842
      %v2862 = vpack.c.b16 %v2861, %v2860
      %v2880 = vunpack.c.l.b16 %v2844
      %v2881 = vunpack.c.l.b16 %v2845
      %v2882 = vunpack.c.l.b16 %v2846
      %v2883 = vunpack.c.l.b16 %v2847
      %v2884 = vunpack.c.l.b16 %v2848
      %v2885 = vunpack.c.l.b16 %v2849
      %v2886 = vunpack.c.l.b16 %v2850
      %v2887 = vunpack.c.l.b16 %v2851
      %v2888 = vunpack.c.l.b16 %v2852
      %v2889 = vunpack.c.l.b16 %v2853
      %v2890 = vunpack.c.l.b16 %v2854
      %v2891 = vunpack.c.l.b16 %v2855
      %v2892 = vunpack.c.l.b16 %v2856
      %v2893 = vunpack.c.l.b16 %v2857
      %v2894 = vunpack.c.l.b16 %v2858
      %v2895 = vunpack.c.l.b16 %v2859
      %v2896 = vpack.c.b16 %v2881, %v2880
      %v2897 = vpack.c.b16 %v2883, %v2882
      %v2898 = vpack.c.b16 %v2885, %v2884
      %v2899 = vpack.c.b16 %v2887, %v2886
      %v2900 = vpack.c.b16 %v2889, %v2888
      %v2901 = vpack.c.b16 %v2891, %v2890
      %v2902 = vpack.c.b16 %v2893, %v2892
      %v2903 = vpack.c.b16 %v2895, %v2894
      %2912 = vmatprep.subr.bf16.mxu0 0
      %2913 = vmatpush1.bf16.msra.mxu0 %v2896
      %2914 = vmatprep.subr.bf16.mxu0 0
      %2915 = vmatpush1.bf16.msra.mxu0 %v2897
      %2916 = vmatprep.subr.bf16.mxu0 0
      %2917 = vmatpush1.bf16.msra.mxu0 %v2898
      %2918 = vmatprep.subr.bf16.mxu0 0
      %2919 = vmatpush1.bf16.msra.mxu0 %v2899
      %2920 = vmatprep.subr.bf16.mxu0 0
      %2921 = vmatpush1.bf16.msra.mxu0 %v2900
      %2922 = vmatprep.subr.bf16.mxu0 0
      %2923 = vmatpush1.bf16.msra.mxu0 %v2901
      %2924 = vmatprep.subr.bf16.mxu0 0
      %2925 = vmatpush1.bf16.msra.mxu0 %v2902
      %2926 = vmatprep.subr.bf16.mxu0 0
      %2927 = vmatpush1.bf16.msra.mxu0 %v2903
      %2928 = vmatprep.subr.bf16.mxu0 0
      %2929 = vmatpush1.bf16.msra.mxu0 0
      %2930 = vmatprep.subr.bf16.mxu0 0
      %2931 = vmatpush1.bf16.msra.mxu0 0
      %2932 = vmatprep.subr.bf16.mxu0 0
      %2933 = vmatpush1.bf16.msra.mxu0 0
      %2934 = vmatprep.subr.bf16.mxu0 0
      %2935 = vmatpush1.bf16.msra.mxu0 0
      %2936 = vmatprep.subr.bf16.mxu0 0
      %2937 = vmatpush1.bf16.msra.mxu0 0
      %2938 = vmatprep.subr.bf16.mxu0 0
      %2939 = vmatpush1.bf16.msra.mxu0 0
      %2940 = vmatprep.subr.bf16.mxu0 0
      %2941 = vmatpush1.bf16.msra.mxu0 0
      %2942 = vmatprep.subr.bf16.mxu0 0
      %2943 = vmatpush1.bf16.msra.mxu0 0
      %2944 = vmatprep.mubr.bf16.mxu0 0
      %2945 = vmatmul.mubr.bf16.gmra.mrb[0].mxu0 %v738
      %v2946 = vpop.f32.mrb[0].mxu0
      %v2947 = vadd.f32 0.0, %v2946
      %v2948 = vpop.f32.mrb[0].mxu0
      %v2949 = vpop.f32.mrb[0].mxu0
      %v2950 = vadd.f32 0.0, %v2949
      %v2951 = vpop.f32.mrb[0].mxu0
      %2952 = vmatprep.mubr.bf16.mxu0 0
      %2953 = vmatmul.mubr.bf16.gmra.mrb[0].mxu0 %v739
      %v2954 = vpop.f32.mrb[0].mxu0
      %v2955 = vadd.f32 0.0, %v2954
      %v2956 = vpop.f32.mrb[0].mxu0
      %v2957 = vpop.f32.mrb[0].mxu0
      %v2958 = vadd.f32 0.0, %v2957
      %v2959 = vpop.f32.mrb[0].mxu0
      %2960 = vmatprep.mubr.bf16.mxu0 0
      %2961 = vmatmul.mubr.bf16.gmra.mrb[0].mxu0 %v740
      %v2962 = vpop.f32.mrb[0].mxu0
      %v2963 = vadd.f32 0.0, %v2962
      %v2964 = vpop.f32.mrb[0].mxu0
      %v2965 = vpop.f32.mrb[0].mxu0
      %v2966 = vadd.f32 0.0, %v2965
      %v2967 = vpop.f32.mrb[0].mxu0
      %2968 = vmatprep.mubr.bf16.mxu0 0
      %2969 = vmatmul.mubr.bf16.gmra.mrb[0].mxu0 %v741
      %v2970 = vpop.f32.mrb[0].mxu0
      %v2971 = vadd.f32 0.0, %v2970
      %v2972 = vpop.f32.mrb[0].mxu0
      %v2973 = vpop.f32.mrb[0].mxu0
      %v2974 = vadd.f32 0.0, %v2973
      %v2975 = vpop.f32.mrb[0].mxu0
      %2976 = vmatprep.mubr.bf16.mxu0 0
      %2977 = vmatmul.mubr.bf16.gmra.mrb[0].mxu0 %v742
      %v2978 = vpop.f32.mrb[0].mxu0
      %v2979 = vadd.f32 0.0, %v2978
      %v2980 = vpop.f32.mrb[0].mxu0
      %v2981 = vpop.f32.mrb[0].mxu0
      %v2982 = vadd.f32 0.0, %v2981
      %v2983 = vpop.f32.mrb[0].mxu0
      %2984 = vmatprep.mubr.bf16.mxu0 0
      %2985 = vmatmul.mubr.bf16.gmra.mrb[0].mxu0 %v743
      %v2986 = vpop.f32.mrb[0].mxu0
      %v2987 = vadd.f32 0.0, %v2986
      %v2988 = vpop.f32.mrb[0].mxu0
      %v2989 = vpop.f32.mrb[0].mxu0
      %v2990 = vadd.f32 0.0, %v2989
      %v2991 = vpop.f32.mrb[0].mxu0
      %2992 = vmatprep.mubr.bf16.mxu0 0
      %2993 = vmatmul.mubr.bf16.gmra.mrb[0].mxu0 %v744
      %v2994 = vpop.f32.mrb[0].mxu0
      %v2995 = vadd.f32 0.0, %v2994
      %v2996 = vpop.f32.mrb[0].mxu0
      %v2997 = vpop.f32.mrb[0].mxu0
      %v2998 = vadd.f32 0.0, %v2997
      %v2999 = vpop.f32.mrb[0].mxu0
      %3000 = vmatprep.mubr.bf16.mxu0 0
      %3001 = vmatmul.mubr.bf16.gmra.mrb[0].mxu0 %v745
      %v3002 = vpop.f32.mrb[0].mxu0
      %v3003 = vadd.f32 0.0, %v3002
      %v3004 = vpop.f32.mrb[0].mxu0
      %v3005 = vpop.f32.mrb[0].mxu0
      %v3006 = vadd.f32 0.0, %v3005
      %v3007 = vpop.f32.mrb[0].mxu0
      %3008 = vmatprep.mubr.bf16.mxu0 0
      %3009 = vmatmul.mubr.bf16.gmra.mrb[0].mxu0 %v746
      %v3010 = vpop.f32.mrb[0].mxu0
      %v3011 = vadd.f32 0.0, %v3010
      %v3012 = vpop.f32.mrb[0].mxu0
      %v3013 = vpop.f32.mrb[0].mxu0
      %v3014 = vadd.f32 0.0, %v3013
      %v3015 = vpop.f32.mrb[0].mxu0
      %3016 = vmatprep.mubr.bf16.mxu0 0
      %3017 = vmatmul.mubr.bf16.gmra.mrb[0].mxu0 %v747
      %v3018 = vpop.f32.mrb[0].mxu0
      %v3019 = vadd.f32 0.0, %v3018
      %v3020 = vpop.f32.mrb[0].mxu0
      %v3021 = vpop.f32.mrb[0].mxu0
      %v3022 = vadd.f32 0.0, %v3021
      %v3023 = vpop.f32.mrb[0].mxu0
      %3024 = vmatprep.mubr.bf16.mxu0 0
      %3025 = vmatmul.mubr.bf16.gmra.mrb[0].mxu0 %v748
      %v3026 = vpop.f32.mrb[0].mxu0
      %v3027 = vadd.f32 0.0, %v3026
      %v3028 = vpop.f32.mrb[0].mxu0
      %v3029 = vpop.f32.mrb[0].mxu0
      %v3030 = vadd.f32 0.0, %v3029
      %v3031 = vpop.f32.mrb[0].mxu0
      %3032 = vmatprep.mubr.bf16.mxu0 0
      %3033 = vmatmul.mubr.bf16.gmra.mrb[0].mxu0 %v749
      %v3034 = vpop.f32.mrb[0].mxu0
      %v3035 = vadd.f32 0.0, %v3034
      %v3036 = vpop.f32.mrb[0].mxu0
      %v3037 = vpop.f32.mrb[0].mxu0
      %v3038 = vadd.f32 0.0, %v3037
      %v3039 = vpop.f32.mrb[0].mxu0
      %3040 = vmatprep.mubr.bf16.mxu0 0
      %3041 = vmatmul.mubr.bf16.gmra.mrb[0].mxu0 %v750
      %v3042 = vpop.f32.mrb[0].mxu0
      %v3043 = vadd.f32 0.0, %v3042
      %v3044 = vpop.f32.mrb[0].mxu0
      %v3045 = vpop.f32.mrb[0].mxu0
      %v3046 = vadd.f32 0.0, %v3045
      %v3047 = vpop.f32.mrb[0].mxu0
      %3048 = vmatprep.mubr.bf16.mxu0 0
      %3049 = vmatmul.mubr.bf16.gmra.mrb[0].mxu0 %v751
      %v3050 = vpop.f32.mrb[0].mxu0
      %v3051 = vadd.f32 0.0, %v3050
      %v3052 = vpop.f32.mrb[0].mxu0
      %v3053 = vpop.f32.mrb[0].mxu0
      %v3054 = vadd.f32 0.0, %v3053
      %v3055 = vpop.f32.mrb[0].mxu0
      %3056 = vmatprep.mubr.bf16.mxu0 0
      %3057 = vmatmul.mubr.bf16.gmra.mrb[0].mxu0 %v2042
      %v3058 = vpop.f32.mrb[0].mxu0
      %v3059 = vadd.f32 0.0, %v3058
      %v3060 = vpop.f32.mrb[0].mxu0
      %v3061 = vpop.f32.mrb[0].mxu0
      %v3062 = vadd.f32 0.0, %v3061
      %v3063 = vpop.f32.mrb[0].mxu0
      %3064 = vmatprep.mubr.bf16.mxu0 0
      %3065 = vmatmul.mubr.bf16.gmra.mrb[0].mxu0 %v2862
      %v3066 = vpop.f32.mrb[0].mxu0
      %v3067 = vadd.f32 0.0, %v3066
      %v3068 = vpop.f32.mrb[0].mxu0
      %v3069 = vpop.f32.mrb[0].mxu0
      %v3070 = vadd.f32 0.0, %v3069
      %v3071 = vpop.f32.mrb[0].mxu0
      %3072 = vdwg.mxu0
      %v3073 = vadd.f32 %v2787, %v2947
      %v3074 = vadd.f32 %v2788, %v2950
      %v3075 = vadd.f32 %v2789, %v2955
      %v3076 = vadd.f32 %v2790, %v2958
      %v3077 = vadd.f32 %v2791, %v2963
      %v3078 = vadd.f32 %v2792, %v2966
      %v3079 = vadd.f32 %v2793, %v2971
      %v3080 = vadd.f32 %v2794, %v2974
      %v3081 = vadd.f32 %v2795, %v2979
      %v3082 = vadd.f32 %v2796, %v2982
      %v3083 = vadd.f32 %v2797, %v2987
      %v3084 = vadd.f32 %v2798, %v2990
      %v3085 = vadd.f32 %v2799, %v2995
      %v3086 = vadd.f32 %v2800, %v2998
      %v3087 = vadd.f32 %v2801, %v3003
      %v3088 = vadd.f32 %v2802, %v3006
      %v3089 = vadd.f32 %v2803, %v3011
      %v3090 = vadd.f32 %v2804, %v3014
      %v3091 = vadd.f32 %v2805, %v3019
      %v3092 = vadd.f32 %v2806, %v3022
      %v3093 = vadd.f32 %v2807, %v3027
      %v3094 = vadd.f32 %v2808, %v3030
      %v3095 = vadd.f32 %v2809, %v3035
      %v3096 = vadd.f32 %v2810, %v3038
      %v3097 = vadd.f32 %v2811, %v3043
      %v3098 = vadd.f32 %v2812, %v3046
      %v3099 = vadd.f32 %v2813, %v3051
      %v3100 = vadd.f32 %v2814, %v3054
      %v3101 = vadd.f32 %v2815, %v3059
      %v3102 = vadd.f32 %v2816, %v3062
      %v3103 = vadd.f32 %v2817, %v3067
      %v3104 = vadd.f32 %v2818, %v3070
      %v3106 = vrot.slane %v281, 5
      %v3107 = vrot.slane %v3106, 4
      %v3108 = vrot.slane %v282, 5
      %v3109 = vsel %vm1300, %v3107, %v3108
      %v3110 = vrot.slane %v3108, 4
      %v3111 = vrot.slane %v283, 5
      %v3112 = vsel %vm1300, %v3110, %v3111
      %s3113 = scalar_lea.vmem %s1, 512
      %v3114 = vld [vmem:[%s3113] sm:$0xf]
      %v3115 = vld [vmem:[%s3113 + $0x4] sm:$0xf]
      %v3116 = vld [vmem:[%s3113 + $0x8] sm:$0xf]
      %v3117 = vld [vmem:[%s3113 + $0xc] sm:$0xf]
      %v3118 = vld [vmem:[%s3113 + $0x10] sm:$0xf]
      %v3119 = vld [vmem:[%s3113 + $0x14] sm:$0xf]
      %v3120 = vld [vmem:[%s3113 + $0x18] sm:$0xf]
      %v3121 = vld [vmem:[%s3113 + $0x1c] sm:$0xf]
      %v3122 = vld [vmem:[%s3113 + $0x20] sm:$0xf]
      %v3123 = vld [vmem:[%s3113 + $0x24] sm:$0xf]
      %v3124 = vld [vmem:[%s3113 + $0x28] sm:$0xf]
      %v3125 = vld [vmem:[%s3113 + $0x2c] sm:$0xf]
      %v3126 = vld [vmem:[%s3113 + $0x30] sm:$0xf]
      %v3127 = vld [vmem:[%s3113 + $0x34] sm:$0xf]
      %v3128 = vld [vmem:[%s3113 + $0x38] sm:$0xf]
      %v3129 = vld [vmem:[%s3113 + $0x3c] sm:$0xf]
      %v3130 = vunpack.c.l.b16 %v3109
      %v3131 = vunpack.c.l.b16 %v3112
      %v3132 = vpack.c.b16 %v3131, %v3130
      %v3150 = vunpack.c.l.b16 %v3114
      %v3151 = vunpack.c.l.b16 %v3115
      %v3152 = vunpack.c.l.b16 %v3116
      %v3153 = vunpack.c.l.b16 %v3117
      %v3154 = vunpack.c.l.b16 %v3118
      %v3155 = vunpack.c.l.b16 %v3119
      %v3156 = vunpack.c.l.b16 %v3120
      %v3157 = vunpack.c.l.b16 %v3121
      %v3158 = vunpack.c.l.b16 %v3122
      %v3159 = vunpack.c.l.b16 %v3123
      %v3160 = vunpack.c.l.b16 %v3124
      %v3161 = vunpack.c.l.b16 %v3125
      %v3162 = vunpack.c.l.b16 %v3126
      %v3163 = vunpack.c.l.b16 %v3127
      %v3164 = vunpack.c.l.b16 %v3128
      %v3165 = vunpack.c.l.b16 %v3129
      %v3166 = vpack.c.b16 %v3151, %v3150
      %v3167 = vpack.c.b16 %v3153, %v3152
      %v3168 = vpack.c.b16 %v3155, %v3154
      %v3169 = vpack.c.b16 %v3157, %v3156
      %v3170 = vpack.c.b16 %v3159, %v3158
      %v3171 = vpack.c.b16 %v3161, %v3160
      %v3172 = vpack.c.b16 %v3163, %v3162
      %v3173 = vpack.c.b16 %v3165, %v3164
      %3182 = vmatprep.subr.bf16.mxu0 0
      %3183 = vmatpush1.bf16.msra.mxu0 %v3166
      %3184 = vmatprep.subr.bf16.mxu0 0
      %3185 = vmatpush1.bf16.msra.mxu0 %v3167
      %3186 = vmatprep.subr.bf16.mxu0 0
      %3187 = vmatpush1.bf16.msra.mxu0 %v3168
      %3188 = vmatprep.subr.bf16.mxu0 0
      %3189 = vmatpush1.bf16.msra.mxu0 %v3169
      %3190 = vmatprep.subr.bf16.mxu0 0
      %3191 = vmatpush1.bf16.msra.mxu0 %v3170
      %3192 = vmatprep.subr.bf16.mxu0 0
      %3193 = vmatpush1.bf16.msra.mxu0 %v3171
      %3194 = vmatprep.subr.bf16.mxu0 0
      %3195 = vmatpush1.bf16.msra.mxu0 %v3172
      %3196 = vmatprep.subr.bf16.mxu0 0
      %3197 = vmatpush1.bf16.msra.mxu0 %v3173
      %3198 = vmatprep.subr.bf16.mxu0 0
      %3199 = vmatpush1.bf16.msra.mxu0 0
      %3200 = vmatprep.subr.bf16.mxu0 0
      %3201 = vmatpush1.bf16.msra.mxu0 0
      %3202 = vmatprep.subr.bf16.mxu0 0
      %3203 = vmatpush1.bf16.msra.mxu0 0
      %3204 = vmatprep.subr.bf16.mxu0 0
      %3205 = vmatpush1.bf16.msra.mxu0 0
      %3206 = vmatprep.subr.bf16.mxu0 0
      %3207 = vmatpush1.bf16.msra.mxu0 0
      %3208 = vmatprep.subr.bf16.mxu0 0
      %3209 = vmatpush1.bf16.msra.mxu0 0
      %3210 = vmatprep.subr.bf16.mxu0 0
      %3211 = vmatpush1.bf16.msra.mxu0 0
      %3212 = vmatprep.subr.bf16.mxu0 0
      %3213 = vmatpush1.bf16.msra.mxu0 0
      %3214 = vmatprep.mubr.bf16.mxu0 0
      %3215 = vmatmul.mubr.bf16.gmra.mrb[0].mxu0 %v1464
      %v3216 = vpop.f32.mrb[0].mxu0
      %v3217 = vadd.f32 0.0, %v3216
      %v3218 = vpop.f32.mrb[0].mxu0
      %v3219 = vpop.f32.mrb[0].mxu0
      %v3220 = vadd.f32 0.0, %v3219
      %v3221 = vpop.f32.mrb[0].mxu0
      %3222 = vmatprep.mubr.bf16.mxu0 0
      %3223 = vmatmul.mubr.bf16.gmra.mrb[0].mxu0 %v1465
      %v3224 = vpop.f32.mrb[0].mxu0
      %v3225 = vadd.f32 0.0, %v3224
      %v3226 = vpop.f32.mrb[0].mxu0
      %v3227 = vpop.f32.mrb[0].mxu0
      %v3228 = vadd.f32 0.0, %v3227
      %v3229 = vpop.f32.mrb[0].mxu0
      %3230 = vmatprep.mubr.bf16.mxu0 0
      %3231 = vmatmul.mubr.bf16.gmra.mrb[0].mxu0 %v1466
      %v3232 = vpop.f32.mrb[0].mxu0
      %v3233 = vadd.f32 0.0, %v3232
      %v3234 = vpop.f32.mrb[0].mxu0
      %v3235 = vpop.f32.mrb[0].mxu0
      %v3236 = vadd.f32 0.0, %v3235
      %v3237 = vpop.f32.mrb[0].mxu0
      %3238 = vmatprep.mubr.bf16.mxu0 0
      %3239 = vmatmul.mubr.bf16.gmra.mrb[0].mxu0 %v1467
      %v3240 = vpop.f32.mrb[0].mxu0
      %v3241 = vadd.f32 0.0, %v3240
      %v3242 = vpop.f32.mrb[0].mxu0
      %v3243 = vpop.f32.mrb[0].mxu0
      %v3244 = vadd.f32 0.0, %v3243
      %v3245 = vpop.f32.mrb[0].mxu0
      %3246 = vmatprep.mubr.bf16.mxu0 0
      %3247 = vmatmul.mubr.bf16.gmra.mrb[0].mxu0 %v1468
      %v3248 = vpop.f32.mrb[0].mxu0
      %v3249 = vadd.f32 0.0, %v3248
      %v3250 = vpop.f32.mrb[0].mxu0
      %v3251 = vpop.f32.mrb[0].mxu0
      %v3252 = vadd.f32 0.0, %v3251
      %v3253 = vpop.f32.mrb[0].mxu0
      %3254 = vmatprep.mubr.bf16.mxu0 0
      %3255 = vmatmul.mubr.bf16.gmra.mrb[0].mxu0 %v1469
      %v3256 = vpop.f32.mrb[0].mxu0
      %v3257 = vadd.f32 0.0, %v3256
      %v3258 = vpop.f32.mrb[0].mxu0
      %v3259 = vpop.f32.mrb[0].mxu0
      %v3260 = vadd.f32 0.0, %v3259
      %v3261 = vpop.f32.mrb[0].mxu0
      %3262 = vmatprep.mubr.bf16.mxu0 0
      %3263 = vmatmul.mubr.bf16.gmra.mrb[0].mxu0 %v1470
      %v3264 = vpop.f32.mrb[0].mxu0
      %v3265 = vadd.f32 0.0, %v3264
      %v3266 = vpop.f32.mrb[0].mxu0
      %v3267 = vpop.f32.mrb[0].mxu0
      %v3268 = vadd.f32 0.0, %v3267
      %v3269 = vpop.f32.mrb[0].mxu0
      %3270 = vmatprep.mubr.bf16.mxu0 0
      %3271 = vmatmul.mubr.bf16.gmra.mrb[0].mxu0 %v1471
      %v3272 = vpop.f32.mrb[0].mxu0
      %v3273 = vadd.f32 0.0, %v3272
      %v3274 = vpop.f32.mrb[0].mxu0
      %v3275 = vpop.f32.mrb[0].mxu0
      %v3276 = vadd.f32 0.0, %v3275
      %v3277 = vpop.f32.mrb[0].mxu0
      %3278 = vmatprep.mubr.bf16.mxu0 0
      %3279 = vmatmul.mubr.bf16.gmra.mrb[0].mxu0 %v1472
      %v3280 = vpop.f32.mrb[0].mxu0
      %v3281 = vadd.f32 0.0, %v3280
      %v3282 = vpop.f32.mrb[0].mxu0
      %v3283 = vpop.f32.mrb[0].mxu0
      %v3284 = vadd.f32 0.0, %v3283
      %v3285 = vpop.f32.mrb[0].mxu0
      %3286 = vmatprep.mubr.bf16.mxu0 0
      %3287 = vmatmul.mubr.bf16.gmra.mrb[0].mxu0 %v1473
      %v3288 = vpop.f32.mrb[0].mxu0
      %v3289 = vadd.f32 0.0, %v3288
      %v3290 = vpop.f32.mrb[0].mxu0
      %v3291 = vpop.f32.mrb[0].mxu0
      %v3292 = vadd.f32 0.0, %v3291
      %v3293 = vpop.f32.mrb[0].mxu0
      %3294 = vmatprep.mubr.bf16.mxu0 0
      %3295 = vmatmul.mubr.bf16.gmra.mrb[0].mxu0 %v1474
      %v3296 = vpop.f32.mrb[0].mxu0
      %v3297 = vadd.f32 0.0, %v3296
      %v3298 = vpop.f32.mrb[0].mxu0
      %v3299 = vpop.f32.mrb[0].mxu0
      %v3300 = vadd.f32 0.0, %v3299
      %v3301 = vpop.f32.mrb[0].mxu0
      %3302 = vmatprep.mubr.bf16.mxu0 0
      %3303 = vmatmul.mubr.bf16.gmra.mrb[0].mxu0 %v1475
      %v3304 = vpop.f32.mrb[0].mxu0
      %v3305 = vadd.f32 0.0, %v3304
      %v3306 = vpop.f32.mrb[0].mxu0
      %v3307 = vpop.f32.mrb[0].mxu0
      %v3308 = vadd.f32 0.0, %v3307
      %v3309 = vpop.f32.mrb[0].mxu0
      %3310 = vmatprep.mubr.bf16.mxu0 0
      %3311 = vmatmul.mubr.bf16.gmra.mrb[0].mxu0 %v1476
      %v3312 = vpop.f32.mrb[0].mxu0
      %v3313 = vadd.f32 0.0, %v3312
      %v3314 = vpop.f32.mrb[0].mxu0
      %v3315 = vpop.f32.mrb[0].mxu0
      %v3316 = vadd.f32 0.0, %v3315
      %v3317 = vpop.f32.mrb[0].mxu0
      %3318 = vmatprep.mubr.bf16.mxu0 0
      %3319 = vmatmul.mubr.bf16.gmra.mrb[0].mxu0 %v1477
      %v3320 = vpop.f32.mrb[0].mxu0
      %v3321 = vadd.f32 0.0, %v3320
      %v3322 = vpop.f32.mrb[0].mxu0
      %v3323 = vpop.f32.mrb[0].mxu0
      %v3324 = vadd.f32 0.0, %v3323
      %v3325 = vpop.f32.mrb[0].mxu0
      %3326 = vmatprep.mubr.bf16.mxu0 0
      %3327 = vmatmul.mubr.bf16.gmra.mrb[0].mxu0 %v2312
      %v3328 = vpop.f32.mrb[0].mxu0
      %v3329 = vadd.f32 0.0, %v3328
      %v3330 = vpop.f32.mrb[0].mxu0
      %v3331 = vpop.f32.mrb[0].mxu0
      %v3332 = vadd.f32 0.0, %v3331
      %v3333 = vpop.f32.mrb[0].mxu0
      %3334 = vmatprep.mubr.bf16.mxu0 0
      %3335 = vmatmul.mubr.bf16.gmra.mrb[0].mxu0 %v3132
      %v3336 = vpop.f32.mrb[0].mxu0
      %v3337 = vadd.f32 0.0, %v3336
      %v3338 = vpop.f32.mrb[0].mxu0
      %v3339 = vpop.f32.mrb[0].mxu0
      %v3340 = vadd.f32 0.0, %v3339
      %v3341 = vpop.f32.mrb[0].mxu0
      %3342 = vdwg.mxu0
      %v3343 = vadd.f32 %v3073, %v3217
      %v3344 = vadd.f32 %v3074, %v3220
      %v3345 = vadd.f32 %v3075, %v3225
      %v3346 = vadd.f32 %v3076, %v3228
      %v3347 = vadd.f32 %v3077, %v3233
      %v3348 = vadd.f32 %v3078, %v3236
      %v3349 = vadd.f32 %v3079, %v3241
      %v3350 = vadd.f32 %v3080, %v3244
      %v3351 = vadd.f32 %v3081, %v3249
      %v3352 = vadd.f32 %v3082, %v3252
      %v3353 = vadd.f32 %v3083, %v3257
      %v3354 = vadd.f32 %v3084, %v3260
      %v3355 = vadd.f32 %v3085, %v3265
      %v3356 = vadd.f32 %v3086, %v3268
      %v3357 = vadd.f32 %v3087, %v3273
      %v3358 = vadd.f32 %v3088, %v3276
      %v3359 = vadd.f32 %v3089, %v3281
      %v3360 = vadd.f32 %v3090, %v3284
      %v3361 = vadd.f32 %v3091, %v3289
      %v3362 = vadd.f32 %v3092, %v3292
      %v3363 = vadd.f32 %v3093, %v3297
      %v3364 = vadd.f32 %v3094, %v3300
      %v3365 = vadd.f32 %v3095, %v3305
      %v3366 = vadd.f32 %v3096, %v3308
      %v3367 = vadd.f32 %v3097, %v3313
      %v3368 = vadd.f32 %v3098, %v3316
      %v3369 = vadd.f32 %v3099, %v3321
      %v3370 = vadd.f32 %v3100, %v3324
      %v3371 = vadd.f32 %v3101, %v3329
      %v3372 = vadd.f32 %v3102, %v3332
      %v3373 = vadd.f32 %v3103, %v3337
      %v3374 = vadd.f32 %v3104, %v3340
      %3375 = vst [vmem:[%s220] sm:$0xff] %v3343
      %3376 = vst [vmem:[%s220 + $0x8] sm:$0xff] %v3344
      %3377 = vst [vmem:[%s220 + $0x10] sm:$0xff] %v3345
      %3378 = vst [vmem:[%s220 + $0x18] sm:$0xff] %v3346
      %3379 = vst [vmem:[%s220 + $0x20] sm:$0xff] %v3347
      %3380 = vst [vmem:[%s220 + $0x28] sm:$0xff] %v3348
      %3381 = vst [vmem:[%s220 + $0x30] sm:$0xff] %v3349
      %3382 = vst [vmem:[%s220 + $0x38] sm:$0xff] %v3350
      %3383 = vst [vmem:[%s220 + $0x40] sm:$0xff] %v3351
      %3384 = vst [vmem:[%s220 + $0x48] sm:$0xff] %v3352
      %3385 = vst [vmem:[%s220 + $0x50] sm:$0xff] %v3353
      %3386 = vst [vmem:[%s220 + $0x58] sm:$0xff] %v3354
      %3387 = vst [vmem:[%s220 + $0x60] sm:$0xff] %v3355
      %3388 = vst [vmem:[%s220 + $0x68] sm:$0xff] %v3356
      %3389 = vst [vmem:[%s220 + $0x70] sm:$0xff] %v3357
      %3390 = vst [vmem:[%s220 + $0x78] sm:$0xff] %v3358
      %3391 = vst [vmem:[%s220 + $0x80] sm:$0xff] %v3359
      %3392 = vst [vmem:[%s220 + $0x88] sm:$0xff] %v3360
      %3393 = vst [vmem:[%s220 + $0x90] sm:$0xff] %v3361
      %3394 = vst [vmem:[%s220 + $0x98] sm:$0xff] %v3362
      %3395 = vst [vmem:[%s220 + $0xa0] sm:$0xff] %v3363
      %3396 = vst [vmem:[%s220 + $0xa8] sm:$0xff] %v3364
      %3397 = vst [vmem:[%s220 + $0xb0] sm:$0xff] %v3365
      %3398 = vst [vmem:[%s220 + $0xb8] sm:$0xff] %v3366
      %3399 = vst [vmem:[%s220 + $0xc0] sm:$0xff] %v3367
      %3400 = vst [vmem:[%s220 + $0xc8] sm:$0xff] %v3368
      %3401 = vst [vmem:[%s220 + $0xd0] sm:$0xff] %v3369
      %3402 = vst [vmem:[%s220 + $0xd8] sm:$0xff] %v3370
      %3403 = vst [vmem:[%s220 + $0xe0] sm:$0xff] %v3371
      %3404 = vst [vmem:[%s220 + $0xe8] sm:$0xff] %v3372
      %3405 = vst [vmem:[%s220 + $0xf0] sm:$0xff] %v3373
      %3406 = vst [vmem:[%s220 + $0xf8] sm:$0xff] %v3374
      %v3407 = vadd.f32 %v3343, %v3344
      %v3408 = vadd.f32 %v3407, %v3345
      %v3409 = vadd.f32 %v3408, %v3346
      %v3410 = vadd.f32 %v3409, %v3347
      %v3411 = vadd.f32 %v3410, %v3348
      %v3412 = vadd.f32 %v3411, %v3349
      %v3413 = vadd.f32 %v3412, %v3350
      %v3414 = vadd.f32 %v3413, %v3351
      %v3415 = vadd.f32 %v3414, %v3352
      %v3416 = vadd.f32 %v3415, %v3353
      %v3417 = vadd.f32 %v3416, %v3354
      %v3418 = vadd.f32 %v3417, %v3355
      %v3419 = vadd.f32 %v3418, %v3356
      %v3420 = vadd.f32 %v3419, %v3357
      %v3421 = vadd.f32 %v3420, %v3358
      %v3422 = vadd.f32 %v3421, %v3359
      %v3423 = vadd.f32 %v3422, %v3360
      %v3424 = vadd.f32 %v3423, %v3361
      %v3425 = vadd.f32 %v3424, %v3362
      %v3426 = vadd.f32 %v3425, %v3363
      %v3427 = vadd.f32 %v3426, %v3364
      %v3428 = vadd.f32 %v3427, %v3365
      %v3429 = vadd.f32 %v3428, %v3366
      %v3430 = vadd.f32 %v3429, %v3367
      %v3431 = vadd.f32 %v3430, %v3368
      %v3432 = vadd.f32 %v3431, %v3369
      %v3433 = vadd.f32 %v3432, %v3370
      %v3434 = vadd.f32 %v3433, %v3371
      %v3435 = vadd.f32 %v3434, %v3372
      %v3436 = vadd.f32 %v3435, %v3373
      %v3437 = vadd.f32 %v3436, %v3374
      %v3438 = vrot.slane %v3437, 4
      %v3439 = vadd.f32 %v3437, %v3438
      %v3440 = vrot.slane %v3439, 2
      %v3441 = vadd.f32 %v3439, %v3440
      %v3442 = vrot.slane %v3441, 1
      %v3443 = vadd.f32 %v3441, %v3442
      %v3444 = vmul.f32 %v3343, %v3343
      %v3445 = vmul.f32 %v3344, %v3344
      %v3446 = vmul.f32 %v3345, %v3345
      %v3447 = vmul.f32 %v3346, %v3346
      %v3448 = vmul.f32 %v3347, %v3347
      %v3449 = vmul.f32 %v3348, %v3348
      %v3450 = vmul.f32 %v3349, %v3349
      %v3451 = vmul.f32 %v3350, %v3350
      %v3452 = vmul.f32 %v3351, %v3351
      %v3453 = vmul.f32 %v3352, %v3352
      %v3454 = vmul.f32 %v3353, %v3353
      %v3455 = vmul.f32 %v3354, %v3354
      %v3456 = vmul.f32 %v3355, %v3355
      %v3457 = vmul.f32 %v3356, %v3356
      %v3458 = vmul.f32 %v3357, %v3357
      %v3459 = vmul.f32 %v3358, %v3358
      %v3460 = vmul.f32 %v3359, %v3359
      %v3461 = vmul.f32 %v3360, %v3360
      %v3462 = vmul.f32 %v3361, %v3361
      %v3463 = vmul.f32 %v3362, %v3362
      %v3464 = vmul.f32 %v3363, %v3363
      %v3465 = vmul.f32 %v3364, %v3364
      %v3466 = vmul.f32 %v3365, %v3365
      %v3467 = vmul.f32 %v3366, %v3366
      %v3468 = vmul.f32 %v3367, %v3367
      %v3469 = vmul.f32 %v3368, %v3368
      %v3470 = vmul.f32 %v3369, %v3369
      %v3471 = vmul.f32 %v3370, %v3370
      %v3472 = vmul.f32 %v3371, %v3371
      %v3473 = vmul.f32 %v3372, %v3372
      %v3474 = vmul.f32 %v3373, %v3373
      %v3475 = vmul.f32 %v3374, %v3374
      %v3476 = vadd.f32 %v3444, %v3445
      %v3477 = vadd.f32 %v3476, %v3446
      %v3478 = vadd.f32 %v3477, %v3447
      %v3479 = vadd.f32 %v3478, %v3448
      %v3480 = vadd.f32 %v3479, %v3449
      %v3481 = vadd.f32 %v3480, %v3450
      %v3482 = vadd.f32 %v3481, %v3451
      %v3483 = vadd.f32 %v3482, %v3452
      %v3484 = vadd.f32 %v3483, %v3453
      %v3485 = vadd.f32 %v3484, %v3454
      %v3486 = vadd.f32 %v3485, %v3455
      %v3487 = vadd.f32 %v3486, %v3456
      %v3488 = vadd.f32 %v3487, %v3457
      %v3489 = vadd.f32 %v3488, %v3458
      %v3490 = vadd.f32 %v3489, %v3459
      %v3491 = vadd.f32 %v3490, %v3460
      %v3492 = vadd.f32 %v3491, %v3461
      %v3493 = vadd.f32 %v3492, %v3462
      %v3494 = vadd.f32 %v3493, %v3463
      %v3495 = vadd.f32 %v3494, %v3464
      %v3496 = vadd.f32 %v3495, %v3465
      %v3497 = vadd.f32 %v3496, %v3466
      %v3498 = vadd.f32 %v3497, %v3467
      %v3499 = vadd.f32 %v3498, %v3468
      %v3500 = vadd.f32 %v3499, %v3469
      %v3501 = vadd.f32 %v3500, %v3470
      %v3502 = vadd.f32 %v3501, %v3471
      %v3503 = vadd.f32 %v3502, %v3472
      %v3504 = vadd.f32 %v3503, %v3473
      %v3505 = vadd.f32 %v3504, %v3474
      %v3506 = vadd.f32 %v3505, %v3475
      %v3507 = vrot.slane %v3506, 4
      %v3508 = vadd.f32 %v3506, %v3507
      %v3509 = vrot.slane %v3508, 2
      %v3510 = vadd.f32 %v3508, %v3509
      %v3511 = vrot.slane %v3510, 1
      %v3512 = vadd.f32 %v3510, %v3511
      %vm3513 = vcmask 1040384
      %v3514 = vsel %vm3513, %v3443, %v3512
      %3515 = vst [vmem:[%s228] sm:$0x3] %v3514
      %s3516 = smul.u32 16, %s20
      %p3517 = scmp.lt.s32.totalorder %s19, 1
      %s3518 = scalar_select %p3517, %s19, 1
      %p3519 = scmp.lt.s32.totalorder %s3516, 15
      %s3520 = scalar_select %p3519, %s3516, 15
      %s3521 = smul.addr %s3520, 2
      %s3522 = smul.addr %s3518, 32
      %s3523 = sadd.s32 %s3521, %s3522
      %s3524 = smul.addr %s3523, 8
      %s3525 = scalar_lea.vmem %s2, %s3524
      %p3526 = scmp.lt.s32.totalorder %s19, 1
      %s3527 = scalar_select %p3526, %s19, 1
      %p3528 = scmp.lt.s32.totalorder %s20, 0
      %s3529 = scalar_select %p3528, %s20, 0
      %s3530 = sadd.s32 %s3529, %s3527
      %s3531 = smul.addr %s3530, 2
      %s3532 = scalar_lea.vmem %s3, %s3531
      // Predicated region
      $region29: #{up_layer_forward.8} parent=27 // pred_check
        %p3533 = pneg %p96
      $region30: #{up_layer_forward.8} parent=27 // pred_check_branch
        %3535 = sbr.rel (%p3533) target = $region32
      $region31: #{up_layer_forward.8} parent=27 // pred_region
        %s3536 = smul.u32 16, %s20
      $region32: #{up_layer_forward.8} parent=27 // pred_fallthru
        _
      // Predicated region
      $region33: #{up_layer_forward.8} parent=27 // pred_check
        %p3537 = pneg %p124
      $region34: #{up_layer_forward.8} parent=27 // pred_check_branch
        %3539 = sbr.rel (%p3537) target = $region36
      $region35: #{up_layer_forward.8} parent=27 // pred_region
        _
      $region36: #{up_layer_forward.8} parent=27 // pred_fallthru
        _
    $region28: #{up_layer_forward.8} parent=5 // pred_fallthru
      _
    %p3540 = scmp.le.s32.totalorder 2, %s10
    // Predicated region
    $region37: #{up_layer_forward.8} parent=5 // pred_check
      %p3541 = pneg %p3540
    $region38: #{up_layer_forward.8} parent=5 // pred_check_branch
      %3543 = sbr.rel (%p3541) target = $region40
    $region39: #{up_layer_forward.8} parent=5 // pred_region
      %s3544 = ssub.s32 %s10, 2
      // Predicated region
      $region41: #{up_layer_forward.8} parent=39 // pred_check
        %p3545 = pneg %p102
      $region42: #{up_layer_forward.8} parent=39 // pred_check_branch
        %3547 = sbr.rel (%p3545) target = $region44
      $region43: #{up_layer_forward.8} parent=39 // pred_region
        %s3548 = smul.u32 16, %s22
        %p3549 = scmp.lt.s32.totalorder %s21, 1
        %s3550 = scalar_select %p3549, %s21, 1
        %p3551 = scmp.lt.s32.totalorder %s3548, 15
        %s3552 = scalar_select %p3551, %s3548, 15
        %s3553 = smul.addr %s3552, 2
        %s3554 = smul.addr %s3550, 32
        %s3555 = sadd.s32 %s3553, %s3554
        %s3556 = smul.addr %s3555, 8
        %s3557 = scalar_lea.vmem %s2, %s3556
      $region44: #{up_layer_forward.8} parent=39 // pred_fallthru
        _
      // Predicated region
      $region45: #{up_layer_forward.8} parent=39 // pred_check
        %p3558 = pneg %p130
      $region46: #{up_layer_forward.8} parent=39 // pred_check_branch
        %3560 = sbr.rel (%p3558) target = $region48
      $region47: #{up_layer_forward.8} parent=39 // pred_region
        %p3561 = scmp.lt.s32.totalorder %s21, 1
        %s3562 = scalar_select %p3561, %s21, 1
        %p3563 = scmp.lt.s32.totalorder %s22, 0
        %s3564 = scalar_select %p3563, %s22, 0
        %s3565 = sadd.s32 %s3564, %s3562
        %s3566 = smul.addr %s3565, 2
        %s3567 = scalar_lea.vmem %s3, %s3566
      $region48: #{up_layer_forward.8} parent=39 // pred_fallthru
        _
    $region40: #{up_layer_forward.8} parent=5 // pred_fallthru
      _
  $region6: #{up_layer_forward.8} parent=0 // loop_footer
    %s14 = sadd.s32 1, %s10
  $region7: #{up_layer_forward.8} parent=0 // loop_footer_branch
    %9 = sbr.rel target = $region3
  $region8: #{up_layer_forward.8} parent=0 // loop_exit
    _

</llo_original>
